<compile_context>
chip_gen: v7x
topology: tpu7x:2x2x1
jax: 0.10.0
libtpu: 0.0.40
codegen_flags: <defaults>
</compile_context>

<pallas_src>
import jax
import jax.numpy as jnp
from jax import lax
from jax.experimental import pallas as pl
from jax.experimental.pallas import tpu as pltpu


def _round_up(x, m):
    return ((x + m - 1) // m) * m


# ----------------------------- encoder kernel ------------------------------

def make_encoder_kernel(batch, hw):
    inv_hw = 1.0 / float(hw)

    def kernel(img_ref, wstem_t_ref, wenc_ref, benc_ref, out_ref, pooled_scr):
        # img: (B, Cin, HW) f32      wstem_t: (Cmid, Cin) f32
        # wenc: (Cmid, Ep) f32       benc: (1, Ep) f32
        # out: (Bp, Ep) f32          pooled_scr: (Bp, Cmid) f32
        pooled_scr[...] = jnp.zeros_like(pooled_scr)
        ones_row = jnp.ones((1, hw), jnp.float32)
        for b in range(batch):                          # static unroll, B tiny
            xb = img_ref[b]                             # (Cin, HW), lane = HW
            feat = jnp.maximum(
                jnp.dot(wstem_t_ref[...], xb,
                        preferred_element_type=jnp.float32), 0.0)  # stem + ReLU
            # AdaptiveAvgPool2d((1,1)) as a ones-row matmul (A @ B^T) on the MXU.
            pooled = lax.dot_general(
                ones_row, feat, (((1,), (1,)), ((), ())),
                preferred_element_type=jnp.float32) * inv_hw       # (1, Cmid)
            pooled_scr[pl.ds(b, 1), :] = pooled
        # ONE batched projection + ReLU (dropout = identity) + ONE full store.
        emb = jnp.dot(pooled_scr[...], wenc_ref[...],
                      preferred_element_type=jnp.float32) + benc_ref[...]
        emb = jnp.maximum(emb, 0.0)
        row = lax.broadcasted_iota(jnp.int32, emb.shape, 0)
        out_ref[...] = jnp.where(row < batch, emb, 0.0)  # zero padded batch rows

    return kernel


def encoder_forward(images_nchw, wstem_t, wenc_p, benc_p, b_pad, e_pad):
    B, Cin, Hi, Wi = images_nchw.shape
    HW = Hi * Wi
    Cmid = wstem_t.shape[0]
    img = images_nchw.reshape(B, Cin, HW)               # pure reshape, no transpose
    return pl.pallas_call(
        make_encoder_kernel(B, HW),
        out_shape=jax.ShapeDtypeStruct((b_pad, e_pad), jnp.float32),
        scratch_shapes=[pltpu.VMEM((b_pad, Cmid), jnp.float32)],
    )(img, wstem_t, wenc_p, benc_p)


# ----------------------------- decoder kernel ------------------------------

def make_decoder_kernel(num_layers, t_chunk, batch, h_pad, v_pad):
    L = num_layers

    def kernel(tf_ref, cap_ref, feat_ref, *args):
        # args = [wxh_0, b_0, ..., wxh_{L-1}, b_{L-1}, w_out, b_out, embed,
        #         out_ref, h_scr, c_scr, inp_scr]
        n_w = 2 * L
        lstm_refs = args[:n_w]
        w_out_ref, b_out_ref, emb_ref = args[n_w:n_w + 3]
        out_ref = args[n_w + 3]
        h_scr, c_scr, inp_scr = args[n_w + 4:n_w + 7]

        c = pl.program_id(0)

        def stack_step(x):
            """One timestep through the stacked LSTM; updates h/c scratch."""
            inp = x
            for l in range(L):
                w = lstm_refs[2 * l]                    # (D_l + Hp, 4*Hp) bf16 fused
                b = lstm_refs[2 * l + 1]                # (1, 4*Hp) f32
                h_prev = h_scr[l]                       # (Bp, Hp)
                c_prev = c_scr[l]
                xh = jnp.concatenate([inp, h_prev], axis=-1).astype(jnp.bfloat16)
                gates = jnp.dot(xh, w[...],
                                preferred_element_type=jnp.float32) + b[...]
                i_g = jax.nn.sigmoid(gates[:, 0 * h_pad:1 * h_pad])
                f_g = jax.nn.sigmoid(gates[:, 1 * h_pad:2 * h_pad])
                g_g = jnp.tanh(gates[:, 2 * h_pad:3 * h_pad])
                o_g = jax.nn.sigmoid(gates[:, 3 * h_pad:4 * h_pad])
                c_new = f_g * c_prev + i_g * g_g
                h_new = o_g * jnp.tanh(c_new)
                h_scr[l] = h_new
                c_scr[l] = c_new
                inp = h_new
            return inp

        def greedy_gather(logits):
            # Greedy next-token embedding: per-row argmax -> dynamic row gather
            # from the embedding table (no one-hot matmul, only real rows).
            col = lax.broadcasted_iota(jnp.int32, (1, v_pad), 1)
            for b in range(batch):
                row = logits[b:b + 1, :]                              # (1, Vp)
                row_max = jnp.max(row, axis=1, keepdims=True)         # (1, 1)
                idx = jnp.min(jnp.where(row >= row_max, col, v_pad))  # scalar i32
                idx = jnp.minimum(idx, v_pad - 1)
                inp_scr[pl.ds(b, 1), :] = emb_ref[pl.ds(idx, 1), :]

        # One chunk of t_chunk output steps; the warm-up "lstm(features)" step
        # is the first unrolled iteration, executed only for the first chunk.
        for k in range(t_chunk + 1):
            if k == 0:
                @pl.when(c == 0)
                def _():
                    h_scr[...] = jnp.zeros_like(h_scr)
                    c_scr[...] = jnp.zeros_like(c_scr)
                    stack_step(feat_ref[...])           # warm-up, output discarded
            else:
                j = k - 1                               # static in-chunk index
                t = c * t_chunk + j                     # global timestep (traced)
                # Step t consumes the teacher-forcing coin flipped after step t-1.
                tf_prev = tf_ref[jnp.maximum(t - 1, 0)] > 0
                use_cap = jnp.logical_or(t == 0, tf_prev)

                @pl.when(use_cap)
                def _():
                    inp_scr[...] = cap_ref[j]           # embed(captions[:, t])

                top_h = stack_step(inp_scr[...])        # (Bp, Hp)
                logits = jnp.dot(top_h.astype(jnp.bfloat16), w_out_ref[...],
                                 preferred_element_type=jnp.float32) + b_out_ref[...]
                out_ref[j] = logits                     # (Bp, Vp), lane-dense
                greedy_gather(logits)                   # next greedy input

    return kernel


# ------------------------------ padding helpers -----------------------------

def _pad_gate_cols(w, rows, rows_pad, h, h_pad):
    w4 = w.reshape(rows, 4, h)
    w4 = jnp.pad(w4, ((0, rows_pad - rows), (0, 0), (0, h_pad - h)))
    return w4.reshape(rows_pad, 4 * h_pad)


def _fused_lstm_weight(wih, whh, in_dim, in_pad, h, h_pad):
    # Fused [wih; whh]: rows [0, in_pad) multiply the layer input, rows
    # [in_pad, in_pad + h_pad) multiply h_prev (matches concat([x, h]) in-kernel).
    return jnp.concatenate(
        [_pad_gate_cols(wih, in_dim, in_pad, h, h_pad),
         _pad_gate_cols(whh, h, h_pad, h, h_pad)], axis=0)


def _pad_lstm_b(b, h, h_pad):
    b4 = b.reshape(1, 4, h)
    b4 = jnp.pad(b4, ((0, 0), (0, 0), (0, h_pad - h)))
    return b4.reshape(1, 4 * h_pad)


# ------------------------------ model forward -------------------------------

def cnn_to_rnn_forward(images, captions, params, teacher_forcing_ratio=0.5,
                       rng_key=None):
    B = images.shape[0]
    E = params["w_enc"].shape[1]
    H = params["whh"][0].shape[0]
    V = params["embed"].shape[0]
    L = len(params["wih"])

    Bp = _round_up(B, 8)
    Ep = _round_up(E, 128)
    Hp = _round_up(H, 128)
    Vp = _round_up(V, 128)

    # ------------------------------- encoder --------------------------------
    wstem_t = params["w_stem"].T                                       # (Cmid, Cin)
    wenc_p = jnp.pad(params["w_enc"], ((0, 0), (0, Ep - E)))
    benc_p = jnp.pad(params["b_enc"].reshape(1, E), ((0, 0), (0, Ep - E)))
    features = encoder_forward(images, wstem_t, wenc_p, benc_p, Bp, Ep)  # (Bp, Ep)

    if captions is None:
        return None

    # ------------------------------- decoder --------------------------------
    seq_len = captions.shape[1] - 1
    # Largest chunk of timesteps (<= 4) dividing seq_len: amortizes the
    # per-grid-step pipeline overhead over several LSTM steps.
    t_chunk = max(d for d in range(1, min(4, seq_len) + 1) if seq_len % d == 0)
    num_chunks = seq_len // t_chunk

    embed_p = jnp.pad(params["embed"], ((0, Vp - V), (0, Ep - E)))       # (Vp, Ep) f32
    # Time-major caption embeddings, one (Bp, Ep) slab per step.
    cap_emb = jnp.take(embed_p, captions[:, :seq_len].T, axis=0)        # (T, B, Ep)
    cap_emb = jnp.pad(cap_emb, ((0, 0), (0, Bp - B), (0, 0)))           # (T, Bp, Ep)

    weight_args = []
    for l in range(L):
        in_dim = E if l == 0 else H
        in_pad = Ep if l == 0 else Hp
        weight_args.append(
            _fused_lstm_weight(params["wih"][l], params["whh"][l],
                               in_dim, in_pad, H, Hp).astype(jnp.bfloat16))
        weight_args.append(_pad_lstm_b(params["b_lstm"][l], H, Hp))
    w_out_p = jnp.pad(params["w_out"], ((0, Hp - H), (0, Vp - V))).astype(jnp.bfloat16)
    # Padded vocab lanes biased to -1e30 so greedy argmax never selects them.
    b_out_p = jnp.pad(params["b_out"].reshape(1, V), ((0, 0), (0, Vp - V)),
                      constant_values=-1e30)
    weight_args += [w_out_p, b_out_p, embed_p]

    if rng_key is None:
        rng_key = jax.random.PRNGKey(42)
    tf_flags = (jax.random.uniform(rng_key, (seq_len,))
                < teacher_forcing_ratio).astype(jnp.int32)

    const2 = lambda c, tf: (0, 0)
    weight_specs = [pl.BlockSpec(w.shape, const2) for w in weight_args]

    grid_spec = pltpu.PrefetchScalarGridSpec(
        num_scalar_prefetch=1,
        grid=(num_chunks,),
        in_specs=[
            pl.BlockSpec((t_chunk, Bp, Ep), lambda c, tf: (c, 0, 0)),  # cap chunk
            pl.BlockSpec((Bp, Ep), const2),                            # features
            *weight_specs,                                             # resident weights
        ],
        out_specs=pl.BlockSpec((t_chunk, Bp, Vp), lambda c, tf: (c, 0, 0)),
        scratch_shapes=[
            pltpu.VMEM((L, Bp, Hp), jnp.float32),   # h state
            pltpu.VMEM((L, Bp, Hp), jnp.float32),   # c state
            pltpu.VMEM((Bp, Ep), jnp.float32),      # current / greedy input
        ],
    )

    # Explicit VMEM budget sized from the resident-weight footprint (32 MiB
    # floor covers toy sizes; headroom + cap keeps it sane on v5e/v6e/v7x).
    resident = sum(int(w.size) * w.dtype.itemsize for w in weight_args)
    vmem_limit = int(min(100 * 2**20, max(32 * 2**20, 4 * resident)))

    logits_tm = pl.pallas_call(
        make_decoder_kernel(L, t_chunk, B, Hp, Vp),
        out_shape=jax.ShapeDtypeStruct((seq_len, Bp, Vp), jnp.float32),
        grid_spec=grid_spec,
        compiler_params=pltpu.CompilerParams(
            dimension_semantics=("arbitrary",),
            vmem_limit_bytes=vmem_limit),
    )(tf_flags, cap_emb, features, *weight_args)

    # (T, Bp, Vp) -> (B, T, V)
    return jnp.transpose(logits_tm[:, :B, :V], (1, 0, 2))


# ------------------------------ parameter init ------------------------------

def init_params(key, embed_size, hidden_size, vocab_size, num_layers, cin,
                cmid=1280, scale=0.1):
    ks = jax.random.split(key, 8 + 4 * num_layers)
    p = {
        "w_stem": scale * jax.random.normal(ks[0], (cin, cmid), jnp.float32),
        "w_enc": scale * jax.random.normal(ks[1], (cmid, embed_size), jnp.float32),
        "b_enc": scale * jax.random.normal(ks[2], (embed_size,), jnp.float32),
        "embed": scale * jax.random.normal(ks[3], (vocab_size, embed_size), jnp.float32),
        "w_out": scale * jax.random.normal(ks[4], (hidden_size, vocab_size), jnp.float32),
        "b_out": scale * jax.random.normal(ks[5], (1, vocab_size), jnp.float32),
        "wih": [], "whh": [], "b_lstm": [],
    }
    for l in range(num_layers):
        in_dim = embed_size if l == 0 else hidden_size
        k0, k1, k2, k3 = ks[8 + 4 * l: 12 + 4 * l]
        p["wih"].append(scale * jax.random.normal(k0, (in_dim, 4 * hidden_size), jnp.float32))
        p["whh"].append(scale * jax.random.normal(k1, (hidden_size, 4 * hidden_size), jnp.float32))
        b_ih = scale * jax.random.normal(k2, (4 * hidden_size,), jnp.float32)
        b_hh = scale * jax.random.normal(k3, (4 * hidden_size,), jnp.float32)
        p["b_lstm"].append((b_ih + b_hh).reshape(1, 4 * hidden_size))
    return p


# ----------------------------------- main -----------------------------------

if __name__ == "__main__":
    B, CIN, IMG = 2, 3, 16
    EMBED, HIDDEN, VOCAB, LAYERS = 32, 32, 32, 2
    CAP_LEN = 9  # -> seq_len = 8

    key = jax.random.PRNGKey(0)
    k_img, k_cap, k_par = jax.random.split(key, 3)

    images = jax.random.normal(k_img, (B, CIN, IMG, IMG), jnp.float32)   # NCHW
    captions = jax.random.randint(k_cap, (B, CAP_LEN), 0, VOCAB, jnp.int32)
    params = init_params(k_par, EMBED, HIDDEN, VOCAB, LAYERS, CIN)

    fwd = jax.jit(lambda im, cap, p: cnn_to_rnn_forward(
        im, cap, p, teacher_forcing_ratio=1.0))
    out = jax.block_until_ready(fwd(images, captions, params))

    assert out.shape == (B, CAP_LEN - 1, VOCAB), out.shape
    assert out.dtype == jnp.float32
    assert bool(jnp.all(jnp.isfinite(out)))
    print("KERNEL_OK")
</pallas_src>

<mosaic_0001>
module attributes {stable_mosaic.version = 11 : i64} {
  func.func @kernel(%arg0: i32, %arg1: memref<8xi32, #tpu.memory_space<smem>>, %arg2: memref<4x8x128xf32, #tpu.memory_space<vmem>>, %arg3: memref<8x128xf32, #tpu.memory_space<vmem>>, %arg4: memref<256x512xbf16, #tpu.memory_space<vmem>>, %arg5: memref<1x512xf32, #tpu.memory_space<vmem>>, %arg6: memref<256x512xbf16, #tpu.memory_space<vmem>>, %arg7: memref<1x512xf32, #tpu.memory_space<vmem>>, %arg8: memref<128x128xbf16, #tpu.memory_space<vmem>>, %arg9: memref<1x128xf32, #tpu.memory_space<vmem>>, %arg10: memref<128x128xf32, #tpu.memory_space<vmem>>, %arg11: memref<4x8x128xf32, #tpu.memory_space<vmem>>, %arg12: memref<2x8x128xf32, #tpu.memory_space<vmem>>, %arg13: memref<2x8x128xf32, #tpu.memory_space<vmem>>, %arg14: memref<8x128xf32, #tpu.memory_space<vmem>>) attributes {dimension_semantics = [#tpu.dimension_semantics<arbitrary>], iteration_bounds = array<i64: 2>, scalar_prefetch = 1 : i64, scratch_operands = 3 : i64, tpu.core_type = #tpu.core_type<tc>, window_params = [{transform_indices = @transform_0, window_bounds = array<i64: 4, 8, 128>}, {pipeline_mode = #tpu.pipeline_mode<synchronous>, transform_indices = @transform_1, window_bounds = array<i64: 8, 128>}, {pipeline_mode = #tpu.pipeline_mode<synchronous>, transform_indices = @transform_2, window_bounds = array<i64: 256, 512>}, {pipeline_mode = #tpu.pipeline_mode<synchronous>, transform_indices = @transform_3, window_bounds = array<i64: 1, 512>}, {pipeline_mode = #tpu.pipeline_mode<synchronous>, transform_indices = @transform_4, window_bounds = array<i64: 256, 512>}, {pipeline_mode = #tpu.pipeline_mode<synchronous>, transform_indices = @transform_5, window_bounds = array<i64: 1, 512>}, {pipeline_mode = #tpu.pipeline_mode<synchronous>, transform_indices = @transform_6, window_bounds = array<i64: 128, 128>}, {pipeline_mode = #tpu.pipeline_mode<synchronous>, transform_indices = @transform_7, window_bounds = array<i64: 1, 128>}, {pipeline_mode = #tpu.pipeline_mode<synchronous>, transform_indices = @transform_8, window_bounds = array<i64: 128, 128>}, {transform_indices = @transform_9, window_bounds = array<i64: 4, 8, 128>}]} {
    %c0_i32 = arith.constant 0 : i32
    %0 = arith.cmpi eq, %arg0, %c0_i32 : i32
    %1 = arith.extui %0 : i1 to i32
    %c0_i32_0 = arith.constant 0 : i32
    %2 = arith.cmpi ne, %1, %c0_i32_0 : i32
    scf.if %2 {
      %cst_274 = arith.constant 0.000000e+00 : f32
      %547 = vector.broadcast %cst_274 : f32 to vector<2x8x128xf32>
      %c0_275 = arith.constant 0 : index
      %c0_276 = arith.constant 0 : index
      %c0_277 = arith.constant 0 : index
      %548 = vector.load %arg12[%c0_275, %c0_276, %c0_277] : memref<2x8x128xf32, #tpu.memory_space<vmem>>, vector<2x8x128xf32>
      tpu.vector_store %arg12[%c0_275, %c0_276, %c0_277], %547 {strides = array<i32>} : memref<2x8x128xf32, #tpu.memory_space<vmem>>, vector<2x8x128xf32>,
      %cst_278 = arith.constant 0.000000e+00 : f32
      %549 = vector.broadcast %cst_278 : f32 to vector<2x8x128xf32>
      %c0_279 = arith.constant 0 : index
      %c0_280 = arith.constant 0 : index
      %c0_281 = arith.constant 0 : index
      %550 = vector.load %arg13[%c0_279, %c0_280, %c0_281] : memref<2x8x128xf32, #tpu.memory_space<vmem>>, vector<2x8x128xf32>
      tpu.vector_store %arg13[%c0_279, %c0_280, %c0_281], %549 {strides = array<i32>} : memref<2x8x128xf32, #tpu.memory_space<vmem>>, vector<2x8x128xf32>,
      %c0_282 = arith.constant 0 : index
      %c0_283 = arith.constant 0 : index
      %551 = vector.load %arg3[%c0_282, %c0_283] : memref<8x128xf32, #tpu.memory_space<vmem>>, vector<8x128xf32>
      %c0_284 = arith.constant 0 : index
      %c0_285 = arith.constant 0 : index
      %c0_286 = arith.constant 0 : index
      %552 = vector.load %arg12[%c0_284, %c0_285, %c0_286] : memref<2x8x128xf32, #tpu.memory_space<vmem>>, vector<1x8x128xf32>
      %553 = vector.shape_cast %552 : vector<1x8x128xf32> to vector<8x128xf32>
      %c0_287 = arith.constant 0 : index
      %c0_288 = arith.constant 0 : index
      %c0_289 = arith.constant 0 : index
      %554 = vector.load %arg13[%c0_287, %c0_288, %c0_289] : memref<2x8x128xf32, #tpu.memory_space<vmem>>, vector<1x8x128xf32>
      %555 = vector.shape_cast %554 : vector<1x8x128xf32> to vector<8x128xf32>
      %556 = tpu.concatenate %551, %553 in 1 : vector<8x128xf32>, vector<8x128xf32> -> vector<8x256xf32>
      %557 = arith.truncf %556 : vector<8x256xf32> to vector<8x256xbf16>
      %c0_290 = arith.constant 0 : index
      %c0_291 = arith.constant 0 : index
      %558 = vector.load %arg4[%c0_290, %c0_291] : memref<256x512xbf16, #tpu.memory_space<vmem>>, vector<256x512xbf16>
      %cst_292 = arith.constant dense<0.000000e+00> : vector<8x512xf32>
      %559 = tpu.matmul %557, %558, %cst_292 {dimension_numbers = #tpu.dot_dimension_numbers<[1], [0], [0], [1], [0, 0, 1, 1], [], []>} : vector<8x256xbf16>, vector<256x512xbf16>, vector<8x512xf32> -> vector<8x512xf32>
      %c0_293 = arith.constant 0 : index
      %c0_294 = arith.constant 0 : index
      %560 = vector.load %arg5[%c0_293, %c0_294] : memref<1x512xf32, #tpu.memory_space<vmem>>, vector<1x512xf32>
      %561 = vector.broadcast %560 : vector<1x512xf32> to vector<8x512xf32>
      %562 = arith.addf %559, %561 : vector<8x512xf32>
      %563 = vector.extract_strided_slice %562 {offsets = [0, 0], sizes = [8, 128], strides = [1, 1]} : vector<8x512xf32> to vector<8x128xf32>
      %564 = arith.negf %563 : vector<8x128xf32>
      %565 = math.exp %564 : vector<8x128xf32>
      %cst_295 = arith.constant 1.000000e+00 : f32
      %566 = vector.broadcast %cst_295 : f32 to vector<8x128xf32>
      %567 = arith.addf %566, %565 : vector<8x128xf32>
      %568 = arith.divf %566, %567 : vector<8x128xf32>
      %569 = vector.extract_strided_slice %562 {offsets = [0, 128], sizes = [8, 128], strides = [1, 1]} : vector<8x512xf32> to vector<8x128xf32>
      %570 = arith.negf %569 : vector<8x128xf32>
      %571 = math.exp %570 : vector<8x128xf32>
      %cst_296 = arith.constant 1.000000e+00 : f32
      %572 = vector.broadcast %cst_296 : f32 to vector<8x128xf32>
      %573 = arith.addf %572, %571 : vector<8x128xf32>
      %574 = arith.divf %572, %573 : vector<8x128xf32>
      %575 = vector.extract_strided_slice %562 {offsets = [0, 256], sizes = [8, 128], strides = [1, 1]} : vector<8x512xf32> to vector<8x128xf32>
      %576 = math.tanh %575 : vector<8x128xf32>
      %577 = vector.extract_strided_slice %562 {offsets = [0, 384], sizes = [8, 128], strides = [1, 1]} : vector<8x512xf32> to vector<8x128xf32>
      %578 = arith.negf %577 : vector<8x128xf32>
      %579 = math.exp %578 : vector<8x128xf32>
      %cst_297 = arith.constant 1.000000e+00 : f32
      %580 = vector.broadcast %cst_297 : f32 to vector<8x128xf32>
      %581 = arith.addf %580, %579 : vector<8x128xf32>
      %582 = arith.divf %580, %581 : vector<8x128xf32>
      %583 = arith.mulf %574, %555 : vector<8x128xf32>
      %584 = arith.mulf %568, %576 : vector<8x128xf32>
      %585 = arith.addf %583, %584 : vector<8x128xf32>
      %586 = math.tanh %585 : vector<8x128xf32>
      %587 = arith.mulf %582, %586 : vector<8x128xf32>
      %c0_298 = arith.constant 0 : index
      %c0_299 = arith.constant 0 : index
      %c0_300 = arith.constant 0 : index
      %588 = vector.load %arg12[%c0_298, %c0_299, %c0_300] : memref<2x8x128xf32, #tpu.memory_space<vmem>>, vector<1x8x128xf32>
      %589 = vector.shape_cast %588 : vector<1x8x128xf32> to vector<8x128xf32>
      %590 = vector.shape_cast %587 : vector<8x128xf32> to vector<1x8x128xf32>
      tpu.vector_store %arg12[%c0_298, %c0_299, %c0_300], %590 {strides = array<i32>} : memref<2x8x128xf32, #tpu.memory_space<vmem>>, vector<1x8x128xf32>,
      %c0_301 = arith.constant 0 : index
      %c0_302 = arith.constant 0 : index
      %c0_303 = arith.constant 0 : index
      %591 = vector.load %arg13[%c0_301, %c0_302, %c0_303] : memref<2x8x128xf32, #tpu.memory_space<vmem>>, vector<1x8x128xf32>
      %592 = vector.shape_cast %591 : vector<1x8x128xf32> to vector<8x128xf32>
      %593 = vector.shape_cast %585 : vector<8x128xf32> to vector<1x8x128xf32>
      tpu.vector_store %arg13[%c0_301, %c0_302, %c0_303], %593 {strides = array<i32>} : memref<2x8x128xf32, #tpu.memory_space<vmem>>, vector<1x8x128xf32>,
      %c1_304 = arith.constant 1 : index
      %c0_305 = arith.constant 0 : index
      %c0_306 = arith.constant 0 : index
      %594 = vector.load %arg12[%c1_304, %c0_305, %c0_306] : memref<2x8x128xf32, #tpu.memory_space<vmem>>, vector<1x8x128xf32>
      %595 = vector.shape_cast %594 : vector<1x8x128xf32> to vector<8x128xf32>
      %c1_307 = arith.constant 1 : index
      %c0_308 = arith.constant 0 : index
      %c0_309 = arith.constant 0 : index
      %596 = vector.load %arg13[%c1_307, %c0_308, %c0_309] : memref<2x8x128xf32, #tpu.memory_space<vmem>>, vector<1x8x128xf32>
      %597 = vector.shape_cast %596 : vector<1x8x128xf32> to vector<8x128xf32>
      %598 = tpu.concatenate %587, %595 in 1 : vector<8x128xf32>, vector<8x128xf32> -> vector<8x256xf32>
      %599 = arith.truncf %598 : vector<8x256xf32> to vector<8x256xbf16>
      %c0_310 = arith.constant 0 : index
      %c0_311 = arith.constant 0 : index
      %600 = vector.load %arg6[%c0_310, %c0_311] : memref<256x512xbf16, #tpu.memory_space<vmem>>, vector<256x512xbf16>
      %cst_312 = arith.constant dense<0.000000e+00> : vector<8x512xf32>
      %601 = tpu.matmul %599, %600, %cst_312 {dimension_numbers = #tpu.dot_dimension_numbers<[1], [0], [0], [1], [0, 0, 1, 1], [], []>} : vector<8x256xbf16>, vector<256x512xbf16>, vector<8x512xf32> -> vector<8x512xf32>
      %c0_313 = arith.constant 0 : index
      %c0_314 = arith.constant 0 : index
      %602 = vector.load %arg7[%c0_313, %c0_314] : memref<1x512xf32, #tpu.memory_space<vmem>>, vector<1x512xf32>
      %603 = vector.broadcast %602 : vector<1x512xf32> to vector<8x512xf32>
      %604 = arith.addf %601, %603 : vector<8x512xf32>
      %605 = vector.extract_strided_slice %604 {offsets = [0, 0], sizes = [8, 128], strides = [1, 1]} : vector<8x512xf32> to vector<8x128xf32>
      %606 = arith.negf %605 : vector<8x128xf32>
      %607 = math.exp %606 : vector<8x128xf32>
      %cst_315 = arith.constant 1.000000e+00 : f32
      %608 = vector.broadcast %cst_315 : f32 to vector<8x128xf32>
      %609 = arith.addf %608, %607 : vector<8x128xf32>
      %610 = arith.divf %608, %609 : vector<8x128xf32>
      %611 = vector.extract_strided_slice %604 {offsets = [0, 128], sizes = [8, 128], strides = [1, 1]} : vector<8x512xf32> to vector<8x128xf32>
      %612 = arith.negf %611 : vector<8x128xf32>
      %613 = math.exp %612 : vector<8x128xf32>
      %cst_316 = arith.constant 1.000000e+00 : f32
      %614 = vector.broadcast %cst_316 : f32 to vector<8x128xf32>
      %615 = arith.addf %614, %613 : vector<8x128xf32>
      %616 = arith.divf %614, %615 : vector<8x128xf32>
      %617 = vector.extract_strided_slice %604 {offsets = [0, 256], sizes = [8, 128], strides = [1, 1]} : vector<8x512xf32> to vector<8x128xf32>
      %618 = math.tanh %617 : vector<8x128xf32>
      %619 = vector.extract_strided_slice %604 {offsets = [0, 384], sizes = [8, 128], strides = [1, 1]} : vector<8x512xf32> to vector<8x128xf32>
      %620 = arith.negf %619 : vector<8x128xf32>
      %621 = math.exp %620 : vector<8x128xf32>
      %cst_317 = arith.constant 1.000000e+00 : f32
      %622 = vector.broadcast %cst_317 : f32 to vector<8x128xf32>
      %623 = arith.addf %622, %621 : vector<8x128xf32>
      %624 = arith.divf %622, %623 : vector<8x128xf32>
      %625 = arith.mulf %616, %597 : vector<8x128xf32>
      %626 = arith.mulf %610, %618 : vector<8x128xf32>
      %627 = arith.addf %625, %626 : vector<8x128xf32>
      %628 = math.tanh %627 : vector<8x128xf32>
      %629 = arith.mulf %624, %628 : vector<8x128xf32>
      %c1_318 = arith.constant 1 : index
      %c0_319 = arith.constant 0 : index
      %c0_320 = arith.constant 0 : index
      %630 = vector.load %arg12[%c1_318, %c0_319, %c0_320] : memref<2x8x128xf32, #tpu.memory_space<vmem>>, vector<1x8x128xf32>
      %631 = vector.shape_cast %630 : vector<1x8x128xf32> to vector<8x128xf32>
      %632 = vector.shape_cast %629 : vector<8x128xf32> to vector<1x8x128xf32>
      tpu.vector_store %arg12[%c1_318, %c0_319, %c0_320], %632 {strides = array<i32>} : memref<2x8x128xf32, #tpu.memory_space<vmem>>, vector<1x8x128xf32>,
      %c1_321 = arith.constant 1 : index
      %c0_322 = arith.constant 0 : index
      %c0_323 = arith.constant 0 : index
      %633 = vector.load %arg13[%c1_321, %c0_322, %c0_323] : memref<2x8x128xf32, #tpu.memory_space<vmem>>, vector<1x8x128xf32>
      %634 = vector.shape_cast %633 : vector<1x8x128xf32> to vector<8x128xf32>
      %635 = vector.shape_cast %627 : vector<8x128xf32> to vector<1x8x128xf32>
      tpu.vector_store %arg13[%c1_321, %c0_322, %c0_323], %635 {strides = array<i32>} : memref<2x8x128xf32, #tpu.memory_space<vmem>>, vector<1x8x128xf32>,
    } else {
    }
    %c4_i32 = arith.constant 4 : i32
    %3 = arith.muli %arg0, %c4_i32 : i32
    %c0_i32_1 = arith.constant 0 : i32
    %4 = arith.addi %3, %c0_i32_1 : i32
    %c1_i32 = arith.constant 1 : i32
    %5 = arith.subi %4, %c1_i32 : i32
    %c0_i32_2 = arith.constant 0 : i32
    %6 = arith.maxsi %5, %c0_i32_2 : i32
    %7 = arith.index_cast %6 : i32 to index
    %8 = memref.load %arg1[%7] : memref<8xi32, #tpu.memory_space<smem>>
    %c0_i32_3 = arith.constant 0 : i32
    %9 = arith.cmpi sgt, %8, %c0_i32_3 : i32
    %c0_i32_4 = arith.constant 0 : i32
    %10 = arith.cmpi eq, %4, %c0_i32_4 : i32
    %11 = arith.ori %10, %9 : i1
    %12 = arith.extui %11 : i1 to i32
    %c0_i32_5 = arith.constant 0 : i32
    %13 = arith.cmpi ne, %12, %c0_i32_5 : i32
    scf.if %13 {
      %c0_274 = arith.constant 0 : index
      %c0_275 = arith.constant 0 : index
      %c0_276 = arith.constant 0 : index
      %547 = vector.load %arg2[%c0_274, %c0_275, %c0_276] : memref<4x8x128xf32, #tpu.memory_space<vmem>>, vector<1x8x128xf32>
      %548 = vector.shape_cast %547 : vector<1x8x128xf32> to vector<8x128xf32>
      %c0_277 = arith.constant 0 : index
      %c0_278 = arith.constant 0 : index
      %549 = vector.load %arg14[%c0_277, %c0_278] : memref<8x128xf32, #tpu.memory_space<vmem>>, vector<8x128xf32>
      tpu.vector_store %arg14[%c0_277, %c0_278], %548 {strides = array<i32>} : memref<8x128xf32, #tpu.memory_space<vmem>>, vector<8x128xf32>,
    } else {
    }
    %c0 = arith.constant 0 : index
    %c0_6 = arith.constant 0 : index
    %14 = vector.load %arg14[%c0, %c0_6] : memref<8x128xf32, #tpu.memory_space<vmem>>, vector<8x128xf32>
    %c0_7 = arith.constant 0 : index
    %c0_8 = arith.constant 0 : index
    %c0_9 = arith.constant 0 : index
    %15 = vector.load %arg12[%c0_7, %c0_8, %c0_9] : memref<2x8x128xf32, #tpu.memory_space<vmem>>, vector<1x8x128xf32>
    %16 = vector.shape_cast %15 : vector<1x8x128xf32> to vector<8x128xf32>
    %c0_10 = arith.constant 0 : index
    %c0_11 = arith.constant 0 : index
    %c0_12 = arith.constant 0 : index
    %17 = vector.load %arg13[%c0_10, %c0_11, %c0_12] : memref<2x8x128xf32, #tpu.memory_space<vmem>>, vector<1x8x128xf32>
    %18 = vector.shape_cast %17 : vector<1x8x128xf32> to vector<8x128xf32>
    %19 = tpu.concatenate %14, %16 in 1 : vector<8x128xf32>, vector<8x128xf32> -> vector<8x256xf32>
    %20 = arith.truncf %19 : vector<8x256xf32> to vector<8x256xbf16>
    %c0_13 = arith.constant 0 : index
    %c0_14 = arith.constant 0 : index
    %21 = vector.load %arg4[%c0_13, %c0_14] : memref<256x512xbf16, #tpu.memory_space<vmem>>, vector<256x512xbf16>
    %cst = arith.constant dense<0.000000e+00> : vector<8x512xf32>
    %22 = tpu.matmul %20, %21, %cst {dimension_numbers = #tpu.dot_dimension_numbers<[1], [0], [0], [1], [0, 0, 1, 1], [], []>} : vector<8x256xbf16>, vector<256x512xbf16>, vector<8x512xf32> -> vector<8x512xf32>
    %c0_15 = arith.constant 0 : index
    %c0_16 = arith.constant 0 : index
    %23 = vector.load %arg5[%c0_15, %c0_16] : memref<1x512xf32, #tpu.memory_space<vmem>>, vector<1x512xf32>
    %24 = vector.broadcast %23 : vector<1x512xf32> to vector<8x512xf32>
    %25 = arith.addf %22, %24 : vector<8x512xf32>
    %26 = vector.extract_strided_slice %25 {offsets = [0, 0], sizes = [8, 128], strides = [1, 1]} : vector<8x512xf32> to vector<8x128xf32>
    %27 = arith.negf %26 : vector<8x128xf32>
    %28 = math.exp %27 : vector<8x128xf32>
    %cst_17 = arith.constant 1.000000e+00 : f32
    %29 = vector.broadcast %cst_17 : f32 to vector<8x128xf32>
    %30 = arith.addf %29, %28 : vector<8x128xf32>
    %31 = arith.divf %29, %30 : vector<8x128xf32>
    %32 = vector.extract_strided_slice %25 {offsets = [0, 128], sizes = [8, 128], strides = [1, 1]} : vector<8x512xf32> to vector<8x128xf32>
    %33 = arith.negf %32 : vector<8x128xf32>
    %34 = math.exp %33 : vector<8x128xf32>
    %cst_18 = arith.constant 1.000000e+00 : f32
    %35 = vector.broadcast %cst_18 : f32 to vector<8x128xf32>
    %36 = arith.addf %35, %34 : vector<8x128xf32>
    %37 = arith.divf %35, %36 : vector<8x128xf32>
    %38 = vector.extract_strided_slice %25 {offsets = [0, 256], sizes = [8, 128], strides = [1, 1]} : vector<8x512xf32> to vector<8x128xf32>
    %39 = math.tanh %38 : vector<8x128xf32>
    %40 = vector.extract_strided_slice %25 {offsets = [0, 384], sizes = [8, 128], strides = [1, 1]} : vector<8x512xf32> to vector<8x128xf32>
    %41 = arith.negf %40 : vector<8x128xf32>
    %42 = math.exp %41 : vector<8x128xf32>
    %cst_19 = arith.constant 1.000000e+00 : f32
    %43 = vector.broadcast %cst_19 : f32 to vector<8x128xf32>
    %44 = arith.addf %43, %42 : vector<8x128xf32>
    %45 = arith.divf %43, %44 : vector<8x128xf32>
    %46 = arith.mulf %37, %18 : vector<8x128xf32>
    %47 = arith.mulf %31, %39 : vector<8x128xf32>
    %48 = arith.addf %46, %47 : vector<8x128xf32>
    %49 = math.tanh %48 : vector<8x128xf32>
    %50 = arith.mulf %45, %49 : vector<8x128xf32>
    %c0_20 = arith.constant 0 : index
    %c0_21 = arith.constant 0 : index
    %c0_22 = arith.constant 0 : index
    %51 = vector.load %arg12[%c0_20, %c0_21, %c0_22] : memref<2x8x128xf32, #tpu.memory_space<vmem>>, vector<1x8x128xf32>
    %52 = vector.shape_cast %51 : vector<1x8x128xf32> to vector<8x128xf32>
    %53 = vector.shape_cast %50 : vector<8x128xf32> to vector<1x8x128xf32>
    tpu.vector_store %arg12[%c0_20, %c0_21, %c0_22], %53 {strides = array<i32>} : memref<2x8x128xf32, #tpu.memory_space<vmem>>, vector<1x8x128xf32>,
    %c0_23 = arith.constant 0 : index
    %c0_24 = arith.constant 0 : index
    %c0_25 = arith.constant 0 : index
    %54 = vector.load %arg13[%c0_23, %c0_24, %c0_25] : memref<2x8x128xf32, #tpu.memory_space<vmem>>, vector<1x8x128xf32>
    %55 = vector.shape_cast %54 : vector<1x8x128xf32> to vector<8x128xf32>
    %56 = vector.shape_cast %48 : vector<8x128xf32> to vector<1x8x128xf32>
    tpu.vector_store %arg13[%c0_23, %c0_24, %c0_25], %56 {strides = array<i32>} : memref<2x8x128xf32, #tpu.memory_space<vmem>>, vector<1x8x128xf32>,
    %c1 = arith.constant 1 : index
    %c0_26 = arith.constant 0 : index
    %c0_27 = arith.constant 0 : index
    %57 = vector.load %arg12[%c1, %c0_26, %c0_27] : memref<2x8x128xf32, #tpu.memory_space<vmem>>, vector<1x8x128xf32>
    %58 = vector.shape_cast %57 : vector<1x8x128xf32> to vector<8x128xf32>
    %c1_28 = arith.constant 1 : index
    %c0_29 = arith.constant 0 : index
    %c0_30 = arith.constant 0 : index
    %59 = vector.load %arg13[%c1_28, %c0_29, %c0_30] : memref<2x8x128xf32, #tpu.memory_space<vmem>>, vector<1x8x128xf32>
    %60 = vector.shape_cast %59 : vector<1x8x128xf32> to vector<8x128xf32>
    %61 = tpu.concatenate %50, %58 in 1 : vector<8x128xf32>, vector<8x128xf32> -> vector<8x256xf32>
    %62 = arith.truncf %61 : vector<8x256xf32> to vector<8x256xbf16>
    %c0_31 = arith.constant 0 : index
    %c0_32 = arith.constant 0 : index
    %63 = vector.load %arg6[%c0_31, %c0_32] : memref<256x512xbf16, #tpu.memory_space<vmem>>, vector<256x512xbf16>
    %cst_33 = arith.constant dense<0.000000e+00> : vector<8x512xf32>
    %64 = tpu.matmul %62, %63, %cst_33 {dimension_numbers = #tpu.dot_dimension_numbers<[1], [0], [0], [1], [0, 0, 1, 1], [], []>} : vector<8x256xbf16>, vector<256x512xbf16>, vector<8x512xf32> -> vector<8x512xf32>
    %c0_34 = arith.constant 0 : index
    %c0_35 = arith.constant 0 : index
    %65 = vector.load %arg7[%c0_34, %c0_35] : memref<1x512xf32, #tpu.memory_space<vmem>>, vector<1x512xf32>
    %66 = vector.broadcast %65 : vector<1x512xf32> to vector<8x512xf32>
    %67 = arith.addf %64, %66 : vector<8x512xf32>
    %68 = vector.extract_strided_slice %67 {offsets = [0, 0], sizes = [8, 128], strides = [1, 1]} : vector<8x512xf32> to vector<8x128xf32>
    %69 = arith.negf %68 : vector<8x128xf32>
    %70 = math.exp %69 : vector<8x128xf32>
    %cst_36 = arith.constant 1.000000e+00 : f32
    %71 = vector.broadcast %cst_36 : f32 to vector<8x128xf32>
    %72 = arith.addf %71, %70 : vector<8x128xf32>
    %73 = arith.divf %71, %72 : vector<8x128xf32>
    %74 = vector.extract_strided_slice %67 {offsets = [0, 128], sizes = [8, 128], strides = [1, 1]} : vector<8x512xf32> to vector<8x128xf32>
    %75 = arith.negf %74 : vector<8x128xf32>
    %76 = math.exp %75 : vector<8x128xf32>
    %cst_37 = arith.constant 1.000000e+00 : f32
    %77 = vector.broadcast %cst_37 : f32 to vector<8x128xf32>
    %78 = arith.addf %77, %76 : vector<8x128xf32>
    %79 = arith.divf %77, %78 : vector<8x128xf32>
    %80 = vector.extract_strided_slice %67 {offsets = [0, 256], sizes = [8, 128], strides = [1, 1]} : vector<8x512xf32> to vector<8x128xf32>
    %81 = math.tanh %80 : vector<8x128xf32>
    %82 = vector.extract_strided_slice %67 {offsets = [0, 384], sizes = [8, 128], strides = [1, 1]} : vector<8x512xf32> to vector<8x128xf32>
    %83 = arith.negf %82 : vector<8x128xf32>
    %84 = math.exp %83 : vector<8x128xf32>
    %cst_38 = arith.constant 1.000000e+00 : f32
    %85 = vector.broadcast %cst_38 : f32 to vector<8x128xf32>
    %86 = arith.addf %85, %84 : vector<8x128xf32>
    %87 = arith.divf %85, %86 : vector<8x128xf32>
    %88 = arith.mulf %79, %60 : vector<8x128xf32>
    %89 = arith.mulf %73, %81 : vector<8x128xf32>
    %90 = arith.addf %88, %89 : vector<8x128xf32>
    %91 = math.tanh %90 : vector<8x128xf32>
    %92 = arith.mulf %87, %91 : vector<8x128xf32>
    %c1_39 = arith.constant 1 : index
    %c0_40 = arith.constant 0 : index
    %c0_41 = arith.constant 0 : index
    %93 = vector.load %arg12[%c1_39, %c0_40, %c0_41] : memref<2x8x128xf32, #tpu.memory_space<vmem>>, vector<1x8x128xf32>
    %94 = vector.shape_cast %93 : vector<1x8x128xf32> to vector<8x128xf32>
    %95 = vector.shape_cast %92 : vector<8x128xf32> to vector<1x8x128xf32>
    tpu.vector_store %arg12[%c1_39, %c0_40, %c0_41], %95 {strides = array<i32>} : memref<2x8x128xf32, #tpu.memory_space<vmem>>, vector<1x8x128xf32>,
    %c1_42 = arith.constant 1 : index
    %c0_43 = arith.constant 0 : index
    %c0_44 = arith.constant 0 : index
    %96 = vector.load %arg13[%c1_42, %c0_43, %c0_44] : memref<2x8x128xf32, #tpu.memory_space<vmem>>, vector<1x8x128xf32>
    %97 = vector.shape_cast %96 : vector<1x8x128xf32> to vector<8x128xf32>
    %98 = vector.shape_cast %90 : vector<8x128xf32> to vector<1x8x128xf32>
    tpu.vector_store %arg13[%c1_42, %c0_43, %c0_44], %98 {strides = array<i32>} : memref<2x8x128xf32, #tpu.memory_space<vmem>>, vector<1x8x128xf32>,
    %99 = arith.truncf %92 : vector<8x128xf32> to vector<8x128xbf16>
    %c0_45 = arith.constant 0 : index
    %c0_46 = arith.constant 0 : index
    %100 = vector.load %arg8[%c0_45, %c0_46] : memref<128x128xbf16, #tpu.memory_space<vmem>>, vector<128x128xbf16>
    %cst_47 = arith.constant dense<0.000000e+00> : vector<8x128xf32>
    %101 = tpu.matmul %99, %100, %cst_47 {dimension_numbers = #tpu.dot_dimension_numbers<[1], [0], [0], [1], [0, 0, 1, 1], [], []>} : vector<8x128xbf16>, vector<128x128xbf16>, vector<8x128xf32> -> vector<8x128xf32>
    %c0_48 = arith.constant 0 : index
    %c0_49 = arith.constant 0 : index
    %102 = vector.load %arg9[%c0_48, %c0_49] : memref<1x128xf32, #tpu.memory_space<vmem>>, vector<1x128xf32>
    %103 = vector.broadcast %102 : vector<1x128xf32> to vector<8x128xf32>
    %104 = arith.addf %101, %103 : vector<8x128xf32>
    %c0_50 = arith.constant 0 : index
    %c0_51 = arith.constant 0 : index
    %c0_52 = arith.constant 0 : index
    %105 = vector.load %arg11[%c0_50, %c0_51, %c0_52] : memref<4x8x128xf32, #tpu.memory_space<vmem>>, vector<1x8x128xf32>
    %106 = vector.shape_cast %105 : vector<1x8x128xf32> to vector<8x128xf32>
    %107 = vector.shape_cast %104 : vector<8x128xf32> to vector<1x8x128xf32>
    tpu.vector_store %arg11[%c0_50, %c0_51, %c0_52], %107 {strides = array<i32>} : memref<4x8x128xf32, #tpu.memory_space<vmem>>, vector<1x8x128xf32>,
    %108 = tpu.iota {dimensions = array<i32: 1>} : vector<1x128xi32>
    %109 = vector.extract_strided_slice %104 {offsets = [0, 0], sizes = [1, 128], strides = [1, 1]} : vector<8x128xf32> to vector<1x128xf32>
    %cst_53 = arith.constant dense<0xFF800000> : vector<1xf32>
    %110 = vector.multi_reduction <maximumf>, %109, %cst_53 [1] : vector<1x128xf32> to vector<1xf32>
    %111 = vector.shape_cast %110 : vector<1xf32> to vector<1x1xf32>
    %112 = vector.broadcast %111 : vector<1x1xf32> to vector<1x128xf32>
    %113 = arith.cmpf oge, %109, %112 : vector<1x128xf32>
    %c128_i32 = arith.constant 128 : i32
    %114 = vector.broadcast %c128_i32 : i32 to vector<1x128xi32>
    %115 = arith.select %113, %108, %114 : vector<1x128xi1>, vector<1x128xi32>
    %116 = vector.shape_cast %115 : vector<1x128xi32> to vector<1x1x128xi32>
    %cst_54 = arith.constant dense<2147483647> : vector<1xi32>
    %117 = vector.multi_reduction <minsi>, %116, %cst_54 [1, 2] : vector<1x1x128xi32> to vector<1xi32>
    %118 = vector.shape_cast %117 : vector<1xi32> to vector<1x1x1xi32>
    %119 = vector.extract %118[0, 0, 0] : i32 from vector<1x1x1xi32>
    %c127_i32 = arith.constant 127 : i32
    %120 = arith.minsi %119, %c127_i32 : i32
    %121 = arith.index_cast %120 : i32 to index
    %c0_55 = arith.constant 0 : index
    %122 = vector.load %arg10[%121, %c0_55] : memref<128x128xf32, #tpu.memory_space<vmem>>, vector<1x128xf32>
    %c0_56 = arith.constant 0 : index
    %c0_57 = arith.constant 0 : index
    %123 = vector.load %arg14[%c0_56, %c0_57] : memref<8x128xf32, #tpu.memory_space<vmem>>, vector<1x128xf32>
    tpu.vector_store %arg14[%c0_56, %c0_57], %122 {strides = array<i32>} : memref<8x128xf32, #tpu.memory_space<vmem>>, vector<1x128xf32>,
    %124 = vector.extract_strided_slice %104 {offsets = [1, 0], sizes = [1, 128], strides = [1, 1]} : vector<8x128xf32> to vector<1x128xf32>
    %cst_58 = arith.constant dense<0xFF800000> : vector<1xf32>
    %125 = vector.multi_reduction <maximumf>, %124, %cst_58 [1] : vector<1x128xf32> to vector<1xf32>
    %126 = vector.shape_cast %125 : vector<1xf32> to vector<1x1xf32>
    %127 = vector.broadcast %126 : vector<1x1xf32> to vector<1x128xf32>
    %128 = arith.cmpf oge, %124, %127 : vector<1x128xf32>
    %c128_i32_59 = arith.constant 128 : i32
    %129 = vector.broadcast %c128_i32_59 : i32 to vector<1x128xi32>
    %130 = arith.select %128, %108, %129 : vector<1x128xi1>, vector<1x128xi32>
    %131 = vector.shape_cast %130 : vector<1x128xi32> to vector<1x1x128xi32>
    %cst_60 = arith.constant dense<2147483647> : vector<1xi32>
    %132 = vector.multi_reduction <minsi>, %131, %cst_60 [1, 2] : vector<1x1x128xi32> to vector<1xi32>
    %133 = vector.shape_cast %132 : vector<1xi32> to vector<1x1x1xi32>
    %134 = vector.extract %133[0, 0, 0] : i32 from vector<1x1x1xi32>
    %c127_i32_61 = arith.constant 127 : i32
    %135 = arith.minsi %134, %c127_i32_61 : i32
    %136 = arith.index_cast %135 : i32 to index
    %c0_62 = arith.constant 0 : index
    %137 = vector.load %arg10[%136, %c0_62] : memref<128x128xf32, #tpu.memory_space<vmem>>, vector<1x128xf32>
    %c1_63 = arith.constant 1 : index
    %c0_64 = arith.constant 0 : index
    %138 = vector.load %arg14[%c1_63, %c0_64] : memref<8x128xf32, #tpu.memory_space<vmem>>, vector<1x128xf32>
    tpu.vector_store %arg14[%c1_63, %c0_64], %137 {strides = array<i32>} : memref<8x128xf32, #tpu.memory_space<vmem>>, vector<1x128xf32>,
    %c4_i32_65 = arith.constant 4 : i32
    %139 = arith.muli %arg0, %c4_i32_65 : i32
    %c1_i32_66 = arith.constant 1 : i32
    %140 = arith.addi %139, %c1_i32_66 : i32
    %c1_i32_67 = arith.constant 1 : i32
    %141 = arith.subi %140, %c1_i32_67 : i32
    %c0_i32_68 = arith.constant 0 : i32
    %142 = arith.maxsi %141, %c0_i32_68 : i32
    %143 = arith.index_cast %142 : i32 to index
    %144 = memref.load %arg1[%143] : memref<8xi32, #tpu.memory_space<smem>>
    %c0_i32_69 = arith.constant 0 : i32
    %145 = arith.cmpi sgt, %144, %c0_i32_69 : i32
    %c0_i32_70 = arith.constant 0 : i32
    %146 = arith.cmpi eq, %140, %c0_i32_70 : i32
    %147 = arith.ori %146, %145 : i1
    %148 = arith.extui %147 : i1 to i32
    %c0_i32_71 = arith.constant 0 : i32
    %149 = arith.cmpi ne, %148, %c0_i32_71 : i32
    scf.if %149 {
      %c1_274 = arith.constant 1 : index
      %c0_275 = arith.constant 0 : index
      %c0_276 = arith.constant 0 : index
      %547 = vector.load %arg2[%c1_274, %c0_275, %c0_276] : memref<4x8x128xf32, #tpu.memory_space<vmem>>, vector<1x8x128xf32>
      %548 = vector.shape_cast %547 : vector<1x8x128xf32> to vector<8x128xf32>
      %c0_277 = arith.constant 0 : index
      %c0_278 = arith.constant 0 : index
      %549 = vector.load %arg14[%c0_277, %c0_278] : memref<8x128xf32, #tpu.memory_space<vmem>>, vector<8x128xf32>
      tpu.vector_store %arg14[%c0_277, %c0_278], %548 {strides = array<i32>} : memref<8x128xf32, #tpu.memory_space<vmem>>, vector<8x128xf32>,
    } else {
    }
    %c0_72 = arith.constant 0 : index
    %c0_73 = arith.constant 0 : index
    %150 = vector.load %arg14[%c0_72, %c0_73] : memref<8x128xf32, #tpu.memory_space<vmem>>, vector<8x128xf32>
    %c0_74 = arith.constant 0 : index
    %c0_75 = arith.constant 0 : index
    %c0_76 = arith.constant 0 : index
    %151 = vector.load %arg12[%c0_74, %c0_75, %c0_76] : memref<2x8x128xf32, #tpu.memory_space<vmem>>, vector<1x8x128xf32>
    %152 = vector.shape_cast %151 : vector<1x8x128xf32> to vector<8x128xf32>
    %c0_77 = arith.constant 0 : index
    %c0_78 = arith.constant 0 : index
    %c0_79 = arith.constant 0 : index
    %153 = vector.load %arg13[%c0_77, %c0_78, %c0_79] : memref<2x8x128xf32, #tpu.memory_space<vmem>>, vector<1x8x128xf32>
    %154 = vector.shape_cast %153 : vector<1x8x128xf32> to vector<8x128xf32>
    %155 = tpu.concatenate %150, %152 in 1 : vector<8x128xf32>, vector<8x128xf32> -> vector<8x256xf32>
    %156 = arith.truncf %155 : vector<8x256xf32> to vector<8x256xbf16>
    %c0_80 = arith.constant 0 : index
    %c0_81 = arith.constant 0 : index
    %157 = vector.load %arg4[%c0_80, %c0_81] : memref<256x512xbf16, #tpu.memory_space<vmem>>, vector<256x512xbf16>
    %cst_82 = arith.constant dense<0.000000e+00> : vector<8x512xf32>
    %158 = tpu.matmul %156, %157, %cst_82 {dimension_numbers = #tpu.dot_dimension_numbers<[1], [0], [0], [1], [0, 0, 1, 1], [], []>} : vector<8x256xbf16>, vector<256x512xbf16>, vector<8x512xf32> -> vector<8x512xf32>
    %c0_83 = arith.constant 0 : index
    %c0_84 = arith.constant 0 : index
    %159 = vector.load %arg5[%c0_83, %c0_84] : memref<1x512xf32, #tpu.memory_space<vmem>>, vector<1x512xf32>
    %160 = vector.broadcast %159 : vector<1x512xf32> to vector<8x512xf32>
    %161 = arith.addf %158, %160 : vector<8x512xf32>
    %162 = vector.extract_strided_slice %161 {offsets = [0, 0], sizes = [8, 128], strides = [1, 1]} : vector<8x512xf32> to vector<8x128xf32>
    %163 = arith.negf %162 : vector<8x128xf32>
    %164 = math.exp %163 : vector<8x128xf32>
    %cst_85 = arith.constant 1.000000e+00 : f32
    %165 = vector.broadcast %cst_85 : f32 to vector<8x128xf32>
    %166 = arith.addf %165, %164 : vector<8x128xf32>
    %167 = arith.divf %165, %166 : vector<8x128xf32>
    %168 = vector.extract_strided_slice %161 {offsets = [0, 128], sizes = [8, 128], strides = [1, 1]} : vector<8x512xf32> to vector<8x128xf32>
    %169 = arith.negf %168 : vector<8x128xf32>
    %170 = math.exp %169 : vector<8x128xf32>
    %cst_86 = arith.constant 1.000000e+00 : f32
    %171 = vector.broadcast %cst_86 : f32 to vector<8x128xf32>
    %172 = arith.addf %171, %170 : vector<8x128xf32>
    %173 = arith.divf %171, %172 : vector<8x128xf32>
    %174 = vector.extract_strided_slice %161 {offsets = [0, 256], sizes = [8, 128], strides = [1, 1]} : vector<8x512xf32> to vector<8x128xf32>
    %175 = math.tanh %174 : vector<8x128xf32>
    %176 = vector.extract_strided_slice %161 {offsets = [0, 384], sizes = [8, 128], strides = [1, 1]} : vector<8x512xf32> to vector<8x128xf32>
    %177 = arith.negf %176 : vector<8x128xf32>
    %178 = math.exp %177 : vector<8x128xf32>
    %cst_87 = arith.constant 1.000000e+00 : f32
    %179 = vector.broadcast %cst_87 : f32 to vector<8x128xf32>
    %180 = arith.addf %179, %178 : vector<8x128xf32>
    %181 = arith.divf %179, %180 : vector<8x128xf32>
    %182 = arith.mulf %173, %154 : vector<8x128xf32>
    %183 = arith.mulf %167, %175 : vector<8x128xf32>
    %184 = arith.addf %182, %183 : vector<8x128xf32>
    %185 = math.tanh %184 : vector<8x128xf32>
    %186 = arith.mulf %181, %185 : vector<8x128xf32>
    %c0_88 = arith.constant 0 : index
    %c0_89 = arith.constant 0 : index
    %c0_90 = arith.constant 0 : index
    %187 = vector.load %arg12[%c0_88, %c0_89, %c0_90] : memref<2x8x128xf32, #tpu.memory_space<vmem>>, vector<1x8x128xf32>
    %188 = vector.shape_cast %187 : vector<1x8x128xf32> to vector<8x128xf32>
    %189 = vector.shape_cast %186 : vector<8x128xf32> to vector<1x8x128xf32>
    tpu.vector_store %arg12[%c0_88, %c0_89, %c0_90], %189 {strides = array<i32>} : memref<2x8x128xf32, #tpu.memory_space<vmem>>, vector<1x8x128xf32>,
    %c0_91 = arith.constant 0 : index
    %c0_92 = arith.constant 0 : index
    %c0_93 = arith.constant 0 : index
    %190 = vector.load %arg13[%c0_91, %c0_92, %c0_93] : memref<2x8x128xf32, #tpu.memory_space<vmem>>, vector<1x8x128xf32>
    %191 = vector.shape_cast %190 : vector<1x8x128xf32> to vector<8x128xf32>
    %192 = vector.shape_cast %184 : vector<8x128xf32> to vector<1x8x128xf32>
    tpu.vector_store %arg13[%c0_91, %c0_92, %c0_93], %192 {strides = array<i32>} : memref<2x8x128xf32, #tpu.memory_space<vmem>>, vector<1x8x128xf32>,
    %c1_94 = arith.constant 1 : index
    %c0_95 = arith.constant 0 : index
    %c0_96 = arith.constant 0 : index
    %193 = vector.load %arg12[%c1_94, %c0_95, %c0_96] : memref<2x8x128xf32, #tpu.memory_space<vmem>>, vector<1x8x128xf32>
    %194 = vector.shape_cast %193 : vector<1x8x128xf32> to vector<8x128xf32>
    %c1_97 = arith.constant 1 : index
    %c0_98 = arith.constant 0 : index
    %c0_99 = arith.constant 0 : index
    %195 = vector.load %arg13[%c1_97, %c0_98, %c0_99] : memref<2x8x128xf32, #tpu.memory_space<vmem>>, vector<1x8x128xf32>
    %196 = vector.shape_cast %195 : vector<1x8x128xf32> to vector<8x128xf32>
    %197 = tpu.concatenate %186, %194 in 1 : vector<8x128xf32>, vector<8x128xf32> -> vector<8x256xf32>
    %198 = arith.truncf %197 : vector<8x256xf32> to vector<8x256xbf16>
    %c0_100 = arith.constant 0 : index
    %c0_101 = arith.constant 0 : index
    %199 = vector.load %arg6[%c0_100, %c0_101] : memref<256x512xbf16, #tpu.memory_space<vmem>>, vector<256x512xbf16>
    %cst_102 = arith.constant dense<0.000000e+00> : vector<8x512xf32>
    %200 = tpu.matmul %198, %199, %cst_102 {dimension_numbers = #tpu.dot_dimension_numbers<[1], [0], [0], [1], [0, 0, 1, 1], [], []>} : vector<8x256xbf16>, vector<256x512xbf16>, vector<8x512xf32> -> vector<8x512xf32>
    %c0_103 = arith.constant 0 : index
    %c0_104 = arith.constant 0 : index
    %201 = vector.load %arg7[%c0_103, %c0_104] : memref<1x512xf32, #tpu.memory_space<vmem>>, vector<1x512xf32>
    %202 = vector.broadcast %201 : vector<1x512xf32> to vector<8x512xf32>
    %203 = arith.addf %200, %202 : vector<8x512xf32>
    %204 = vector.extract_strided_slice %203 {offsets = [0, 0], sizes = [8, 128], strides = [1, 1]} : vector<8x512xf32> to vector<8x128xf32>
    %205 = arith.negf %204 : vector<8x128xf32>
    %206 = math.exp %205 : vector<8x128xf32>
    %cst_105 = arith.constant 1.000000e+00 : f32
    %207 = vector.broadcast %cst_105 : f32 to vector<8x128xf32>
    %208 = arith.addf %207, %206 : vector<8x128xf32>
    %209 = arith.divf %207, %208 : vector<8x128xf32>
    %210 = vector.extract_strided_slice %203 {offsets = [0, 128], sizes = [8, 128], strides = [1, 1]} : vector<8x512xf32> to vector<8x128xf32>
    %211 = arith.negf %210 : vector<8x128xf32>
    %212 = math.exp %211 : vector<8x128xf32>
    %cst_106 = arith.constant 1.000000e+00 : f32
    %213 = vector.broadcast %cst_106 : f32 to vector<8x128xf32>
    %214 = arith.addf %213, %212 : vector<8x128xf32>
    %215 = arith.divf %213, %214 : vector<8x128xf32>
    %216 = vector.extract_strided_slice %203 {offsets = [0, 256], sizes = [8, 128], strides = [1, 1]} : vector<8x512xf32> to vector<8x128xf32>
    %217 = math.tanh %216 : vector<8x128xf32>
    %218 = vector.extract_strided_slice %203 {offsets = [0, 384], sizes = [8, 128], strides = [1, 1]} : vector<8x512xf32> to vector<8x128xf32>
    %219 = arith.negf %218 : vector<8x128xf32>
    %220 = math.exp %219 : vector<8x128xf32>
    %cst_107 = arith.constant 1.000000e+00 : f32
    %221 = vector.broadcast %cst_107 : f32 to vector<8x128xf32>
    %222 = arith.addf %221, %220 : vector<8x128xf32>
    %223 = arith.divf %221, %222 : vector<8x128xf32>
    %224 = arith.mulf %215, %196 : vector<8x128xf32>
    %225 = arith.mulf %209, %217 : vector<8x128xf32>
    %226 = arith.addf %224, %225 : vector<8x128xf32>
    %227 = math.tanh %226 : vector<8x128xf32>
    %228 = arith.mulf %223, %227 : vector<8x128xf32>
    %c1_108 = arith.constant 1 : index
    %c0_109 = arith.constant 0 : index
    %c0_110 = arith.constant 0 : index
    %229 = vector.load %arg12[%c1_108, %c0_109, %c0_110] : memref<2x8x128xf32, #tpu.memory_space<vmem>>, vector<1x8x128xf32>
    %230 = vector.shape_cast %229 : vector<1x8x128xf32> to vector<8x128xf32>
    %231 = vector.shape_cast %228 : vector<8x128xf32> to vector<1x8x128xf32>
    tpu.vector_store %arg12[%c1_108, %c0_109, %c0_110], %231 {strides = array<i32>} : memref<2x8x128xf32, #tpu.memory_space<vmem>>, vector<1x8x128xf32>,
    %c1_111 = arith.constant 1 : index
    %c0_112 = arith.constant 0 : index
    %c0_113 = arith.constant 0 : index
    %232 = vector.load %arg13[%c1_111, %c0_112, %c0_113] : memref<2x8x128xf32, #tpu.memory_space<vmem>>, vector<1x8x128xf32>
    %233 = vector.shape_cast %232 : vector<1x8x128xf32> to vector<8x128xf32>
    %234 = vector.shape_cast %226 : vector<8x128xf32> to vector<1x8x128xf32>
    tpu.vector_store %arg13[%c1_111, %c0_112, %c0_113], %234 {strides = array<i32>} : memref<2x8x128xf32, #tpu.memory_space<vmem>>, vector<1x8x128xf32>,
    %235 = arith.truncf %228 : vector<8x128xf32> to vector<8x128xbf16>
    %c0_114 = arith.constant 0 : index
    %c0_115 = arith.constant 0 : index
    %236 = vector.load %arg8[%c0_114, %c0_115] : memref<128x128xbf16, #tpu.memory_space<vmem>>, vector<128x128xbf16>
    %cst_116 = arith.constant dense<0.000000e+00> : vector<8x128xf32>
    %237 = tpu.matmul %235, %236, %cst_116 {dimension_numbers = #tpu.dot_dimension_numbers<[1], [0], [0], [1], [0, 0, 1, 1], [], []>} : vector<8x128xbf16>, vector<128x128xbf16>, vector<8x128xf32> -> vector<8x128xf32>
    %c0_117 = arith.constant 0 : index
    %c0_118 = arith.constant 0 : index
    %238 = vector.load %arg9[%c0_117, %c0_118] : memref<1x128xf32, #tpu.memory_space<vmem>>, vector<1x128xf32>
    %239 = vector.broadcast %238 : vector<1x128xf32> to vector<8x128xf32>
    %240 = arith.addf %237, %239 : vector<8x128xf32>
    %c1_119 = arith.constant 1 : index
    %c0_120 = arith.constant 0 : index
    %c0_121 = arith.constant 0 : index
    %241 = vector.load %arg11[%c1_119, %c0_120, %c0_121] : memref<4x8x128xf32, #tpu.memory_space<vmem>>, vector<1x8x128xf32>
    %242 = vector.shape_cast %241 : vector<1x8x128xf32> to vector<8x128xf32>
    %243 = vector.shape_cast %240 : vector<8x128xf32> to vector<1x8x128xf32>
    tpu.vector_store %arg11[%c1_119, %c0_120, %c0_121], %243 {strides = array<i32>} : memref<4x8x128xf32, #tpu.memory_space<vmem>>, vector<1x8x128xf32>,
    %244 = tpu.iota {dimensions = array<i32: 1>} : vector<1x128xi32>
    %245 = vector.extract_strided_slice %240 {offsets = [0, 0], sizes = [1, 128], strides = [1, 1]} : vector<8x128xf32> to vector<1x128xf32>
    %cst_122 = arith.constant dense<0xFF800000> : vector<1xf32>
    %246 = vector.multi_reduction <maximumf>, %245, %cst_122 [1] : vector<1x128xf32> to vector<1xf32>
    %247 = vector.shape_cast %246 : vector<1xf32> to vector<1x1xf32>
    %248 = vector.broadcast %247 : vector<1x1xf32> to vector<1x128xf32>
    %249 = arith.cmpf oge, %245, %248 : vector<1x128xf32>
    %c128_i32_123 = arith.constant 128 : i32
    %250 = vector.broadcast %c128_i32_123 : i32 to vector<1x128xi32>
    %251 = arith.select %249, %244, %250 : vector<1x128xi1>, vector<1x128xi32>
    %252 = vector.shape_cast %251 : vector<1x128xi32> to vector<1x1x128xi32>
    %cst_124 = arith.constant dense<2147483647> : vector<1xi32>
    %253 = vector.multi_reduction <minsi>, %252, %cst_124 [1, 2] : vector<1x1x128xi32> to vector<1xi32>
    %254 = vector.shape_cast %253 : vector<1xi32> to vector<1x1x1xi32>
    %255 = vector.extract %254[0, 0, 0] : i32 from vector<1x1x1xi32>
    %c127_i32_125 = arith.constant 127 : i32
    %256 = arith.minsi %255, %c127_i32_125 : i32
    %257 = arith.index_cast %256 : i32 to index
    %c0_126 = arith.constant 0 : index
    %258 = vector.load %arg10[%257, %c0_126] : memref<128x128xf32, #tpu.memory_space<vmem>>, vector<1x128xf32>
    %c0_127 = arith.constant 0 : index
    %c0_128 = arith.constant 0 : index
    %259 = vector.load %arg14[%c0_127, %c0_128] : memref<8x128xf32, #tpu.memory_space<vmem>>, vector<1x128xf32>
    tpu.vector_store %arg14[%c0_127, %c0_128], %258 {strides = array<i32>} : memref<8x128xf32, #tpu.memory_space<vmem>>, vector<1x128xf32>,
    %260 = vector.extract_strided_slice %240 {offsets = [1, 0], sizes = [1, 128], strides = [1, 1]} : vector<8x128xf32> to vector<1x128xf32>
    %cst_129 = arith.constant dense<0xFF800000> : vector<1xf32>
    %261 = vector.multi_reduction <maximumf>, %260, %cst_129 [1] : vector<1x128xf32> to vector<1xf32>
    %262 = vector.shape_cast %261 : vector<1xf32> to vector<1x1xf32>
    %263 = vector.broadcast %262 : vector<1x1xf32> to vector<1x128xf32>
    %264 = arith.cmpf oge, %260, %263 : vector<1x128xf32>
    %c128_i32_130 = arith.constant 128 : i32
    %265 = vector.broadcast %c128_i32_130 : i32 to vector<1x128xi32>
    %266 = arith.select %264, %244, %265 : vector<1x128xi1>, vector<1x128xi32>
    %267 = vector.shape_cast %266 : vector<1x128xi32> to vector<1x1x128xi32>
    %cst_131 = arith.constant dense<2147483647> : vector<1xi32>
    %268 = vector.multi_reduction <minsi>, %267, %cst_131 [1, 2] : vector<1x1x128xi32> to vector<1xi32>
    %269 = vector.shape_cast %268 : vector<1xi32> to vector<1x1x1xi32>
    %270 = vector.extract %269[0, 0, 0] : i32 from vector<1x1x1xi32>
    %c127_i32_132 = arith.constant 127 : i32
    %271 = arith.minsi %270, %c127_i32_132 : i32
    %272 = arith.index_cast %271 : i32 to index
    %c0_133 = arith.constant 0 : index
    %273 = vector.load %arg10[%272, %c0_133] : memref<128x128xf32, #tpu.memory_space<vmem>>, vector<1x128xf32>
    %c1_134 = arith.constant 1 : index
    %c0_135 = arith.constant 0 : index
    %274 = vector.load %arg14[%c1_134, %c0_135] : memref<8x128xf32, #tpu.memory_space<vmem>>, vector<1x128xf32>
    tpu.vector_store %arg14[%c1_134, %c0_135], %273 {strides = array<i32>} : memref<8x128xf32, #tpu.memory_space<vmem>>, vector<1x128xf32>,
    %c4_i32_136 = arith.constant 4 : i32
    %275 = arith.muli %arg0, %c4_i32_136 : i32
    %c2_i32 = arith.constant 2 : i32
    %276 = arith.addi %275, %c2_i32 : i32
    %c1_i32_137 = arith.constant 1 : i32
    %277 = arith.subi %276, %c1_i32_137 : i32
    %c0_i32_138 = arith.constant 0 : i32
    %278 = arith.maxsi %277, %c0_i32_138 : i32
    %279 = arith.index_cast %278 : i32 to index
    %280 = memref.load %arg1[%279] : memref<8xi32, #tpu.memory_space<smem>>
    %c0_i32_139 = arith.constant 0 : i32
    %281 = arith.cmpi sgt, %280, %c0_i32_139 : i32
    %c0_i32_140 = arith.constant 0 : i32
    %282 = arith.cmpi eq, %276, %c0_i32_140 : i32
    %283 = arith.ori %282, %281 : i1
    %284 = arith.extui %283 : i1 to i32
    %c0_i32_141 = arith.constant 0 : i32
    %285 = arith.cmpi ne, %284, %c0_i32_141 : i32
    scf.if %285 {
      %c2_274 = arith.constant 2 : index
      %c0_275 = arith.constant 0 : index
      %c0_276 = arith.constant 0 : index
      %547 = vector.load %arg2[%c2_274, %c0_275, %c0_276] : memref<4x8x128xf32, #tpu.memory_space<vmem>>, vector<1x8x128xf32>
      %548 = vector.shape_cast %547 : vector<1x8x128xf32> to vector<8x128xf32>
      %c0_277 = arith.constant 0 : index
      %c0_278 = arith.constant 0 : index
      %549 = vector.load %arg14[%c0_277, %c0_278] : memref<8x128xf32, #tpu.memory_space<vmem>>, vector<8x128xf32>
      tpu.vector_store %arg14[%c0_277, %c0_278], %548 {strides = array<i32>} : memref<8x128xf32, #tpu.memory_space<vmem>>, vector<8x128xf32>,
    } else {
    }
    %c0_142 = arith.constant 0 : index
    %c0_143 = arith.constant 0 : index
    %286 = vector.load %arg14[%c0_142, %c0_143] : memref<8x128xf32, #tpu.memory_space<vmem>>, vector<8x128xf32>
    %c0_144 = arith.constant 0 : index
    %c0_145 = arith.constant 0 : index
    %c0_146 = arith.constant 0 : index
    %287 = vector.load %arg12[%c0_144, %c0_145, %c0_146] : memref<2x8x128xf32, #tpu.memory_space<vmem>>, vector<1x8x128xf32>
    %288 = vector.shape_cast %287 : vector<1x8x128xf32> to vector<8x128xf32>
    %c0_147 = arith.constant 0 : index
    %c0_148 = arith.constant 0 : index
    %c0_149 = arith.constant 0 : index
    %289 = vector.load %arg13[%c0_147, %c0_148, %c0_149] : memref<2x8x128xf32, #tpu.memory_space<vmem>>, vector<1x8x128xf32>
    %290 = vector.shape_cast %289 : vector<1x8x128xf32> to vector<8x128xf32>
    %291 = tpu.concatenate %286, %288 in 1 : vector<8x128xf32>, vector<8x128xf32> -> vector<8x256xf32>
    %292 = arith.truncf %291 : vector<8x256xf32> to vector<8x256xbf16>
    %c0_150 = arith.constant 0 : index
    %c0_151 = arith.constant 0 : index
    %293 = vector.load %arg4[%c0_150, %c0_151] : memref<256x512xbf16, #tpu.memory_space<vmem>>, vector<256x512xbf16>
    %cst_152 = arith.constant dense<0.000000e+00> : vector<8x512xf32>
    %294 = tpu.matmul %292, %293, %cst_152 {dimension_numbers = #tpu.dot_dimension_numbers<[1], [0], [0], [1], [0, 0, 1, 1], [], []>} : vector<8x256xbf16>, vector<256x512xbf16>, vector<8x512xf32> -> vector<8x512xf32>
    %c0_153 = arith.constant 0 : index
    %c0_154 = arith.constant 0 : index
    %295 = vector.load %arg5[%c0_153, %c0_154] : memref<1x512xf32, #tpu.memory_space<vmem>>, vector<1x512xf32>
    %296 = vector.broadcast %295 : vector<1x512xf32> to vector<8x512xf32>
    %297 = arith.addf %294, %296 : vector<8x512xf32>
    %298 = vector.extract_strided_slice %297 {offsets = [0, 0], sizes = [8, 128], strides = [1, 1]} : vector<8x512xf32> to vector<8x128xf32>
    %299 = arith.negf %298 : vector<8x128xf32>
    %300 = math.exp %299 : vector<8x128xf32>
    %cst_155 = arith.constant 1.000000e+00 : f32
    %301 = vector.broadcast %cst_155 : f32 to vector<8x128xf32>
    %302 = arith.addf %301, %300 : vector<8x128xf32>
    %303 = arith.divf %301, %302 : vector<8x128xf32>
    %304 = vector.extract_strided_slice %297 {offsets = [0, 128], sizes = [8, 128], strides = [1, 1]} : vector<8x512xf32> to vector<8x128xf32>
    %305 = arith.negf %304 : vector<8x128xf32>
    %306 = math.exp %305 : vector<8x128xf32>
    %cst_156 = arith.constant 1.000000e+00 : f32
    %307 = vector.broadcast %cst_156 : f32 to vector<8x128xf32>
    %308 = arith.addf %307, %306 : vector<8x128xf32>
    %309 = arith.divf %307, %308 : vector<8x128xf32>
    %310 = vector.extract_strided_slice %297 {offsets = [0, 256], sizes = [8, 128], strides = [1, 1]} : vector<8x512xf32> to vector<8x128xf32>
    %311 = math.tanh %310 : vector<8x128xf32>
    %312 = vector.extract_strided_slice %297 {offsets = [0, 384], sizes = [8, 128], strides = [1, 1]} : vector<8x512xf32> to vector<8x128xf32>
    %313 = arith.negf %312 : vector<8x128xf32>
    %314 = math.exp %313 : vector<8x128xf32>
    %cst_157 = arith.constant 1.000000e+00 : f32
    %315 = vector.broadcast %cst_157 : f32 to vector<8x128xf32>
    %316 = arith.addf %315, %314 : vector<8x128xf32>
    %317 = arith.divf %315, %316 : vector<8x128xf32>
    %318 = arith.mulf %309, %290 : vector<8x128xf32>
    %319 = arith.mulf %303, %311 : vector<8x128xf32>
    %320 = arith.addf %318, %319 : vector<8x128xf32>
    %321 = math.tanh %320 : vector<8x128xf32>
    %322 = arith.mulf %317, %321 : vector<8x128xf32>
    %c0_158 = arith.constant 0 : index
    %c0_159 = arith.constant 0 : index
    %c0_160 = arith.constant 0 : index
    %323 = vector.load %arg12[%c0_158, %c0_159, %c0_160] : memref<2x8x128xf32, #tpu.memory_space<vmem>>, vector<1x8x128xf32>
    %324 = vector.shape_cast %323 : vector<1x8x128xf32> to vector<8x128xf32>
    %325 = vector.shape_cast %322 : vector<8x128xf32> to vector<1x8x128xf32>
    tpu.vector_store %arg12[%c0_158, %c0_159, %c0_160], %325 {strides = array<i32>} : memref<2x8x128xf32, #tpu.memory_space<vmem>>, vector<1x8x128xf32>,
    %c0_161 = arith.constant 0 : index
    %c0_162 = arith.constant 0 : index
    %c0_163 = arith.constant 0 : index
    %326 = vector.load %arg13[%c0_161, %c0_162, %c0_163] : memref<2x8x128xf32, #tpu.memory_space<vmem>>, vector<1x8x128xf32>
    %327 = vector.shape_cast %326 : vector<1x8x128xf32> to vector<8x128xf32>
    %328 = vector.shape_cast %320 : vector<8x128xf32> to vector<1x8x128xf32>
    tpu.vector_store %arg13[%c0_161, %c0_162, %c0_163], %328 {strides = array<i32>} : memref<2x8x128xf32, #tpu.memory_space<vmem>>, vector<1x8x128xf32>,
    %c1_164 = arith.constant 1 : index
    %c0_165 = arith.constant 0 : index
    %c0_166 = arith.constant 0 : index
    %329 = vector.load %arg12[%c1_164, %c0_165, %c0_166] : memref<2x8x128xf32, #tpu.memory_space<vmem>>, vector<1x8x128xf32>
    %330 = vector.shape_cast %329 : vector<1x8x128xf32> to vector<8x128xf32>
    %c1_167 = arith.constant 1 : index
    %c0_168 = arith.constant 0 : index
    %c0_169 = arith.constant 0 : index
    %331 = vector.load %arg13[%c1_167, %c0_168, %c0_169] : memref<2x8x128xf32, #tpu.memory_space<vmem>>, vector<1x8x128xf32>
    %332 = vector.shape_cast %331 : vector<1x8x128xf32> to vector<8x128xf32>
    %333 = tpu.concatenate %322, %330 in 1 : vector<8x128xf32>, vector<8x128xf32> -> vector<8x256xf32>
    %334 = arith.truncf %333 : vector<8x256xf32> to vector<8x256xbf16>
    %c0_170 = arith.constant 0 : index
    %c0_171 = arith.constant 0 : index
    %335 = vector.load %arg6[%c0_170, %c0_171] : memref<256x512xbf16, #tpu.memory_space<vmem>>, vector<256x512xbf16>
    %cst_172 = arith.constant dense<0.000000e+00> : vector<8x512xf32>
    %336 = tpu.matmul %334, %335, %cst_172 {dimension_numbers = #tpu.dot_dimension_numbers<[1], [0], [0], [1], [0, 0, 1, 1], [], []>} : vector<8x256xbf16>, vector<256x512xbf16>, vector<8x512xf32> -> vector<8x512xf32>
    %c0_173 = arith.constant 0 : index
    %c0_174 = arith.constant 0 : index
    %337 = vector.load %arg7[%c0_173, %c0_174] : memref<1x512xf32, #tpu.memory_space<vmem>>, vector<1x512xf32>
    %338 = vector.broadcast %337 : vector<1x512xf32> to vector<8x512xf32>
    %339 = arith.addf %336, %338 : vector<8x512xf32>
    %340 = vector.extract_strided_slice %339 {offsets = [0, 0], sizes = [8, 128], strides = [1, 1]} : vector<8x512xf32> to vector<8x128xf32>
    %341 = arith.negf %340 : vector<8x128xf32>
    %342 = math.exp %341 : vector<8x128xf32>
    %cst_175 = arith.constant 1.000000e+00 : f32
    %343 = vector.broadcast %cst_175 : f32 to vector<8x128xf32>
    %344 = arith.addf %343, %342 : vector<8x128xf32>
    %345 = arith.divf %343, %344 : vector<8x128xf32>
    %346 = vector.extract_strided_slice %339 {offsets = [0, 128], sizes = [8, 128], strides = [1, 1]} : vector<8x512xf32> to vector<8x128xf32>
    %347 = arith.negf %346 : vector<8x128xf32>
    %348 = math.exp %347 : vector<8x128xf32>
    %cst_176 = arith.constant 1.000000e+00 : f32
    %349 = vector.broadcast %cst_176 : f32 to vector<8x128xf32>
    %350 = arith.addf %349, %348 : vector<8x128xf32>
    %351 = arith.divf %349, %350 : vector<8x128xf32>
    %352 = vector.extract_strided_slice %339 {offsets = [0, 256], sizes = [8, 128], strides = [1, 1]} : vector<8x512xf32> to vector<8x128xf32>
    %353 = math.tanh %352 : vector<8x128xf32>
    %354 = vector.extract_strided_slice %339 {offsets = [0, 384], sizes = [8, 128], strides = [1, 1]} : vector<8x512xf32> to vector<8x128xf32>
    %355 = arith.negf %354 : vector<8x128xf32>
    %356 = math.exp %355 : vector<8x128xf32>
    %cst_177 = arith.constant 1.000000e+00 : f32
    %357 = vector.broadcast %cst_177 : f32 to vector<8x128xf32>
    %358 = arith.addf %357, %356 : vector<8x128xf32>
    %359 = arith.divf %357, %358 : vector<8x128xf32>
    %360 = arith.mulf %351, %332 : vector<8x128xf32>
    %361 = arith.mulf %345, %353 : vector<8x128xf32>
    %362 = arith.addf %360, %361 : vector<8x128xf32>
    %363 = math.tanh %362 : vector<8x128xf32>
    %364 = arith.mulf %359, %363 : vector<8x128xf32>
    %c1_178 = arith.constant 1 : index
    %c0_179 = arith.constant 0 : index
    %c0_180 = arith.constant 0 : index
    %365 = vector.load %arg12[%c1_178, %c0_179, %c0_180] : memref<2x8x128xf32, #tpu.memory_space<vmem>>, vector<1x8x128xf32>
    %366 = vector.shape_cast %365 : vector<1x8x128xf32> to vector<8x128xf32>
    %367 = vector.shape_cast %364 : vector<8x128xf32> to vector<1x8x128xf32>
    tpu.vector_store %arg12[%c1_178, %c0_179, %c0_180], %367 {strides = array<i32>} : memref<2x8x128xf32, #tpu.memory_space<vmem>>, vector<1x8x128xf32>,
    %c1_181 = arith.constant 1 : index
    %c0_182 = arith.constant 0 : index
    %c0_183 = arith.constant 0 : index
    %368 = vector.load %arg13[%c1_181, %c0_182, %c0_183] : memref<2x8x128xf32, #tpu.memory_space<vmem>>, vector<1x8x128xf32>
    %369 = vector.shape_cast %368 : vector<1x8x128xf32> to vector<8x128xf32>
    %370 = vector.shape_cast %362 : vector<8x128xf32> to vector<1x8x128xf32>
    tpu.vector_store %arg13[%c1_181, %c0_182, %c0_183], %370 {strides = array<i32>} : memref<2x8x128xf32, #tpu.memory_space<vmem>>, vector<1x8x128xf32>,
    %371 = arith.truncf %364 : vector<8x128xf32> to vector<8x128xbf16>
    %c0_184 = arith.constant 0 : index
    %c0_185 = arith.constant 0 : index
    %372 = vector.load %arg8[%c0_184, %c0_185] : memref<128x128xbf16, #tpu.memory_space<vmem>>, vector<128x128xbf16>
    %cst_186 = arith.constant dense<0.000000e+00> : vector<8x128xf32>
    %373 = tpu.matmul %371, %372, %cst_186 {dimension_numbers = #tpu.dot_dimension_numbers<[1], [0], [0], [1], [0, 0, 1, 1], [], []>} : vector<8x128xbf16>, vector<128x128xbf16>, vector<8x128xf32> -> vector<8x128xf32>
    %c0_187 = arith.constant 0 : index
    %c0_188 = arith.constant 0 : index
    %374 = vector.load %arg9[%c0_187, %c0_188] : memref<1x128xf32, #tpu.memory_space<vmem>>, vector<1x128xf32>
    %375 = vector.broadcast %374 : vector<1x128xf32> to vector<8x128xf32>
    %376 = arith.addf %373, %375 : vector<8x128xf32>
    %c2 = arith.constant 2 : index
    %c0_189 = arith.constant 0 : index
    %c0_190 = arith.constant 0 : index
    %377 = vector.load %arg11[%c2, %c0_189, %c0_190] : memref<4x8x128xf32, #tpu.memory_space<vmem>>, vector<1x8x128xf32>
    %378 = vector.shape_cast %377 : vector<1x8x128xf32> to vector<8x128xf32>
    %379 = vector.shape_cast %376 : vector<8x128xf32> to vector<1x8x128xf32>
    tpu.vector_store %arg11[%c2, %c0_189, %c0_190], %379 {strides = array<i32>} : memref<4x8x128xf32, #tpu.memory_space<vmem>>, vector<1x8x128xf32>,
    %380 = tpu.iota {dimensions = array<i32: 1>} : vector<1x128xi32>
    %381 = vector.extract_strided_slice %376 {offsets = [0, 0], sizes = [1, 128], strides = [1, 1]} : vector<8x128xf32> to vector<1x128xf32>
    %cst_191 = arith.constant dense<0xFF800000> : vector<1xf32>
    %382 = vector.multi_reduction <maximumf>, %381, %cst_191 [1] : vector<1x128xf32> to vector<1xf32>
    %383 = vector.shape_cast %382 : vector<1xf32> to vector<1x1xf32>
    %384 = vector.broadcast %383 : vector<1x1xf32> to vector<1x128xf32>
    %385 = arith.cmpf oge, %381, %384 : vector<1x128xf32>
    %c128_i32_192 = arith.constant 128 : i32
    %386 = vector.broadcast %c128_i32_192 : i32 to vector<1x128xi32>
    %387 = arith.select %385, %380, %386 : vector<1x128xi1>, vector<1x128xi32>
    %388 = vector.shape_cast %387 : vector<1x128xi32> to vector<1x1x128xi32>
    %cst_193 = arith.constant dense<2147483647> : vector<1xi32>
    %389 = vector.multi_reduction <minsi>, %388, %cst_193 [1, 2] : vector<1x1x128xi32> to vector<1xi32>
    %390 = vector.shape_cast %389 : vector<1xi32> to vector<1x1x1xi32>
    %391 = vector.extract %390[0, 0, 0] : i32 from vector<1x1x1xi32>
    %c127_i32_194 = arith.constant 127 : i32
    %392 = arith.minsi %391, %c127_i32_194 : i32
    %393 = arith.index_cast %392 : i32 to index
    %c0_195 = arith.constant 0 : index
    %394 = vector.load %arg10[%393, %c0_195] : memref<128x128xf32, #tpu.memory_space<vmem>>, vector<1x128xf32>
    %c0_196 = arith.constant 0 : index
    %c0_197 = arith.constant 0 : index
    %395 = vector.load %arg14[%c0_196, %c0_197] : memref<8x128xf32, #tpu.memory_space<vmem>>, vector<1x128xf32>
    tpu.vector_store %arg14[%c0_196, %c0_197], %394 {strides = array<i32>} : memref<8x128xf32, #tpu.memory_space<vmem>>, vector<1x128xf32>,
    %396 = vector.extract_strided_slice %376 {offsets = [1, 0], sizes = [1, 128], strides = [1, 1]} : vector<8x128xf32> to vector<1x128xf32>
    %cst_198 = arith.constant dense<0xFF800000> : vector<1xf32>
    %397 = vector.multi_reduction <maximumf>, %396, %cst_198 [1] : vector<1x128xf32> to vector<1xf32>
    %398 = vector.shape_cast %397 : vector<1xf32> to vector<1x1xf32>
    %399 = vector.broadcast %398 : vector<1x1xf32> to vector<1x128xf32>
    %400 = arith.cmpf oge, %396, %399 : vector<1x128xf32>
    %c128_i32_199 = arith.constant 128 : i32
    %401 = vector.broadcast %c128_i32_199 : i32 to vector<1x128xi32>
    %402 = arith.select %400, %380, %401 : vector<1x128xi1>, vector<1x128xi32>
    %403 = vector.shape_cast %402 : vector<1x128xi32> to vector<1x1x128xi32>
    %cst_200 = arith.constant dense<2147483647> : vector<1xi32>
    %404 = vector.multi_reduction <minsi>, %403, %cst_200 [1, 2] : vector<1x1x128xi32> to vector<1xi32>
    %405 = vector.shape_cast %404 : vector<1xi32> to vector<1x1x1xi32>
    %406 = vector.extract %405[0, 0, 0] : i32 from vector<1x1x1xi32>
    %c127_i32_201 = arith.constant 127 : i32
    %407 = arith.minsi %406, %c127_i32_201 : i32
    %408 = arith.index_cast %407 : i32 to index
    %c0_202 = arith.constant 0 : index
    %409 = vector.load %arg10[%408, %c0_202] : memref<128x128xf32, #tpu.memory_space<vmem>>, vector<1x128xf32>
    %c1_203 = arith.constant 1 : index
    %c0_204 = arith.constant 0 : index
    %410 = vector.load %arg14[%c1_203, %c0_204] : memref<8x128xf32, #tpu.memory_space<vmem>>, vector<1x128xf32>
    tpu.vector_store %arg14[%c1_203, %c0_204], %409 {strides = array<i32>} : memref<8x128xf32, #tpu.memory_space<vmem>>, vector<1x128xf32>,
    %c4_i32_205 = arith.constant 4 : i32
    %411 = arith.muli %arg0, %c4_i32_205 : i32
    %c3_i32 = arith.constant 3 : i32
    %412 = arith.addi %411, %c3_i32 : i32
    %c1_i32_206 = arith.constant 1 : i32
    %413 = arith.subi %412, %c1_i32_206 : i32
    %c0_i32_207 = arith.constant 0 : i32
    %414 = arith.maxsi %413, %c0_i32_207 : i32
    %415 = arith.index_cast %414 : i32 to index
    %416 = memref.load %arg1[%415] : memref<8xi32, #tpu.memory_space<smem>>
    %c0_i32_208 = arith.constant 0 : i32
    %417 = arith.cmpi sgt, %416, %c0_i32_208 : i32
    %c0_i32_209 = arith.constant 0 : i32
    %418 = arith.cmpi eq, %412, %c0_i32_209 : i32
    %419 = arith.ori %418, %417 : i1
    %420 = arith.extui %419 : i1 to i32
    %c0_i32_210 = arith.constant 0 : i32
    %421 = arith.cmpi ne, %420, %c0_i32_210 : i32
    scf.if %421 {
      %c3_274 = arith.constant 3 : index
      %c0_275 = arith.constant 0 : index
      %c0_276 = arith.constant 0 : index
      %547 = vector.load %arg2[%c3_274, %c0_275, %c0_276] : memref<4x8x128xf32, #tpu.memory_space<vmem>>, vector<1x8x128xf32>
      %548 = vector.shape_cast %547 : vector<1x8x128xf32> to vector<8x128xf32>
      %c0_277 = arith.constant 0 : index
      %c0_278 = arith.constant 0 : index
      %549 = vector.load %arg14[%c0_277, %c0_278] : memref<8x128xf32, #tpu.memory_space<vmem>>, vector<8x128xf32>
      tpu.vector_store %arg14[%c0_277, %c0_278], %548 {strides = array<i32>} : memref<8x128xf32, #tpu.memory_space<vmem>>, vector<8x128xf32>,
    } else {
    }
    %c0_211 = arith.constant 0 : index
    %c0_212 = arith.constant 0 : index
    %422 = vector.load %arg14[%c0_211, %c0_212] : memref<8x128xf32, #tpu.memory_space<vmem>>, vector<8x128xf32>
    %c0_213 = arith.constant 0 : index
    %c0_214 = arith.constant 0 : index
    %c0_215 = arith.constant 0 : index
    %423 = vector.load %arg12[%c0_213, %c0_214, %c0_215] : memref<2x8x128xf32, #tpu.memory_space<vmem>>, vector<1x8x128xf32>
    %424 = vector.shape_cast %423 : vector<1x8x128xf32> to vector<8x128xf32>
    %c0_216 = arith.constant 0 : index
    %c0_217 = arith.constant 0 : index
    %c0_218 = arith.constant 0 : index
    %425 = vector.load %arg13[%c0_216, %c0_217, %c0_218] : memref<2x8x128xf32, #tpu.memory_space<vmem>>, vector<1x8x128xf32>
    %426 = vector.shape_cast %425 : vector<1x8x128xf32> to vector<8x128xf32>
    %427 = tpu.concatenate %422, %424 in 1 : vector<8x128xf32>, vector<8x128xf32> -> vector<8x256xf32>
    %428 = arith.truncf %427 : vector<8x256xf32> to vector<8x256xbf16>
    %c0_219 = arith.constant 0 : index
    %c0_220 = arith.constant 0 : index
    %429 = vector.load %arg4[%c0_219, %c0_220] : memref<256x512xbf16, #tpu.memory_space<vmem>>, vector<256x512xbf16>
    %cst_221 = arith.constant dense<0.000000e+00> : vector<8x512xf32>
    %430 = tpu.matmul %428, %429, %cst_221 {dimension_numbers = #tpu.dot_dimension_numbers<[1], [0], [0], [1], [0, 0, 1, 1], [], []>} : vector<8x256xbf16>, vector<256x512xbf16>, vector<8x512xf32> -> vector<8x512xf32>
    %c0_222 = arith.constant 0 : index
    %c0_223 = arith.constant 0 : index
    %431 = vector.load %arg5[%c0_222, %c0_223] : memref<1x512xf32, #tpu.memory_space<vmem>>, vector<1x512xf32>
    %432 = vector.broadcast %431 : vector<1x512xf32> to vector<8x512xf32>
    %433 = arith.addf %430, %432 : vector<8x512xf32>
    %434 = vector.extract_strided_slice %433 {offsets = [0, 0], sizes = [8, 128], strides = [1, 1]} : vector<8x512xf32> to vector<8x128xf32>
    %435 = arith.negf %434 : vector<8x128xf32>
    %436 = math.exp %435 : vector<8x128xf32>
    %cst_224 = arith.constant 1.000000e+00 : f32
    %437 = vector.broadcast %cst_224 : f32 to vector<8x128xf32>
    %438 = arith.addf %437, %436 : vector<8x128xf32>
    %439 = arith.divf %437, %438 : vector<8x128xf32>
    %440 = vector.extract_strided_slice %433 {offsets = [0, 128], sizes = [8, 128], strides = [1, 1]} : vector<8x512xf32> to vector<8x128xf32>
    %441 = arith.negf %440 : vector<8x128xf32>
    %442 = math.exp %441 : vector<8x128xf32>
    %cst_225 = arith.constant 1.000000e+00 : f32
    %443 = vector.broadcast %cst_225 : f32 to vector<8x128xf32>
    %444 = arith.addf %443, %442 : vector<8x128xf32>
    %445 = arith.divf %443, %444 : vector<8x128xf32>
    %446 = vector.extract_strided_slice %433 {offsets = [0, 256], sizes = [8, 128], strides = [1, 1]} : vector<8x512xf32> to vector<8x128xf32>
    %447 = math.tanh %446 : vector<8x128xf32>
    %448 = vector.extract_strided_slice %433 {offsets = [0, 384], sizes = [8, 128], strides = [1, 1]} : vector<8x512xf32> to vector<8x128xf32>
    %449 = arith.negf %448 : vector<8x128xf32>
    %450 = math.exp %449 : vector<8x128xf32>
    %cst_226 = arith.constant 1.000000e+00 : f32
    %451 = vector.broadcast %cst_226 : f32 to vector<8x128xf32>
    %452 = arith.addf %451, %450 : vector<8x128xf32>
    %453 = arith.divf %451, %452 : vector<8x128xf32>
    %454 = arith.mulf %445, %426 : vector<8x128xf32>
    %455 = arith.mulf %439, %447 : vector<8x128xf32>
    %456 = arith.addf %454, %455 : vector<8x128xf32>
    %457 = math.tanh %456 : vector<8x128xf32>
    %458 = arith.mulf %453, %457 : vector<8x128xf32>
    %c0_227 = arith.constant 0 : index
    %c0_228 = arith.constant 0 : index
    %c0_229 = arith.constant 0 : index
    %459 = vector.load %arg12[%c0_227, %c0_228, %c0_229] : memref<2x8x128xf32, #tpu.memory_space<vmem>>, vector<1x8x128xf32>
    %460 = vector.shape_cast %459 : vector<1x8x128xf32> to vector<8x128xf32>
    %461 = vector.shape_cast %458 : vector<8x128xf32> to vector<1x8x128xf32>
    tpu.vector_store %arg12[%c0_227, %c0_228, %c0_229], %461 {strides = array<i32>} : memref<2x8x128xf32, #tpu.memory_space<vmem>>, vector<1x8x128xf32>,
    %c0_230 = arith.constant 0 : index
    %c0_231 = arith.constant 0 : index
    %c0_232 = arith.constant 0 : index
    %462 = vector.load %arg13[%c0_230, %c0_231, %c0_232] : memref<2x8x128xf32, #tpu.memory_space<vmem>>, vector<1x8x128xf32>
    %463 = vector.shape_cast %462 : vector<1x8x128xf32> to vector<8x128xf32>
    %464 = vector.shape_cast %456 : vector<8x128xf32> to vector<1x8x128xf32>
    tpu.vector_store %arg13[%c0_230, %c0_231, %c0_232], %464 {strides = array<i32>} : memref<2x8x128xf32, #tpu.memory_space<vmem>>, vector<1x8x128xf32>,
    %c1_233 = arith.constant 1 : index
    %c0_234 = arith.constant 0 : index
    %c0_235 = arith.constant 0 : index
    %465 = vector.load %arg12[%c1_233, %c0_234, %c0_235] : memref<2x8x128xf32, #tpu.memory_space<vmem>>, vector<1x8x128xf32>
    %466 = vector.shape_cast %465 : vector<1x8x128xf32> to vector<8x128xf32>
    %c1_236 = arith.constant 1 : index
    %c0_237 = arith.constant 0 : index
    %c0_238 = arith.constant 0 : index
    %467 = vector.load %arg13[%c1_236, %c0_237, %c0_238] : memref<2x8x128xf32, #tpu.memory_space<vmem>>, vector<1x8x128xf32>
    %468 = vector.shape_cast %467 : vector<1x8x128xf32> to vector<8x128xf32>
    %469 = tpu.concatenate %458, %466 in 1 : vector<8x128xf32>, vector<8x128xf32> -> vector<8x256xf32>
    %470 = arith.truncf %469 : vector<8x256xf32> to vector<8x256xbf16>
    %c0_239 = arith.constant 0 : index
    %c0_240 = arith.constant 0 : index
    %471 = vector.load %arg6[%c0_239, %c0_240] : memref<256x512xbf16, #tpu.memory_space<vmem>>, vector<256x512xbf16>
    %cst_241 = arith.constant dense<0.000000e+00> : vector<8x512xf32>
    %472 = tpu.matmul %470, %471, %cst_241 {dimension_numbers = #tpu.dot_dimension_numbers<[1], [0], [0], [1], [0, 0, 1, 1], [], []>} : vector<8x256xbf16>, vector<256x512xbf16>, vector<8x512xf32> -> vector<8x512xf32>
    %c0_242 = arith.constant 0 : index
    %c0_243 = arith.constant 0 : index
    %473 = vector.load %arg7[%c0_242, %c0_243] : memref<1x512xf32, #tpu.memory_space<vmem>>, vector<1x512xf32>
    %474 = vector.broadcast %473 : vector<1x512xf32> to vector<8x512xf32>
    %475 = arith.addf %472, %474 : vector<8x512xf32>
    %476 = vector.extract_strided_slice %475 {offsets = [0, 0], sizes = [8, 128], strides = [1, 1]} : vector<8x512xf32> to vector<8x128xf32>
    %477 = arith.negf %476 : vector<8x128xf32>
    %478 = math.exp %477 : vector<8x128xf32>
    %cst_244 = arith.constant 1.000000e+00 : f32
    %479 = vector.broadcast %cst_244 : f32 to vector<8x128xf32>
    %480 = arith.addf %479, %478 : vector<8x128xf32>
    %481 = arith.divf %479, %480 : vector<8x128xf32>
    %482 = vector.extract_strided_slice %475 {offsets = [0, 128], sizes = [8, 128], strides = [1, 1]} : vector<8x512xf32> to vector<8x128xf32>
    %483 = arith.negf %482 : vector<8x128xf32>
    %484 = math.exp %483 : vector<8x128xf32>
    %cst_245 = arith.constant 1.000000e+00 : f32
    %485 = vector.broadcast %cst_245 : f32 to vector<8x128xf32>
    %486 = arith.addf %485, %484 : vector<8x128xf32>
    %487 = arith.divf %485, %486 : vector<8x128xf32>
    %488 = vector.extract_strided_slice %475 {offsets = [0, 256], sizes = [8, 128], strides = [1, 1]} : vector<8x512xf32> to vector<8x128xf32>
    %489 = math.tanh %488 : vector<8x128xf32>
    %490 = vector.extract_strided_slice %475 {offsets = [0, 384], sizes = [8, 128], strides = [1, 1]} : vector<8x512xf32> to vector<8x128xf32>
    %491 = arith.negf %490 : vector<8x128xf32>
    %492 = math.exp %491 : vector<8x128xf32>
    %cst_246 = arith.constant 1.000000e+00 : f32
    %493 = vector.broadcast %cst_246 : f32 to vector<8x128xf32>
    %494 = arith.addf %493, %492 : vector<8x128xf32>
    %495 = arith.divf %493, %494 : vector<8x128xf32>
    %496 = arith.mulf %487, %468 : vector<8x128xf32>
    %497 = arith.mulf %481, %489 : vector<8x128xf32>
    %498 = arith.addf %496, %497 : vector<8x128xf32>
    %499 = math.tanh %498 : vector<8x128xf32>
    %500 = arith.mulf %495, %499 : vector<8x128xf32>
    %c1_247 = arith.constant 1 : index
    %c0_248 = arith.constant 0 : index
    %c0_249 = arith.constant 0 : index
    %501 = vector.load %arg12[%c1_247, %c0_248, %c0_249] : memref<2x8x128xf32, #tpu.memory_space<vmem>>, vector<1x8x128xf32>
    %502 = vector.shape_cast %501 : vector<1x8x128xf32> to vector<8x128xf32>
    %503 = vector.shape_cast %500 : vector<8x128xf32> to vector<1x8x128xf32>
    tpu.vector_store %arg12[%c1_247, %c0_248, %c0_249], %503 {strides = array<i32>} : memref<2x8x128xf32, #tpu.memory_space<vmem>>, vector<1x8x128xf32>,
    %c1_250 = arith.constant 1 : index
    %c0_251 = arith.constant 0 : index
    %c0_252 = arith.constant 0 : index
    %504 = vector.load %arg13[%c1_250, %c0_251, %c0_252] : memref<2x8x128xf32, #tpu.memory_space<vmem>>, vector<1x8x128xf32>
    %505 = vector.shape_cast %504 : vector<1x8x128xf32> to vector<8x128xf32>
    %506 = vector.shape_cast %498 : vector<8x128xf32> to vector<1x8x128xf32>
    tpu.vector_store %arg13[%c1_250, %c0_251, %c0_252], %506 {strides = array<i32>} : memref<2x8x128xf32, #tpu.memory_space<vmem>>, vector<1x8x128xf32>,
    %507 = arith.truncf %500 : vector<8x128xf32> to vector<8x128xbf16>
    %c0_253 = arith.constant 0 : index
    %c0_254 = arith.constant 0 : index
    %508 = vector.load %arg8[%c0_253, %c0_254] : memref<128x128xbf16, #tpu.memory_space<vmem>>, vector<128x128xbf16>
    %cst_255 = arith.constant dense<0.000000e+00> : vector<8x128xf32>
    %509 = tpu.matmul %507, %508, %cst_255 {dimension_numbers = #tpu.dot_dimension_numbers<[1], [0], [0], [1], [0, 0, 1, 1], [], []>} : vector<8x128xbf16>, vector<128x128xbf16>, vector<8x128xf32> -> vector<8x128xf32>
    %c0_256 = arith.constant 0 : index
    %c0_257 = arith.constant 0 : index
    %510 = vector.load %arg9[%c0_256, %c0_257] : memref<1x128xf32, #tpu.memory_space<vmem>>, vector<1x128xf32>
    %511 = vector.broadcast %510 : vector<1x128xf32> to vector<8x128xf32>
    %512 = arith.addf %509, %511 : vector<8x128xf32>
    %c3 = arith.constant 3 : index
    %c0_258 = arith.constant 0 : index
    %c0_259 = arith.constant 0 : index
    %513 = vector.load %arg11[%c3, %c0_258, %c0_259] : memref<4x8x128xf32, #tpu.memory_space<vmem>>, vector<1x8x128xf32>
    %514 = vector.shape_cast %513 : vector<1x8x128xf32> to vector<8x128xf32>
    %515 = vector.shape_cast %512 : vector<8x128xf32> to vector<1x8x128xf32>
    tpu.vector_store %arg11[%c3, %c0_258, %c0_259], %515 {strides = array<i32>} : memref<4x8x128xf32, #tpu.memory_space<vmem>>, vector<1x8x128xf32>,
    %516 = tpu.iota {dimensions = array<i32: 1>} : vector<1x128xi32>
    %517 = vector.extract_strided_slice %512 {offsets = [0, 0], sizes = [1, 128], strides = [1, 1]} : vector<8x128xf32> to vector<1x128xf32>
    %cst_260 = arith.constant dense<0xFF800000> : vector<1xf32>
    %518 = vector.multi_reduction <maximumf>, %517, %cst_260 [1] : vector<1x128xf32> to vector<1xf32>
    %519 = vector.shape_cast %518 : vector<1xf32> to vector<1x1xf32>
    %520 = vector.broadcast %519 : vector<1x1xf32> to vector<1x128xf32>
    %521 = arith.cmpf oge, %517, %520 : vector<1x128xf32>
    %c128_i32_261 = arith.constant 128 : i32
    %522 = vector.broadcast %c128_i32_261 : i32 to vector<1x128xi32>
    %523 = arith.select %521, %516, %522 : vector<1x128xi1>, vector<1x128xi32>
    %524 = vector.shape_cast %523 : vector<1x128xi32> to vector<1x1x128xi32>
    %cst_262 = arith.constant dense<2147483647> : vector<1xi32>
    %525 = vector.multi_reduction <minsi>, %524, %cst_262 [1, 2] : vector<1x1x128xi32> to vector<1xi32>
    %526 = vector.shape_cast %525 : vector<1xi32> to vector<1x1x1xi32>
    %527 = vector.extract %526[0, 0, 0] : i32 from vector<1x1x1xi32>
    %c127_i32_263 = arith.constant 127 : i32
    %528 = arith.minsi %527, %c127_i32_263 : i32
    %529 = arith.index_cast %528 : i32 to index
    %c0_264 = arith.constant 0 : index
    %530 = vector.load %arg10[%529, %c0_264] : memref<128x128xf32, #tpu.memory_space<vmem>>, vector<1x128xf32>
    %c0_265 = arith.constant 0 : index
    %c0_266 = arith.constant 0 : index
    %531 = vector.load %arg14[%c0_265, %c0_266] : memref<8x128xf32, #tpu.memory_space<vmem>>, vector<1x128xf32>
    tpu.vector_store %arg14[%c0_265, %c0_266], %530 {strides = array<i32>} : memref<8x128xf32, #tpu.memory_space<vmem>>, vector<1x128xf32>,
    %532 = vector.extract_strided_slice %512 {offsets = [1, 0], sizes = [1, 128], strides = [1, 1]} : vector<8x128xf32> to vector<1x128xf32>
    %cst_267 = arith.constant dense<0xFF800000> : vector<1xf32>
    %533 = vector.multi_reduction <maximumf>, %532, %cst_267 [1] : vector<1x128xf32> to vector<1xf32>
    %534 = vector.shape_cast %533 : vector<1xf32> to vector<1x1xf32>
    %535 = vector.broadcast %534 : vector<1x1xf32> to vector<1x128xf32>
    %536 = arith.cmpf oge, %532, %535 : vector<1x128xf32>
    %c128_i32_268 = arith.constant 128 : i32
    %537 = vector.broadcast %c128_i32_268 : i32 to vector<1x128xi32>
    %538 = arith.select %536, %516, %537 : vector<1x128xi1>, vector<1x128xi32>
    %539 = vector.shape_cast %538 : vector<1x128xi32> to vector<1x1x128xi32>
    %cst_269 = arith.constant dense<2147483647> : vector<1xi32>
    %540 = vector.multi_reduction <minsi>, %539, %cst_269 [1, 2] : vector<1x1x128xi32> to vector<1xi32>
    %541 = vector.shape_cast %540 : vector<1xi32> to vector<1x1x1xi32>
    %542 = vector.extract %541[0, 0, 0] : i32 from vector<1x1x1xi32>
    %c127_i32_270 = arith.constant 127 : i32
    %543 = arith.minsi %542, %c127_i32_270 : i32
    %544 = arith.index_cast %543 : i32 to index
    %c0_271 = arith.constant 0 : index
    %545 = vector.load %arg10[%544, %c0_271] : memref<128x128xf32, #tpu.memory_space<vmem>>, vector<1x128xf32>
    %c1_272 = arith.constant 1 : index
    %c0_273 = arith.constant 0 : index
    %546 = vector.load %arg14[%c1_272, %c0_273] : memref<8x128xf32, #tpu.memory_space<vmem>>, vector<1x128xf32>
    tpu.vector_store %arg14[%c1_272, %c0_273], %545 {strides = array<i32>} : memref<8x128xf32, #tpu.memory_space<vmem>>, vector<1x128xf32>,
    return
  }
  func.func @transform_0(%arg0: i32, %arg1: memref<8xi32, #tpu.memory_space<smem>>) -> (i32, i32, i32) {
    %c0_i32 = arith.constant 0 : i32
    %c0_i32_0 = arith.constant 0 : i32
    %c0_i32_1 = arith.constant 0 : i32
    return %arg0, %c0_i32, %c0_i32_0 : i32, i32, i32
  }
  func.func @transform_1(%arg0: i32, %arg1: memref<8xi32, #tpu.memory_space<smem>>) -> (i32, i32) {
    %c0_i32 = arith.constant 0 : i32
    %c0_i32_0 = arith.constant 0 : i32
    %c0_i32_1 = arith.constant 0 : i32
    return %c0_i32, %c0_i32_0 : i32, i32
  }
  func.func @transform_2(%arg0: i32, %arg1: memref<8xi32, #tpu.memory_space<smem>>) -> (i32, i32) {
    %c0_i32 = arith.constant 0 : i32
    %c0_i32_0 = arith.constant 0 : i32
    %c0_i32_1 = arith.constant 0 : i32
    return %c0_i32, %c0_i32_0 : i32, i32
  }
  func.func @transform_3(%arg0: i32, %arg1: memref<8xi32, #tpu.memory_space<smem>>) -> (i32, i32) {
    %c0_i32 = arith.constant 0 : i32
    %c0_i32_0 = arith.constant 0 : i32
    %c0_i32_1 = arith.constant 0 : i32
    return %c0_i32, %c0_i32_0 : i32, i32
  }
  func.func @transform_4(%arg0: i32, %arg1: memref<8xi32, #tpu.memory_space<smem>>) -> (i32, i32) {
    %c0_i32 = arith.constant 0 : i32
    %c0_i32_0 = arith.constant 0 : i32
    %c0_i32_1 = arith.constant 0 : i32
    return %c0_i32, %c0_i32_0 : i32, i32
  }
  func.func @transform_5(%arg0: i32, %arg1: memref<8xi32, #tpu.memory_space<smem>>) -> (i32, i32) {
    %c0_i32 = arith.constant 0 : i32
    %c0_i32_0 = arith.constant 0 : i32
    %c0_i32_1 = arith.constant 0 : i32
    return %c0_i32, %c0_i32_0 : i32, i32
  }
  func.func @transform_6(%arg0: i32, %arg1: memref<8xi32, #tpu.memory_space<smem>>) -> (i32, i32) {
    %c0_i32 = arith.constant 0 : i32
    %c0_i32_0 = arith.constant 0 : i32
    %c0_i32_1 = arith.constant 0 : i32
    return %c0_i32, %c0_i32_0 : i32, i32
  }
  func.func @transform_7(%arg0: i32, %arg1: memref<8xi32, #tpu.memory_space<smem>>) -> (i32, i32) {
    %c0_i32 = arith.constant 0 : i32
    %c0_i32_0 = arith.constant 0 : i32
    %c0_i32_1 = arith.constant 0 : i32
    return %c0_i32, %c0_i32_0 : i32, i32
  }
  func.func @transform_8(%arg0: i32, %arg1: memref<8xi32, #tpu.memory_space<smem>>) -> (i32, i32) {
    %c0_i32 = arith.constant 0 : i32
    %c0_i32_0 = arith.constant 0 : i32
    %c0_i32_1 = arith.constant 0 : i32
    return %c0_i32, %c0_i32_0 : i32, i32
  }
  func.func @transform_9(%arg0: i32, %arg1: memref<8xi32, #tpu.memory_space<smem>>) -> (i32, i32, i32) {
    %c0_i32 = arith.constant 0 : i32
    %c0_i32_0 = arith.constant 0 : i32
    %c0_i32_1 = arith.constant 0 : i32
    return %arg0, %c0_i32, %c0_i32_0 : i32, i32, i32
  }
}

module attributes {stable_mosaic.version = 11 : i64} {
  func.func @kernel(%arg0: memref<2x3x256xf32, #tpu.memory_space<vmem>>, %arg1: memref<1280x3xf32, #tpu.memory_space<vmem>>, %arg2: memref<1280x128xf32, #tpu.memory_space<vmem>>, %arg3: memref<1x128xf32, #tpu.memory_space<vmem>>, %arg4: memref<8x128xf32, #tpu.memory_space<vmem>>, %arg5: memref<8x1280xf32, #tpu.memory_space<vmem>>) attributes {dimension_semantics = [], scalar_prefetch = 0 : i64, scratch_operands = 1 : i64, tpu.core_type = #tpu.core_type<tc>} {
    %cst = arith.constant 0.000000e+00 : f32
    %0 = vector.broadcast %cst : f32 to vector<8x1280xf32>
    %c0 = arith.constant 0 : index
    %c0_0 = arith.constant 0 : index
    %1 = vector.load %arg5[%c0, %c0_0] : memref<8x1280xf32, #tpu.memory_space<vmem>>, vector<8x1280xf32>
    tpu.vector_store %arg5[%c0, %c0_0], %0 {strides = array<i32>} : memref<8x1280xf32, #tpu.memory_space<vmem>>, vector<8x1280xf32>,
    %cst_1 = arith.constant 1.000000e+00 : f32
    %2 = vector.broadcast %cst_1 : f32 to vector<1x256xf32>
    %c0_2 = arith.constant 0 : index
    %c0_3 = arith.constant 0 : index
    %c0_4 = arith.constant 0 : index
    %3 = vector.load %arg0[%c0_2, %c0_3, %c0_4] : memref<2x3x256xf32, #tpu.memory_space<vmem>>, vector<1x3x256xf32>
    %4 = vector.shape_cast %3 : vector<1x3x256xf32> to vector<3x256xf32>
    %c0_5 = arith.constant 0 : index
    %c0_6 = arith.constant 0 : index
    %5 = vector.load %arg1[%c0_5, %c0_6] : memref<1280x3xf32, #tpu.memory_space<vmem>>, vector<1280x3xf32>
    %cst_7 = arith.constant dense<0.000000e+00> : vector<1280x256xf32>
    %6 = tpu.matmul %5, %4, %cst_7 {dimension_numbers = #tpu.dot_dimension_numbers<[1], [0], [0], [1], [0, 0, 1, 1], [], []>} : vector<1280x3xf32>, vector<3x256xf32>, vector<1280x256xf32> -> vector<1280x256xf32>
    %cst_8 = arith.constant 0.000000e+00 : f32
    %7 = vector.broadcast %cst_8 : f32 to vector<1280x256xf32>
    %8 = arith.maximumf %6, %7 : vector<1280x256xf32>
    %cst_9 = arith.constant dense<0.000000e+00> : vector<1x1280xf32>
    %9 = tpu.matmul %2, %8, %cst_9 {dimension_numbers = #tpu.dot_dimension_numbers<[1], [1], [0], [0], [0, 0, 1, 0], [], []>} : vector<1x256xf32>, vector<1280x256xf32>, vector<1x1280xf32> -> vector<1x1280xf32>
    %cst_10 = arith.constant 3.906250e-03 : f32
    %10 = vector.broadcast %cst_10 : f32 to vector<1x1280xf32>
    %11 = arith.mulf %9, %10 : vector<1x1280xf32>
    %c0_11 = arith.constant 0 : index
    %c0_12 = arith.constant 0 : index
    %12 = vector.load %arg5[%c0_11, %c0_12] : memref<8x1280xf32, #tpu.memory_space<vmem>>, vector<1x1280xf32>
    tpu.vector_store %arg5[%c0_11, %c0_12], %11 {strides = array<i32>} : memref<8x1280xf32, #tpu.memory_space<vmem>>, vector<1x1280xf32>,
    %c1 = arith.constant 1 : index
    %c0_13 = arith.constant 0 : index
    %c0_14 = arith.constant 0 : index
    %13 = vector.load %arg0[%c1, %c0_13, %c0_14] : memref<2x3x256xf32, #tpu.memory_space<vmem>>, vector<1x3x256xf32>
    %14 = vector.shape_cast %13 : vector<1x3x256xf32> to vector<3x256xf32>
    %c0_15 = arith.constant 0 : index
    %c0_16 = arith.constant 0 : index
    %15 = vector.load %arg1[%c0_15, %c0_16] : memref<1280x3xf32, #tpu.memory_space<vmem>>, vector<1280x3xf32>
    %cst_17 = arith.constant dense<0.000000e+00> : vector<1280x256xf32>
    %16 = tpu.matmul %15, %14, %cst_17 {dimension_numbers = #tpu.dot_dimension_numbers<[1], [0], [0], [1], [0, 0, 1, 1], [], []>} : vector<1280x3xf32>, vector<3x256xf32>, vector<1280x256xf32> -> vector<1280x256xf32>
    %cst_18 = arith.constant 0.000000e+00 : f32
    %17 = vector.broadcast %cst_18 : f32 to vector<1280x256xf32>
    %18 = arith.maximumf %16, %17 : vector<1280x256xf32>
    %cst_19 = arith.constant dense<0.000000e+00> : vector<1x1280xf32>
    %19 = tpu.matmul %2, %18, %cst_19 {dimension_numbers = #tpu.dot_dimension_numbers<[1], [1], [0], [0], [0, 0, 1, 0], [], []>} : vector<1x256xf32>, vector<1280x256xf32>, vector<1x1280xf32> -> vector<1x1280xf32>
    %cst_20 = arith.constant 3.906250e-03 : f32
    %20 = vector.broadcast %cst_20 : f32 to vector<1x1280xf32>
    %21 = arith.mulf %19, %20 : vector<1x1280xf32>
    %c1_21 = arith.constant 1 : index
    %c0_22 = arith.constant 0 : index
    %22 = vector.load %arg5[%c1_21, %c0_22] : memref<8x1280xf32, #tpu.memory_space<vmem>>, vector<1x1280xf32>
    tpu.vector_store %arg5[%c1_21, %c0_22], %21 {strides = array<i32>} : memref<8x1280xf32, #tpu.memory_space<vmem>>, vector<1x1280xf32>,
    %c0_23 = arith.constant 0 : index
    %c0_24 = arith.constant 0 : index
    %23 = vector.load %arg5[%c0_23, %c0_24] : memref<8x1280xf32, #tpu.memory_space<vmem>>, vector<8x1280xf32>
    %c0_25 = arith.constant 0 : index
    %c0_26 = arith.constant 0 : index
    %24 = vector.load %arg2[%c0_25, %c0_26] : memref<1280x128xf32, #tpu.memory_space<vmem>>, vector<1280x128xf32>
    %cst_27 = arith.constant dense<0.000000e+00> : vector<8x128xf32>
    %25 = tpu.matmul %23, %24, %cst_27 {dimension_numbers = #tpu.dot_dimension_numbers<[1], [0], [0], [1], [0, 0, 1, 1], [], []>} : vector<8x1280xf32>, vector<1280x128xf32>, vector<8x128xf32> -> vector<8x128xf32>
    %c0_28 = arith.constant 0 : index
    %c0_29 = arith.constant 0 : index
    %26 = vector.load %arg3[%c0_28, %c0_29] : memref<1x128xf32, #tpu.memory_space<vmem>>, vector<1x128xf32>
    %27 = vector.broadcast %26 : vector<1x128xf32> to vector<8x128xf32>
    %28 = arith.addf %25, %27 : vector<8x128xf32>
    %cst_30 = arith.constant 0.000000e+00 : f32
    %29 = vector.broadcast %cst_30 : f32 to vector<8x128xf32>
    %30 = arith.maximumf %28, %29 : vector<8x128xf32>
    %31 = tpu.iota {dimensions = array<i32: 0>} : vector<8x128xi32>
    %c2_i32 = arith.constant 2 : i32
    %32 = vector.broadcast %c2_i32 : i32 to vector<8x128xi32>
    %33 = arith.cmpi slt, %31, %32 : vector<8x128xi32>
    %cst_31 = arith.constant 0.000000e+00 : f32
    %34 = vector.broadcast %cst_31 : f32 to vector<8x128xf32>
    %35 = arith.select %33, %30, %34 : vector<8x128xi1>, vector<8x128xf32>
    %c0_32 = arith.constant 0 : index
    %c0_33 = arith.constant 0 : index
    %36 = vector.load %arg4[%c0_32, %c0_33] : memref<8x128xf32, #tpu.memory_space<vmem>>, vector<8x128xf32>
    tpu.vector_store %arg4[%c0_32, %c0_33], %35 {strides = array<i32>} : memref<8x128xf32, #tpu.memory_space<vmem>>, vector<8x128xf32>,
    return
  }
}

</mosaic_0001>

<llo_original>
// kernel: _lambda_.2
$region0: #{_lambda_.2}
  #allocation0 [shape = 'u32[]', space=smem, size = 0x4, offset = 0x4, fixed_abs, tag = 'smem constant byte address 0x4 - core index']
  #allocation1 [shape = 'u32[144,128]{1,0:T(1,128)}', space=vmem, size = 0x12000, scoped, tag = 'internal scratch']
  #allocation2 [shape = 'f32[8,1280]{1,0:T(8,128)}', space=vmem, size = 0xa000, scoped, tag = 'scratch operand']
  %s0 = inlined_call_operand.vmem [shape: f32[2,3,256], index: 0, kind: input, shape index: {}]
  %s1 = inlined_call_operand.vmem [shape: f32[1280,3], index: 1, kind: input, shape index: {}]
  %s2 = inlined_call_operand.vmem [shape: f32[1280,128], index: 2, kind: input, shape index: {}]
  %s3 = inlined_call_operand.vmem [shape: f32[1,128], index: 3, kind: input, shape index: {}]
  %s4 = inlined_call_operand.vmem [shape: f32[8,128], index: 4, kind: output, shape index: {}]
  %s5 = sld [smem:[#allocation0]]
  $region26: #{_lambda_.2} parent=0
    _
  %s7 = ssub.s32 1, %s5
  %s8 = scalar_select 0, %s7, %s5
  // Predicated region
  $region2: #{_lambda_.2} parent=0 // pred_check
    _
  $region3: #{_lambda_.2} parent=0 // pred_check_branch
    %10 = sbr.rel (0) target = $region5
  $region4: #{_lambda_.2} parent=0 // pred_region
    _
  $region5: #{_lambda_.2} parent=0 // pred_fallthru
    _
  // Predicated region
  $region6: #{_lambda_.2} parent=0 // pred_check
    _
  $region7: #{_lambda_.2} parent=0 // pred_check_branch
    %12 = sbr.rel (0) target = $region9
  $region8: #{_lambda_.2} parent=0 // pred_region
    _
  $region9: #{_lambda_.2} parent=0 // pred_fallthru
    _
  // Predicated region
  $region10: #{_lambda_.2} parent=0 // pred_check
    _
  $region11: #{_lambda_.2} parent=0 // pred_check_branch
    %14 = sbr.rel (0) target = $region13
  $region12: #{_lambda_.2} parent=0 // pred_region
    _
  $region13: #{_lambda_.2} parent=0 // pred_fallthru
    _
  // Predicated region
  $region14: #{_lambda_.2} parent=0 // pred_check
    _
  $region15: #{_lambda_.2} parent=0 // pred_check_branch
    %16 = sbr.rel (0) target = $region17
  $region16: #{_lambda_.2} parent=0 // pred_region
    _
  $region17: #{_lambda_.2} parent=0 // pred_fallthru
    _
  %17 = vst [vmem:[#allocation2] sm:$0xff] 0.0
  %18 = vst [vmem:[#allocation2 + $0x8] sm:$0xff] 0.0
  %19 = vst [vmem:[#allocation2 + $0x10] sm:$0xff] 0.0
  %20 = vst [vmem:[#allocation2 + $0x18] sm:$0xff] 0.0
  %21 = vst [vmem:[#allocation2 + $0x20] sm:$0xff] 0.0
  %22 = vst [vmem:[#allocation2 + $0x28] sm:$0xff] 0.0
  %23 = vst [vmem:[#allocation2 + $0x30] sm:$0xff] 0.0
  %24 = vst [vmem:[#allocation2 + $0x38] sm:$0xff] 0.0
  %25 = vst [vmem:[#allocation2 + $0x40] sm:$0xff] 0.0
  %26 = vst [vmem:[#allocation2 + $0x48] sm:$0xff] 0.0
  %v27 = vld [vmem:[%s0] sm:$0x77]
  %v28 = vld [vmem:[%s1] sm:$0xff]
  %v29 = vld [vmem:[%s1 + $0x8] sm:$0xff]
  %v30 = vld [vmem:[%s1 + $0x10] sm:$0xff]
  %v31 = vld [vmem:[%s1 + $0x18] sm:$0xff]
  %v32 = vld [vmem:[%s1 + $0x20] sm:$0xff]
  %v33 = vld [vmem:[%s1 + $0x28] sm:$0xff]
  %v34 = vld [vmem:[%s1 + $0x30] sm:$0xff]
  %v35 = vld [vmem:[%s1 + $0x38] sm:$0xff]
  %v36 = vld [vmem:[%s1 + $0x40] sm:$0xff]
  %v37 = vld [vmem:[%s1 + $0x48] sm:$0xff]
  %v38 = vld [vmem:[%s1 + $0x50] sm:$0xff]
  %v39 = vld [vmem:[%s1 + $0x58] sm:$0xff]
  %v40 = vld [vmem:[%s1 + $0x60] sm:$0xff]
  %v41 = vld [vmem:[%s1 + $0x68] sm:$0xff]
  %v42 = vld [vmem:[%s1 + $0x70] sm:$0xff]
  %v43 = vld [vmem:[%s1 + $0x78] sm:$0xff]
  %v44 = vld [vmem:[%s1 + $0x80] sm:$0xff]
  %v45 = vld [vmem:[%s1 + $0x88] sm:$0xff]
  %v46 = vld [vmem:[%s1 + $0x90] sm:$0xff]
  %v47 = vld [vmem:[%s1 + $0x98] sm:$0xff]
  %v48 = vld [vmem:[%s1 + $0xa0] sm:$0xff]
  %v49 = vld [vmem:[%s1 + $0xa8] sm:$0xff]
  %v50 = vld [vmem:[%s1 + $0xb0] sm:$0xff]
  %v51 = vld [vmem:[%s1 + $0xb8] sm:$0xff]
  %v52 = vld [vmem:[%s1 + $0xc0] sm:$0xff]
  %v53 = vld [vmem:[%s1 + $0xc8] sm:$0xff]
  %v54 = vld [vmem:[%s1 + $0xd0] sm:$0xff]
  %v55 = vld [vmem:[%s1 + $0xd8] sm:$0xff]
  %v56 = vld [vmem:[%s1 + $0xe0] sm:$0xff]
  %v57 = vld [vmem:[%s1 + $0xe8] sm:$0xff]
  %v58 = vld [vmem:[%s1 + $0xf0] sm:$0xff]
  %v59 = vld [vmem:[%s1 + $0xf8] sm:$0xff]
  %v60 = vld [vmem:[%s1 + $0x100] sm:$0xff]
  %v61 = vld [vmem:[%s1 + $0x108] sm:$0xff]
  %v62 = vld [vmem:[%s1 + $0x110] sm:$0xff]
  %v63 = vld [vmem:[%s1 + $0x118] sm:$0xff]
  %v64 = vld [vmem:[%s1 + $0x120] sm:$0xff]
  %v65 = vld [vmem:[%s1 + $0x128] sm:$0xff]
  %v66 = vld [vmem:[%s1 + $0x130] sm:$0xff]
  %v67 = vld [vmem:[%s1 + $0x138] sm:$0xff]
  %v68 = vld [vmem:[%s1 + $0x140] sm:$0xff]
  %v69 = vld [vmem:[%s1 + $0x148] sm:$0xff]
  %v70 = vld [vmem:[%s1 + $0x150] sm:$0xff]
  %v71 = vld [vmem:[%s1 + $0x158] sm:$0xff]
  %v72 = vld [vmem:[%s1 + $0x160] sm:$0xff]
  %v73 = vld [vmem:[%s1 + $0x168] sm:$0xff]
  %v74 = vld [vmem:[%s1 + $0x170] sm:$0xff]
  %v75 = vld [vmem:[%s1 + $0x178] sm:$0xff]
  %v76 = vld [vmem:[%s1 + $0x180] sm:$0xff]
  %v77 = vld [vmem:[%s1 + $0x188] sm:$0xff]
  %v78 = vld [vmem:[%s1 + $0x190] sm:$0xff]
  %v79 = vld [vmem:[%s1 + $0x198] sm:$0xff]
  %v80 = vld [vmem:[%s1 + $0x1a0] sm:$0xff]
  %v81 = vld [vmem:[%s1 + $0x1a8] sm:$0xff]
  %v82 = vld [vmem:[%s1 + $0x1b0] sm:$0xff]
  %v83 = vld [vmem:[%s1 + $0x1b8] sm:$0xff]
  %v84 = vld [vmem:[%s1 + $0x1c0] sm:$0xff]
  %v85 = vld [vmem:[%s1 + $0x1c8] sm:$0xff]
  %v86 = vld [vmem:[%s1 + $0x1d0] sm:$0xff]
  %v87 = vld [vmem:[%s1 + $0x1d8] sm:$0xff]
  %v88 = vld [vmem:[%s1 + $0x1e0] sm:$0xff]
  %v89 = vld [vmem:[%s1 + $0x1e8] sm:$0xff]
  %v90 = vld [vmem:[%s1 + $0x1f0] sm:$0xff]
  %v91 = vld [vmem:[%s1 + $0x1f8] sm:$0xff]
  %v92 = vld [vmem:[%s1 + $0x200] sm:$0xff]
  %v93 = vld [vmem:[%s1 + $0x208] sm:$0xff]
  %v94 = vld [vmem:[%s1 + $0x210] sm:$0xff]
  %v95 = vld [vmem:[%s1 + $0x218] sm:$0xff]
  %v96 = vld [vmem:[%s1 + $0x220] sm:$0xff]
  %v97 = vld [vmem:[%s1 + $0x228] sm:$0xff]
  %v98 = vld [vmem:[%s1 + $0x230] sm:$0xff]
  %v99 = vld [vmem:[%s1 + $0x238] sm:$0xff]
  %v100 = vld [vmem:[%s1 + $0x240] sm:$0xff]
  %v101 = vld [vmem:[%s1 + $0x248] sm:$0xff]
  %v102 = vld [vmem:[%s1 + $0x250] sm:$0xff]
  %v103 = vld [vmem:[%s1 + $0x258] sm:$0xff]
  %v104 = vld [vmem:[%s1 + $0x260] sm:$0xff]
  %v105 = vld [vmem:[%s1 + $0x268] sm:$0xff]
  %v106 = vld [vmem:[%s1 + $0x270] sm:$0xff]
  %v107 = vld [vmem:[%s1 + $0x278] sm:$0xff]
  %v108 = vld [vmem:[%s1 + $0x280] sm:$0xff]
  %v109 = vld [vmem:[%s1 + $0x288] sm:$0xff]
  %v110 = vld [vmem:[%s1 + $0x290] sm:$0xff]
  %v111 = vld [vmem:[%s1 + $0x298] sm:$0xff]
  %v112 = vld [vmem:[%s1 + $0x2a0] sm:$0xff]
  %v113 = vld [vmem:[%s1 + $0x2a8] sm:$0xff]
  %v114 = vld [vmem:[%s1 + $0x2b0] sm:$0xff]
  %v115 = vld [vmem:[%s1 + $0x2b8] sm:$0xff]
  %v116 = vld [vmem:[%s1 + $0x2c0] sm:$0xff]
  %v117 = vld [vmem:[%s1 + $0x2c8] sm:$0xff]
  %v118 = vld [vmem:[%s1 + $0x2d0] sm:$0xff]
  %v119 = vld [vmem:[%s1 + $0x2d8] sm:$0xff]
  %v120 = vld [vmem:[%s1 + $0x2e0] sm:$0xff]
  %v121 = vld [vmem:[%s1 + $0x2e8] sm:$0xff]
  %v122 = vld [vmem:[%s1 + $0x2f0] sm:$0xff]
  %v123 = vld [vmem:[%s1 + $0x2f8] sm:$0xff]
  %v124 = vld [vmem:[%s1 + $0x300] sm:$0xff]
  %v125 = vld [vmem:[%s1 + $0x308] sm:$0xff]
  %v126 = vld [vmem:[%s1 + $0x310] sm:$0xff]
  %v127 = vld [vmem:[%s1 + $0x318] sm:$0xff]
  %v128 = vld [vmem:[%s1 + $0x320] sm:$0xff]
  %v129 = vld [vmem:[%s1 + $0x328] sm:$0xff]
  %v130 = vld [vmem:[%s1 + $0x330] sm:$0xff]
  %v131 = vld [vmem:[%s1 + $0x338] sm:$0xff]
  %v132 = vld [vmem:[%s1 + $0x340] sm:$0xff]
  %v133 = vld [vmem:[%s1 + $0x348] sm:$0xff]
  %v134 = vld [vmem:[%s1 + $0x350] sm:$0xff]
  %v135 = vld [vmem:[%s1 + $0x358] sm:$0xff]
  %v136 = vld [vmem:[%s1 + $0x360] sm:$0xff]
  %v137 = vld [vmem:[%s1 + $0x368] sm:$0xff]
  %v138 = vld [vmem:[%s1 + $0x370] sm:$0xff]
  %v139 = vld [vmem:[%s1 + $0x378] sm:$0xff]
  %v140 = vld [vmem:[%s1 + $0x380] sm:$0xff]
  %v141 = vld [vmem:[%s1 + $0x388] sm:$0xff]
  %v142 = vld [vmem:[%s1 + $0x390] sm:$0xff]
  %v143 = vld [vmem:[%s1 + $0x398] sm:$0xff]
  %v144 = vld [vmem:[%s1 + $0x3a0] sm:$0xff]
  %v145 = vld [vmem:[%s1 + $0x3a8] sm:$0xff]
  %v146 = vld [vmem:[%s1 + $0x3b0] sm:$0xff]
  %v147 = vld [vmem:[%s1 + $0x3b8] sm:$0xff]
  %v148 = vld [vmem:[%s1 + $0x3c0] sm:$0xff]
  %v149 = vld [vmem:[%s1 + $0x3c8] sm:$0xff]
  %v150 = vld [vmem:[%s1 + $0x3d0] sm:$0xff]
  %v151 = vld [vmem:[%s1 + $0x3d8] sm:$0xff]
  %v152 = vld [vmem:[%s1 + $0x3e0] sm:$0xff]
  %v153 = vld [vmem:[%s1 + $0x3e8] sm:$0xff]
  %v154 = vld [vmem:[%s1 + $0x3f0] sm:$0xff]
  %v155 = vld [vmem:[%s1 + $0x3f8] sm:$0xff]
  %v156 = vld [vmem:[%s1 + $0x400] sm:$0xff]
  %v157 = vld [vmem:[%s1 + $0x408] sm:$0xff]
  %v158 = vld [vmem:[%s1 + $0x410] sm:$0xff]
  %v159 = vld [vmem:[%s1 + $0x418] sm:$0xff]
  %v160 = vld [vmem:[%s1 + $0x420] sm:$0xff]
  %v161 = vld [vmem:[%s1 + $0x428] sm:$0xff]
  %v162 = vld [vmem:[%s1 + $0x430] sm:$0xff]
  %v163 = vld [vmem:[%s1 + $0x438] sm:$0xff]
  %v164 = vld [vmem:[%s1 + $0x440] sm:$0xff]
  %v165 = vld [vmem:[%s1 + $0x448] sm:$0xff]
  %v166 = vld [vmem:[%s1 + $0x450] sm:$0xff]
  %v167 = vld [vmem:[%s1 + $0x458] sm:$0xff]
  %v168 = vld [vmem:[%s1 + $0x460] sm:$0xff]
  %v169 = vld [vmem:[%s1 + $0x468] sm:$0xff]
  %v170 = vld [vmem:[%s1 + $0x470] sm:$0xff]
  %v171 = vld [vmem:[%s1 + $0x478] sm:$0xff]
  %v172 = vld [vmem:[%s1 + $0x480] sm:$0xff]
  %v173 = vld [vmem:[%s1 + $0x488] sm:$0xff]
  %v174 = vld [vmem:[%s1 + $0x490] sm:$0xff]
  %v175 = vld [vmem:[%s1 + $0x498] sm:$0xff]
  %v176 = vld [vmem:[%s1 + $0x4a0] sm:$0xff]
  %v177 = vld [vmem:[%s1 + $0x4a8] sm:$0xff]
  %v178 = vld [vmem:[%s1 + $0x4b0] sm:$0xff]
  %v179 = vld [vmem:[%s1 + $0x4b8] sm:$0xff]
  %v180 = vld [vmem:[%s1 + $0x4c0] sm:$0xff]
  %v181 = vld [vmem:[%s1 + $0x4c8] sm:$0xff]
  %v182 = vld [vmem:[%s1 + $0x4d0] sm:$0xff]
  %v183 = vld [vmem:[%s1 + $0x4d8] sm:$0xff]
  %v184 = vld [vmem:[%s1 + $0x4e0] sm:$0xff]
  %v185 = vld [vmem:[%s1 + $0x4e8] sm:$0xff]
  %v186 = vld [vmem:[%s1 + $0x4f0] sm:$0xff]
  %v187 = vld [vmem:[%s1 + $0x4f8] sm:$0xff]
  %v189 = vcombine.high %v27, %v27
  %vm190 = vcmask 23552
  %v192 = vsel %vm190, %v28, 0
  %v195 = vsel %vm190, %v29, 0
  %v198 = vsel %vm190, %v30, 0
  %v201 = vsel %vm190, %v31, 0
  %v204 = vsel %vm190, %v32, 0
  %v207 = vsel %vm190, %v33, 0
  %v210 = vsel %vm190, %v34, 0
  %v213 = vsel %vm190, %v35, 0
  %v216 = vsel %vm190, %v36, 0
  %v219 = vsel %vm190, %v37, 0
  %v222 = vsel %vm190, %v38, 0
  %v225 = vsel %vm190, %v39, 0
  %v228 = vsel %vm190, %v40, 0
  %v231 = vsel %vm190, %v41, 0
  %v234 = vsel %vm190, %v42, 0
  %v237 = vsel %vm190, %v43, 0
  %v240 = vsel %vm190, %v44, 0
  %v243 = vsel %vm190, %v45, 0
  %v246 = vsel %vm190, %v46, 0
  %v249 = vsel %vm190, %v47, 0
  %v252 = vsel %vm190, %v48, 0
  %v255 = vsel %vm190, %v49, 0
  %v258 = vsel %vm190, %v50, 0
  %v261 = vsel %vm190, %v51, 0
  %v264 = vsel %vm190, %v52, 0
  %v267 = vsel %vm190, %v53, 0
  %v270 = vsel %vm190, %v54, 0
  %v273 = vsel %vm190, %v55, 0
  %v276 = vsel %vm190, %v56, 0
  %v279 = vsel %vm190, %v57, 0
  %v282 = vsel %vm190, %v58, 0
  %v285 = vsel %vm190, %v59, 0
  %v288 = vsel %vm190, %v60, 0
  %v291 = vsel %vm190, %v61, 0
  %v294 = vsel %vm190, %v62, 0
  %v297 = vsel %vm190, %v63, 0
  %v300 = vsel %vm190, %v64, 0
  %v303 = vsel %vm190, %v65, 0
  %v306 = vsel %vm190, %v66, 0
  %v309 = vsel %vm190, %v67, 0
  %v312 = vsel %vm190, %v68, 0
  %v315 = vsel %vm190, %v69, 0
  %v318 = vsel %vm190, %v70, 0
  %v321 = vsel %vm190, %v71, 0
  %v324 = vsel %vm190, %v72, 0
  %v327 = vsel %vm190, %v73, 0
  %v330 = vsel %vm190, %v74, 0
  %v333 = vsel %vm190, %v75, 0
  %v336 = vsel %vm190, %v76, 0
  %v339 = vsel %vm190, %v77, 0
  %v342 = vsel %vm190, %v78, 0
  %v345 = vsel %vm190, %v79, 0
  %v348 = vsel %vm190, %v80, 0
  %v351 = vsel %vm190, %v81, 0
  %v354 = vsel %vm190, %v82, 0
  %v357 = vsel %vm190, %v83, 0
  %v360 = vsel %vm190, %v84, 0
  %v363 = vsel %vm190, %v85, 0
  %v366 = vsel %vm190, %v86, 0
  %v369 = vsel %vm190, %v87, 0
  %v372 = vsel %vm190, %v88, 0
  %v375 = vsel %vm190, %v89, 0
  %v378 = vsel %vm190, %v90, 0
  %v381 = vsel %vm190, %v91, 0
  %v384 = vsel %vm190, %v92, 0
  %v387 = vsel %vm190, %v93, 0
  %v390 = vsel %vm190, %v94, 0
  %v393 = vsel %vm190, %v95, 0
  %v396 = vsel %vm190, %v96, 0
  %v399 = vsel %vm190, %v97, 0
  %v402 = vsel %vm190, %v98, 0
  %v405 = vsel %vm190, %v99, 0
  %v408 = vsel %vm190, %v100, 0
  %v411 = vsel %vm190, %v101, 0
  %v414 = vsel %vm190, %v102, 0
  %v417 = vsel %vm190, %v103, 0
  %v420 = vsel %vm190, %v104, 0
  %v423 = vsel %vm190, %v105, 0
  %v426 = vsel %vm190, %v106, 0
  %v429 = vsel %vm190, %v107, 0
  %v432 = vsel %vm190, %v108, 0
  %v435 = vsel %vm190, %v109, 0
  %v438 = vsel %vm190, %v110, 0
  %v441 = vsel %vm190, %v111, 0
  %v444 = vsel %vm190, %v112, 0
  %v447 = vsel %vm190, %v113, 0
  %v450 = vsel %vm190, %v114, 0
  %v453 = vsel %vm190, %v115, 0
  %v456 = vsel %vm190, %v116, 0
  %v459 = vsel %vm190, %v117, 0
  %v462 = vsel %vm190, %v118, 0
  %v465 = vsel %vm190, %v119, 0
  %v468 = vsel %vm190, %v120, 0
  %v471 = vsel %vm190, %v121, 0
  %v474 = vsel %vm190, %v122, 0
  %v477 = vsel %vm190, %v123, 0
  %v480 = vsel %vm190, %v124, 0
  %v483 = vsel %vm190, %v125, 0
  %v486 = vsel %vm190, %v126, 0
  %v489 = vsel %vm190, %v127, 0
  %v492 = vsel %vm190, %v128, 0
  %v495 = vsel %vm190, %v129, 0
  %v498 = vsel %vm190, %v130, 0
  %v501 = vsel %vm190, %v131, 0
  %v504 = vsel %vm190, %v132, 0
  %v507 = vsel %vm190, %v133, 0
  %v510 = vsel %vm190, %v134, 0
  %v513 = vsel %vm190, %v135, 0
  %v516 = vsel %vm190, %v136, 0
  %v519 = vsel %vm190, %v137, 0
  %v522 = vsel %vm190, %v138, 0
  %v525 = vsel %vm190, %v139, 0
  %v528 = vsel %vm190, %v140, 0
  %v531 = vsel %vm190, %v141, 0
  %v534 = vsel %vm190, %v142, 0
  %v537 = vsel %vm190, %v143, 0
  %v540 = vsel %vm190, %v144, 0
  %v543 = vsel %vm190, %v145, 0
  %v546 = vsel %vm190, %v146, 0
  %v549 = vsel %vm190, %v147, 0
  %v552 = vsel %vm190, %v148, 0
  %v555 = vsel %vm190, %v149, 0
  %v558 = vsel %vm190, %v150, 0
  %v561 = vsel %vm190, %v151, 0
  %v564 = vsel %vm190, %v152, 0
  %v567 = vsel %vm190, %v153, 0
  %v570 = vsel %vm190, %v154, 0
  %v573 = vsel %vm190, %v155, 0
  %v576 = vsel %vm190, %v156, 0
  %v579 = vsel %vm190, %v157, 0
  %v582 = vsel %vm190, %v158, 0
  %v585 = vsel %vm190, %v159, 0
  %v588 = vsel %vm190, %v160, 0
  %v591 = vsel %vm190, %v161, 0
  %v594 = vsel %vm190, %v162, 0
  %v597 = vsel %vm190, %v163, 0
  %v600 = vsel %vm190, %v164, 0
  %v603 = vsel %vm190, %v165, 0
  %v606 = vsel %vm190, %v166, 0
  %v609 = vsel %vm190, %v167, 0
  %v612 = vsel %vm190, %v168, 0
  %v615 = vsel %vm190, %v169, 0
  %v618 = vsel %vm190, %v170, 0
  %v621 = vsel %vm190, %v171, 0
  %v624 = vsel %vm190, %v172, 0
  %v627 = vsel %vm190, %v173, 0
  %v630 = vsel %vm190, %v174, 0
  %v633 = vsel %vm190, %v175, 0
  %v636 = vsel %vm190, %v176, 0
  %v639 = vsel %vm190, %v177, 0
  %v642 = vsel %vm190, %v178, 0
  %v645 = vsel %vm190, %v179, 0
  %v648 = vsel %vm190, %v180, 0
  %v651 = vsel %vm190, %v181, 0
  %v654 = vsel %vm190, %v182, 0
  %v657 = vsel %vm190, %v183, 0
  %v660 = vsel %vm190, %v184, 0
  %v663 = vsel %vm190, %v185, 0
  %v666 = vsel %vm190, %v186, 0
  %v669 = vsel %vm190, %v187, 0
  %vm671 = vcmask 1042432
  %v672 = vsel %vm671, %v27, 0
  %v674 = vsel %vm671, %v189, 0
  %676 = vmatprep.subr.mxu0 %v674
  %677 = vmatpush1.msra.mxu0 %v672
  %678 = vmatprep.subr.mxu0 0.0
  %679 = vmatpush1.msra.mxu0 0.0
  %680 = vmatprep.subr.mxu0 0.0
  %681 = vmatpush1.msra.mxu0 0.0
  %682 = vmatprep.subr.mxu0 0.0
  %683 = vmatpush1.msra.mxu0 0.0
  %684 = vmatprep.subr.mxu0 0.0
  %685 = vmatpush1.msra.mxu0 0.0
  %686 = vmatprep.subr.mxu0 0.0
  %687 = vmatpush1.msra.mxu0 0.0
  %688 = vmatprep.subr.mxu0 0.0
  %689 = vmatpush1.msra.mxu0 0.0
  %690 = vmatprep.subr.mxu0 0.0
  %691 = vmatpush1.msra.mxu0 0.0
  %692 = vmatprep.subr.mxu0 0.0
  %693 = vmatpush1.msra.mxu0 0.0
  %694 = vmatprep.subr.mxu0 0.0
  %695 = vmatpush1.msra.mxu0 0.0
  %696 = vmatprep.subr.mxu0 0.0
  %697 = vmatpush1.msra.mxu0 0.0
  %698 = vmatprep.subr.mxu0 0.0
  %699 = vmatpush1.msra.mxu0 0.0
  %700 = vmatprep.subr.mxu0 0.0
  %701 = vmatpush1.msra.mxu0 0.0
  %702 = vmatprep.subr.mxu0 0.0
  %703 = vmatpush1.msra.mxu0 0.0
  %704 = vmatprep.subr.mxu0 0.0
  %705 = vmatpush1.msra.mxu0 0.0
  %706 = vmatprep.subr.mxu0 0.0
  %707 = vmatpush1.msra.mxu0 0.0
  %708 = vmatprep.subr.mxu0 0.0
  %709 = vmatpush1.msra.mxu0 0.0
  %710 = vmatprep.subr.mxu0 0.0
  %711 = vmatpush1.msra.mxu0 0.0
  %712 = vmatprep.subr.mxu0 0.0
  %713 = vmatpush1.msra.mxu0 0.0
  %714 = vmatprep.subr.mxu0 0.0
  %715 = vmatpush1.msra.mxu0 0.0
  %716 = vmatprep.subr.mxu0 0.0
  %717 = vmatpush1.msra.mxu0 0.0
  %718 = vmatprep.subr.mxu0 0.0
  %719 = vmatpush1.msra.mxu0 0.0
  %720 = vmatprep.subr.mxu0 0.0
  %721 = vmatpush1.msra.mxu0 0.0
  %722 = vmatprep.subr.mxu0 0.0
  %723 = vmatpush1.msra.mxu0 0.0
  %724 = vmatprep.subr.mxu0 0.0
  %725 = vmatpush1.msra.mxu0 0.0
  %726 = vmatprep.subr.mxu0 0.0
  %727 = vmatpush1.msra.mxu0 0.0
  %728 = vmatprep.subr.mxu0 0.0
  %729 = vmatpush1.msra.mxu0 0.0
  %730 = vmatprep.subr.mxu0 0.0
  %731 = vmatpush1.msra.mxu0 0.0
  %732 = vmatprep.subr.mxu0 0.0
  %733 = vmatpush1.msra.mxu0 0.0
  %734 = vmatprep.subr.mxu0 0.0
  %735 = vmatpush1.msra.mxu0 0.0
  %736 = vmatprep.subr.mxu0 0.0
  %737 = vmatpush1.msra.mxu0 0.0
  %738 = vmatprep.subr.mxu0 0.0
  %739 = vmatpush1.msra.mxu0 0.0
  %740 = vmatprep.mubr.f32.mxu0 0.0
  %741 = vmatmul.mubr.f32.gmra.mrb[0].mxu0 %v192
  %v742 = vpop.f32.mrb[0].mxu0
  %v743 = vadd.f32 0.0, %v742
  %v744 = vpop.f32.mrb[0].mxu0
  %v745 = vadd.f32 0.0, %v744
  %746 = vmatprep.mubr.f32.mxu0 0.0
  %747 = vmatmul.mubr.f32.gmra.mrb[0].mxu0 %v195
  %v748 = vpop.f32.mrb[0].mxu0
  %v749 = vadd.f32 0.0, %v748
  %v750 = vpop.f32.mrb[0].mxu0
  %v751 = vadd.f32 0.0, %v750
  %752 = vmatprep.mubr.f32.mxu0 0.0
  %753 = vmatmul.mubr.f32.gmra.mrb[0].mxu0 %v198
  %v754 = vpop.f32.mrb[0].mxu0
  %v755 = vadd.f32 0.0, %v754
  %v756 = vpop.f32.mrb[0].mxu0
  %v757 = vadd.f32 0.0, %v756
  %758 = vmatprep.mubr.f32.mxu0 0.0
  %759 = vmatmul.mubr.f32.gmra.mrb[0].mxu0 %v201
  %v760 = vpop.f32.mrb[0].mxu0
  %v761 = vadd.f32 0.0, %v760
  %v762 = vpop.f32.mrb[0].mxu0
  %v763 = vadd.f32 0.0, %v762
  %764 = vmatprep.mubr.f32.mxu0 0.0
  %765 = vmatmul.mubr.f32.gmra.mrb[0].mxu0 %v204
  %v766 = vpop.f32.mrb[0].mxu0
  %v767 = vadd.f32 0.0, %v766
  %v768 = vpop.f32.mrb[0].mxu0
  %v769 = vadd.f32 0.0, %v768
  %770 = vmatprep.mubr.f32.mxu0 0.0
  %771 = vmatmul.mubr.f32.gmra.mrb[0].mxu0 %v207
  %v772 = vpop.f32.mrb[0].mxu0
  %v773 = vadd.f32 0.0, %v772
  %v774 = vpop.f32.mrb[0].mxu0
  %v775 = vadd.f32 0.0, %v774
  %776 = vmatprep.mubr.f32.mxu0 0.0
  %777 = vmatmul.mubr.f32.gmra.mrb[0].mxu0 %v210
  %v778 = vpop.f32.mrb[0].mxu0
  %v779 = vadd.f32 0.0, %v778
  %v780 = vpop.f32.mrb[0].mxu0
  %v781 = vadd.f32 0.0, %v780
  %782 = vmatprep.mubr.f32.mxu0 0.0
  %783 = vmatmul.mubr.f32.gmra.mrb[0].mxu0 %v213
  %v784 = vpop.f32.mrb[0].mxu0
  %v785 = vadd.f32 0.0, %v784
  %v786 = vpop.f32.mrb[0].mxu0
  %v787 = vadd.f32 0.0, %v786
  %788 = vmatprep.mubr.f32.mxu0 0.0
  %789 = vmatmul.mubr.f32.gmra.mrb[0].mxu0 %v216
  %v790 = vpop.f32.mrb[0].mxu0
  %v791 = vadd.f32 0.0, %v790
  %v792 = vpop.f32.mrb[0].mxu0
  %v793 = vadd.f32 0.0, %v792
  %794 = vmatprep.mubr.f32.mxu0 0.0
  %795 = vmatmul.mubr.f32.gmra.mrb[0].mxu0 %v219
  %v796 = vpop.f32.mrb[0].mxu0
  %v797 = vadd.f32 0.0, %v796
  %v798 = vpop.f32.mrb[0].mxu0
  %v799 = vadd.f32 0.0, %v798
  %800 = vmatprep.mubr.f32.mxu0 0.0
  %801 = vmatmul.mubr.f32.gmra.mrb[0].mxu0 %v222
  %v802 = vpop.f32.mrb[0].mxu0
  %v803 = vadd.f32 0.0, %v802
  %v804 = vpop.f32.mrb[0].mxu0
  %v805 = vadd.f32 0.0, %v804
  %806 = vmatprep.mubr.f32.mxu0 0.0
  %807 = vmatmul.mubr.f32.gmra.mrb[0].mxu0 %v225
  %v808 = vpop.f32.mrb[0].mxu0
  %v809 = vadd.f32 0.0, %v808
  %v810 = vpop.f32.mrb[0].mxu0
  %v811 = vadd.f32 0.0, %v810
  %812 = vmatprep.mubr.f32.mxu0 0.0
  %813 = vmatmul.mubr.f32.gmra.mrb[0].mxu0 %v228
  %v814 = vpop.f32.mrb[0].mxu0
  %v815 = vadd.f32 0.0, %v814
  %v816 = vpop.f32.mrb[0].mxu0
  %v817 = vadd.f32 0.0, %v816
  %818 = vmatprep.mubr.f32.mxu0 0.0
  %819 = vmatmul.mubr.f32.gmra.mrb[0].mxu0 %v231
  %v820 = vpop.f32.mrb[0].mxu0
  %v821 = vadd.f32 0.0, %v820
  %v822 = vpop.f32.mrb[0].mxu0
  %v823 = vadd.f32 0.0, %v822
  %824 = vmatprep.mubr.f32.mxu0 0.0
  %825 = vmatmul.mubr.f32.gmra.mrb[0].mxu0 %v234
  %v826 = vpop.f32.mrb[0].mxu0
  %v827 = vadd.f32 0.0, %v826
  %v828 = vpop.f32.mrb[0].mxu0
  %v829 = vadd.f32 0.0, %v828
  %830 = vmatprep.mubr.f32.mxu0 0.0
  %831 = vmatmul.mubr.f32.gmra.mrb[0].mxu0 %v237
  %v832 = vpop.f32.mrb[0].mxu0
  %v833 = vadd.f32 0.0, %v832
  %v834 = vpop.f32.mrb[0].mxu0
  %v835 = vadd.f32 0.0, %v834
  %836 = vmatprep.mubr.f32.mxu0 0.0
  %837 = vmatmul.mubr.f32.gmra.mrb[0].mxu0 %v240
  %v838 = vpop.f32.mrb[0].mxu0
  %v839 = vadd.f32 0.0, %v838
  %v840 = vpop.f32.mrb[0].mxu0
  %v841 = vadd.f32 0.0, %v840
  %842 = vmatprep.mubr.f32.mxu0 0.0
  %843 = vmatmul.mubr.f32.gmra.mrb[0].mxu0 %v243
  %v844 = vpop.f32.mrb[0].mxu0
  %v845 = vadd.f32 0.0, %v844
  %v846 = vpop.f32.mrb[0].mxu0
  %v847 = vadd.f32 0.0, %v846
  %848 = vmatprep.mubr.f32.mxu0 0.0
  %849 = vmatmul.mubr.f32.gmra.mrb[0].mxu0 %v246
  %v850 = vpop.f32.mrb[0].mxu0
  %v851 = vadd.f32 0.0, %v850
  %v852 = vpop.f32.mrb[0].mxu0
  %v853 = vadd.f32 0.0, %v852
  %854 = vmatprep.mubr.f32.mxu0 0.0
  %855 = vmatmul.mubr.f32.gmra.mrb[0].mxu0 %v249
  %v856 = vpop.f32.mrb[0].mxu0
  %v857 = vadd.f32 0.0, %v856
  %v858 = vpop.f32.mrb[0].mxu0
  %v859 = vadd.f32 0.0, %v858
  %860 = vmatprep.mubr.f32.mxu0 0.0
  %861 = vmatmul.mubr.f32.gmra.mrb[0].mxu0 %v252
  %v862 = vpop.f32.mrb[0].mxu0
  %v863 = vadd.f32 0.0, %v862
  %v864 = vpop.f32.mrb[0].mxu0
  %v865 = vadd.f32 0.0, %v864
  %866 = vmatprep.mubr.f32.mxu0 0.0
  %867 = vmatmul.mubr.f32.gmra.mrb[0].mxu0 %v255
  %v868 = vpop.f32.mrb[0].mxu0
  %v869 = vadd.f32 0.0, %v868
  %v870 = vpop.f32.mrb[0].mxu0
  %v871 = vadd.f32 0.0, %v870
  %872 = vmatprep.mubr.f32.mxu0 0.0
  %873 = vmatmul.mubr.f32.gmra.mrb[0].mxu0 %v258
  %v874 = vpop.f32.mrb[0].mxu0
  %v875 = vadd.f32 0.0, %v874
  %v876 = vpop.f32.mrb[0].mxu0
  %v877 = vadd.f32 0.0, %v876
  %878 = vmatprep.mubr.f32.mxu0 0.0
  %879 = vmatmul.mubr.f32.gmra.mrb[0].mxu0 %v261
  %v880 = vpop.f32.mrb[0].mxu0
  %v881 = vadd.f32 0.0, %v880
  %v882 = vpop.f32.mrb[0].mxu0
  %v883 = vadd.f32 0.0, %v882
  %884 = vmatprep.mubr.f32.mxu0 0.0
  %885 = vmatmul.mubr.f32.gmra.mrb[0].mxu0 %v264
  %v886 = vpop.f32.mrb[0].mxu0
  %v887 = vadd.f32 0.0, %v886
  %v888 = vpop.f32.mrb[0].mxu0
  %v889 = vadd.f32 0.0, %v888
  %890 = vmatprep.mubr.f32.mxu0 0.0
  %891 = vmatmul.mubr.f32.gmra.mrb[0].mxu0 %v267
  %v892 = vpop.f32.mrb[0].mxu0
  %v893 = vadd.f32 0.0, %v892
  %v894 = vpop.f32.mrb[0].mxu0
  %v895 = vadd.f32 0.0, %v894
  %896 = vmatprep.mubr.f32.mxu0 0.0
  %897 = vmatmul.mubr.f32.gmra.mrb[0].mxu0 %v270
  %v898 = vpop.f32.mrb[0].mxu0
  %v899 = vadd.f32 0.0, %v898
  %v900 = vpop.f32.mrb[0].mxu0
  %v901 = vadd.f32 0.0, %v900
  %902 = vmatprep.mubr.f32.mxu0 0.0
  %903 = vmatmul.mubr.f32.gmra.mrb[0].mxu0 %v273
  %v904 = vpop.f32.mrb[0].mxu0
  %v905 = vadd.f32 0.0, %v904
  %v906 = vpop.f32.mrb[0].mxu0
  %v907 = vadd.f32 0.0, %v906
  %908 = vmatprep.mubr.f32.mxu0 0.0
  %909 = vmatmul.mubr.f32.gmra.mrb[0].mxu0 %v276
  %v910 = vpop.f32.mrb[0].mxu0
  %v911 = vadd.f32 0.0, %v910
  %v912 = vpop.f32.mrb[0].mxu0
  %v913 = vadd.f32 0.0, %v912
  %914 = vmatprep.mubr.f32.mxu0 0.0
  %915 = vmatmul.mubr.f32.gmra.mrb[0].mxu0 %v279
  %v916 = vpop.f32.mrb[0].mxu0
  %v917 = vadd.f32 0.0, %v916
  %v918 = vpop.f32.mrb[0].mxu0
  %v919 = vadd.f32 0.0, %v918
  %920 = vmatprep.mubr.f32.mxu0 0.0
  %921 = vmatmul.mubr.f32.gmra.mrb[0].mxu0 %v282
  %v922 = vpop.f32.mrb[0].mxu0
  %v923 = vadd.f32 0.0, %v922
  %v924 = vpop.f32.mrb[0].mxu0
  %v925 = vadd.f32 0.0, %v924
  %926 = vmatprep.mubr.f32.mxu0 0.0
  %927 = vmatmul.mubr.f32.gmra.mrb[0].mxu0 %v285
  %v928 = vpop.f32.mrb[0].mxu0
  %v929 = vadd.f32 0.0, %v928
  %v930 = vpop.f32.mrb[0].mxu0
  %v931 = vadd.f32 0.0, %v930
  %932 = vmatprep.mubr.f32.mxu0 0.0
  %933 = vmatmul.mubr.f32.gmra.mrb[0].mxu0 %v288
  %v934 = vpop.f32.mrb[0].mxu0
  %v935 = vadd.f32 0.0, %v934
  %v936 = vpop.f32.mrb[0].mxu0
  %v937 = vadd.f32 0.0, %v936
  %938 = vmatprep.mubr.f32.mxu0 0.0
  %939 = vmatmul.mubr.f32.gmra.mrb[0].mxu0 %v291
  %v940 = vpop.f32.mrb[0].mxu0
  %v941 = vadd.f32 0.0, %v940
  %v942 = vpop.f32.mrb[0].mxu0
  %v943 = vadd.f32 0.0, %v942
  %944 = vmatprep.mubr.f32.mxu0 0.0
  %945 = vmatmul.mubr.f32.gmra.mrb[0].mxu0 %v294
  %v946 = vpop.f32.mrb[0].mxu0
  %v947 = vadd.f32 0.0, %v946
  %v948 = vpop.f32.mrb[0].mxu0
  %v949 = vadd.f32 0.0, %v948
  %950 = vmatprep.mubr.f32.mxu0 0.0
  %951 = vmatmul.mubr.f32.gmra.mrb[0].mxu0 %v297
  %v952 = vpop.f32.mrb[0].mxu0
  %v953 = vadd.f32 0.0, %v952
  %v954 = vpop.f32.mrb[0].mxu0
  %v955 = vadd.f32 0.0, %v954
  %956 = vmatprep.mubr.f32.mxu0 0.0
  %957 = vmatmul.mubr.f32.gmra.mrb[0].mxu0 %v300
  %v958 = vpop.f32.mrb[0].mxu0
  %v959 = vadd.f32 0.0, %v958
  %v960 = vpop.f32.mrb[0].mxu0
  %v961 = vadd.f32 0.0, %v960
  %962 = vmatprep.mubr.f32.mxu0 0.0
  %963 = vmatmul.mubr.f32.gmra.mrb[0].mxu0 %v303
  %v964 = vpop.f32.mrb[0].mxu0
  %v965 = vadd.f32 0.0, %v964
  %v966 = vpop.f32.mrb[0].mxu0
  %v967 = vadd.f32 0.0, %v966
  %968 = vmatprep.mubr.f32.mxu0 0.0
  %969 = vmatmul.mubr.f32.gmra.mrb[0].mxu0 %v306
  %v970 = vpop.f32.mrb[0].mxu0
  %v971 = vadd.f32 0.0, %v970
  %v972 = vpop.f32.mrb[0].mxu0
  %v973 = vadd.f32 0.0, %v972
  %974 = vmatprep.mubr.f32.mxu0 0.0
  %975 = vmatmul.mubr.f32.gmra.mrb[0].mxu0 %v309
  %v976 = vpop.f32.mrb[0].mxu0
  %v977 = vadd.f32 0.0, %v976
  %v978 = vpop.f32.mrb[0].mxu0
  %v979 = vadd.f32 0.0, %v978
  %980 = vmatprep.mubr.f32.mxu0 0.0
  %981 = vmatmul.mubr.f32.gmra.mrb[0].mxu0 %v312
  %v982 = vpop.f32.mrb[0].mxu0
  %v983 = vadd.f32 0.0, %v982
  %v984 = vpop.f32.mrb[0].mxu0
  %v985 = vadd.f32 0.0, %v984
  %986 = vmatprep.mubr.f32.mxu0 0.0
  %987 = vmatmul.mubr.f32.gmra.mrb[0].mxu0 %v315
  %v988 = vpop.f32.mrb[0].mxu0
  %v989 = vadd.f32 0.0, %v988
  %v990 = vpop.f32.mrb[0].mxu0
  %v991 = vadd.f32 0.0, %v990
  %992 = vmatprep.mubr.f32.mxu0 0.0
  %993 = vmatmul.mubr.f32.gmra.mrb[0].mxu0 %v318
  %v994 = vpop.f32.mrb[0].mxu0
  %v995 = vadd.f32 0.0, %v994
  %v996 = vpop.f32.mrb[0].mxu0
  %v997 = vadd.f32 0.0, %v996
  %998 = vmatprep.mubr.f32.mxu0 0.0
  %999 = vmatmul.mubr.f32.gmra.mrb[0].mxu0 %v321
  %v1000 = vpop.f32.mrb[0].mxu0
  %v1001 = vadd.f32 0.0, %v1000
  %v1002 = vpop.f32.mrb[0].mxu0
  %v1003 = vadd.f32 0.0, %v1002
  %1004 = vmatprep.mubr.f32.mxu0 0.0
  %1005 = vmatmul.mubr.f32.gmra.mrb[0].mxu0 %v324
  %v1006 = vpop.f32.mrb[0].mxu0
  %v1007 = vadd.f32 0.0, %v1006
  %v1008 = vpop.f32.mrb[0].mxu0
  %v1009 = vadd.f32 0.0, %v1008
  %1010 = vmatprep.mubr.f32.mxu0 0.0
  %1011 = vmatmul.mubr.f32.gmra.mrb[0].mxu0 %v327
  %v1012 = vpop.f32.mrb[0].mxu0
  %v1013 = vadd.f32 0.0, %v1012
  %v1014 = vpop.f32.mrb[0].mxu0
  %v1015 = vadd.f32 0.0, %v1014
  %1016 = vmatprep.mubr.f32.mxu0 0.0
  %1017 = vmatmul.mubr.f32.gmra.mrb[0].mxu0 %v330
  %v1018 = vpop.f32.mrb[0].mxu0
  %v1019 = vadd.f32 0.0, %v1018
  %v1020 = vpop.f32.mrb[0].mxu0
  %v1021 = vadd.f32 0.0, %v1020
  %1022 = vmatprep.mubr.f32.mxu0 0.0
  %1023 = vmatmul.mubr.f32.gmra.mrb[0].mxu0 %v333
  %v1024 = vpop.f32.mrb[0].mxu0
  %v1025 = vadd.f32 0.0, %v1024
  %v1026 = vpop.f32.mrb[0].mxu0
  %v1027 = vadd.f32 0.0, %v1026
  %1028 = vmatprep.mubr.f32.mxu0 0.0
  %1029 = vmatmul.mubr.f32.gmra.mrb[0].mxu0 %v336
  %v1030 = vpop.f32.mrb[0].mxu0
  %v1031 = vadd.f32 0.0, %v1030
  %v1032 = vpop.f32.mrb[0].mxu0
  %v1033 = vadd.f32 0.0, %v1032
  %1034 = vmatprep.mubr.f32.mxu0 0.0
  %1035 = vmatmul.mubr.f32.gmra.mrb[0].mxu0 %v339
  %v1036 = vpop.f32.mrb[0].mxu0
  %v1037 = vadd.f32 0.0, %v1036
  %v1038 = vpop.f32.mrb[0].mxu0
  %v1039 = vadd.f32 0.0, %v1038
  %1040 = vmatprep.mubr.f32.mxu0 0.0
  %1041 = vmatmul.mubr.f32.gmra.mrb[0].mxu0 %v342
  %v1042 = vpop.f32.mrb[0].mxu0
  %v1043 = vadd.f32 0.0, %v1042
  %v1044 = vpop.f32.mrb[0].mxu0
  %v1045 = vadd.f32 0.0, %v1044
  %1046 = vmatprep.mubr.f32.mxu0 0.0
  %1047 = vmatmul.mubr.f32.gmra.mrb[0].mxu0 %v345
  %v1048 = vpop.f32.mrb[0].mxu0
  %v1049 = vadd.f32 0.0, %v1048
  %v1050 = vpop.f32.mrb[0].mxu0
  %v1051 = vadd.f32 0.0, %v1050
  %1052 = vmatprep.mubr.f32.mxu0 0.0
  %1053 = vmatmul.mubr.f32.gmra.mrb[0].mxu0 %v348
  %v1054 = vpop.f32.mrb[0].mxu0
  %v1055 = vadd.f32 0.0, %v1054
  %v1056 = vpop.f32.mrb[0].mxu0
  %v1057 = vadd.f32 0.0, %v1056
  %1058 = vmatprep.mubr.f32.mxu0 0.0
  %1059 = vmatmul.mubr.f32.gmra.mrb[0].mxu0 %v351
  %v1060 = vpop.f32.mrb[0].mxu0
  %v1061 = vadd.f32 0.0, %v1060
  %v1062 = vpop.f32.mrb[0].mxu0
  %v1063 = vadd.f32 0.0, %v1062
  %1064 = vmatprep.mubr.f32.mxu0 0.0
  %1065 = vmatmul.mubr.f32.gmra.mrb[0].mxu0 %v354
  %v1066 = vpop.f32.mrb[0].mxu0
  %v1067 = vadd.f32 0.0, %v1066
  %v1068 = vpop.f32.mrb[0].mxu0
  %v1069 = vadd.f32 0.0, %v1068
  %1070 = vmatprep.mubr.f32.mxu0 0.0
  %1071 = vmatmul.mubr.f32.gmra.mrb[0].mxu0 %v357
  %v1072 = vpop.f32.mrb[0].mxu0
  %v1073 = vadd.f32 0.0, %v1072
  %v1074 = vpop.f32.mrb[0].mxu0
  %v1075 = vadd.f32 0.0, %v1074
  %1076 = vmatprep.mubr.f32.mxu0 0.0
  %1077 = vmatmul.mubr.f32.gmra.mrb[0].mxu0 %v360
  %v1078 = vpop.f32.mrb[0].mxu0
  %v1079 = vadd.f32 0.0, %v1078
  %v1080 = vpop.f32.mrb[0].mxu0
  %v1081 = vadd.f32 0.0, %v1080
  %1082 = vmatprep.mubr.f32.mxu0 0.0
  %1083 = vmatmul.mubr.f32.gmra.mrb[0].mxu0 %v363
  %v1084 = vpop.f32.mrb[0].mxu0
  %v1085 = vadd.f32 0.0, %v1084
  %v1086 = vpop.f32.mrb[0].mxu0
  %v1087 = vadd.f32 0.0, %v1086
  %1088 = vmatprep.mubr.f32.mxu0 0.0
  %1089 = vmatmul.mubr.f32.gmra.mrb[0].mxu0 %v366
  %v1090 = vpop.f32.mrb[0].mxu0
  %v1091 = vadd.f32 0.0, %v1090
  %v1092 = vpop.f32.mrb[0].mxu0
  %v1093 = vadd.f32 0.0, %v1092
  %1094 = vmatprep.mubr.f32.mxu0 0.0
  %1095 = vmatmul.mubr.f32.gmra.mrb[0].mxu0 %v369
  %v1096 = vpop.f32.mrb[0].mxu0
  %v1097 = vadd.f32 0.0, %v1096
  %v1098 = vpop.f32.mrb[0].mxu0
  %v1099 = vadd.f32 0.0, %v1098
  %1100 = vmatprep.mubr.f32.mxu0 0.0
  %1101 = vmatmul.mubr.f32.gmra.mrb[0].mxu0 %v372
  %v1102 = vpop.f32.mrb[0].mxu0
  %v1103 = vadd.f32 0.0, %v1102
  %v1104 = vpop.f32.mrb[0].mxu0
  %v1105 = vadd.f32 0.0, %v1104
  %1106 = vmatprep.mubr.f32.mxu0 0.0
  %1107 = vmatmul.mubr.f32.gmra.mrb[0].mxu0 %v375
  %v1108 = vpop.f32.mrb[0].mxu0
  %v1109 = vadd.f32 0.0, %v1108
  %v1110 = vpop.f32.mrb[0].mxu0
  %v1111 = vadd.f32 0.0, %v1110
  %1112 = vmatprep.mubr.f32.mxu0 0.0
  %1113 = vmatmul.mubr.f32.gmra.mrb[0].mxu0 %v378
  %v1114 = vpop.f32.mrb[0].mxu0
  %v1115 = vadd.f32 0.0, %v1114
  %v1116 = vpop.f32.mrb[0].mxu0
  %v1117 = vadd.f32 0.0, %v1116
  %1118 = vmatprep.mubr.f32.mxu0 0.0
  %1119 = vmatmul.mubr.f32.gmra.mrb[0].mxu0 %v381
  %v1120 = vpop.f32.mrb[0].mxu0
  %v1121 = vadd.f32 0.0, %v1120
  %v1122 = vpop.f32.mrb[0].mxu0
  %v1123 = vadd.f32 0.0, %v1122
  %1124 = vmatprep.mubr.f32.mxu0 0.0
  %1125 = vmatmul.mubr.f32.gmra.mrb[0].mxu0 %v384
  %v1126 = vpop.f32.mrb[0].mxu0
  %v1127 = vadd.f32 0.0, %v1126
  %v1128 = vpop.f32.mrb[0].mxu0
  %v1129 = vadd.f32 0.0, %v1128
  %1130 = vmatprep.mubr.f32.mxu0 0.0
  %1131 = vmatmul.mubr.f32.gmra.mrb[0].mxu0 %v387
  %v1132 = vpop.f32.mrb[0].mxu0
  %v1133 = vadd.f32 0.0, %v1132
  %v1134 = vpop.f32.mrb[0].mxu0
  %v1135 = vadd.f32 0.0, %v1134
  %1136 = vmatprep.mubr.f32.mxu0 0.0
  %1137 = vmatmul.mubr.f32.gmra.mrb[0].mxu0 %v390
  %v1138 = vpop.f32.mrb[0].mxu0
  %v1139 = vadd.f32 0.0, %v1138
  %v1140 = vpop.f32.mrb[0].mxu0
  %v1141 = vadd.f32 0.0, %v1140
  %1142 = vmatprep.mubr.f32.mxu0 0.0
  %1143 = vmatmul.mubr.f32.gmra.mrb[0].mxu0 %v393
  %v1144 = vpop.f32.mrb[0].mxu0
  %v1145 = vadd.f32 0.0, %v1144
  %v1146 = vpop.f32.mrb[0].mxu0
  %v1147 = vadd.f32 0.0, %v1146
  %1148 = vmatprep.mubr.f32.mxu0 0.0
  %1149 = vmatmul.mubr.f32.gmra.mrb[0].mxu0 %v396
  %v1150 = vpop.f32.mrb[0].mxu0
  %v1151 = vadd.f32 0.0, %v1150
  %v1152 = vpop.f32.mrb[0].mxu0
  %v1153 = vadd.f32 0.0, %v1152
  %1154 = vmatprep.mubr.f32.mxu0 0.0
  %1155 = vmatmul.mubr.f32.gmra.mrb[0].mxu0 %v399
  %v1156 = vpop.f32.mrb[0].mxu0
  %v1157 = vadd.f32 0.0, %v1156
  %v1158 = vpop.f32.mrb[0].mxu0
  %v1159 = vadd.f32 0.0, %v1158
  %1160 = vmatprep.mubr.f32.mxu0 0.0
  %1161 = vmatmul.mubr.f32.gmra.mrb[0].mxu0 %v402
  %v1162 = vpop.f32.mrb[0].mxu0
  %v1163 = vadd.f32 0.0, %v1162
  %v1164 = vpop.f32.mrb[0].mxu0
  %v1165 = vadd.f32 0.0, %v1164
  %1166 = vmatprep.mubr.f32.mxu0 0.0
  %1167 = vmatmul.mubr.f32.gmra.mrb[0].mxu0 %v405
  %v1168 = vpop.f32.mrb[0].mxu0
  %v1169 = vadd.f32 0.0, %v1168
  %v1170 = vpop.f32.mrb[0].mxu0
  %v1171 = vadd.f32 0.0, %v1170
  %1172 = vmatprep.mubr.f32.mxu0 0.0
  %1173 = vmatmul.mubr.f32.gmra.mrb[0].mxu0 %v408
  %v1174 = vpop.f32.mrb[0].mxu0
  %v1175 = vadd.f32 0.0, %v1174
  %v1176 = vpop.f32.mrb[0].mxu0
  %v1177 = vadd.f32 0.0, %v1176
  %1178 = vmatprep.mubr.f32.mxu0 0.0
  %1179 = vmatmul.mubr.f32.gmra.mrb[0].mxu0 %v411
  %v1180 = vpop.f32.mrb[0].mxu0
  %v1181 = vadd.f32 0.0, %v1180
  %v1182 = vpop.f32.mrb[0].mxu0
  %v1183 = vadd.f32 0.0, %v1182
  %1184 = vmatprep.mubr.f32.mxu0 0.0
  %1185 = vmatmul.mubr.f32.gmra.mrb[0].mxu0 %v414
  %v1186 = vpop.f32.mrb[0].mxu0
  %v1187 = vadd.f32 0.0, %v1186
  %v1188 = vpop.f32.mrb[0].mxu0
  %v1189 = vadd.f32 0.0, %v1188
  %1190 = vmatprep.mubr.f32.mxu0 0.0
  %1191 = vmatmul.mubr.f32.gmra.mrb[0].mxu0 %v417
  %v1192 = vpop.f32.mrb[0].mxu0
  %v1193 = vadd.f32 0.0, %v1192
  %v1194 = vpop.f32.mrb[0].mxu0
  %v1195 = vadd.f32 0.0, %v1194
  %1196 = vmatprep.mubr.f32.mxu0 0.0
  %1197 = vmatmul.mubr.f32.gmra.mrb[0].mxu0 %v420
  %v1198 = vpop.f32.mrb[0].mxu0
  %v1199 = vadd.f32 0.0, %v1198
  %v1200 = vpop.f32.mrb[0].mxu0
  %v1201 = vadd.f32 0.0, %v1200
  %1202 = vmatprep.mubr.f32.mxu0 0.0
  %1203 = vmatmul.mubr.f32.gmra.mrb[0].mxu0 %v423
  %v1204 = vpop.f32.mrb[0].mxu0
  %v1205 = vadd.f32 0.0, %v1204
  %v1206 = vpop.f32.mrb[0].mxu0
  %v1207 = vadd.f32 0.0, %v1206
  %1208 = vmatprep.mubr.f32.mxu0 0.0
  %1209 = vmatmul.mubr.f32.gmra.mrb[0].mxu0 %v426
  %v1210 = vpop.f32.mrb[0].mxu0
  %v1211 = vadd.f32 0.0, %v1210
  %v1212 = vpop.f32.mrb[0].mxu0
  %v1213 = vadd.f32 0.0, %v1212
  %1214 = vmatprep.mubr.f32.mxu0 0.0
  %1215 = vmatmul.mubr.f32.gmra.mrb[0].mxu0 %v429
  %v1216 = vpop.f32.mrb[0].mxu0
  %v1217 = vadd.f32 0.0, %v1216
  %v1218 = vpop.f32.mrb[0].mxu0
  %v1219 = vadd.f32 0.0, %v1218
  %1220 = vmatprep.mubr.f32.mxu0 0.0
  %1221 = vmatmul.mubr.f32.gmra.mrb[0].mxu0 %v432
  %v1222 = vpop.f32.mrb[0].mxu0
  %v1223 = vadd.f32 0.0, %v1222
  %v1224 = vpop.f32.mrb[0].mxu0
  %v1225 = vadd.f32 0.0, %v1224
  %1226 = vmatprep.mubr.f32.mxu0 0.0
  %1227 = vmatmul.mubr.f32.gmra.mrb[0].mxu0 %v435
  %v1228 = vpop.f32.mrb[0].mxu0
  %v1229 = vadd.f32 0.0, %v1228
  %v1230 = vpop.f32.mrb[0].mxu0
  %v1231 = vadd.f32 0.0, %v1230
  %1232 = vmatprep.mubr.f32.mxu0 0.0
  %1233 = vmatmul.mubr.f32.gmra.mrb[0].mxu0 %v438
  %v1234 = vpop.f32.mrb[0].mxu0
  %v1235 = vadd.f32 0.0, %v1234
  %v1236 = vpop.f32.mrb[0].mxu0
  %v1237 = vadd.f32 0.0, %v1236
  %1238 = vmatprep.mubr.f32.mxu0 0.0
  %1239 = vmatmul.mubr.f32.gmra.mrb[0].mxu0 %v441
  %v1240 = vpop.f32.mrb[0].mxu0
  %v1241 = vadd.f32 0.0, %v1240
  %v1242 = vpop.f32.mrb[0].mxu0
  %v1243 = vadd.f32 0.0, %v1242
  %1244 = vmatprep.mubr.f32.mxu0 0.0
  %1245 = vmatmul.mubr.f32.gmra.mrb[0].mxu0 %v444
  %v1246 = vpop.f32.mrb[0].mxu0
  %v1247 = vadd.f32 0.0, %v1246
  %v1248 = vpop.f32.mrb[0].mxu0
  %v1249 = vadd.f32 0.0, %v1248
  %1250 = vmatprep.mubr.f32.mxu0 0.0
  %1251 = vmatmul.mubr.f32.gmra.mrb[0].mxu0 %v447
  %v1252 = vpop.f32.mrb[0].mxu0
  %v1253 = vadd.f32 0.0, %v1252
  %v1254 = vpop.f32.mrb[0].mxu0
  %v1255 = vadd.f32 0.0, %v1254
  %1256 = vmatprep.mubr.f32.mxu0 0.0
  %1257 = vmatmul.mubr.f32.gmra.mrb[0].mxu0 %v450
  %v1258 = vpop.f32.mrb[0].mxu0
  %v1259 = vadd.f32 0.0, %v1258
  %v1260 = vpop.f32.mrb[0].mxu0
  %v1261 = vadd.f32 0.0, %v1260
  %1262 = vmatprep.mubr.f32.mxu0 0.0
  %1263 = vmatmul.mubr.f32.gmra.mrb[0].mxu0 %v453
  %v1264 = vpop.f32.mrb[0].mxu0
  %v1265 = vadd.f32 0.0, %v1264
  %v1266 = vpop.f32.mrb[0].mxu0
  %v1267 = vadd.f32 0.0, %v1266
  %1268 = vmatprep.mubr.f32.mxu0 0.0
  %1269 = vmatmul.mubr.f32.gmra.mrb[0].mxu0 %v456
  %v1270 = vpop.f32.mrb[0].mxu0
  %v1271 = vadd.f32 0.0, %v1270
  %v1272 = vpop.f32.mrb[0].mxu0
  %v1273 = vadd.f32 0.0, %v1272
  %1274 = vmatprep.mubr.f32.mxu0 0.0
  %1275 = vmatmul.mubr.f32.gmra.mrb[0].mxu0 %v459
  %v1276 = vpop.f32.mrb[0].mxu0
  %v1277 = vadd.f32 0.0, %v1276
  %v1278 = vpop.f32.mrb[0].mxu0
  %v1279 = vadd.f32 0.0, %v1278
  %1280 = vmatprep.mubr.f32.mxu0 0.0
  %1281 = vmatmul.mubr.f32.gmra.mrb[0].mxu0 %v462
  %v1282 = vpop.f32.mrb[0].mxu0
  %v1283 = vadd.f32 0.0, %v1282
  %v1284 = vpop.f32.mrb[0].mxu0
  %v1285 = vadd.f32 0.0, %v1284
  %1286 = vmatprep.mubr.f32.mxu0 0.0
  %1287 = vmatmul.mubr.f32.gmra.mrb[0].mxu0 %v465
  %v1288 = vpop.f32.mrb[0].mxu0
  %v1289 = vadd.f32 0.0, %v1288
  %v1290 = vpop.f32.mrb[0].mxu0
  %v1291 = vadd.f32 0.0, %v1290
  %1292 = vmatprep.mubr.f32.mxu0 0.0
  %1293 = vmatmul.mubr.f32.gmra.mrb[0].mxu0 %v468
  %v1294 = vpop.f32.mrb[0].mxu0
  %v1295 = vadd.f32 0.0, %v1294
  %v1296 = vpop.f32.mrb[0].mxu0
  %v1297 = vadd.f32 0.0, %v1296
  %1298 = vmatprep.mubr.f32.mxu0 0.0
  %1299 = vmatmul.mubr.f32.gmra.mrb[0].mxu0 %v471
  %v1300 = vpop.f32.mrb[0].mxu0
  %v1301 = vadd.f32 0.0, %v1300
  %v1302 = vpop.f32.mrb[0].mxu0
  %v1303 = vadd.f32 0.0, %v1302
  %1304 = vmatprep.mubr.f32.mxu0 0.0
  %1305 = vmatmul.mubr.f32.gmra.mrb[0].mxu0 %v474
  %v1306 = vpop.f32.mrb[0].mxu0
  %v1307 = vadd.f32 0.0, %v1306
  %v1308 = vpop.f32.mrb[0].mxu0
  %v1309 = vadd.f32 0.0, %v1308
  %1310 = vmatprep.mubr.f32.mxu0 0.0
  %1311 = vmatmul.mubr.f32.gmra.mrb[0].mxu0 %v477
  %v1312 = vpop.f32.mrb[0].mxu0
  %v1313 = vadd.f32 0.0, %v1312
  %v1314 = vpop.f32.mrb[0].mxu0
  %v1315 = vadd.f32 0.0, %v1314
  %1316 = vmatprep.mubr.f32.mxu0 0.0
  %1317 = vmatmul.mubr.f32.gmra.mrb[0].mxu0 %v480
  %v1318 = vpop.f32.mrb[0].mxu0
  %v1319 = vadd.f32 0.0, %v1318
  %v1320 = vpop.f32.mrb[0].mxu0
  %v1321 = vadd.f32 0.0, %v1320
  %1322 = vmatprep.mubr.f32.mxu0 0.0
  %1323 = vmatmul.mubr.f32.gmra.mrb[0].mxu0 %v483
  %v1324 = vpop.f32.mrb[0].mxu0
  %v1325 = vadd.f32 0.0, %v1324
  %v1326 = vpop.f32.mrb[0].mxu0
  %v1327 = vadd.f32 0.0, %v1326
  %1328 = vmatprep.mubr.f32.mxu0 0.0
  %1329 = vmatmul.mubr.f32.gmra.mrb[0].mxu0 %v486
  %v1330 = vpop.f32.mrb[0].mxu0
  %v1331 = vadd.f32 0.0, %v1330
  %v1332 = vpop.f32.mrb[0].mxu0
  %v1333 = vadd.f32 0.0, %v1332
  %1334 = vmatprep.mubr.f32.mxu0 0.0
  %1335 = vmatmul.mubr.f32.gmra.mrb[0].mxu0 %v489
  %v1336 = vpop.f32.mrb[0].mxu0
  %v1337 = vadd.f32 0.0, %v1336
  %v1338 = vpop.f32.mrb[0].mxu0
  %v1339 = vadd.f32 0.0, %v1338
  %1340 = vmatprep.mubr.f32.mxu0 0.0
  %1341 = vmatmul.mubr.f32.gmra.mrb[0].mxu0 %v492
  %v1342 = vpop.f32.mrb[0].mxu0
  %v1343 = vadd.f32 0.0, %v1342
  %v1344 = vpop.f32.mrb[0].mxu0
  %v1345 = vadd.f32 0.0, %v1344
  %1346 = vmatprep.mubr.f32.mxu0 0.0
  %1347 = vmatmul.mubr.f32.gmra.mrb[0].mxu0 %v495
  %v1348 = vpop.f32.mrb[0].mxu0
  %v1349 = vadd.f32 0.0, %v1348
  %v1350 = vpop.f32.mrb[0].mxu0
  %v1351 = vadd.f32 0.0, %v1350
  %1352 = vmatprep.mubr.f32.mxu0 0.0
  %1353 = vmatmul.mubr.f32.gmra.mrb[0].mxu0 %v498
  %v1354 = vpop.f32.mrb[0].mxu0
  %v1355 = vadd.f32 0.0, %v1354
  %v1356 = vpop.f32.mrb[0].mxu0
  %v1357 = vadd.f32 0.0, %v1356
  %1358 = vmatprep.mubr.f32.mxu0 0.0
  %1359 = vmatmul.mubr.f32.gmra.mrb[0].mxu0 %v501
  %v1360 = vpop.f32.mrb[0].mxu0
  %v1361 = vadd.f32 0.0, %v1360
  %v1362 = vpop.f32.mrb[0].mxu0
  %v1363 = vadd.f32 0.0, %v1362
  %1364 = vmatprep.mubr.f32.mxu0 0.0
  %1365 = vmatmul.mubr.f32.gmra.mrb[0].mxu0 %v504
  %v1366 = vpop.f32.mrb[0].mxu0
  %v1367 = vadd.f32 0.0, %v1366
  %v1368 = vpop.f32.mrb[0].mxu0
  %v1369 = vadd.f32 0.0, %v1368
  %1370 = vmatprep.mubr.f32.mxu0 0.0
  %1371 = vmatmul.mubr.f32.gmra.mrb[0].mxu0 %v507
  %v1372 = vpop.f32.mrb[0].mxu0
  %v1373 = vadd.f32 0.0, %v1372
  %v1374 = vpop.f32.mrb[0].mxu0
  %v1375 = vadd.f32 0.0, %v1374
  %1376 = vmatprep.mubr.f32.mxu0 0.0
  %1377 = vmatmul.mubr.f32.gmra.mrb[0].mxu0 %v510
  %v1378 = vpop.f32.mrb[0].mxu0
  %v1379 = vadd.f32 0.0, %v1378
  %v1380 = vpop.f32.mrb[0].mxu0
  %v1381 = vadd.f32 0.0, %v1380
  %1382 = vmatprep.mubr.f32.mxu0 0.0
  %1383 = vmatmul.mubr.f32.gmra.mrb[0].mxu0 %v513
  %v1384 = vpop.f32.mrb[0].mxu0
  %v1385 = vadd.f32 0.0, %v1384
  %v1386 = vpop.f32.mrb[0].mxu0
  %v1387 = vadd.f32 0.0, %v1386
  %1388 = vmatprep.mubr.f32.mxu0 0.0
  %1389 = vmatmul.mubr.f32.gmra.mrb[0].mxu0 %v516
  %v1390 = vpop.f32.mrb[0].mxu0
  %v1391 = vadd.f32 0.0, %v1390
  %v1392 = vpop.f32.mrb[0].mxu0
  %v1393 = vadd.f32 0.0, %v1392
  %1394 = vmatprep.mubr.f32.mxu0 0.0
  %1395 = vmatmul.mubr.f32.gmra.mrb[0].mxu0 %v519
  %v1396 = vpop.f32.mrb[0].mxu0
  %v1397 = vadd.f32 0.0, %v1396
  %v1398 = vpop.f32.mrb[0].mxu0
  %v1399 = vadd.f32 0.0, %v1398
  %1400 = vmatprep.mubr.f32.mxu0 0.0
  %1401 = vmatmul.mubr.f32.gmra.mrb[0].mxu0 %v522
  %v1402 = vpop.f32.mrb[0].mxu0
  %v1403 = vadd.f32 0.0, %v1402
  %v1404 = vpop.f32.mrb[0].mxu0
  %v1405 = vadd.f32 0.0, %v1404
  %1406 = vmatprep.mubr.f32.mxu0 0.0
  %1407 = vmatmul.mubr.f32.gmra.mrb[0].mxu0 %v525
  %v1408 = vpop.f32.mrb[0].mxu0
  %v1409 = vadd.f32 0.0, %v1408
  %v1410 = vpop.f32.mrb[0].mxu0
  %v1411 = vadd.f32 0.0, %v1410
  %1412 = vmatprep.mubr.f32.mxu0 0.0
  %1413 = vmatmul.mubr.f32.gmra.mrb[0].mxu0 %v528
  %v1414 = vpop.f32.mrb[0].mxu0
  %v1415 = vadd.f32 0.0, %v1414
  %v1416 = vpop.f32.mrb[0].mxu0
  %v1417 = vadd.f32 0.0, %v1416
  %1418 = vmatprep.mubr.f32.mxu0 0.0
  %1419 = vmatmul.mubr.f32.gmra.mrb[0].mxu0 %v531
  %v1420 = vpop.f32.mrb[0].mxu0
  %v1421 = vadd.f32 0.0, %v1420
  %v1422 = vpop.f32.mrb[0].mxu0
  %v1423 = vadd.f32 0.0, %v1422
  %1424 = vmatprep.mubr.f32.mxu0 0.0
  %1425 = vmatmul.mubr.f32.gmra.mrb[0].mxu0 %v534
  %v1426 = vpop.f32.mrb[0].mxu0
  %v1427 = vadd.f32 0.0, %v1426
  %v1428 = vpop.f32.mrb[0].mxu0
  %v1429 = vadd.f32 0.0, %v1428
  %1430 = vmatprep.mubr.f32.mxu0 0.0
  %1431 = vmatmul.mubr.f32.gmra.mrb[0].mxu0 %v537
  %v1432 = vpop.f32.mrb[0].mxu0
  %v1433 = vadd.f32 0.0, %v1432
  %v1434 = vpop.f32.mrb[0].mxu0
  %v1435 = vadd.f32 0.0, %v1434
  %1436 = vmatprep.mubr.f32.mxu0 0.0
  %1437 = vmatmul.mubr.f32.gmra.mrb[0].mxu0 %v540
  %v1438 = vpop.f32.mrb[0].mxu0
  %v1439 = vadd.f32 0.0, %v1438
  %v1440 = vpop.f32.mrb[0].mxu0
  %v1441 = vadd.f32 0.0, %v1440
  %1442 = vmatprep.mubr.f32.mxu0 0.0
  %1443 = vmatmul.mubr.f32.gmra.mrb[0].mxu0 %v543
  %v1444 = vpop.f32.mrb[0].mxu0
  %v1445 = vadd.f32 0.0, %v1444
  %v1446 = vpop.f32.mrb[0].mxu0
  %v1447 = vadd.f32 0.0, %v1446
  %1448 = vmatprep.mubr.f32.mxu0 0.0
  %1449 = vmatmul.mubr.f32.gmra.mrb[0].mxu0 %v546
  %v1450 = vpop.f32.mrb[0].mxu0
  %v1451 = vadd.f32 0.0, %v1450
  %v1452 = vpop.f32.mrb[0].mxu0
  %v1453 = vadd.f32 0.0, %v1452
  %1454 = vmatprep.mubr.f32.mxu0 0.0
  %1455 = vmatmul.mubr.f32.gmra.mrb[0].mxu0 %v549
  %v1456 = vpop.f32.mrb[0].mxu0
  %v1457 = vadd.f32 0.0, %v1456
  %v1458 = vpop.f32.mrb[0].mxu0
  %v1459 = vadd.f32 0.0, %v1458
  %1460 = vmatprep.mubr.f32.mxu0 0.0
  %1461 = vmatmul.mubr.f32.gmra.mrb[0].mxu0 %v552
  %v1462 = vpop.f32.mrb[0].mxu0
  %v1463 = vadd.f32 0.0, %v1462
  %v1464 = vpop.f32.mrb[0].mxu0
  %v1465 = vadd.f32 0.0, %v1464
  %1466 = vmatprep.mubr.f32.mxu0 0.0
  %1467 = vmatmul.mubr.f32.gmra.mrb[0].mxu0 %v555
  %v1468 = vpop.f32.mrb[0].mxu0
  %v1469 = vadd.f32 0.0, %v1468
  %v1470 = vpop.f32.mrb[0].mxu0
  %v1471 = vadd.f32 0.0, %v1470
  %1472 = vmatprep.mubr.f32.mxu0 0.0
  %1473 = vmatmul.mubr.f32.gmra.mrb[0].mxu0 %v558
  %v1474 = vpop.f32.mrb[0].mxu0
  %v1475 = vadd.f32 0.0, %v1474
  %v1476 = vpop.f32.mrb[0].mxu0
  %v1477 = vadd.f32 0.0, %v1476
  %1478 = vmatprep.mubr.f32.mxu0 0.0
  %1479 = vmatmul.mubr.f32.gmra.mrb[0].mxu0 %v561
  %v1480 = vpop.f32.mrb[0].mxu0
  %v1481 = vadd.f32 0.0, %v1480
  %v1482 = vpop.f32.mrb[0].mxu0
  %v1483 = vadd.f32 0.0, %v1482
  %1484 = vmatprep.mubr.f32.mxu0 0.0
  %1485 = vmatmul.mubr.f32.gmra.mrb[0].mxu0 %v564
  %v1486 = vpop.f32.mrb[0].mxu0
  %v1487 = vadd.f32 0.0, %v1486
  %v1488 = vpop.f32.mrb[0].mxu0
  %v1489 = vadd.f32 0.0, %v1488
  %1490 = vmatprep.mubr.f32.mxu0 0.0
  %1491 = vmatmul.mubr.f32.gmra.mrb[0].mxu0 %v567
  %v1492 = vpop.f32.mrb[0].mxu0
  %v1493 = vadd.f32 0.0, %v1492
  %v1494 = vpop.f32.mrb[0].mxu0
  %v1495 = vadd.f32 0.0, %v1494
  %1496 = vmatprep.mubr.f32.mxu0 0.0
  %1497 = vmatmul.mubr.f32.gmra.mrb[0].mxu0 %v570
  %v1498 = vpop.f32.mrb[0].mxu0
  %v1499 = vadd.f32 0.0, %v1498
  %v1500 = vpop.f32.mrb[0].mxu0
  %v1501 = vadd.f32 0.0, %v1500
  %1502 = vmatprep.mubr.f32.mxu0 0.0
  %1503 = vmatmul.mubr.f32.gmra.mrb[0].mxu0 %v573
  %v1504 = vpop.f32.mrb[0].mxu0
  %v1505 = vadd.f32 0.0, %v1504
  %v1506 = vpop.f32.mrb[0].mxu0
  %v1507 = vadd.f32 0.0, %v1506
  %1508 = vmatprep.mubr.f32.mxu0 0.0
  %1509 = vmatmul.mubr.f32.gmra.mrb[0].mxu0 %v576
  %v1510 = vpop.f32.mrb[0].mxu0
  %v1511 = vadd.f32 0.0, %v1510
  %v1512 = vpop.f32.mrb[0].mxu0
  %v1513 = vadd.f32 0.0, %v1512
  %1514 = vmatprep.mubr.f32.mxu0 0.0
  %1515 = vmatmul.mubr.f32.gmra.mrb[0].mxu0 %v579
  %v1516 = vpop.f32.mrb[0].mxu0
  %v1517 = vadd.f32 0.0, %v1516
  %v1518 = vpop.f32.mrb[0].mxu0
  %v1519 = vadd.f32 0.0, %v1518
  %1520 = vmatprep.mubr.f32.mxu0 0.0
  %1521 = vmatmul.mubr.f32.gmra.mrb[0].mxu0 %v582
  %v1522 = vpop.f32.mrb[0].mxu0
  %v1523 = vadd.f32 0.0, %v1522
  %v1524 = vpop.f32.mrb[0].mxu0
  %v1525 = vadd.f32 0.0, %v1524
  %1526 = vmatprep.mubr.f32.mxu0 0.0
  %1527 = vmatmul.mubr.f32.gmra.mrb[0].mxu0 %v585
  %v1528 = vpop.f32.mrb[0].mxu0
  %v1529 = vadd.f32 0.0, %v1528
  %v1530 = vpop.f32.mrb[0].mxu0
  %v1531 = vadd.f32 0.0, %v1530
  %1532 = vmatprep.mubr.f32.mxu0 0.0
  %1533 = vmatmul.mubr.f32.gmra.mrb[0].mxu0 %v588
  %v1534 = vpop.f32.mrb[0].mxu0
  %v1535 = vadd.f32 0.0, %v1534
  %v1536 = vpop.f32.mrb[0].mxu0
  %v1537 = vadd.f32 0.0, %v1536
  %1538 = vmatprep.mubr.f32.mxu0 0.0
  %1539 = vmatmul.mubr.f32.gmra.mrb[0].mxu0 %v591
  %v1540 = vpop.f32.mrb[0].mxu0
  %v1541 = vadd.f32 0.0, %v1540
  %v1542 = vpop.f32.mrb[0].mxu0
  %v1543 = vadd.f32 0.0, %v1542
  %1544 = vmatprep.mubr.f32.mxu0 0.0
  %1545 = vmatmul.mubr.f32.gmra.mrb[0].mxu0 %v594
  %v1546 = vpop.f32.mrb[0].mxu0
  %v1547 = vadd.f32 0.0, %v1546
  %v1548 = vpop.f32.mrb[0].mxu0
  %v1549 = vadd.f32 0.0, %v1548
  %1550 = vmatprep.mubr.f32.mxu0 0.0
  %1551 = vmatmul.mubr.f32.gmra.mrb[0].mxu0 %v597
  %v1552 = vpop.f32.mrb[0].mxu0
  %v1553 = vadd.f32 0.0, %v1552
  %v1554 = vpop.f32.mrb[0].mxu0
  %v1555 = vadd.f32 0.0, %v1554
  %1556 = vmatprep.mubr.f32.mxu0 0.0
  %1557 = vmatmul.mubr.f32.gmra.mrb[0].mxu0 %v600
  %v1558 = vpop.f32.mrb[0].mxu0
  %v1559 = vadd.f32 0.0, %v1558
  %v1560 = vpop.f32.mrb[0].mxu0
  %v1561 = vadd.f32 0.0, %v1560
  %1562 = vmatprep.mubr.f32.mxu0 0.0
  %1563 = vmatmul.mubr.f32.gmra.mrb[0].mxu0 %v603
  %v1564 = vpop.f32.mrb[0].mxu0
  %v1565 = vadd.f32 0.0, %v1564
  %v1566 = vpop.f32.mrb[0].mxu0
  %v1567 = vadd.f32 0.0, %v1566
  %1568 = vmatprep.mubr.f32.mxu0 0.0
  %1569 = vmatmul.mubr.f32.gmra.mrb[0].mxu0 %v606
  %v1570 = vpop.f32.mrb[0].mxu0
  %v1571 = vadd.f32 0.0, %v1570
  %v1572 = vpop.f32.mrb[0].mxu0
  %v1573 = vadd.f32 0.0, %v1572
  %1574 = vmatprep.mubr.f32.mxu0 0.0
  %1575 = vmatmul.mubr.f32.gmra.mrb[0].mxu0 %v609
  %v1576 = vpop.f32.mrb[0].mxu0
  %v1577 = vadd.f32 0.0, %v1576
  %v1578 = vpop.f32.mrb[0].mxu0
  %v1579 = vadd.f32 0.0, %v1578
  %1580 = vmatprep.mubr.f32.mxu0 0.0
  %1581 = vmatmul.mubr.f32.gmra.mrb[0].mxu0 %v612
  %v1582 = vpop.f32.mrb[0].mxu0
  %v1583 = vadd.f32 0.0, %v1582
  %v1584 = vpop.f32.mrb[0].mxu0
  %v1585 = vadd.f32 0.0, %v1584
  %1586 = vmatprep.mubr.f32.mxu0 0.0
  %1587 = vmatmul.mubr.f32.gmra.mrb[0].mxu0 %v615
  %v1588 = vpop.f32.mrb[0].mxu0
  %v1589 = vadd.f32 0.0, %v1588
  %v1590 = vpop.f32.mrb[0].mxu0
  %v1591 = vadd.f32 0.0, %v1590
  %1592 = vmatprep.mubr.f32.mxu0 0.0
  %1593 = vmatmul.mubr.f32.gmra.mrb[0].mxu0 %v618
  %v1594 = vpop.f32.mrb[0].mxu0
  %v1595 = vadd.f32 0.0, %v1594
  %v1596 = vpop.f32.mrb[0].mxu0
  %v1597 = vadd.f32 0.0, %v1596
  %1598 = vmatprep.mubr.f32.mxu0 0.0
  %1599 = vmatmul.mubr.f32.gmra.mrb[0].mxu0 %v621
  %v1600 = vpop.f32.mrb[0].mxu0
  %v1601 = vadd.f32 0.0, %v1600
  %v1602 = vpop.f32.mrb[0].mxu0
  %v1603 = vadd.f32 0.0, %v1602
  %1604 = vmatprep.mubr.f32.mxu0 0.0
  %1605 = vmatmul.mubr.f32.gmra.mrb[0].mxu0 %v624
  %v1606 = vpop.f32.mrb[0].mxu0
  %v1607 = vadd.f32 0.0, %v1606
  %v1608 = vpop.f32.mrb[0].mxu0
  %v1609 = vadd.f32 0.0, %v1608
  %1610 = vmatprep.mubr.f32.mxu0 0.0
  %1611 = vmatmul.mubr.f32.gmra.mrb[0].mxu0 %v627
  %v1612 = vpop.f32.mrb[0].mxu0
  %v1613 = vadd.f32 0.0, %v1612
  %v1614 = vpop.f32.mrb[0].mxu0
  %v1615 = vadd.f32 0.0, %v1614
  %1616 = vmatprep.mubr.f32.mxu0 0.0
  %1617 = vmatmul.mubr.f32.gmra.mrb[0].mxu0 %v630
  %v1618 = vpop.f32.mrb[0].mxu0
  %v1619 = vadd.f32 0.0, %v1618
  %v1620 = vpop.f32.mrb[0].mxu0
  %v1621 = vadd.f32 0.0, %v1620
  %1622 = vmatprep.mubr.f32.mxu0 0.0
  %1623 = vmatmul.mubr.f32.gmra.mrb[0].mxu0 %v633
  %v1624 = vpop.f32.mrb[0].mxu0
  %v1625 = vadd.f32 0.0, %v1624
  %v1626 = vpop.f32.mrb[0].mxu0
  %v1627 = vadd.f32 0.0, %v1626
  %1628 = vmatprep.mubr.f32.mxu0 0.0
  %1629 = vmatmul.mubr.f32.gmra.mrb[0].mxu0 %v636
  %v1630 = vpop.f32.mrb[0].mxu0
  %v1631 = vadd.f32 0.0, %v1630
  %v1632 = vpop.f32.mrb[0].mxu0
  %v1633 = vadd.f32 0.0, %v1632
  %1634 = vmatprep.mubr.f32.mxu0 0.0
  %1635 = vmatmul.mubr.f32.gmra.mrb[0].mxu0 %v639
  %v1636 = vpop.f32.mrb[0].mxu0
  %v1637 = vadd.f32 0.0, %v1636
  %v1638 = vpop.f32.mrb[0].mxu0
  %v1639 = vadd.f32 0.0, %v1638
  %1640 = vmatprep.mubr.f32.mxu0 0.0
  %1641 = vmatmul.mubr.f32.gmra.mrb[0].mxu0 %v642
  %v1642 = vpop.f32.mrb[0].mxu0
  %v1643 = vadd.f32 0.0, %v1642
  %v1644 = vpop.f32.mrb[0].mxu0
  %v1645 = vadd.f32 0.0, %v1644
  %1646 = vmatprep.mubr.f32.mxu0 0.0
  %1647 = vmatmul.mubr.f32.gmra.mrb[0].mxu0 %v645
  %v1648 = vpop.f32.mrb[0].mxu0
  %v1649 = vadd.f32 0.0, %v1648
  %v1650 = vpop.f32.mrb[0].mxu0
  %v1651 = vadd.f32 0.0, %v1650
  %1652 = vmatprep.mubr.f32.mxu0 0.0
  %1653 = vmatmul.mubr.f32.gmra.mrb[0].mxu0 %v648
  %v1654 = vpop.f32.mrb[0].mxu0
  %v1655 = vadd.f32 0.0, %v1654
  %v1656 = vpop.f32.mrb[0].mxu0
  %v1657 = vadd.f32 0.0, %v1656
  %1658 = vmatprep.mubr.f32.mxu0 0.0
  %1659 = vmatmul.mubr.f32.gmra.mrb[0].mxu0 %v651
  %v1660 = vpop.f32.mrb[0].mxu0
  %v1661 = vadd.f32 0.0, %v1660
  %v1662 = vpop.f32.mrb[0].mxu0
  %v1663 = vadd.f32 0.0, %v1662
  %1664 = vmatprep.mubr.f32.mxu0 0.0
  %1665 = vmatmul.mubr.f32.gmra.mrb[0].mxu0 %v654
  %v1666 = vpop.f32.mrb[0].mxu0
  %v1667 = vadd.f32 0.0, %v1666
  %v1668 = vpop.f32.mrb[0].mxu0
  %v1669 = vadd.f32 0.0, %v1668
  %1670 = vmatprep.mubr.f32.mxu0 0.0
  %1671 = vmatmul.mubr.f32.gmra.mrb[0].mxu0 %v657
  %v1672 = vpop.f32.mrb[0].mxu0
  %v1673 = vadd.f32 0.0, %v1672
  %v1674 = vpop.f32.mrb[0].mxu0
  %v1675 = vadd.f32 0.0, %v1674
  %1676 = vmatprep.mubr.f32.mxu0 0.0
  %1677 = vmatmul.mubr.f32.gmra.mrb[0].mxu0 %v660
  %v1678 = vpop.f32.mrb[0].mxu0
  %v1679 = vadd.f32 0.0, %v1678
  %v1680 = vpop.f32.mrb[0].mxu0
  %v1681 = vadd.f32 0.0, %v1680
  %1682 = vmatprep.mubr.f32.mxu0 0.0
  %1683 = vmatmul.mubr.f32.gmra.mrb[0].mxu0 %v663
  %v1684 = vpop.f32.mrb[0].mxu0
  %v1685 = vadd.f32 0.0, %v1684
  %v1686 = vpop.f32.mrb[0].mxu0
  %v1687 = vadd.f32 0.0, %v1686
  %1688 = vmatprep.mubr.f32.mxu0 0.0
  %1689 = vmatmul.mubr.f32.gmra.mrb[0].mxu0 %v666
  %v1690 = vpop.f32.mrb[0].mxu0
  %v1691 = vadd.f32 0.0, %v1690
  %v1692 = vpop.f32.mrb[0].mxu0
  %v1693 = vadd.f32 0.0, %v1692
  %1694 = vmatprep.mubr.f32.mxu0 0.0
  %1695 = vmatmul.mubr.f32.gmra.mrb[0].mxu0 %v669
  %v1696 = vpop.f32.mrb[0].mxu0
  %v1697 = vadd.f32 0.0, %v1696
  %v1698 = vpop.f32.mrb[0].mxu0
  %v1699 = vadd.f32 0.0, %v1698
  %1700 = vdwg.mxu0
  %v1701 = vmax.f32 %v743, 0.0
  %v1702 = vmax.f32 %v745, 0.0
  %v1703 = vmax.f32 %v749, 0.0
  %v1704 = vmax.f32 %v751, 0.0
  %v1705 = vmax.f32 %v755, 0.0
  %v1706 = vmax.f32 %v757, 0.0
  %v1707 = vmax.f32 %v761, 0.0
  %v1708 = vmax.f32 %v763, 0.0
  %v1709 = vmax.f32 %v767, 0.0
  %v1710 = vmax.f32 %v769, 0.0
  %v1711 = vmax.f32 %v773, 0.0
  %v1712 = vmax.f32 %v775, 0.0
  %v1713 = vmax.f32 %v779, 0.0
  %v1714 = vmax.f32 %v781, 0.0
  %v1715 = vmax.f32 %v785, 0.0
  %v1716 = vmax.f32 %v787, 0.0
  %v1717 = vmax.f32 %v791, 0.0
  %v1718 = vmax.f32 %v793, 0.0
  %v1719 = vmax.f32 %v797, 0.0
  %v1720 = vmax.f32 %v799, 0.0
  %v1721 = vmax.f32 %v803, 0.0
  %v1722 = vmax.f32 %v805, 0.0
  %v1723 = vmax.f32 %v809, 0.0
  %v1724 = vmax.f32 %v811, 0.0
  %v1725 = vmax.f32 %v815, 0.0
  %v1726 = vmax.f32 %v817, 0.0
  %v1727 = vmax.f32 %v821, 0.0
  %v1728 = vmax.f32 %v823, 0.0
  %v1729 = vmax.f32 %v827, 0.0
  %v1730 = vmax.f32 %v829, 0.0
  %v1731 = vmax.f32 %v833, 0.0
  %v1732 = vmax.f32 %v835, 0.0
  %v1733 = vmax.f32 %v839, 0.0
  %v1734 = vmax.f32 %v841, 0.0
  %v1735 = vmax.f32 %v845, 0.0
  %v1736 = vmax.f32 %v847, 0.0
  %v1737 = vmax.f32 %v851, 0.0
  %v1738 = vmax.f32 %v853, 0.0
  %v1739 = vmax.f32 %v857, 0.0
  %v1740 = vmax.f32 %v859, 0.0
  %v1741 = vmax.f32 %v863, 0.0
  %v1742 = vmax.f32 %v865, 0.0
  %v1743 = vmax.f32 %v869, 0.0
  %v1744 = vmax.f32 %v871, 0.0
  %v1745 = vmax.f32 %v875, 0.0
  %v1746 = vmax.f32 %v877, 0.0
  %v1747 = vmax.f32 %v881, 0.0
  %v1748 = vmax.f32 %v883, 0.0
  %v1749 = vmax.f32 %v887, 0.0
  %v1750 = vmax.f32 %v889, 0.0
  %v1751 = vmax.f32 %v893, 0.0
  %v1752 = vmax.f32 %v895, 0.0
  %v1753 = vmax.f32 %v899, 0.0
  %v1754 = vmax.f32 %v901, 0.0
  %v1755 = vmax.f32 %v905, 0.0
  %v1756 = vmax.f32 %v907, 0.0
  %v1757 = vmax.f32 %v911, 0.0
  %v1758 = vmax.f32 %v913, 0.0
  %v1759 = vmax.f32 %v917, 0.0
  %v1760 = vmax.f32 %v919, 0.0
  %v1761 = vmax.f32 %v923, 0.0
  %v1762 = vmax.f32 %v925, 0.0
  %v1763 = vmax.f32 %v929, 0.0
  %v1764 = vmax.f32 %v931, 0.0
  %v1765 = vmax.f32 %v935, 0.0
  %v1766 = vmax.f32 %v937, 0.0
  %v1767 = vmax.f32 %v941, 0.0
  %v1768 = vmax.f32 %v943, 0.0
  %v1769 = vmax.f32 %v947, 0.0
  %v1770 = vmax.f32 %v949, 0.0
  %v1771 = vmax.f32 %v953, 0.0
  %v1772 = vmax.f32 %v955, 0.0
  %v1773 = vmax.f32 %v959, 0.0
  %v1774 = vmax.f32 %v961, 0.0
  %v1775 = vmax.f32 %v965, 0.0
  %v1776 = vmax.f32 %v967, 0.0
  %v1777 = vmax.f32 %v971, 0.0
  %v1778 = vmax.f32 %v973, 0.0
  %v1779 = vmax.f32 %v977, 0.0
  %v1780 = vmax.f32 %v979, 0.0
  %v1781 = vmax.f32 %v983, 0.0
  %v1782 = vmax.f32 %v985, 0.0
  %v1783 = vmax.f32 %v989, 0.0
  %v1784 = vmax.f32 %v991, 0.0
  %v1785 = vmax.f32 %v995, 0.0
  %v1786 = vmax.f32 %v997, 0.0
  %v1787 = vmax.f32 %v1001, 0.0
  %v1788 = vmax.f32 %v1003, 0.0
  %v1789 = vmax.f32 %v1007, 0.0
  %v1790 = vmax.f32 %v1009, 0.0
  %v1791 = vmax.f32 %v1013, 0.0
  %v1792 = vmax.f32 %v1015, 0.0
  %v1793 = vmax.f32 %v1019, 0.0
  %v1794 = vmax.f32 %v1021, 0.0
  %v1795 = vmax.f32 %v1025, 0.0
  %v1796 = vmax.f32 %v1027, 0.0
  %v1797 = vmax.f32 %v1031, 0.0
  %v1798 = vmax.f32 %v1033, 0.0
  %v1799 = vmax.f32 %v1037, 0.0
  %v1800 = vmax.f32 %v1039, 0.0
  %v1801 = vmax.f32 %v1043, 0.0
  %v1802 = vmax.f32 %v1045, 0.0
  %v1803 = vmax.f32 %v1049, 0.0
  %v1804 = vmax.f32 %v1051, 0.0
  %v1805 = vmax.f32 %v1055, 0.0
  %v1806 = vmax.f32 %v1057, 0.0
  %v1807 = vmax.f32 %v1061, 0.0
  %v1808 = vmax.f32 %v1063, 0.0
  %v1809 = vmax.f32 %v1067, 0.0
  %v1810 = vmax.f32 %v1069, 0.0
  %v1811 = vmax.f32 %v1073, 0.0
  %v1812 = vmax.f32 %v1075, 0.0
  %v1813 = vmax.f32 %v1079, 0.0
  %v1814 = vmax.f32 %v1081, 0.0
  %v1815 = vmax.f32 %v1085, 0.0
  %v1816 = vmax.f32 %v1087, 0.0
  %v1817 = vmax.f32 %v1091, 0.0
  %v1818 = vmax.f32 %v1093, 0.0
  %v1819 = vmax.f32 %v1097, 0.0
  %v1820 = vmax.f32 %v1099, 0.0
  %v1821 = vmax.f32 %v1103, 0.0
  %v1822 = vmax.f32 %v1105, 0.0
  %v1823 = vmax.f32 %v1109, 0.0
  %v1824 = vmax.f32 %v1111, 0.0
  %v1825 = vmax.f32 %v1115, 0.0
  %v1826 = vmax.f32 %v1117, 0.0
  %v1827 = vmax.f32 %v1121, 0.0
  %v1828 = vmax.f32 %v1123, 0.0
  %v1829 = vmax.f32 %v1127, 0.0
  %v1830 = vmax.f32 %v1129, 0.0
  %v1831 = vmax.f32 %v1133, 0.0
  %v1832 = vmax.f32 %v1135, 0.0
  %v1833 = vmax.f32 %v1139, 0.0
  %v1834 = vmax.f32 %v1141, 0.0
  %v1835 = vmax.f32 %v1145, 0.0
  %v1836 = vmax.f32 %v1147, 0.0
  %v1837 = vmax.f32 %v1151, 0.0
  %v1838 = vmax.f32 %v1153, 0.0
  %v1839 = vmax.f32 %v1157, 0.0
  %v1840 = vmax.f32 %v1159, 0.0
  %v1841 = vmax.f32 %v1163, 0.0
  %v1842 = vmax.f32 %v1165, 0.0
  %v1843 = vmax.f32 %v1169, 0.0
  %v1844 = vmax.f32 %v1171, 0.0
  %v1845 = vmax.f32 %v1175, 0.0
  %v1846 = vmax.f32 %v1177, 0.0
  %v1847 = vmax.f32 %v1181, 0.0
  %v1848 = vmax.f32 %v1183, 0.0
  %v1849 = vmax.f32 %v1187, 0.0
  %v1850 = vmax.f32 %v1189, 0.0
  %v1851 = vmax.f32 %v1193, 0.0
  %v1852 = vmax.f32 %v1195, 0.0
  %v1853 = vmax.f32 %v1199, 0.0
  %v1854 = vmax.f32 %v1201, 0.0
  %v1855 = vmax.f32 %v1205, 0.0
  %v1856 = vmax.f32 %v1207, 0.0
  %v1857 = vmax.f32 %v1211, 0.0
  %v1858 = vmax.f32 %v1213, 0.0
  %v1859 = vmax.f32 %v1217, 0.0
  %v1860 = vmax.f32 %v1219, 0.0
  %v1861 = vmax.f32 %v1223, 0.0
  %v1862 = vmax.f32 %v1225, 0.0
  %v1863 = vmax.f32 %v1229, 0.0
  %v1864 = vmax.f32 %v1231, 0.0
  %v1865 = vmax.f32 %v1235, 0.0
  %v1866 = vmax.f32 %v1237, 0.0
  %v1867 = vmax.f32 %v1241, 0.0
  %v1868 = vmax.f32 %v1243, 0.0
  %v1869 = vmax.f32 %v1247, 0.0
  %v1870 = vmax.f32 %v1249, 0.0
  %v1871 = vmax.f32 %v1253, 0.0
  %v1872 = vmax.f32 %v1255, 0.0
  %v1873 = vmax.f32 %v1259, 0.0
  %v1874 = vmax.f32 %v1261, 0.0
  %v1875 = vmax.f32 %v1265, 0.0
  %v1876 = vmax.f32 %v1267, 0.0
  %v1877 = vmax.f32 %v1271, 0.0
  %v1878 = vmax.f32 %v1273, 0.0
  %v1879 = vmax.f32 %v1277, 0.0
  %v1880 = vmax.f32 %v1279, 0.0
  %v1881 = vmax.f32 %v1283, 0.0
  %v1882 = vmax.f32 %v1285, 0.0
  %v1883 = vmax.f32 %v1289, 0.0
  %v1884 = vmax.f32 %v1291, 0.0
  %v1885 = vmax.f32 %v1295, 0.0
  %v1886 = vmax.f32 %v1297, 0.0
  %v1887 = vmax.f32 %v1301, 0.0
  %v1888 = vmax.f32 %v1303, 0.0
  %v1889 = vmax.f32 %v1307, 0.0
  %v1890 = vmax.f32 %v1309, 0.0
  %v1891 = vmax.f32 %v1313, 0.0
  %v1892 = vmax.f32 %v1315, 0.0
  %v1893 = vmax.f32 %v1319, 0.0
  %v1894 = vmax.f32 %v1321, 0.0
  %v1895 = vmax.f32 %v1325, 0.0
  %v1896 = vmax.f32 %v1327, 0.0
  %v1897 = vmax.f32 %v1331, 0.0
  %v1898 = vmax.f32 %v1333, 0.0
  %v1899 = vmax.f32 %v1337, 0.0
  %v1900 = vmax.f32 %v1339, 0.0
  %v1901 = vmax.f32 %v1343, 0.0
  %v1902 = vmax.f32 %v1345, 0.0
  %v1903 = vmax.f32 %v1349, 0.0
  %v1904 = vmax.f32 %v1351, 0.0
  %v1905 = vmax.f32 %v1355, 0.0
  %v1906 = vmax.f32 %v1357, 0.0
  %v1907 = vmax.f32 %v1361, 0.0
  %v1908 = vmax.f32 %v1363, 0.0
  %v1909 = vmax.f32 %v1367, 0.0
  %v1910 = vmax.f32 %v1369, 0.0
  %v1911 = vmax.f32 %v1373, 0.0
  %v1912 = vmax.f32 %v1375, 0.0
  %v1913 = vmax.f32 %v1379, 0.0
  %v1914 = vmax.f32 %v1381, 0.0
  %v1915 = vmax.f32 %v1385, 0.0
  %v1916 = vmax.f32 %v1387, 0.0
  %v1917 = vmax.f32 %v1391, 0.0
  %v1918 = vmax.f32 %v1393, 0.0
  %v1919 = vmax.f32 %v1397, 0.0
  %v1920 = vmax.f32 %v1399, 0.0
  %v1921 = vmax.f32 %v1403, 0.0
  %v1922 = vmax.f32 %v1405, 0.0
  %v1923 = vmax.f32 %v1409, 0.0
  %v1924 = vmax.f32 %v1411, 0.0
  %v1925 = vmax.f32 %v1415, 0.0
  %v1926 = vmax.f32 %v1417, 0.0
  %v1927 = vmax.f32 %v1421, 0.0
  %v1928 = vmax.f32 %v1423, 0.0
  %v1929 = vmax.f32 %v1427, 0.0
  %v1930 = vmax.f32 %v1429, 0.0
  %v1931 = vmax.f32 %v1433, 0.0
  %v1932 = vmax.f32 %v1435, 0.0
  %v1933 = vmax.f32 %v1439, 0.0
  %v1934 = vmax.f32 %v1441, 0.0
  %v1935 = vmax.f32 %v1445, 0.0
  %v1936 = vmax.f32 %v1447, 0.0
  %v1937 = vmax.f32 %v1451, 0.0
  %v1938 = vmax.f32 %v1453, 0.0
  %v1939 = vmax.f32 %v1457, 0.0
  %v1940 = vmax.f32 %v1459, 0.0
  %v1941 = vmax.f32 %v1463, 0.0
  %v1942 = vmax.f32 %v1465, 0.0
  %v1943 = vmax.f32 %v1469, 0.0
  %v1944 = vmax.f32 %v1471, 0.0
  %v1945 = vmax.f32 %v1475, 0.0
  %v1946 = vmax.f32 %v1477, 0.0
  %v1947 = vmax.f32 %v1481, 0.0
  %v1948 = vmax.f32 %v1483, 0.0
  %v1949 = vmax.f32 %v1487, 0.0
  %v1950 = vmax.f32 %v1489, 0.0
  %v1951 = vmax.f32 %v1493, 0.0
  %v1952 = vmax.f32 %v1495, 0.0
  %v1953 = vmax.f32 %v1499, 0.0
  %v1954 = vmax.f32 %v1501, 0.0
  %v1955 = vmax.f32 %v1505, 0.0
  %v1956 = vmax.f32 %v1507, 0.0
  %v1957 = vmax.f32 %v1511, 0.0
  %v1958 = vmax.f32 %v1513, 0.0
  %v1959 = vmax.f32 %v1517, 0.0
  %v1960 = vmax.f32 %v1519, 0.0
  %v1961 = vmax.f32 %v1523, 0.0
  %v1962 = vmax.f32 %v1525, 0.0
  %v1963 = vmax.f32 %v1529, 0.0
  %v1964 = vmax.f32 %v1531, 0.0
  %v1965 = vmax.f32 %v1535, 0.0
  %v1966 = vmax.f32 %v1537, 0.0
  %v1967 = vmax.f32 %v1541, 0.0
  %v1968 = vmax.f32 %v1543, 0.0
  %v1969 = vmax.f32 %v1547, 0.0
  %v1970 = vmax.f32 %v1549, 0.0
  %v1971 = vmax.f32 %v1553, 0.0
  %v1972 = vmax.f32 %v1555, 0.0
  %v1973 = vmax.f32 %v1559, 0.0
  %v1974 = vmax.f32 %v1561, 0.0
  %v1975 = vmax.f32 %v1565, 0.0
  %v1976 = vmax.f32 %v1567, 0.0
  %v1977 = vmax.f32 %v1571, 0.0
  %v1978 = vmax.f32 %v1573, 0.0
  %v1979 = vmax.f32 %v1577, 0.0
  %v1980 = vmax.f32 %v1579, 0.0
  %v1981 = vmax.f32 %v1583, 0.0
  %v1982 = vmax.f32 %v1585, 0.0
  %v1983 = vmax.f32 %v1589, 0.0
  %v1984 = vmax.f32 %v1591, 0.0
  %v1985 = vmax.f32 %v1595, 0.0
  %v1986 = vmax.f32 %v1597, 0.0
  %v1987 = vmax.f32 %v1601, 0.0
  %v1988 = vmax.f32 %v1603, 0.0
  %v1989 = vmax.f32 %v1607, 0.0
  %v1990 = vmax.f32 %v1609, 0.0
  %v1991 = vmax.f32 %v1613, 0.0
  %v1992 = vmax.f32 %v1615, 0.0
  %v1993 = vmax.f32 %v1619, 0.0
  %v1994 = vmax.f32 %v1621, 0.0
  %v1995 = vmax.f32 %v1625, 0.0
  %v1996 = vmax.f32 %v1627, 0.0
  %v1997 = vmax.f32 %v1631, 0.0
  %v1998 = vmax.f32 %v1633, 0.0
  %v1999 = vmax.f32 %v1637, 0.0
  %v2000 = vmax.f32 %v1639, 0.0
  %v2001 = vmax.f32 %v1643, 0.0
  %v2002 = vmax.f32 %v1645, 0.0
  %v2003 = vmax.f32 %v1649, 0.0
  %v2004 = vmax.f32 %v1651, 0.0
  %v2005 = vmax.f32 %v1655, 0.0
  %v2006 = vmax.f32 %v1657, 0.0
  %v2007 = vmax.f32 %v1661, 0.0
  %v2008 = vmax.f32 %v1663, 0.0
  %v2009 = vmax.f32 %v1667, 0.0
  %v2010 = vmax.f32 %v1669, 0.0
  %v2011 = vmax.f32 %v1673, 0.0
  %v2012 = vmax.f32 %v1675, 0.0
  %v2013 = vmax.f32 %v1679, 0.0
  %v2014 = vmax.f32 %v1681, 0.0
  %v2015 = vmax.f32 %v1685, 0.0
  %v2016 = vmax.f32 %v1687, 0.0
  %v2017 = vmax.f32 %v1691, 0.0
  %v2018 = vmax.f32 %v1693, 0.0
  %v2019 = vmax.f32 %v1697, 0.0
  %v2020 = vmax.f32 %v1699, 0.0
  %2021 = vmatprep.subr.mxu0 %v1702
  %2022 = vmatpush1.xpose.msra.mxu0 %v1701
  %2023 = vmatprep.subr.mxu0 %v1704
  %2024 = vmatpush1.xpose.msra.mxu0 %v1703
  %2025 = vmatprep.subr.mxu0 %v1706
  %2026 = vmatpush1.xpose.msra.mxu0 %v1705
  %2027 = vmatprep.subr.mxu0 %v1708
  %2028 = vmatpush1.xpose.msra.mxu0 %v1707
  %2029 = vmatprep.subr.mxu0 %v1710
  %2030 = vmatpush1.xpose.msra.mxu0 %v1709
  %2031 = vmatprep.subr.mxu0 %v1712
  %2032 = vmatpush1.xpose.msra.mxu0 %v1711
  %2033 = vmatprep.subr.mxu0 %v1714
  %2034 = vmatpush1.xpose.msra.mxu0 %v1713
  %2035 = vmatprep.subr.mxu0 %v1716
  %2036 = vmatpush1.xpose.msra.mxu0 %v1715
  %2037 = vmatprep.subr.mxu0 %v1718
  %2038 = vmatpush1.xpose.msra.mxu0 %v1717
  %2039 = vmatprep.subr.mxu0 %v1720
  %2040 = vmatpush1.xpose.msra.mxu0 %v1719
  %2041 = vmatprep.subr.mxu0 %v1722
  %2042 = vmatpush1.xpose.msra.mxu0 %v1721
  %2043 = vmatprep.subr.mxu0 %v1724
  %2044 = vmatpush1.xpose.msra.mxu0 %v1723
  %2045 = vmatprep.subr.mxu0 %v1726
  %2046 = vmatpush1.xpose.msra.mxu0 %v1725
  %2047 = vmatprep.subr.mxu0 %v1728
  %2048 = vmatpush1.xpose.msra.mxu0 %v1727
  %2049 = vmatprep.subr.mxu0 %v1730
  %2050 = vmatpush1.xpose.msra.mxu0 %v1729
  %2051 = vmatprep.subr.mxu0 %v1732
  %2052 = vmatpush1.xpose.msra.mxu0 %v1731
  %2053 = vmatprep.subr.mxu0 %v1734
  %2054 = vmatpush1.xpose.msra.mxu0 %v1733
  %2055 = vmatprep.subr.mxu0 %v1736
  %2056 = vmatpush1.xpose.msra.mxu0 %v1735
  %2057 = vmatprep.subr.mxu0 %v1738
  %2058 = vmatpush1.xpose.msra.mxu0 %v1737
  %2059 = vmatprep.subr.mxu0 %v1740
  %2060 = vmatpush1.xpose.msra.mxu0 %v1739
  %2061 = vmatprep.subr.mxu0 %v1742
  %2062 = vmatpush1.xpose.msra.mxu0 %v1741
  %2063 = vmatprep.subr.mxu0 %v1744
  %2064 = vmatpush1.xpose.msra.mxu0 %v1743
  %2065 = vmatprep.subr.mxu0 %v1746
  %2066 = vmatpush1.xpose.msra.mxu0 %v1745
  %2067 = vmatprep.subr.mxu0 %v1748
  %2068 = vmatpush1.xpose.msra.mxu0 %v1747
  %2069 = vmatprep.subr.mxu0 %v1750
  %2070 = vmatpush1.xpose.msra.mxu0 %v1749
  %2071 = vmatprep.subr.mxu0 %v1752
  %2072 = vmatpush1.xpose.msra.mxu0 %v1751
  %2073 = vmatprep.subr.mxu0 %v1754
  %2074 = vmatpush1.xpose.msra.mxu0 %v1753
  %2075 = vmatprep.subr.mxu0 %v1756
  %2076 = vmatpush1.xpose.msra.mxu0 %v1755
  %2077 = vmatprep.subr.mxu0 %v1758
  %2078 = vmatpush1.xpose.msra.mxu0 %v1757
  %2079 = vmatprep.subr.mxu0 %v1760
  %2080 = vmatpush1.xpose.msra.mxu0 %v1759
  %2081 = vmatprep.subr.mxu0 %v1762
  %2082 = vmatpush1.xpose.msra.mxu0 %v1761
  %2083 = vmatprep.subr.mxu0 %v1764
  %2084 = vmatpush1.xpose.msra.mxu0 %v1763
  %2085 = vmatprep.mubr.f32.mxu0 1.0
  %2086 = vmatmul.mubr.f32.gmra.mrb[0].mxu0 1.0
  %v2087 = vpop.f32.mrb[0].mxu0
  %v2088 = vadd.f32 0.0, %v2087
  %v2089 = vpop.f32.mrb[0].mxu0
  %v2090 = vadd.f32 0.0, %v2089
  %2091 = vdwg.mxu0
  %2092 = vmatprep.subr.mxu0 %v1766
  %2093 = vmatpush1.xpose.msra.mxu0 %v1765
  %2094 = vmatprep.subr.mxu0 %v1768
  %2095 = vmatpush1.xpose.msra.mxu0 %v1767
  %2096 = vmatprep.subr.mxu0 %v1770
  %2097 = vmatpush1.xpose.msra.mxu0 %v1769
  %2098 = vmatprep.subr.mxu0 %v1772
  %2099 = vmatpush1.xpose.msra.mxu0 %v1771
  %2100 = vmatprep.subr.mxu0 %v1774
  %2101 = vmatpush1.xpose.msra.mxu0 %v1773
  %2102 = vmatprep.subr.mxu0 %v1776
  %2103 = vmatpush1.xpose.msra.mxu0 %v1775
  %2104 = vmatprep.subr.mxu0 %v1778
  %2105 = vmatpush1.xpose.msra.mxu0 %v1777
  %2106 = vmatprep.subr.mxu0 %v1780
  %2107 = vmatpush1.xpose.msra.mxu0 %v1779
  %2108 = vmatprep.subr.mxu0 %v1782
  %2109 = vmatpush1.xpose.msra.mxu0 %v1781
  %2110 = vmatprep.subr.mxu0 %v1784
  %2111 = vmatpush1.xpose.msra.mxu0 %v1783
  %2112 = vmatprep.subr.mxu0 %v1786
  %2113 = vmatpush1.xpose.msra.mxu0 %v1785
  %2114 = vmatprep.subr.mxu0 %v1788
  %2115 = vmatpush1.xpose.msra.mxu0 %v1787
  %2116 = vmatprep.subr.mxu0 %v1790
  %2117 = vmatpush1.xpose.msra.mxu0 %v1789
  %2118 = vmatprep.subr.mxu0 %v1792
  %2119 = vmatpush1.xpose.msra.mxu0 %v1791
  %2120 = vmatprep.subr.mxu0 %v1794
  %2121 = vmatpush1.xpose.msra.mxu0 %v1793
  %2122 = vmatprep.subr.mxu0 %v1796
  %2123 = vmatpush1.xpose.msra.mxu0 %v1795
  %2124 = vmatprep.subr.mxu0 %v1798
  %2125 = vmatpush1.xpose.msra.mxu0 %v1797
  %2126 = vmatprep.subr.mxu0 %v1800
  %2127 = vmatpush1.xpose.msra.mxu0 %v1799
  %2128 = vmatprep.subr.mxu0 %v1802
  %2129 = vmatpush1.xpose.msra.mxu0 %v1801
  %2130 = vmatprep.subr.mxu0 %v1804
  %2131 = vmatpush1.xpose.msra.mxu0 %v1803
  %2132 = vmatprep.subr.mxu0 %v1806
  %2133 = vmatpush1.xpose.msra.mxu0 %v1805
  %2134 = vmatprep.subr.mxu0 %v1808
  %2135 = vmatpush1.xpose.msra.mxu0 %v1807
  %2136 = vmatprep.subr.mxu0 %v1810
  %2137 = vmatpush1.xpose.msra.mxu0 %v1809
  %2138 = vmatprep.subr.mxu0 %v1812
  %2139 = vmatpush1.xpose.msra.mxu0 %v1811
  %2140 = vmatprep.subr.mxu0 %v1814
  %2141 = vmatpush1.xpose.msra.mxu0 %v1813
  %2142 = vmatprep.subr.mxu0 %v1816
  %2143 = vmatpush1.xpose.msra.mxu0 %v1815
  %2144 = vmatprep.subr.mxu0 %v1818
  %2145 = vmatpush1.xpose.msra.mxu0 %v1817
  %2146 = vmatprep.subr.mxu0 %v1820
  %2147 = vmatpush1.xpose.msra.mxu0 %v1819
  %2148 = vmatprep.subr.mxu0 %v1822
  %2149 = vmatpush1.xpose.msra.mxu0 %v1821
  %2150 = vmatprep.subr.mxu0 %v1824
  %2151 = vmatpush1.xpose.msra.mxu0 %v1823
  %2152 = vmatprep.subr.mxu0 %v1826
  %2153 = vmatpush1.xpose.msra.mxu0 %v1825
  %2154 = vmatprep.subr.mxu0 %v1828
  %2155 = vmatpush1.xpose.msra.mxu0 %v1827
  %2156 = vmatprep.mubr.f32.mxu0 1.0
  %2157 = vmatmul.mubr.f32.gmra.mrb[0].mxu0 1.0
  %v2158 = vpop.f32.mrb[0].mxu0
  %v2159 = vadd.f32 0.0, %v2158
  %v2160 = vpop.f32.mrb[0].mxu0
  %v2161 = vadd.f32 0.0, %v2160
  %2162 = vdwg.mxu0
  %2163 = vmatprep.subr.mxu0 %v1830
  %2164 = vmatpush1.xpose.msra.mxu0 %v1829
  %2165 = vmatprep.subr.mxu0 %v1832
  %2166 = vmatpush1.xpose.msra.mxu0 %v1831
  %2167 = vmatprep.subr.mxu0 %v1834
  %2168 = vmatpush1.xpose.msra.mxu0 %v1833
  %2169 = vmatprep.subr.mxu0 %v1836
  %2170 = vmatpush1.xpose.msra.mxu0 %v1835
  %2171 = vmatprep.subr.mxu0 %v1838
  %2172 = vmatpush1.xpose.msra.mxu0 %v1837
  %2173 = vmatprep.subr.mxu0 %v1840
  %2174 = vmatpush1.xpose.msra.mxu0 %v1839
  %2175 = vmatprep.subr.mxu0 %v1842
  %2176 = vmatpush1.xpose.msra.mxu0 %v1841
  %2177 = vmatprep.subr.mxu0 %v1844
  %2178 = vmatpush1.xpose.msra.mxu0 %v1843
  %2179 = vmatprep.subr.mxu0 %v1846
  %2180 = vmatpush1.xpose.msra.mxu0 %v1845
  %2181 = vmatprep.subr.mxu0 %v1848
  %2182 = vmatpush1.xpose.msra.mxu0 %v1847
  %2183 = vmatprep.subr.mxu0 %v1850
  %2184 = vmatpush1.xpose.msra.mxu0 %v1849
  %2185 = vmatprep.subr.mxu0 %v1852
  %2186 = vmatpush1.xpose.msra.mxu0 %v1851
  %2187 = vmatprep.subr.mxu0 %v1854
  %2188 = vmatpush1.xpose.msra.mxu0 %v1853
  %2189 = vmatprep.subr.mxu0 %v1856
  %2190 = vmatpush1.xpose.msra.mxu0 %v1855
  %2191 = vmatprep.subr.mxu0 %v1858
  %2192 = vmatpush1.xpose.msra.mxu0 %v1857
  %2193 = vmatprep.subr.mxu0 %v1860
  %2194 = vmatpush1.xpose.msra.mxu0 %v1859
  %2195 = vmatprep.subr.mxu0 %v1862
  %2196 = vmatpush1.xpose.msra.mxu0 %v1861
  %2197 = vmatprep.subr.mxu0 %v1864
  %2198 = vmatpush1.xpose.msra.mxu0 %v1863
  %2199 = vmatprep.subr.mxu0 %v1866
  %2200 = vmatpush1.xpose.msra.mxu0 %v1865
  %2201 = vmatprep.subr.mxu0 %v1868
  %2202 = vmatpush1.xpose.msra.mxu0 %v1867
  %2203 = vmatprep.subr.mxu0 %v1870
  %2204 = vmatpush1.xpose.msra.mxu0 %v1869
  %2205 = vmatprep.subr.mxu0 %v1872
  %2206 = vmatpush1.xpose.msra.mxu0 %v1871
  %2207 = vmatprep.subr.mxu0 %v1874
  %2208 = vmatpush1.xpose.msra.mxu0 %v1873
  %2209 = vmatprep.subr.mxu0 %v1876
  %2210 = vmatpush1.xpose.msra.mxu0 %v1875
  %2211 = vmatprep.subr.mxu0 %v1878
  %2212 = vmatpush1.xpose.msra.mxu0 %v1877
  %2213 = vmatprep.subr.mxu0 %v1880
  %2214 = vmatpush1.xpose.msra.mxu0 %v1879
  %2215 = vmatprep.subr.mxu0 %v1882
  %2216 = vmatpush1.xpose.msra.mxu0 %v1881
  %2217 = vmatprep.subr.mxu0 %v1884
  %2218 = vmatpush1.xpose.msra.mxu0 %v1883
  %2219 = vmatprep.subr.mxu0 %v1886
  %2220 = vmatpush1.xpose.msra.mxu0 %v1885
  %2221 = vmatprep.subr.mxu0 %v1888
  %2222 = vmatpush1.xpose.msra.mxu0 %v1887
  %2223 = vmatprep.subr.mxu0 %v1890
  %2224 = vmatpush1.xpose.msra.mxu0 %v1889
  %2225 = vmatprep.subr.mxu0 %v1892
  %2226 = vmatpush1.xpose.msra.mxu0 %v1891
  %2227 = vmatprep.mubr.f32.mxu0 1.0
  %2228 = vmatmul.mubr.f32.gmra.mrb[0].mxu0 1.0
  %v2229 = vpop.f32.mrb[0].mxu0
  %v2230 = vadd.f32 0.0, %v2229
  %v2231 = vpop.f32.mrb[0].mxu0
  %v2232 = vadd.f32 0.0, %v2231
  %2233 = vdwg.mxu0
  %2234 = vmatprep.subr.mxu0 %v1894
  %2235 = vmatpush1.xpose.msra.mxu0 %v1893
  %2236 = vmatprep.subr.mxu0 %v1896
  %2237 = vmatpush1.xpose.msra.mxu0 %v1895
  %2238 = vmatprep.subr.mxu0 %v1898
  %2239 = vmatpush1.xpose.msra.mxu0 %v1897
  %2240 = vmatprep.subr.mxu0 %v1900
  %2241 = vmatpush1.xpose.msra.mxu0 %v1899
  %2242 = vmatprep.subr.mxu0 %v1902
  %2243 = vmatpush1.xpose.msra.mxu0 %v1901
  %2244 = vmatprep.subr.mxu0 %v1904
  %2245 = vmatpush1.xpose.msra.mxu0 %v1903
  %2246 = vmatprep.subr.mxu0 %v1906
  %2247 = vmatpush1.xpose.msra.mxu0 %v1905
  %2248 = vmatprep.subr.mxu0 %v1908
  %2249 = vmatpush1.xpose.msra.mxu0 %v1907
  %2250 = vmatprep.subr.mxu0 %v1910
  %2251 = vmatpush1.xpose.msra.mxu0 %v1909
  %2252 = vmatprep.subr.mxu0 %v1912
  %2253 = vmatpush1.xpose.msra.mxu0 %v1911
  %2254 = vmatprep.subr.mxu0 %v1914
  %2255 = vmatpush1.xpose.msra.mxu0 %v1913
  %2256 = vmatprep.subr.mxu0 %v1916
  %2257 = vmatpush1.xpose.msra.mxu0 %v1915
  %2258 = vmatprep.subr.mxu0 %v1918
  %2259 = vmatpush1.xpose.msra.mxu0 %v1917
  %2260 = vmatprep.subr.mxu0 %v1920
  %2261 = vmatpush1.xpose.msra.mxu0 %v1919
  %2262 = vmatprep.subr.mxu0 %v1922
  %2263 = vmatpush1.xpose.msra.mxu0 %v1921
  %2264 = vmatprep.subr.mxu0 %v1924
  %2265 = vmatpush1.xpose.msra.mxu0 %v1923
  %2266 = vmatprep.subr.mxu0 %v1926
  %2267 = vmatpush1.xpose.msra.mxu0 %v1925
  %2268 = vmatprep.subr.mxu0 %v1928
  %2269 = vmatpush1.xpose.msra.mxu0 %v1927
  %2270 = vmatprep.subr.mxu0 %v1930
  %2271 = vmatpush1.xpose.msra.mxu0 %v1929
  %2272 = vmatprep.subr.mxu0 %v1932
  %2273 = vmatpush1.xpose.msra.mxu0 %v1931
  %2274 = vmatprep.subr.mxu0 %v1934
  %2275 = vmatpush1.xpose.msra.mxu0 %v1933
  %2276 = vmatprep.subr.mxu0 %v1936
  %2277 = vmatpush1.xpose.msra.mxu0 %v1935
  %2278 = vmatprep.subr.mxu0 %v1938
  %2279 = vmatpush1.xpose.msra.mxu0 %v1937
  %2280 = vmatprep.subr.mxu0 %v1940
  %2281 = vmatpush1.xpose.msra.mxu0 %v1939
  %2282 = vmatprep.subr.mxu0 %v1942
  %2283 = vmatpush1.xpose.msra.mxu0 %v1941
  %2284 = vmatprep.subr.mxu0 %v1944
  %2285 = vmatpush1.xpose.msra.mxu0 %v1943
  %2286 = vmatprep.subr.mxu0 %v1946
  %2287 = vmatpush1.xpose.msra.mxu0 %v1945
  %2288 = vmatprep.subr.mxu0 %v1948
  %2289 = vmatpush1.xpose.msra.mxu0 %v1947
  %2290 = vmatprep.subr.mxu0 %v1950
  %2291 = vmatpush1.xpose.msra.mxu0 %v1949
  %2292 = vmatprep.subr.mxu0 %v1952
  %2293 = vmatpush1.xpose.msra.mxu0 %v1951
  %2294 = vmatprep.subr.mxu0 %v1954
  %2295 = vmatpush1.xpose.msra.mxu0 %v1953
  %2296 = vmatprep.subr.mxu0 %v1956
  %2297 = vmatpush1.xpose.msra.mxu0 %v1955
  %2298 = vmatprep.mubr.f32.mxu0 1.0
  %2299 = vmatmul.mubr.f32.gmra.mrb[0].mxu0 1.0
  %v2300 = vpop.f32.mrb[0].mxu0
  %v2301 = vadd.f32 0.0, %v2300
  %v2302 = vpop.f32.mrb[0].mxu0
  %v2303 = vadd.f32 0.0, %v2302
  %2304 = vdwg.mxu0
  %2305 = vmatprep.subr.mxu0 %v1958
  %2306 = vmatpush1.xpose.msra.mxu0 %v1957
  %2307 = vmatprep.subr.mxu0 %v1960
  %2308 = vmatpush1.xpose.msra.mxu0 %v1959
  %2309 = vmatprep.subr.mxu0 %v1962
  %2310 = vmatpush1.xpose.msra.mxu0 %v1961
  %2311 = vmatprep.subr.mxu0 %v1964
  %2312 = vmatpush1.xpose.msra.mxu0 %v1963
  %2313 = vmatprep.subr.mxu0 %v1966
  %2314 = vmatpush1.xpose.msra.mxu0 %v1965
  %2315 = vmatprep.subr.mxu0 %v1968
  %2316 = vmatpush1.xpose.msra.mxu0 %v1967
  %2317 = vmatprep.subr.mxu0 %v1970
  %2318 = vmatpush1.xpose.msra.mxu0 %v1969
  %2319 = vmatprep.subr.mxu0 %v1972
  %2320 = vmatpush1.xpose.msra.mxu0 %v1971
  %2321 = vmatprep.subr.mxu0 %v1974
  %2322 = vmatpush1.xpose.msra.mxu0 %v1973
  %2323 = vmatprep.subr.mxu0 %v1976
  %2324 = vmatpush1.xpose.msra.mxu0 %v1975
  %2325 = vmatprep.subr.mxu0 %v1978
  %2326 = vmatpush1.xpose.msra.mxu0 %v1977
  %2327 = vmatprep.subr.mxu0 %v1980
  %2328 = vmatpush1.xpose.msra.mxu0 %v1979
  %2329 = vmatprep.subr.mxu0 %v1982
  %2330 = vmatpush1.xpose.msra.mxu0 %v1981
  %2331 = vmatprep.subr.mxu0 %v1984
  %2332 = vmatpush1.xpose.msra.mxu0 %v1983
  %2333 = vmatprep.subr.mxu0 %v1986
  %2334 = vmatpush1.xpose.msra.mxu0 %v1985
  %2335 = vmatprep.subr.mxu0 %v1988
  %2336 = vmatpush1.xpose.msra.mxu0 %v1987
  %2337 = vmatprep.subr.mxu0 %v1990
  %2338 = vmatpush1.xpose.msra.mxu0 %v1989
  %2339 = vmatprep.subr.mxu0 %v1992
  %2340 = vmatpush1.xpose.msra.mxu0 %v1991
  %2341 = vmatprep.subr.mxu0 %v1994
  %2342 = vmatpush1.xpose.msra.mxu0 %v1993
  %2343 = vmatprep.subr.mxu0 %v1996
  %2344 = vmatpush1.xpose.msra.mxu0 %v1995
  %2345 = vmatprep.subr.mxu0 %v1998
  %2346 = vmatpush1.xpose.msra.mxu0 %v1997
  %2347 = vmatprep.subr.mxu0 %v2000
  %2348 = vmatpush1.xpose.msra.mxu0 %v1999
  %2349 = vmatprep.subr.mxu0 %v2002
  %2350 = vmatpush1.xpose.msra.mxu0 %v2001
  %2351 = vmatprep.subr.mxu0 %v2004
  %2352 = vmatpush1.xpose.msra.mxu0 %v2003
  %2353 = vmatprep.subr.mxu0 %v2006
  %2354 = vmatpush1.xpose.msra.mxu0 %v2005
  %2355 = vmatprep.subr.mxu0 %v2008
  %2356 = vmatpush1.xpose.msra.mxu0 %v2007
  %2357 = vmatprep.subr.mxu0 %v2010
  %2358 = vmatpush1.xpose.msra.mxu0 %v2009
  %2359 = vmatprep.subr.mxu0 %v2012
  %2360 = vmatpush1.xpose.msra.mxu0 %v2011
  %2361 = vmatprep.subr.mxu0 %v2014
  %2362 = vmatpush1.xpose.msra.mxu0 %v2013
  %2363 = vmatprep.subr.mxu0 %v2016
  %2364 = vmatpush1.xpose.msra.mxu0 %v2015
  %2365 = vmatprep.subr.mxu0 %v2018
  %2366 = vmatpush1.xpose.msra.mxu0 %v2017
  %2367 = vmatprep.subr.mxu0 %v2020
  %2368 = vmatpush1.xpose.msra.mxu0 %v2019
  %2369 = vmatprep.mubr.f32.mxu0 1.0
  %2370 = vmatmul.mubr.f32.gmra.mrb[0].mxu0 1.0
  %v2371 = vpop.f32.mrb[0].mxu0
  %v2372 = vadd.f32 0.0, %v2371
  %v2373 = vpop.f32.mrb[0].mxu0
  %v2374 = vadd.f32 0.0, %v2373
  %2375 = vdwg.mxu0
  %v2376 = vmul.f32 %v2088, 0.00390625
  %v2377 = vmul.f32 %v2090, 0.00390625
  %v2378 = vmul.f32 %v2159, 0.00390625
  %v2379 = vmul.f32 %v2161, 0.00390625
  %v2380 = vmul.f32 %v2230, 0.00390625
  %v2381 = vmul.f32 %v2232, 0.00390625
  %v2382 = vmul.f32 %v2301, 0.00390625
  %v2383 = vmul.f32 %v2303, 0.00390625
  %v2384 = vmul.f32 %v2372, 0.00390625
  %v2385 = vmul.f32 %v2374, 0.00390625
  %v2396 = vcombine.low %v2376, %v2377
  %v2397 = vcombine.low %v2378, %v2379
  %v2398 = vcombine.low %v2380, %v2381
  %v2399 = vcombine.low %v2382, %v2383
  %v2401 = vunpack.c.l.s4 1966171168
  %v2402 = vunpack.c.0.s8 %v2401
  %v2403 = vlaneseq
  %v2404 = vshrl.u32 %v2403, 7
  %v2405 = vsub.s32 %v2402, %v2404
  %v2406 = vrot.slane %v2396, %v2405
  %v2408 = vunpack.c.l.s4 1966171168
  %v2409 = vunpack.c.0.s8 %v2408
  %v2410 = vlaneseq
  %v2411 = vshrl.u32 %v2410, 7
  %v2412 = vsub.s32 %v2409, %v2411
  %v2413 = vrot.slane %v2397, %v2412
  %v2415 = vunpack.c.l.s4 1966171168
  %v2416 = vunpack.c.0.s8 %v2415
  %v2417 = vlaneseq
  %v2418 = vshrl.u32 %v2417, 7
  %v2419 = vsub.s32 %v2416, %v2418
  %v2420 = vrot.slane %v2398, %v2419
  %v2422 = vunpack.c.l.s4 1966171168
  %v2423 = vunpack.c.0.s8 %v2422
  %v2424 = vlaneseq
  %v2425 = vshrl.u32 %v2424, 7
  %v2426 = vsub.s32 %v2423, %v2425
  %v2427 = vrot.slane %v2399, %v2426
  %v2428 = vcombine.low %v2406, %v2413
  %v2429 = vcombine.low %v2420, %v2427
  %v2431 = vunpack.c.l.s4 1966171168
  %v2432 = vunpack.c.0.s8 %v2431
  %v2433 = vlaneseq
  %v2434 = vshrl.u32 %v2433, 7
  %v2435 = vsub.s32 %v2432, %v2434
  %v2436 = vrot.slane %v2428, %v2435
  %v2438 = vunpack.c.l.s4 1966171168
  %v2439 = vunpack.c.0.s8 %v2438
  %v2440 = vlaneseq
  %v2441 = vshrl.u32 %v2440, 7
  %v2442 = vsub.s32 %v2439, %v2441
  %v2443 = vrot.slane %v2429, %v2442
  %v2444 = vcombine.low %v2436, %v2443
  %v2445 = vcombine.low %v2384, %v2385
  %v2447 = vunpack.c.l.s4 1966171168
  %v2448 = vunpack.c.0.s8 %v2447
  %v2449 = vlaneseq
  %v2450 = vshrl.u32 %v2449, 7
  %v2451 = vsub.s32 %v2448, %v2450
  %v2452 = vrot.slane %v2445, %v2451
  %v2454 = vunpack.c.l.s4 1966171168
  %v2455 = vunpack.c.0.s8 %v2454
  %v2456 = vlaneseq
  %v2457 = vshrl.u32 %v2456, 7
  %v2458 = vsub.s32 %v2455, %v2457
  %v2459 = vrot.slane %v2452, %v2458
  %2462 = vst [vmem:[#allocation2] ss:$8 sm:$0xf] %v2444
  %2463 = vst [vmem:[#allocation2] ss:$8 sm:$0xf0] %v2444
  %v2464 = vlaneseq
  %vm2465 = vcmp.ge.s32.totalorder %v2464, 0
  %vm2466 = vcmp.lt.s32.totalorder %v2464, 256
  %vm2467 = vmand %vm2465, %vm2466
  %s2468 = scalar_lea.vmem [#allocation2], 64
  %2469 = vst.msk [vmem:[%s2468] ss:$8 sm:$0x3] %vm2467, %v2459
  %2470 = vst.msk [vmem:[%s2468] ss:$8 sm:$0x0] %vm2467, %v2459
  %s2471 = scalar_lea.vmem %s0, 8
  %v2472 = vld [vmem:[%s2471] sm:$0x77]
  %v2473 = vld [vmem:[%s1] sm:$0xff]
  %v2474 = vld [vmem:[%s1 + $0x8] sm:$0xff]
  %v2475 = vld [vmem:[%s1 + $0x10] sm:$0xff]
  %v2476 = vld [vmem:[%s1 + $0x18] sm:$0xff]
  %v2477 = vld [vmem:[%s1 + $0x20] sm:$0xff]
  %v2478 = vld [vmem:[%s1 + $0x28] sm:$0xff]
  %v2479 = vld [vmem:[%s1 + $0x30] sm:$0xff]
  %v2480 = vld [vmem:[%s1 + $0x38] sm:$0xff]
  %v2481 = vld [vmem:[%s1 + $0x40] sm:$0xff]
  %v2482 = vld [vmem:[%s1 + $0x48] sm:$0xff]
  %v2483 = vld [vmem:[%s1 + $0x50] sm:$0xff]
  %v2484 = vld [vmem:[%s1 + $0x58] sm:$0xff]
  %v2485 = vld [vmem:[%s1 + $0x60] sm:$0xff]
  %v2486 = vld [vmem:[%s1 + $0x68] sm:$0xff]
  %v2487 = vld [vmem:[%s1 + $0x70] sm:$0xff]
  %v2488 = vld [vmem:[%s1 + $0x78] sm:$0xff]
  %v2489 = vld [vmem:[%s1 + $0x80] sm:$0xff]
  %v2490 = vld [vmem:[%s1 + $0x88] sm:$0xff]
  %v2491 = vld [vmem:[%s1 + $0x90] sm:$0xff]
  %v2492 = vld [vmem:[%s1 + $0x98] sm:$0xff]
  %v2493 = vld [vmem:[%s1 + $0xa0] sm:$0xff]
  %v2494 = vld [vmem:[%s1 + $0xa8] sm:$0xff]
  %v2495 = vld [vmem:[%s1 + $0xb0] sm:$0xff]
  %v2496 = vld [vmem:[%s1 + $0xb8] sm:$0xff]
  %v2497 = vld [vmem:[%s1 + $0xc0] sm:$0xff]
  %v2498 = vld [vmem:[%s1 + $0xc8] sm:$0xff]
  %v2499 = vld [vmem:[%s1 + $0xd0] sm:$0xff]
  %v2500 = vld [vmem:[%s1 + $0xd8] sm:$0xff]
  %v2501 = vld [vmem:[%s1 + $0xe0] sm:$0xff]
  %v2502 = vld [vmem:[%s1 + $0xe8] sm:$0xff]
  %v2503 = vld [vmem:[%s1 + $0xf0] sm:$0xff]
  %v2504 = vld [vmem:[%s1 + $0xf8] sm:$0xff]
  %v2505 = vld [vmem:[%s1 + $0x100] sm:$0xff]
  %v2506 = vld [vmem:[%s1 + $0x108] sm:$0xff]
  %v2507 = vld [vmem:[%s1 + $0x110] sm:$0xff]
  %v2508 = vld [vmem:[%s1 + $0x118] sm:$0xff]
  %v2509 = vld [vmem:[%s1 + $0x120] sm:$0xff]
  %v2510 = vld [vmem:[%s1 + $0x128] sm:$0xff]
  %v2511 = vld [vmem:[%s1 + $0x130] sm:$0xff]
  %v2512 = vld [vmem:[%s1 + $0x138] sm:$0xff]
  %v2513 = vld [vmem:[%s1 + $0x140] sm:$0xff]
  %v2514 = vld [vmem:[%s1 + $0x148] sm:$0xff]
  %v2515 = vld [vmem:[%s1 + $0x150] sm:$0xff]
  %v2516 = vld [vmem:[%s1 + $0x158] sm:$0xff]
  %v2517 = vld [vmem:[%s1 + $0x160] sm:$0xff]
  %v2518 = vld [vmem:[%s1 + $0x168] sm:$0xff]
  %v2519 = vld [vmem:[%s1 + $0x170] sm:$0xff]
  %v2520 = vld [vmem:[%s1 + $0x178] sm:$0xff]
  %v2521 = vld [vmem:[%s1 + $0x180] sm:$0xff]
  %v2522 = vld [vmem:[%s1 + $0x188] sm:$0xff]
  %v2523 = vld [vmem:[%s1 + $0x190] sm:$0xff]
  %v2524 = vld [vmem:[%s1 + $0x198] sm:$0xff]
  %v2525 = vld [vmem:[%s1 + $0x1a0] sm:$0xff]
  %v2526 = vld [vmem:[%s1 + $0x1a8] sm:$0xff]
  %v2527 = vld [vmem:[%s1 + $0x1b0] sm:$0xff]
  %v2528 = vld [vmem:[%s1 + $0x1b8] sm:$0xff]
  %v2529 = vld [vmem:[%s1 + $0x1c0] sm:$0xff]
  %v2530 = vld [vmem:[%s1 + $0x1c8] sm:$0xff]
  %v2531 = vld [vmem:[%s1 + $0x1d0] sm:$0xff]
  %v2532 = vld [vmem:[%s1 + $0x1d8] sm:$0xff]
  %v2533 = vld [vmem:[%s1 + $0x1e0] sm:$0xff]
  %v2534 = vld [vmem:[%s1 + $0x1e8] sm:$0xff]
  %v2535 = vld [vmem:[%s1 + $0x1f0] sm:$0xff]
  %v2536 = vld [vmem:[%s1 + $0x1f8] sm:$0xff]
  %v2537 = vld [vmem:[%s1 + $0x200] sm:$0xff]
  %v2538 = vld [vmem:[%s1 + $0x208] sm:$0xff]
  %v2539 = vld [vmem:[%s1 + $0x210] sm:$0xff]
  %v2540 = vld [vmem:[%s1 + $0x218] sm:$0xff]
  %v2541 = vld [vmem:[%s1 + $0x220] sm:$0xff]
  %v2542 = vld [vmem:[%s1 + $0x228] sm:$0xff]
  %v2543 = vld [vmem:[%s1 + $0x230] sm:$0xff]
  %v2544 = vld [vmem:[%s1 + $0x238] sm:$0xff]
  %v2545 = vld [vmem:[%s1 + $0x240] sm:$0xff]
  %v2546 = vld [vmem:[%s1 + $0x248] sm:$0xff]
  %v2547 = vld [vmem:[%s1 + $0x250] sm:$0xff]
  %v2548 = vld [vmem:[%s1 + $0x258] sm:$0xff]
  %v2549 = vld [vmem:[%s1 + $0x260] sm:$0xff]
  %v2550 = vld [vmem:[%s1 + $0x268] sm:$0xff]
  %v2551 = vld [vmem:[%s1 + $0x270] sm:$0xff]
  %v2552 = vld [vmem:[%s1 + $0x278] sm:$0xff]
  %v2553 = vld [vmem:[%s1 + $0x280] sm:$0xff]
  %v2554 = vld [vmem:[%s1 + $0x288] sm:$0xff]
  %v2555 = vld [vmem:[%s1 + $0x290] sm:$0xff]
  %v2556 = vld [vmem:[%s1 + $0x298] sm:$0xff]
  %v2557 = vld [vmem:[%s1 + $0x2a0] sm:$0xff]
  %v2558 = vld [vmem:[%s1 + $0x2a8] sm:$0xff]
  %v2559 = vld [vmem:[%s1 + $0x2b0] sm:$0xff]
  %v2560 = vld [vmem:[%s1 + $0x2b8] sm:$0xff]
  %v2561 = vld [vmem:[%s1 + $0x2c0] sm:$0xff]
  %v2562 = vld [vmem:[%s1 + $0x2c8] sm:$0xff]
  %v2563 = vld [vmem:[%s1 + $0x2d0] sm:$0xff]
  %v2564 = vld [vmem:[%s1 + $0x2d8] sm:$0xff]
  %v2565 = vld [vmem:[%s1 + $0x2e0] sm:$0xff]
  %v2566 = vld [vmem:[%s1 + $0x2e8] sm:$0xff]
  %v2567 = vld [vmem:[%s1 + $0x2f0] sm:$0xff]
  %v2568 = vld [vmem:[%s1 + $0x2f8] sm:$0xff]
  %v2569 = vld [vmem:[%s1 + $0x300] sm:$0xff]
  %v2570 = vld [vmem:[%s1 + $0x308] sm:$0xff]
  %v2571 = vld [vmem:[%s1 + $0x310] sm:$0xff]
  %v2572 = vld [vmem:[%s1 + $0x318] sm:$0xff]
  %v2573 = vld [vmem:[%s1 + $0x320] sm:$0xff]
  %v2574 = vld [vmem:[%s1 + $0x328] sm:$0xff]
  %v2575 = vld [vmem:[%s1 + $0x330] sm:$0xff]
  %v2576 = vld [vmem:[%s1 + $0x338] sm:$0xff]
  %v2577 = vld [vmem:[%s1 + $0x340] sm:$0xff]
  %v2578 = vld [vmem:[%s1 + $0x348] sm:$0xff]
  %v2579 = vld [vmem:[%s1 + $0x350] sm:$0xff]
  %v2580 = vld [vmem:[%s1 + $0x358] sm:$0xff]
  %v2581 = vld [vmem:[%s1 + $0x360] sm:$0xff]
  %v2582 = vld [vmem:[%s1 + $0x368] sm:$0xff]
  %v2583 = vld [vmem:[%s1 + $0x370] sm:$0xff]
  %v2584 = vld [vmem:[%s1 + $0x378] sm:$0xff]
  %v2585 = vld [vmem:[%s1 + $0x380] sm:$0xff]
  %v2586 = vld [vmem:[%s1 + $0x388] sm:$0xff]
  %v2587 = vld [vmem:[%s1 + $0x390] sm:$0xff]
  %v2588 = vld [vmem:[%s1 + $0x398] sm:$0xff]
  %v2589 = vld [vmem:[%s1 + $0x3a0] sm:$0xff]
  %v2590 = vld [vmem:[%s1 + $0x3a8] sm:$0xff]
  %v2591 = vld [vmem:[%s1 + $0x3b0] sm:$0xff]
  %v2592 = vld [vmem:[%s1 + $0x3b8] sm:$0xff]
  %v2593 = vld [vmem:[%s1 + $0x3c0] sm:$0xff]
  %v2594 = vld [vmem:[%s1 + $0x3c8] sm:$0xff]
  %v2595 = vld [vmem:[%s1 + $0x3d0] sm:$0xff]
  %v2596 = vld [vmem:[%s1 + $0x3d8] sm:$0xff]
  %v2597 = vld [vmem:[%s1 + $0x3e0] sm:$0xff]
  %v2598 = vld [vmem:[%s1 + $0x3e8] sm:$0xff]
  %v2599 = vld [vmem:[%s1 + $0x3f0] sm:$0xff]
  %v2600 = vld [vmem:[%s1 + $0x3f8] sm:$0xff]
  %v2601 = vld [vmem:[%s1 + $0x400] sm:$0xff]
  %v2602 = vld [vmem:[%s1 + $0x408] sm:$0xff]
  %v2603 = vld [vmem:[%s1 + $0x410] sm:$0xff]
  %v2604 = vld [vmem:[%s1 + $0x418] sm:$0xff]
  %v2605 = vld [vmem:[%s1 + $0x420] sm:$0xff]
  %v2606 = vld [vmem:[%s1 + $0x428] sm:$0xff]
  %v2607 = vld [vmem:[%s1 + $0x430] sm:$0xff]
  %v2608 = vld [vmem:[%s1 + $0x438] sm:$0xff]
  %v2609 = vld [vmem:[%s1 + $0x440] sm:$0xff]
  %v2610 = vld [vmem:[%s1 + $0x448] sm:$0xff]
  %v2611 = vld [vmem:[%s1 + $0x450] sm:$0xff]
  %v2612 = vld [vmem:[%s1 + $0x458] sm:$0xff]
  %v2613 = vld [vmem:[%s1 + $0x460] sm:$0xff]
  %v2614 = vld [vmem:[%s1 + $0x468] sm:$0xff]
  %v2615 = vld [vmem:[%s1 + $0x470] sm:$0xff]
  %v2616 = vld [vmem:[%s1 + $0x478] sm:$0xff]
  %v2617 = vld [vmem:[%s1 + $0x480] sm:$0xff]
  %v2618 = vld [vmem:[%s1 + $0x488] sm:$0xff]
  %v2619 = vld [vmem:[%s1 + $0x490] sm:$0xff]
  %v2620 = vld [vmem:[%s1 + $0x498] sm:$0xff]
  %v2621 = vld [vmem:[%s1 + $0x4a0] sm:$0xff]
  %v2622 = vld [vmem:[%s1 + $0x4a8] sm:$0xff]
  %v2623 = vld [vmem:[%s1 + $0x4b0] sm:$0xff]
  %v2624 = vld [vmem:[%s1 + $0x4b8] sm:$0xff]
  %v2625 = vld [vmem:[%s1 + $0x4c0] sm:$0xff]
  %v2626 = vld [vmem:[%s1 + $0x4c8] sm:$0xff]
  %v2627 = vld [vmem:[%s1 + $0x4d0] sm:$0xff]
  %v2628 = vld [vmem:[%s1 + $0x4d8] sm:$0xff]
  %v2629 = vld [vmem:[%s1 + $0x4e0] sm:$0xff]
  %v2630 = vld [vmem:[%s1 + $0x4e8] sm:$0xff]
  %v2631 = vld [vmem:[%s1 + $0x4f0] sm:$0xff]
  %v2632 = vld [vmem:[%s1 + $0x4f8] sm:$0xff]
  %v2634 = vcombine.high %v2472, %v2472
  %v2636 = vsel %vm190, %v2473, 0
  %v2639 = vsel %vm190, %v2474, 0
  %v2642 = vsel %vm190, %v2475, 0
  %v2645 = vsel %vm190, %v2476, 0
  %v2648 = vsel %vm190, %v2477, 0
  %v2651 = vsel %vm190, %v2478, 0
  %v2654 = vsel %vm190, %v2479, 0
  %v2657 = vsel %vm190, %v2480, 0
  %v2660 = vsel %vm190, %v2481, 0
  %v2663 = vsel %vm190, %v2482, 0
  %v2666 = vsel %vm190, %v2483, 0
  %v2669 = vsel %vm190, %v2484, 0
  %v2672 = vsel %vm190, %v2485, 0
  %v2675 = vsel %vm190, %v2486, 0
  %v2678 = vsel %vm190, %v2487, 0
  %v2681 = vsel %vm190, %v2488, 0
  %v2684 = vsel %vm190, %v2489, 0
  %v2687 = vsel %vm190, %v2490, 0
  %v2690 = vsel %vm190, %v2491, 0
  %v2693 = vsel %vm190, %v2492, 0
  %v2696 = vsel %vm190, %v2493, 0
  %v2699 = vsel %vm190, %v2494, 0
  %v2702 = vsel %vm190, %v2495, 0
  %v2705 = vsel %vm190, %v2496, 0
  %v2708 = vsel %vm190, %v2497, 0
  %v2711 = vsel %vm190, %v2498, 0
  %v2714 = vsel %vm190, %v2499, 0
  %v2717 = vsel %vm190, %v2500, 0
  %v2720 = vsel %vm190, %v2501, 0
  %v2723 = vsel %vm190, %v2502, 0
  %v2726 = vsel %vm190, %v2503, 0
  %v2729 = vsel %vm190, %v2504, 0
  %v2732 = vsel %vm190, %v2505, 0
  %v2735 = vsel %vm190, %v2506, 0
  %v2738 = vsel %vm190, %v2507, 0
  %v2741 = vsel %vm190, %v2508, 0
  %v2744 = vsel %vm190, %v2509, 0
  %v2747 = vsel %vm190, %v2510, 0
  %v2750 = vsel %vm190, %v2511, 0
  %v2753 = vsel %vm190, %v2512, 0
  %v2756 = vsel %vm190, %v2513, 0
  %v2759 = vsel %vm190, %v2514, 0
  %v2762 = vsel %vm190, %v2515, 0
  %v2765 = vsel %vm190, %v2516, 0
  %v2768 = vsel %vm190, %v2517, 0
  %v2771 = vsel %vm190, %v2518, 0
  %v2774 = vsel %vm190, %v2519, 0
  %v2777 = vsel %vm190, %v2520, 0
  %v2780 = vsel %vm190, %v2521, 0
  %v2783 = vsel %vm190, %v2522, 0
  %v2786 = vsel %vm190, %v2523, 0
  %v2789 = vsel %vm190, %v2524, 0
  %v2792 = vsel %vm190, %v2525, 0
  %v2795 = vsel %vm190, %v2526, 0
  %v2798 = vsel %vm190, %v2527, 0
  %v2801 = vsel %vm190, %v2528, 0
  %v2804 = vsel %vm190, %v2529, 0
  %v2807 = vsel %vm190, %v2530, 0
  %v2810 = vsel %vm190, %v2531, 0
  %v2813 = vsel %vm190, %v2532, 0
  %v2816 = vsel %vm190, %v2533, 0
  %v2819 = vsel %vm190, %v2534, 0
  %v2822 = vsel %vm190, %v2535, 0
  %v2825 = vsel %vm190, %v2536, 0
  %v2828 = vsel %vm190, %v2537, 0
  %v2831 = vsel %vm190, %v2538, 0
  %v2834 = vsel %vm190, %v2539, 0
  %v2837 = vsel %vm190, %v2540, 0
  %v2840 = vsel %vm190, %v2541, 0
  %v2843 = vsel %vm190, %v2542, 0
  %v2846 = vsel %vm190, %v2543, 0
  %v2849 = vsel %vm190, %v2544, 0
  %v2852 = vsel %vm190, %v2545, 0
  %v2855 = vsel %vm190, %v2546, 0
  %v2858 = vsel %vm190, %v2547, 0
  %v2861 = vsel %vm190, %v2548, 0
  %v2864 = vsel %vm190, %v2549, 0
  %v2867 = vsel %vm190, %v2550, 0
  %v2870 = vsel %vm190, %v2551, 0
  %v2873 = vsel %vm190, %v2552, 0
  %v2876 = vsel %vm190, %v2553, 0
  %v2879 = vsel %vm190, %v2554, 0
  %v2882 = vsel %vm190, %v2555, 0
  %v2885 = vsel %vm190, %v2556, 0
  %v2888 = vsel %vm190, %v2557, 0
  %v2891 = vsel %vm190, %v2558, 0
  %v2894 = vsel %vm190, %v2559, 0
  %v2897 = vsel %vm190, %v2560, 0
  %v2900 = vsel %vm190, %v2561, 0
  %v2903 = vsel %vm190, %v2562, 0
  %v2906 = vsel %vm190, %v2563, 0
  %v2909 = vsel %vm190, %v2564, 0
  %v2912 = vsel %vm190, %v2565, 0
  %v2915 = vsel %vm190, %v2566, 0
  %v2918 = vsel %vm190, %v2567, 0
  %v2921 = vsel %vm190, %v2568, 0
  %v2924 = vsel %vm190, %v2569, 0
  %v2927 = vsel %vm190, %v2570, 0
  %v2930 = vsel %vm190, %v2571, 0
  %v2933 = vsel %vm190, %v2572, 0
  %v2936 = vsel %vm190, %v2573, 0
  %v2939 = vsel %vm190, %v2574, 0
  %v2942 = vsel %vm190, %v2575, 0
  %v2945 = vsel %vm190, %v2576, 0
  %v2948 = vsel %vm190, %v2577, 0
  %v2951 = vsel %vm190, %v2578, 0
  %v2954 = vsel %vm190, %v2579, 0
  %v2957 = vsel %vm190, %v2580, 0
  %v2960 = vsel %vm190, %v2581, 0
  %v2963 = vsel %vm190, %v2582, 0
  %v2966 = vsel %vm190, %v2583, 0
  %v2969 = vsel %vm190, %v2584, 0
  %v2972 = vsel %vm190, %v2585, 0
  %v2975 = vsel %vm190, %v2586, 0
  %v2978 = vsel %vm190, %v2587, 0
  %v2981 = vsel %vm190, %v2588, 0
  %v2984 = vsel %vm190, %v2589, 0
  %v2987 = vsel %vm190, %v2590, 0
  %v2990 = vsel %vm190, %v2591, 0
  %v2993 = vsel %vm190, %v2592, 0
  %v2996 = vsel %vm190, %v2593, 0
  %v2999 = vsel %vm190, %v2594, 0
  %v3002 = vsel %vm190, %v2595, 0
  %v3005 = vsel %vm190, %v2596, 0
  %v3008 = vsel %vm190, %v2597, 0
  %v3011 = vsel %vm190, %v2598, 0
  %v3014 = vsel %vm190, %v2599, 0
  %v3017 = vsel %vm190, %v2600, 0
  %v3020 = vsel %vm190, %v2601, 0
  %v3023 = vsel %vm190, %v2602, 0
  %v3026 = vsel %vm190, %v2603, 0
  %v3029 = vsel %vm190, %v2604, 0
  %v3032 = vsel %vm190, %v2605, 0
  %v3035 = vsel %vm190, %v2606, 0
  %v3038 = vsel %vm190, %v2607, 0
  %v3041 = vsel %vm190, %v2608, 0
  %v3044 = vsel %vm190, %v2609, 0
  %v3047 = vsel %vm190, %v2610, 0
  %v3050 = vsel %vm190, %v2611, 0
  %v3053 = vsel %vm190, %v2612, 0
  %v3056 = vsel %vm190, %v2613, 0
  %v3059 = vsel %vm190, %v2614, 0
  %v3062 = vsel %vm190, %v2615, 0
  %v3065 = vsel %vm190, %v2616, 0
  %v3068 = vsel %vm190, %v2617, 0
  %v3071 = vsel %vm190, %v2618, 0
  %v3074 = vsel %vm190, %v2619, 0
  %v3077 = vsel %vm190, %v2620, 0
  %v3080 = vsel %vm190, %v2621, 0
  %v3083 = vsel %vm190, %v2622, 0
  %v3086 = vsel %vm190, %v2623, 0
  %v3089 = vsel %vm190, %v2624, 0
  %v3092 = vsel %vm190, %v2625, 0
  %v3095 = vsel %vm190, %v2626, 0
  %v3098 = vsel %vm190, %v2627, 0
  %v3101 = vsel %vm190, %v2628, 0
  %v3104 = vsel %vm190, %v2629, 0
  %v3107 = vsel %vm190, %v2630, 0
  %v3110 = vsel %vm190, %v2631, 0
  %v3113 = vsel %vm190, %v2632, 0
  %v3115 = vsel %vm671, %v2472, 0
  %v3117 = vsel %vm671, %v2634, 0
  %3119 = vmatprep.subr.mxu0 %v3117
  %3120 = vmatpush1.msra.mxu0 %v3115
  %3121 = vmatprep.subr.mxu0 0.0
  %3122 = vmatpush1.msra.mxu0 0.0
  %3123 = vmatprep.subr.mxu0 0.0
  %3124 = vmatpush1.msra.mxu0 0.0
  %3125 = vmatprep.subr.mxu0 0.0
  %3126 = vmatpush1.msra.mxu0 0.0
  %3127 = vmatprep.subr.mxu0 0.0
  %3128 = vmatpush1.msra.mxu0 0.0
  %3129 = vmatprep.subr.mxu0 0.0
  %3130 = vmatpush1.msra.mxu0 0.0
  %3131 = vmatprep.subr.mxu0 0.0
  %3132 = vmatpush1.msra.mxu0 0.0
  %3133 = vmatprep.subr.mxu0 0.0
  %3134 = vmatpush1.msra.mxu0 0.0
  %3135 = vmatprep.subr.mxu0 0.0
  %3136 = vmatpush1.msra.mxu0 0.0
  %3137 = vmatprep.subr.mxu0 0.0
  %3138 = vmatpush1.msra.mxu0 0.0
  %3139 = vmatprep.subr.mxu0 0.0
  %3140 = vmatpush1.msra.mxu0 0.0
  %3141 = vmatprep.subr.mxu0 0.0
  %3142 = vmatpush1.msra.mxu0 0.0
  %3143 = vmatprep.subr.mxu0 0.0
  %3144 = vmatpush1.msra.mxu0 0.0
  %3145 = vmatprep.subr.mxu0 0.0
  %3146 = vmatpush1.msra.mxu0 0.0
  %3147 = vmatprep.subr.mxu0 0.0
  %3148 = vmatpush1.msra.mxu0 0.0
  %3149 = vmatprep.subr.mxu0 0.0
  %3150 = vmatpush1.msra.mxu0 0.0
  %3151 = vmatprep.subr.mxu0 0.0
  %3152 = vmatpush1.msra.mxu0 0.0
  %3153 = vmatprep.subr.mxu0 0.0
  %3154 = vmatpush1.msra.mxu0 0.0
  %3155 = vmatprep.subr.mxu0 0.0
  %3156 = vmatpush1.msra.mxu0 0.0
  %3157 = vmatprep.subr.mxu0 0.0
  %3158 = vmatpush1.msra.mxu0 0.0
  %3159 = vmatprep.subr.mxu0 0.0
  %3160 = vmatpush1.msra.mxu0 0.0
  %3161 = vmatprep.subr.mxu0 0.0
  %3162 = vmatpush1.msra.mxu0 0.0
  %3163 = vmatprep.subr.mxu0 0.0
  %3164 = vmatpush1.msra.mxu0 0.0
  %3165 = vmatprep.subr.mxu0 0.0
  %3166 = vmatpush1.msra.mxu0 0.0
  %3167 = vmatprep.subr.mxu0 0.0
  %3168 = vmatpush1.msra.mxu0 0.0
  %3169 = vmatprep.subr.mxu0 0.0
  %3170 = vmatpush1.msra.mxu0 0.0
  %3171 = vmatprep.subr.mxu0 0.0
  %3172 = vmatpush1.msra.mxu0 0.0
  %3173 = vmatprep.subr.mxu0 0.0
  %3174 = vmatpush1.msra.mxu0 0.0
  %3175 = vmatprep.subr.mxu0 0.0
  %3176 = vmatpush1.msra.mxu0 0.0
  %3177 = vmatprep.subr.mxu0 0.0
  %3178 = vmatpush1.msra.mxu0 0.0
  %3179 = vmatprep.subr.mxu0 0.0
  %3180 = vmatpush1.msra.mxu0 0.0
  %3181 = vmatprep.subr.mxu0 0.0
  %3182 = vmatpush1.msra.mxu0 0.0
  %3183 = vmatprep.mubr.f32.mxu0 0.0
  %3184 = vmatmul.mubr.f32.gmra.mrb[0].mxu0 %v2636
  %v3185 = vpop.f32.mrb[0].mxu0
  %v3186 = vadd.f32 0.0, %v3185
  %v3187 = vpop.f32.mrb[0].mxu0
  %v3188 = vadd.f32 0.0, %v3187
  %3189 = vmatprep.mubr.f32.mxu0 0.0
  %3190 = vmatmul.mubr.f32.gmra.mrb[0].mxu0 %v2639
  %v3191 = vpop.f32.mrb[0].mxu0
  %v3192 = vadd.f32 0.0, %v3191
  %v3193 = vpop.f32.mrb[0].mxu0
  %v3194 = vadd.f32 0.0, %v3193
  %3195 = vmatprep.mubr.f32.mxu0 0.0
  %3196 = vmatmul.mubr.f32.gmra.mrb[0].mxu0 %v2642
  %v3197 = vpop.f32.mrb[0].mxu0
  %v3198 = vadd.f32 0.0, %v3197
  %v3199 = vpop.f32.mrb[0].mxu0
  %v3200 = vadd.f32 0.0, %v3199
  %3201 = vmatprep.mubr.f32.mxu0 0.0
  %3202 = vmatmul.mubr.f32.gmra.mrb[0].mxu0 %v2645
  %v3203 = vpop.f32.mrb[0].mxu0
  %v3204 = vadd.f32 0.0, %v3203
  %v3205 = vpop.f32.mrb[0].mxu0
  %v3206 = vadd.f32 0.0, %v3205
  %3207 = vmatprep.mubr.f32.mxu0 0.0
  %3208 = vmatmul.mubr.f32.gmra.mrb[0].mxu0 %v2648
  %v3209 = vpop.f32.mrb[0].mxu0
  %v3210 = vadd.f32 0.0, %v3209
  %v3211 = vpop.f32.mrb[0].mxu0
  %v3212 = vadd.f32 0.0, %v3211
  %3213 = vmatprep.mubr.f32.mxu0 0.0
  %3214 = vmatmul.mubr.f32.gmra.mrb[0].mxu0 %v2651
  %v3215 = vpop.f32.mrb[0].mxu0
  %v3216 = vadd.f32 0.0, %v3215
  %v3217 = vpop.f32.mrb[0].mxu0
  %v3218 = vadd.f32 0.0, %v3217
  %3219 = vmatprep.mubr.f32.mxu0 0.0
  %3220 = vmatmul.mubr.f32.gmra.mrb[0].mxu0 %v2654
  %v3221 = vpop.f32.mrb[0].mxu0
  %v3222 = vadd.f32 0.0, %v3221
  %v3223 = vpop.f32.mrb[0].mxu0
  %v3224 = vadd.f32 0.0, %v3223
  %3225 = vmatprep.mubr.f32.mxu0 0.0
  %3226 = vmatmul.mubr.f32.gmra.mrb[0].mxu0 %v2657
  %v3227 = vpop.f32.mrb[0].mxu0
  %v3228 = vadd.f32 0.0, %v3227
  %v3229 = vpop.f32.mrb[0].mxu0
  %v3230 = vadd.f32 0.0, %v3229
  %3231 = vmatprep.mubr.f32.mxu0 0.0
  %3232 = vmatmul.mubr.f32.gmra.mrb[0].mxu0 %v2660
  %v3233 = vpop.f32.mrb[0].mxu0
  %v3234 = vadd.f32 0.0, %v3233
  %v3235 = vpop.f32.mrb[0].mxu0
  %v3236 = vadd.f32 0.0, %v3235
  %3237 = vmatprep.mubr.f32.mxu0 0.0
  %3238 = vmatmul.mubr.f32.gmra.mrb[0].mxu0 %v2663
  %v3239 = vpop.f32.mrb[0].mxu0
  %v3240 = vadd.f32 0.0, %v3239
  %v3241 = vpop.f32.mrb[0].mxu0
  %v3242 = vadd.f32 0.0, %v3241
  %3243 = vmatprep.mubr.f32.mxu0 0.0
  %3244 = vmatmul.mubr.f32.gmra.mrb[0].mxu0 %v2666
  %v3245 = vpop.f32.mrb[0].mxu0
  %v3246 = vadd.f32 0.0, %v3245
  %v3247 = vpop.f32.mrb[0].mxu0
  %v3248 = vadd.f32 0.0, %v3247
  %3249 = vmatprep.mubr.f32.mxu0 0.0
  %3250 = vmatmul.mubr.f32.gmra.mrb[0].mxu0 %v2669
  %v3251 = vpop.f32.mrb[0].mxu0
  %v3252 = vadd.f32 0.0, %v3251
  %v3253 = vpop.f32.mrb[0].mxu0
  %v3254 = vadd.f32 0.0, %v3253
  %3255 = vmatprep.mubr.f32.mxu0 0.0
  %3256 = vmatmul.mubr.f32.gmra.mrb[0].mxu0 %v2672
  %v3257 = vpop.f32.mrb[0].mxu0
  %v3258 = vadd.f32 0.0, %v3257
  %v3259 = vpop.f32.mrb[0].mxu0
  %v3260 = vadd.f32 0.0, %v3259
  %3261 = vmatprep.mubr.f32.mxu0 0.0
  %3262 = vmatmul.mubr.f32.gmra.mrb[0].mxu0 %v2675
  %v3263 = vpop.f32.mrb[0].mxu0
  %v3264 = vadd.f32 0.0, %v3263
  %v3265 = vpop.f32.mrb[0].mxu0
  %v3266 = vadd.f32 0.0, %v3265
  %3267 = vmatprep.mubr.f32.mxu0 0.0
  %3268 = vmatmul.mubr.f32.gmra.mrb[0].mxu0 %v2678
  %v3269 = vpop.f32.mrb[0].mxu0
  %v3270 = vadd.f32 0.0, %v3269
  %v3271 = vpop.f32.mrb[0].mxu0
  %v3272 = vadd.f32 0.0, %v3271
  %3273 = vmatprep.mubr.f32.mxu0 0.0
  %3274 = vmatmul.mubr.f32.gmra.mrb[0].mxu0 %v2681
  %v3275 = vpop.f32.mrb[0].mxu0
  %v3276 = vadd.f32 0.0, %v3275
  %v3277 = vpop.f32.mrb[0].mxu0
  %v3278 = vadd.f32 0.0, %v3277
  %3279 = vmatprep.mubr.f32.mxu0 0.0
  %3280 = vmatmul.mubr.f32.gmra.mrb[0].mxu0 %v2684
  %v3281 = vpop.f32.mrb[0].mxu0
  %v3282 = vadd.f32 0.0, %v3281
  %v3283 = vpop.f32.mrb[0].mxu0
  %v3284 = vadd.f32 0.0, %v3283
  %3285 = vmatprep.mubr.f32.mxu0 0.0
  %3286 = vmatmul.mubr.f32.gmra.mrb[0].mxu0 %v2687
  %v3287 = vpop.f32.mrb[0].mxu0
  %v3288 = vadd.f32 0.0, %v3287
  %v3289 = vpop.f32.mrb[0].mxu0
  %v3290 = vadd.f32 0.0, %v3289
  %3291 = vmatprep.mubr.f32.mxu0 0.0
  %3292 = vmatmul.mubr.f32.gmra.mrb[0].mxu0 %v2690
  %v3293 = vpop.f32.mrb[0].mxu0
  %v3294 = vadd.f32 0.0, %v3293
  %v3295 = vpop.f32.mrb[0].mxu0
  %v3296 = vadd.f32 0.0, %v3295
  %3297 = vmatprep.mubr.f32.mxu0 0.0
  %3298 = vmatmul.mubr.f32.gmra.mrb[0].mxu0 %v2693
  %v3299 = vpop.f32.mrb[0].mxu0
  %v3300 = vadd.f32 0.0, %v3299
  %v3301 = vpop.f32.mrb[0].mxu0
  %v3302 = vadd.f32 0.0, %v3301
  %3303 = vmatprep.mubr.f32.mxu0 0.0
  %3304 = vmatmul.mubr.f32.gmra.mrb[0].mxu0 %v2696
  %v3305 = vpop.f32.mrb[0].mxu0
  %v3306 = vadd.f32 0.0, %v3305
  %v3307 = vpop.f32.mrb[0].mxu0
  %v3308 = vadd.f32 0.0, %v3307
  %3309 = vmatprep.mubr.f32.mxu0 0.0
  %3310 = vmatmul.mubr.f32.gmra.mrb[0].mxu0 %v2699
  %v3311 = vpop.f32.mrb[0].mxu0
  %v3312 = vadd.f32 0.0, %v3311
  %v3313 = vpop.f32.mrb[0].mxu0
  %v3314 = vadd.f32 0.0, %v3313
  %3315 = vmatprep.mubr.f32.mxu0 0.0
  %3316 = vmatmul.mubr.f32.gmra.mrb[0].mxu0 %v2702
  %v3317 = vpop.f32.mrb[0].mxu0
  %v3318 = vadd.f32 0.0, %v3317
  %v3319 = vpop.f32.mrb[0].mxu0
  %v3320 = vadd.f32 0.0, %v3319
  %3321 = vmatprep.mubr.f32.mxu0 0.0
  %3322 = vmatmul.mubr.f32.gmra.mrb[0].mxu0 %v2705
  %v3323 = vpop.f32.mrb[0].mxu0
  %v3324 = vadd.f32 0.0, %v3323
  %v3325 = vpop.f32.mrb[0].mxu0
  %v3326 = vadd.f32 0.0, %v3325
  %3327 = vmatprep.mubr.f32.mxu0 0.0
  %3328 = vmatmul.mubr.f32.gmra.mrb[0].mxu0 %v2708
  %v3329 = vpop.f32.mrb[0].mxu0
  %v3330 = vadd.f32 0.0, %v3329
  %v3331 = vpop.f32.mrb[0].mxu0
  %v3332 = vadd.f32 0.0, %v3331
  %3333 = vmatprep.mubr.f32.mxu0 0.0
  %3334 = vmatmul.mubr.f32.gmra.mrb[0].mxu0 %v2711
  %v3335 = vpop.f32.mrb[0].mxu0
  %v3336 = vadd.f32 0.0, %v3335
  %v3337 = vpop.f32.mrb[0].mxu0
  %v3338 = vadd.f32 0.0, %v3337
  %3339 = vmatprep.mubr.f32.mxu0 0.0
  %3340 = vmatmul.mubr.f32.gmra.mrb[0].mxu0 %v2714
  %v3341 = vpop.f32.mrb[0].mxu0
  %v3342 = vadd.f32 0.0, %v3341
  %v3343 = vpop.f32.mrb[0].mxu0
  %v3344 = vadd.f32 0.0, %v3343
  %3345 = vmatprep.mubr.f32.mxu0 0.0
  %3346 = vmatmul.mubr.f32.gmra.mrb[0].mxu0 %v2717
  %v3347 = vpop.f32.mrb[0].mxu0
  %v3348 = vadd.f32 0.0, %v3347
  %v3349 = vpop.f32.mrb[0].mxu0
  %v3350 = vadd.f32 0.0, %v3349
  %3351 = vmatprep.mubr.f32.mxu0 0.0
  %3352 = vmatmul.mubr.f32.gmra.mrb[0].mxu0 %v2720
  %v3353 = vpop.f32.mrb[0].mxu0
  %v3354 = vadd.f32 0.0, %v3353
  %v3355 = vpop.f32.mrb[0].mxu0
  %v3356 = vadd.f32 0.0, %v3355
  %3357 = vmatprep.mubr.f32.mxu0 0.0
  %3358 = vmatmul.mubr.f32.gmra.mrb[0].mxu0 %v2723
  %v3359 = vpop.f32.mrb[0].mxu0
  %v3360 = vadd.f32 0.0, %v3359
  %v3361 = vpop.f32.mrb[0].mxu0
  %v3362 = vadd.f32 0.0, %v3361
  %3363 = vmatprep.mubr.f32.mxu0 0.0
  %3364 = vmatmul.mubr.f32.gmra.mrb[0].mxu0 %v2726
  %v3365 = vpop.f32.mrb[0].mxu0
  %v3366 = vadd.f32 0.0, %v3365
  %v3367 = vpop.f32.mrb[0].mxu0
  %v3368 = vadd.f32 0.0, %v3367
  %3369 = vmatprep.mubr.f32.mxu0 0.0
  %3370 = vmatmul.mubr.f32.gmra.mrb[0].mxu0 %v2729
  %v3371 = vpop.f32.mrb[0].mxu0
  %v3372 = vadd.f32 0.0, %v3371
  %v3373 = vpop.f32.mrb[0].mxu0
  %v3374 = vadd.f32 0.0, %v3373
  %3375 = vmatprep.mubr.f32.mxu0 0.0
  %3376 = vmatmul.mubr.f32.gmra.mrb[0].mxu0 %v2732
  %v3377 = vpop.f32.mrb[0].mxu0
  %v3378 = vadd.f32 0.0, %v3377
  %v3379 = vpop.f32.mrb[0].mxu0
  %v3380 = vadd.f32 0.0, %v3379
  %3381 = vmatprep.mubr.f32.mxu0 0.0
  %3382 = vmatmul.mubr.f32.gmra.mrb[0].mxu0 %v2735
  %v3383 = vpop.f32.mrb[0].mxu0
  %v3384 = vadd.f32 0.0, %v3383
  %v3385 = vpop.f32.mrb[0].mxu0
  %v3386 = vadd.f32 0.0, %v3385
  %3387 = vmatprep.mubr.f32.mxu0 0.0
  %3388 = vmatmul.mubr.f32.gmra.mrb[0].mxu0 %v2738
  %v3389 = vpop.f32.mrb[0].mxu0
  %v3390 = vadd.f32 0.0, %v3389
  %v3391 = vpop.f32.mrb[0].mxu0
  %v3392 = vadd.f32 0.0, %v3391
  %3393 = vmatprep.mubr.f32.mxu0 0.0
  %3394 = vmatmul.mubr.f32.gmra.mrb[0].mxu0 %v2741
  %v3395 = vpop.f32.mrb[0].mxu0
  %v3396 = vadd.f32 0.0, %v3395
  %v3397 = vpop.f32.mrb[0].mxu0
  %v3398 = vadd.f32 0.0, %v3397
  %3399 = vmatprep.mubr.f32.mxu0 0.0
  %3400 = vmatmul.mubr.f32.gmra.mrb[0].mxu0 %v2744
  %v3401 = vpop.f32.mrb[0].mxu0
  %v3402 = vadd.f32 0.0, %v3401
  %v3403 = vpop.f32.mrb[0].mxu0
  %v3404 = vadd.f32 0.0, %v3403
  %3405 = vmatprep.mubr.f32.mxu0 0.0
  %3406 = vmatmul.mubr.f32.gmra.mrb[0].mxu0 %v2747
  %v3407 = vpop.f32.mrb[0].mxu0
  %v3408 = vadd.f32 0.0, %v3407
  %v3409 = vpop.f32.mrb[0].mxu0
  %v3410 = vadd.f32 0.0, %v3409
  %3411 = vmatprep.mubr.f32.mxu0 0.0
  %3412 = vmatmul.mubr.f32.gmra.mrb[0].mxu0 %v2750
  %v3413 = vpop.f32.mrb[0].mxu0
  %v3414 = vadd.f32 0.0, %v3413
  %v3415 = vpop.f32.mrb[0].mxu0
  %v3416 = vadd.f32 0.0, %v3415
  %3417 = vmatprep.mubr.f32.mxu0 0.0
  %3418 = vmatmul.mubr.f32.gmra.mrb[0].mxu0 %v2753
  %v3419 = vpop.f32.mrb[0].mxu0
  %v3420 = vadd.f32 0.0, %v3419
  %v3421 = vpop.f32.mrb[0].mxu0
  %v3422 = vadd.f32 0.0, %v3421
  %3423 = vmatprep.mubr.f32.mxu0 0.0
  %3424 = vmatmul.mubr.f32.gmra.mrb[0].mxu0 %v2756
  %v3425 = vpop.f32.mrb[0].mxu0
  %v3426 = vadd.f32 0.0, %v3425
  %v3427 = vpop.f32.mrb[0].mxu0
  %v3428 = vadd.f32 0.0, %v3427
  %3429 = vmatprep.mubr.f32.mxu0 0.0
  %3430 = vmatmul.mubr.f32.gmra.mrb[0].mxu0 %v2759
  %v3431 = vpop.f32.mrb[0].mxu0
  %v3432 = vadd.f32 0.0, %v3431
  %v3433 = vpop.f32.mrb[0].mxu0
  %v3434 = vadd.f32 0.0, %v3433
  %3435 = vmatprep.mubr.f32.mxu0 0.0
  %3436 = vmatmul.mubr.f32.gmra.mrb[0].mxu0 %v2762
  %v3437 = vpop.f32.mrb[0].mxu0
  %v3438 = vadd.f32 0.0, %v3437
  %v3439 = vpop.f32.mrb[0].mxu0
  %v3440 = vadd.f32 0.0, %v3439
  %3441 = vmatprep.mubr.f32.mxu0 0.0
  %3442 = vmatmul.mubr.f32.gmra.mrb[0].mxu0 %v2765
  %v3443 = vpop.f32.mrb[0].mxu0
  %v3444 = vadd.f32 0.0, %v3443
  %v3445 = vpop.f32.mrb[0].mxu0
  %v3446 = vadd.f32 0.0, %v3445
  %3447 = vmatprep.mubr.f32.mxu0 0.0
  %3448 = vmatmul.mubr.f32.gmra.mrb[0].mxu0 %v2768
  %v3449 = vpop.f32.mrb[0].mxu0
  %v3450 = vadd.f32 0.0, %v3449
  %v3451 = vpop.f32.mrb[0].mxu0
  %v3452 = vadd.f32 0.0, %v3451
  %3453 = vmatprep.mubr.f32.mxu0 0.0
  %3454 = vmatmul.mubr.f32.gmra.mrb[0].mxu0 %v2771
  %v3455 = vpop.f32.mrb[0].mxu0
  %v3456 = vadd.f32 0.0, %v3455
  %v3457 = vpop.f32.mrb[0].mxu0
  %v3458 = vadd.f32 0.0, %v3457
  %3459 = vmatprep.mubr.f32.mxu0 0.0
  %3460 = vmatmul.mubr.f32.gmra.mrb[0].mxu0 %v2774
  %v3461 = vpop.f32.mrb[0].mxu0
  %v3462 = vadd.f32 0.0, %v3461
  %v3463 = vpop.f32.mrb[0].mxu0
  %v3464 = vadd.f32 0.0, %v3463
  %3465 = vmatprep.mubr.f32.mxu0 0.0
  %3466 = vmatmul.mubr.f32.gmra.mrb[0].mxu0 %v2777
  %v3467 = vpop.f32.mrb[0].mxu0
  %v3468 = vadd.f32 0.0, %v3467
  %v3469 = vpop.f32.mrb[0].mxu0
  %v3470 = vadd.f32 0.0, %v3469
  %3471 = vmatprep.mubr.f32.mxu0 0.0
  %3472 = vmatmul.mubr.f32.gmra.mrb[0].mxu0 %v2780
  %v3473 = vpop.f32.mrb[0].mxu0
  %v3474 = vadd.f32 0.0, %v3473
  %v3475 = vpop.f32.mrb[0].mxu0
  %v3476 = vadd.f32 0.0, %v3475
  %3477 = vmatprep.mubr.f32.mxu0 0.0
  %3478 = vmatmul.mubr.f32.gmra.mrb[0].mxu0 %v2783
  %v3479 = vpop.f32.mrb[0].mxu0
  %v3480 = vadd.f32 0.0, %v3479
  %v3481 = vpop.f32.mrb[0].mxu0
  %v3482 = vadd.f32 0.0, %v3481
  %3483 = vmatprep.mubr.f32.mxu0 0.0
  %3484 = vmatmul.mubr.f32.gmra.mrb[0].mxu0 %v2786
  %v3485 = vpop.f32.mrb[0].mxu0
  %v3486 = vadd.f32 0.0, %v3485
  %v3487 = vpop.f32.mrb[0].mxu0
  %v3488 = vadd.f32 0.0, %v3487
  %3489 = vmatprep.mubr.f32.mxu0 0.0
  %3490 = vmatmul.mubr.f32.gmra.mrb[0].mxu0 %v2789
  %v3491 = vpop.f32.mrb[0].mxu0
  %v3492 = vadd.f32 0.0, %v3491
  %v3493 = vpop.f32.mrb[0].mxu0
  %v3494 = vadd.f32 0.0, %v3493
  %3495 = vmatprep.mubr.f32.mxu0 0.0
  %3496 = vmatmul.mubr.f32.gmra.mrb[0].mxu0 %v2792
  %v3497 = vpop.f32.mrb[0].mxu0
  %v3498 = vadd.f32 0.0, %v3497
  %v3499 = vpop.f32.mrb[0].mxu0
  %v3500 = vadd.f32 0.0, %v3499
  %3501 = vmatprep.mubr.f32.mxu0 0.0
  %3502 = vmatmul.mubr.f32.gmra.mrb[0].mxu0 %v2795
  %v3503 = vpop.f32.mrb[0].mxu0
  %v3504 = vadd.f32 0.0, %v3503
  %v3505 = vpop.f32.mrb[0].mxu0
  %v3506 = vadd.f32 0.0, %v3505
  %3507 = vmatprep.mubr.f32.mxu0 0.0
  %3508 = vmatmul.mubr.f32.gmra.mrb[0].mxu0 %v2798
  %v3509 = vpop.f32.mrb[0].mxu0
  %v3510 = vadd.f32 0.0, %v3509
  %v3511 = vpop.f32.mrb[0].mxu0
  %v3512 = vadd.f32 0.0, %v3511
  %3513 = vmatprep.mubr.f32.mxu0 0.0
  %3514 = vmatmul.mubr.f32.gmra.mrb[0].mxu0 %v2801
  %v3515 = vpop.f32.mrb[0].mxu0
  %v3516 = vadd.f32 0.0, %v3515
  %v3517 = vpop.f32.mrb[0].mxu0
  %v3518 = vadd.f32 0.0, %v3517
  %3519 = vmatprep.mubr.f32.mxu0 0.0
  %3520 = vmatmul.mubr.f32.gmra.mrb[0].mxu0 %v2804
  %v3521 = vpop.f32.mrb[0].mxu0
  %v3522 = vadd.f32 0.0, %v3521
  %v3523 = vpop.f32.mrb[0].mxu0
  %v3524 = vadd.f32 0.0, %v3523
  %3525 = vmatprep.mubr.f32.mxu0 0.0
  %3526 = vmatmul.mubr.f32.gmra.mrb[0].mxu0 %v2807
  %v3527 = vpop.f32.mrb[0].mxu0
  %v3528 = vadd.f32 0.0, %v3527
  %v3529 = vpop.f32.mrb[0].mxu0
  %v3530 = vadd.f32 0.0, %v3529
  %3531 = vmatprep.mubr.f32.mxu0 0.0
  %3532 = vmatmul.mubr.f32.gmra.mrb[0].mxu0 %v2810
  %v3533 = vpop.f32.mrb[0].mxu0
  %v3534 = vadd.f32 0.0, %v3533
  %v3535 = vpop.f32.mrb[0].mxu0
  %v3536 = vadd.f32 0.0, %v3535
  %3537 = vmatprep.mubr.f32.mxu0 0.0
  %3538 = vmatmul.mubr.f32.gmra.mrb[0].mxu0 %v2813
  %v3539 = vpop.f32.mrb[0].mxu0
  %v3540 = vadd.f32 0.0, %v3539
  %v3541 = vpop.f32.mrb[0].mxu0
  %v3542 = vadd.f32 0.0, %v3541
  %3543 = vmatprep.mubr.f32.mxu0 0.0
  %3544 = vmatmul.mubr.f32.gmra.mrb[0].mxu0 %v2816
  %v3545 = vpop.f32.mrb[0].mxu0
  %v3546 = vadd.f32 0.0, %v3545
  %v3547 = vpop.f32.mrb[0].mxu0
  %v3548 = vadd.f32 0.0, %v3547
  %3549 = vmatprep.mubr.f32.mxu0 0.0
  %3550 = vmatmul.mubr.f32.gmra.mrb[0].mxu0 %v2819
  %v3551 = vpop.f32.mrb[0].mxu0
  %v3552 = vadd.f32 0.0, %v3551
  %v3553 = vpop.f32.mrb[0].mxu0
  %v3554 = vadd.f32 0.0, %v3553
  %3555 = vmatprep.mubr.f32.mxu0 0.0
  %3556 = vmatmul.mubr.f32.gmra.mrb[0].mxu0 %v2822
  %v3557 = vpop.f32.mrb[0].mxu0
  %v3558 = vadd.f32 0.0, %v3557
  %v3559 = vpop.f32.mrb[0].mxu0
  %v3560 = vadd.f32 0.0, %v3559
  %3561 = vmatprep.mubr.f32.mxu0 0.0
  %3562 = vmatmul.mubr.f32.gmra.mrb[0].mxu0 %v2825
  %v3563 = vpop.f32.mrb[0].mxu0
  %v3564 = vadd.f32 0.0, %v3563
  %v3565 = vpop.f32.mrb[0].mxu0
  %v3566 = vadd.f32 0.0, %v3565
  %3567 = vmatprep.mubr.f32.mxu0 0.0
  %3568 = vmatmul.mubr.f32.gmra.mrb[0].mxu0 %v2828
  %v3569 = vpop.f32.mrb[0].mxu0
  %v3570 = vadd.f32 0.0, %v3569
  %v3571 = vpop.f32.mrb[0].mxu0
  %v3572 = vadd.f32 0.0, %v3571
  %3573 = vmatprep.mubr.f32.mxu0 0.0
  %3574 = vmatmul.mubr.f32.gmra.mrb[0].mxu0 %v2831
  %v3575 = vpop.f32.mrb[0].mxu0
  %v3576 = vadd.f32 0.0, %v3575
  %v3577 = vpop.f32.mrb[0].mxu0
  %v3578 = vadd.f32 0.0, %v3577
  %3579 = vmatprep.mubr.f32.mxu0 0.0
  %3580 = vmatmul.mubr.f32.gmra.mrb[0].mxu0 %v2834
  %v3581 = vpop.f32.mrb[0].mxu0
  %v3582 = vadd.f32 0.0, %v3581
  %v3583 = vpop.f32.mrb[0].mxu0
  %v3584 = vadd.f32 0.0, %v3583
  %3585 = vmatprep.mubr.f32.mxu0 0.0
  %3586 = vmatmul.mubr.f32.gmra.mrb[0].mxu0 %v2837
  %v3587 = vpop.f32.mrb[0].mxu0
  %v3588 = vadd.f32 0.0, %v3587
  %v3589 = vpop.f32.mrb[0].mxu0
  %v3590 = vadd.f32 0.0, %v3589
  %3591 = vmatprep.mubr.f32.mxu0 0.0
  %3592 = vmatmul.mubr.f32.gmra.mrb[0].mxu0 %v2840
  %v3593 = vpop.f32.mrb[0].mxu0
  %v3594 = vadd.f32 0.0, %v3593
  %v3595 = vpop.f32.mrb[0].mxu0
  %v3596 = vadd.f32 0.0, %v3595
  %3597 = vmatprep.mubr.f32.mxu0 0.0
  %3598 = vmatmul.mubr.f32.gmra.mrb[0].mxu0 %v2843
  %v3599 = vpop.f32.mrb[0].mxu0
  %v3600 = vadd.f32 0.0, %v3599
  %v3601 = vpop.f32.mrb[0].mxu0
  %v3602 = vadd.f32 0.0, %v3601
  %3603 = vmatprep.mubr.f32.mxu0 0.0
  %3604 = vmatmul.mubr.f32.gmra.mrb[0].mxu0 %v2846
  %v3605 = vpop.f32.mrb[0].mxu0
  %v3606 = vadd.f32 0.0, %v3605
  %v3607 = vpop.f32.mrb[0].mxu0
  %v3608 = vadd.f32 0.0, %v3607
  %3609 = vmatprep.mubr.f32.mxu0 0.0
  %3610 = vmatmul.mubr.f32.gmra.mrb[0].mxu0 %v2849
  %v3611 = vpop.f32.mrb[0].mxu0
  %v3612 = vadd.f32 0.0, %v3611
  %v3613 = vpop.f32.mrb[0].mxu0
  %v3614 = vadd.f32 0.0, %v3613
  %3615 = vmatprep.mubr.f32.mxu0 0.0
  %3616 = vmatmul.mubr.f32.gmra.mrb[0].mxu0 %v2852
  %v3617 = vpop.f32.mrb[0].mxu0
  %v3618 = vadd.f32 0.0, %v3617
  %v3619 = vpop.f32.mrb[0].mxu0
  %v3620 = vadd.f32 0.0, %v3619
  %3621 = vmatprep.mubr.f32.mxu0 0.0
  %3622 = vmatmul.mubr.f32.gmra.mrb[0].mxu0 %v2855
  %v3623 = vpop.f32.mrb[0].mxu0
  %v3624 = vadd.f32 0.0, %v3623
  %v3625 = vpop.f32.mrb[0].mxu0
  %v3626 = vadd.f32 0.0, %v3625
  %3627 = vmatprep.mubr.f32.mxu0 0.0
  %3628 = vmatmul.mubr.f32.gmra.mrb[0].mxu0 %v2858
  %v3629 = vpop.f32.mrb[0].mxu0
  %v3630 = vadd.f32 0.0, %v3629
  %v3631 = vpop.f32.mrb[0].mxu0
  %v3632 = vadd.f32 0.0, %v3631
  %3633 = vmatprep.mubr.f32.mxu0 0.0
  %3634 = vmatmul.mubr.f32.gmra.mrb[0].mxu0 %v2861
  %v3635 = vpop.f32.mrb[0].mxu0
  %v3636 = vadd.f32 0.0, %v3635
  %v3637 = vpop.f32.mrb[0].mxu0
  %v3638 = vadd.f32 0.0, %v3637
  %3639 = vmatprep.mubr.f32.mxu0 0.0
  %3640 = vmatmul.mubr.f32.gmra.mrb[0].mxu0 %v2864
  %v3641 = vpop.f32.mrb[0].mxu0
  %v3642 = vadd.f32 0.0, %v3641
  %v3643 = vpop.f32.mrb[0].mxu0
  %v3644 = vadd.f32 0.0, %v3643
  %3645 = vmatprep.mubr.f32.mxu0 0.0
  %3646 = vmatmul.mubr.f32.gmra.mrb[0].mxu0 %v2867
  %v3647 = vpop.f32.mrb[0].mxu0
  %v3648 = vadd.f32 0.0, %v3647
  %v3649 = vpop.f32.mrb[0].mxu0
  %v3650 = vadd.f32 0.0, %v3649
  %3651 = vmatprep.mubr.f32.mxu0 0.0
  %3652 = vmatmul.mubr.f32.gmra.mrb[0].mxu0 %v2870
  %v3653 = vpop.f32.mrb[0].mxu0
  %v3654 = vadd.f32 0.0, %v3653
  %v3655 = vpop.f32.mrb[0].mxu0
  %v3656 = vadd.f32 0.0, %v3655
  %3657 = vmatprep.mubr.f32.mxu0 0.0
  %3658 = vmatmul.mubr.f32.gmra.mrb[0].mxu0 %v2873
  %v3659 = vpop.f32.mrb[0].mxu0
  %v3660 = vadd.f32 0.0, %v3659
  %v3661 = vpop.f32.mrb[0].mxu0
  %v3662 = vadd.f32 0.0, %v3661
  %3663 = vmatprep.mubr.f32.mxu0 0.0
  %3664 = vmatmul.mubr.f32.gmra.mrb[0].mxu0 %v2876
  %v3665 = vpop.f32.mrb[0].mxu0
  %v3666 = vadd.f32 0.0, %v3665
  %v3667 = vpop.f32.mrb[0].mxu0
  %v3668 = vadd.f32 0.0, %v3667
  %3669 = vmatprep.mubr.f32.mxu0 0.0
  %3670 = vmatmul.mubr.f32.gmra.mrb[0].mxu0 %v2879
  %v3671 = vpop.f32.mrb[0].mxu0
  %v3672 = vadd.f32 0.0, %v3671
  %v3673 = vpop.f32.mrb[0].mxu0
  %v3674 = vadd.f32 0.0, %v3673
  %3675 = vmatprep.mubr.f32.mxu0 0.0
  %3676 = vmatmul.mubr.f32.gmra.mrb[0].mxu0 %v2882
  %v3677 = vpop.f32.mrb[0].mxu0
  %v3678 = vadd.f32 0.0, %v3677
  %v3679 = vpop.f32.mrb[0].mxu0
  %v3680 = vadd.f32 0.0, %v3679
  %3681 = vmatprep.mubr.f32.mxu0 0.0
  %3682 = vmatmul.mubr.f32.gmra.mrb[0].mxu0 %v2885
  %v3683 = vpop.f32.mrb[0].mxu0
  %v3684 = vadd.f32 0.0, %v3683
  %v3685 = vpop.f32.mrb[0].mxu0
  %v3686 = vadd.f32 0.0, %v3685
  %3687 = vmatprep.mubr.f32.mxu0 0.0
  %3688 = vmatmul.mubr.f32.gmra.mrb[0].mxu0 %v2888
  %v3689 = vpop.f32.mrb[0].mxu0
  %v3690 = vadd.f32 0.0, %v3689
  %v3691 = vpop.f32.mrb[0].mxu0
  %v3692 = vadd.f32 0.0, %v3691
  %3693 = vmatprep.mubr.f32.mxu0 0.0
  %3694 = vmatmul.mubr.f32.gmra.mrb[0].mxu0 %v2891
  %v3695 = vpop.f32.mrb[0].mxu0
  %v3696 = vadd.f32 0.0, %v3695
  %v3697 = vpop.f32.mrb[0].mxu0
  %v3698 = vadd.f32 0.0, %v3697
  %3699 = vmatprep.mubr.f32.mxu0 0.0
  %3700 = vmatmul.mubr.f32.gmra.mrb[0].mxu0 %v2894
  %v3701 = vpop.f32.mrb[0].mxu0
  %v3702 = vadd.f32 0.0, %v3701
  %v3703 = vpop.f32.mrb[0].mxu0
  %v3704 = vadd.f32 0.0, %v3703
  %3705 = vmatprep.mubr.f32.mxu0 0.0
  %3706 = vmatmul.mubr.f32.gmra.mrb[0].mxu0 %v2897
  %v3707 = vpop.f32.mrb[0].mxu0
  %v3708 = vadd.f32 0.0, %v3707
  %v3709 = vpop.f32.mrb[0].mxu0
  %v3710 = vadd.f32 0.0, %v3709
  %3711 = vmatprep.mubr.f32.mxu0 0.0
  %3712 = vmatmul.mubr.f32.gmra.mrb[0].mxu0 %v2900
  %v3713 = vpop.f32.mrb[0].mxu0
  %v3714 = vadd.f32 0.0, %v3713
  %v3715 = vpop.f32.mrb[0].mxu0
  %v3716 = vadd.f32 0.0, %v3715
  %3717 = vmatprep.mubr.f32.mxu0 0.0
  %3718 = vmatmul.mubr.f32.gmra.mrb[0].mxu0 %v2903
  %v3719 = vpop.f32.mrb[0].mxu0
  %v3720 = vadd.f32 0.0, %v3719
  %v3721 = vpop.f32.mrb[0].mxu0
  %v3722 = vadd.f32 0.0, %v3721
  %3723 = vmatprep.mubr.f32.mxu0 0.0
  %3724 = vmatmul.mubr.f32.gmra.mrb[0].mxu0 %v2906
  %v3725 = vpop.f32.mrb[0].mxu0
  %v3726 = vadd.f32 0.0, %v3725
  %v3727 = vpop.f32.mrb[0].mxu0
  %v3728 = vadd.f32 0.0, %v3727
  %3729 = vmatprep.mubr.f32.mxu0 0.0
  %3730 = vmatmul.mubr.f32.gmra.mrb[0].mxu0 %v2909
  %v3731 = vpop.f32.mrb[0].mxu0
  %v3732 = vadd.f32 0.0, %v3731
  %v3733 = vpop.f32.mrb[0].mxu0
  %v3734 = vadd.f32 0.0, %v3733
  %3735 = vmatprep.mubr.f32.mxu0 0.0
  %3736 = vmatmul.mubr.f32.gmra.mrb[0].mxu0 %v2912
  %v3737 = vpop.f32.mrb[0].mxu0
  %v3738 = vadd.f32 0.0, %v3737
  %v3739 = vpop.f32.mrb[0].mxu0
  %v3740 = vadd.f32 0.0, %v3739
  %3741 = vmatprep.mubr.f32.mxu0 0.0
  %3742 = vmatmul.mubr.f32.gmra.mrb[0].mxu0 %v2915
  %v3743 = vpop.f32.mrb[0].mxu0
  %v3744 = vadd.f32 0.0, %v3743
  %v3745 = vpop.f32.mrb[0].mxu0
  %v3746 = vadd.f32 0.0, %v3745
  %3747 = vmatprep.mubr.f32.mxu0 0.0
  %3748 = vmatmul.mubr.f32.gmra.mrb[0].mxu0 %v2918
  %v3749 = vpop.f32.mrb[0].mxu0
  %v3750 = vadd.f32 0.0, %v3749
  %v3751 = vpop.f32.mrb[0].mxu0
  %v3752 = vadd.f32 0.0, %v3751
  %3753 = vmatprep.mubr.f32.mxu0 0.0
  %3754 = vmatmul.mubr.f32.gmra.mrb[0].mxu0 %v2921
  %v3755 = vpop.f32.mrb[0].mxu0
  %v3756 = vadd.f32 0.0, %v3755
  %v3757 = vpop.f32.mrb[0].mxu0
  %v3758 = vadd.f32 0.0, %v3757
  %3759 = vmatprep.mubr.f32.mxu0 0.0
  %3760 = vmatmul.mubr.f32.gmra.mrb[0].mxu0 %v2924
  %v3761 = vpop.f32.mrb[0].mxu0
  %v3762 = vadd.f32 0.0, %v3761
  %v3763 = vpop.f32.mrb[0].mxu0
  %v3764 = vadd.f32 0.0, %v3763
  %3765 = vmatprep.mubr.f32.mxu0 0.0
  %3766 = vmatmul.mubr.f32.gmra.mrb[0].mxu0 %v2927
  %v3767 = vpop.f32.mrb[0].mxu0
  %v3768 = vadd.f32 0.0, %v3767
  %v3769 = vpop.f32.mrb[0].mxu0
  %v3770 = vadd.f32 0.0, %v3769
  %3771 = vmatprep.mubr.f32.mxu0 0.0
  %3772 = vmatmul.mubr.f32.gmra.mrb[0].mxu0 %v2930
  %v3773 = vpop.f32.mrb[0].mxu0
  %v3774 = vadd.f32 0.0, %v3773
  %v3775 = vpop.f32.mrb[0].mxu0
  %v3776 = vadd.f32 0.0, %v3775
  %3777 = vmatprep.mubr.f32.mxu0 0.0
  %3778 = vmatmul.mubr.f32.gmra.mrb[0].mxu0 %v2933
  %v3779 = vpop.f32.mrb[0].mxu0
  %v3780 = vadd.f32 0.0, %v3779
  %v3781 = vpop.f32.mrb[0].mxu0
  %v3782 = vadd.f32 0.0, %v3781
  %3783 = vmatprep.mubr.f32.mxu0 0.0
  %3784 = vmatmul.mubr.f32.gmra.mrb[0].mxu0 %v2936
  %v3785 = vpop.f32.mrb[0].mxu0
  %v3786 = vadd.f32 0.0, %v3785
  %v3787 = vpop.f32.mrb[0].mxu0
  %v3788 = vadd.f32 0.0, %v3787
  %3789 = vmatprep.mubr.f32.mxu0 0.0
  %3790 = vmatmul.mubr.f32.gmra.mrb[0].mxu0 %v2939
  %v3791 = vpop.f32.mrb[0].mxu0
  %v3792 = vadd.f32 0.0, %v3791
  %v3793 = vpop.f32.mrb[0].mxu0
  %v3794 = vadd.f32 0.0, %v3793
  %3795 = vmatprep.mubr.f32.mxu0 0.0
  %3796 = vmatmul.mubr.f32.gmra.mrb[0].mxu0 %v2942
  %v3797 = vpop.f32.mrb[0].mxu0
  %v3798 = vadd.f32 0.0, %v3797
  %v3799 = vpop.f32.mrb[0].mxu0
  %v3800 = vadd.f32 0.0, %v3799
  %3801 = vmatprep.mubr.f32.mxu0 0.0
  %3802 = vmatmul.mubr.f32.gmra.mrb[0].mxu0 %v2945
  %v3803 = vpop.f32.mrb[0].mxu0
  %v3804 = vadd.f32 0.0, %v3803
  %v3805 = vpop.f32.mrb[0].mxu0
  %v3806 = vadd.f32 0.0, %v3805
  %3807 = vmatprep.mubr.f32.mxu0 0.0
  %3808 = vmatmul.mubr.f32.gmra.mrb[0].mxu0 %v2948
  %v3809 = vpop.f32.mrb[0].mxu0
  %v3810 = vadd.f32 0.0, %v3809
  %v3811 = vpop.f32.mrb[0].mxu0
  %v3812 = vadd.f32 0.0, %v3811
  %3813 = vmatprep.mubr.f32.mxu0 0.0
  %3814 = vmatmul.mubr.f32.gmra.mrb[0].mxu0 %v2951
  %v3815 = vpop.f32.mrb[0].mxu0
  %v3816 = vadd.f32 0.0, %v3815
  %v3817 = vpop.f32.mrb[0].mxu0
  %v3818 = vadd.f32 0.0, %v3817
  %3819 = vmatprep.mubr.f32.mxu0 0.0
  %3820 = vmatmul.mubr.f32.gmra.mrb[0].mxu0 %v2954
  %v3821 = vpop.f32.mrb[0].mxu0
  %v3822 = vadd.f32 0.0, %v3821
  %v3823 = vpop.f32.mrb[0].mxu0
  %v3824 = vadd.f32 0.0, %v3823
  %3825 = vmatprep.mubr.f32.mxu0 0.0
  %3826 = vmatmul.mubr.f32.gmra.mrb[0].mxu0 %v2957
  %v3827 = vpop.f32.mrb[0].mxu0
  %v3828 = vadd.f32 0.0, %v3827
  %v3829 = vpop.f32.mrb[0].mxu0
  %v3830 = vadd.f32 0.0, %v3829
  %3831 = vmatprep.mubr.f32.mxu0 0.0
  %3832 = vmatmul.mubr.f32.gmra.mrb[0].mxu0 %v2960
  %v3833 = vpop.f32.mrb[0].mxu0
  %v3834 = vadd.f32 0.0, %v3833
  %v3835 = vpop.f32.mrb[0].mxu0
  %v3836 = vadd.f32 0.0, %v3835
  %3837 = vmatprep.mubr.f32.mxu0 0.0
  %3838 = vmatmul.mubr.f32.gmra.mrb[0].mxu0 %v2963
  %v3839 = vpop.f32.mrb[0].mxu0
  %v3840 = vadd.f32 0.0, %v3839
  %v3841 = vpop.f32.mrb[0].mxu0
  %v3842 = vadd.f32 0.0, %v3841
  %3843 = vmatprep.mubr.f32.mxu0 0.0
  %3844 = vmatmul.mubr.f32.gmra.mrb[0].mxu0 %v2966
  %v3845 = vpop.f32.mrb[0].mxu0
  %v3846 = vadd.f32 0.0, %v3845
  %v3847 = vpop.f32.mrb[0].mxu0
  %v3848 = vadd.f32 0.0, %v3847
  %3849 = vmatprep.mubr.f32.mxu0 0.0
  %3850 = vmatmul.mubr.f32.gmra.mrb[0].mxu0 %v2969
  %v3851 = vpop.f32.mrb[0].mxu0
  %v3852 = vadd.f32 0.0, %v3851
  %v3853 = vpop.f32.mrb[0].mxu0
  %v3854 = vadd.f32 0.0, %v3853
  %3855 = vmatprep.mubr.f32.mxu0 0.0
  %3856 = vmatmul.mubr.f32.gmra.mrb[0].mxu0 %v2972
  %v3857 = vpop.f32.mrb[0].mxu0
  %v3858 = vadd.f32 0.0, %v3857
  %v3859 = vpop.f32.mrb[0].mxu0
  %v3860 = vadd.f32 0.0, %v3859
  %3861 = vmatprep.mubr.f32.mxu0 0.0
  %3862 = vmatmul.mubr.f32.gmra.mrb[0].mxu0 %v2975
  %v3863 = vpop.f32.mrb[0].mxu0
  %v3864 = vadd.f32 0.0, %v3863
  %v3865 = vpop.f32.mrb[0].mxu0
  %v3866 = vadd.f32 0.0, %v3865
  %3867 = vmatprep.mubr.f32.mxu0 0.0
  %3868 = vmatmul.mubr.f32.gmra.mrb[0].mxu0 %v2978
  %v3869 = vpop.f32.mrb[0].mxu0
  %v3870 = vadd.f32 0.0, %v3869
  %v3871 = vpop.f32.mrb[0].mxu0
  %v3872 = vadd.f32 0.0, %v3871
  %3873 = vmatprep.mubr.f32.mxu0 0.0
  %3874 = vmatmul.mubr.f32.gmra.mrb[0].mxu0 %v2981
  %v3875 = vpop.f32.mrb[0].mxu0
  %v3876 = vadd.f32 0.0, %v3875
  %v3877 = vpop.f32.mrb[0].mxu0
  %v3878 = vadd.f32 0.0, %v3877
  %3879 = vmatprep.mubr.f32.mxu0 0.0
  %3880 = vmatmul.mubr.f32.gmra.mrb[0].mxu0 %v2984
  %v3881 = vpop.f32.mrb[0].mxu0
  %v3882 = vadd.f32 0.0, %v3881
  %v3883 = vpop.f32.mrb[0].mxu0
  %v3884 = vadd.f32 0.0, %v3883
  %3885 = vmatprep.mubr.f32.mxu0 0.0
  %3886 = vmatmul.mubr.f32.gmra.mrb[0].mxu0 %v2987
  %v3887 = vpop.f32.mrb[0].mxu0
  %v3888 = vadd.f32 0.0, %v3887
  %v3889 = vpop.f32.mrb[0].mxu0
  %v3890 = vadd.f32 0.0, %v3889
  %3891 = vmatprep.mubr.f32.mxu0 0.0
  %3892 = vmatmul.mubr.f32.gmra.mrb[0].mxu0 %v2990
  %v3893 = vpop.f32.mrb[0].mxu0
  %v3894 = vadd.f32 0.0, %v3893
  %v3895 = vpop.f32.mrb[0].mxu0
  %v3896 = vadd.f32 0.0, %v3895
  %3897 = vmatprep.mubr.f32.mxu0 0.0
  %3898 = vmatmul.mubr.f32.gmra.mrb[0].mxu0 %v2993
  %v3899 = vpop.f32.mrb[0].mxu0
  %v3900 = vadd.f32 0.0, %v3899
  %v3901 = vpop.f32.mrb[0].mxu0
  %v3902 = vadd.f32 0.0, %v3901
  %3903 = vmatprep.mubr.f32.mxu0 0.0
  %3904 = vmatmul.mubr.f32.gmra.mrb[0].mxu0 %v2996
  %v3905 = vpop.f32.mrb[0].mxu0
  %v3906 = vadd.f32 0.0, %v3905
  %v3907 = vpop.f32.mrb[0].mxu0
  %v3908 = vadd.f32 0.0, %v3907
  %3909 = vmatprep.mubr.f32.mxu0 0.0
  %3910 = vmatmul.mubr.f32.gmra.mrb[0].mxu0 %v2999
  %v3911 = vpop.f32.mrb[0].mxu0
  %v3912 = vadd.f32 0.0, %v3911
  %v3913 = vpop.f32.mrb[0].mxu0
  %v3914 = vadd.f32 0.0, %v3913
  %3915 = vmatprep.mubr.f32.mxu0 0.0
  %3916 = vmatmul.mubr.f32.gmra.mrb[0].mxu0 %v3002
  %v3917 = vpop.f32.mrb[0].mxu0
  %v3918 = vadd.f32 0.0, %v3917
  %v3919 = vpop.f32.mrb[0].mxu0
  %v3920 = vadd.f32 0.0, %v3919
  %3921 = vmatprep.mubr.f32.mxu0 0.0
  %3922 = vmatmul.mubr.f32.gmra.mrb[0].mxu0 %v3005
  %v3923 = vpop.f32.mrb[0].mxu0
  %v3924 = vadd.f32 0.0, %v3923
  %v3925 = vpop.f32.mrb[0].mxu0
  %v3926 = vadd.f32 0.0, %v3925
  %3927 = vmatprep.mubr.f32.mxu0 0.0
  %3928 = vmatmul.mubr.f32.gmra.mrb[0].mxu0 %v3008
  %v3929 = vpop.f32.mrb[0].mxu0
  %v3930 = vadd.f32 0.0, %v3929
  %v3931 = vpop.f32.mrb[0].mxu0
  %v3932 = vadd.f32 0.0, %v3931
  %3933 = vmatprep.mubr.f32.mxu0 0.0
  %3934 = vmatmul.mubr.f32.gmra.mrb[0].mxu0 %v3011
  %v3935 = vpop.f32.mrb[0].mxu0
  %v3936 = vadd.f32 0.0, %v3935
  %v3937 = vpop.f32.mrb[0].mxu0
  %v3938 = vadd.f32 0.0, %v3937
  %3939 = vmatprep.mubr.f32.mxu0 0.0
  %3940 = vmatmul.mubr.f32.gmra.mrb[0].mxu0 %v3014
  %v3941 = vpop.f32.mrb[0].mxu0
  %v3942 = vadd.f32 0.0, %v3941
  %v3943 = vpop.f32.mrb[0].mxu0
  %v3944 = vadd.f32 0.0, %v3943
  %3945 = vmatprep.mubr.f32.mxu0 0.0
  %3946 = vmatmul.mubr.f32.gmra.mrb[0].mxu0 %v3017
  %v3947 = vpop.f32.mrb[0].mxu0
  %v3948 = vadd.f32 0.0, %v3947
  %v3949 = vpop.f32.mrb[0].mxu0
  %v3950 = vadd.f32 0.0, %v3949
  %3951 = vmatprep.mubr.f32.mxu0 0.0
  %3952 = vmatmul.mubr.f32.gmra.mrb[0].mxu0 %v3020
  %v3953 = vpop.f32.mrb[0].mxu0
  %v3954 = vadd.f32 0.0, %v3953
  %v3955 = vpop.f32.mrb[0].mxu0
  %v3956 = vadd.f32 0.0, %v3955
  %3957 = vmatprep.mubr.f32.mxu0 0.0
  %3958 = vmatmul.mubr.f32.gmra.mrb[0].mxu0 %v3023
  %v3959 = vpop.f32.mrb[0].mxu0
  %v3960 = vadd.f32 0.0, %v3959
  %v3961 = vpop.f32.mrb[0].mxu0
  %v3962 = vadd.f32 0.0, %v3961
  %3963 = vmatprep.mubr.f32.mxu0 0.0
  %3964 = vmatmul.mubr.f32.gmra.mrb[0].mxu0 %v3026
  %v3965 = vpop.f32.mrb[0].mxu0
  %v3966 = vadd.f32 0.0, %v3965
  %v3967 = vpop.f32.mrb[0].mxu0
  %v3968 = vadd.f32 0.0, %v3967
  %3969 = vmatprep.mubr.f32.mxu0 0.0
  %3970 = vmatmul.mubr.f32.gmra.mrb[0].mxu0 %v3029
  %v3971 = vpop.f32.mrb[0].mxu0
  %v3972 = vadd.f32 0.0, %v3971
  %v3973 = vpop.f32.mrb[0].mxu0
  %v3974 = vadd.f32 0.0, %v3973
  %3975 = vmatprep.mubr.f32.mxu0 0.0
  %3976 = vmatmul.mubr.f32.gmra.mrb[0].mxu0 %v3032
  %v3977 = vpop.f32.mrb[0].mxu0
  %v3978 = vadd.f32 0.0, %v3977
  %v3979 = vpop.f32.mrb[0].mxu0
  %v3980 = vadd.f32 0.0, %v3979
  %3981 = vmatprep.mubr.f32.mxu0 0.0
  %3982 = vmatmul.mubr.f32.gmra.mrb[0].mxu0 %v3035
  %v3983 = vpop.f32.mrb[0].mxu0
  %v3984 = vadd.f32 0.0, %v3983
  %v3985 = vpop.f32.mrb[0].mxu0
  %v3986 = vadd.f32 0.0, %v3985
  %3987 = vmatprep.mubr.f32.mxu0 0.0
  %3988 = vmatmul.mubr.f32.gmra.mrb[0].mxu0 %v3038
  %v3989 = vpop.f32.mrb[0].mxu0
  %v3990 = vadd.f32 0.0, %v3989
  %v3991 = vpop.f32.mrb[0].mxu0
  %v3992 = vadd.f32 0.0, %v3991
  %3993 = vmatprep.mubr.f32.mxu0 0.0
  %3994 = vmatmul.mubr.f32.gmra.mrb[0].mxu0 %v3041
  %v3995 = vpop.f32.mrb[0].mxu0
  %v3996 = vadd.f32 0.0, %v3995
  %v3997 = vpop.f32.mrb[0].mxu0
  %v3998 = vadd.f32 0.0, %v3997
  %3999 = vmatprep.mubr.f32.mxu0 0.0
  %4000 = vmatmul.mubr.f32.gmra.mrb[0].mxu0 %v3044
  %v4001 = vpop.f32.mrb[0].mxu0
  %v4002 = vadd.f32 0.0, %v4001
  %v4003 = vpop.f32.mrb[0].mxu0
  %v4004 = vadd.f32 0.0, %v4003
  %4005 = vmatprep.mubr.f32.mxu0 0.0
  %4006 = vmatmul.mubr.f32.gmra.mrb[0].mxu0 %v3047
  %v4007 = vpop.f32.mrb[0].mxu0
  %v4008 = vadd.f32 0.0, %v4007
  %v4009 = vpop.f32.mrb[0].mxu0
  %v4010 = vadd.f32 0.0, %v4009
  %4011 = vmatprep.mubr.f32.mxu0 0.0
  %4012 = vmatmul.mubr.f32.gmra.mrb[0].mxu0 %v3050
  %v4013 = vpop.f32.mrb[0].mxu0
  %v4014 = vadd.f32 0.0, %v4013
  %v4015 = vpop.f32.mrb[0].mxu0
  %v4016 = vadd.f32 0.0, %v4015
  %4017 = vmatprep.mubr.f32.mxu0 0.0
  %4018 = vmatmul.mubr.f32.gmra.mrb[0].mxu0 %v3053
  %v4019 = vpop.f32.mrb[0].mxu0
  %v4020 = vadd.f32 0.0, %v4019
  %v4021 = vpop.f32.mrb[0].mxu0
  %v4022 = vadd.f32 0.0, %v4021
  %4023 = vmatprep.mubr.f32.mxu0 0.0
  %4024 = vmatmul.mubr.f32.gmra.mrb[0].mxu0 %v3056
  %v4025 = vpop.f32.mrb[0].mxu0
  %v4026 = vadd.f32 0.0, %v4025
  %v4027 = vpop.f32.mrb[0].mxu0
  %v4028 = vadd.f32 0.0, %v4027
  %4029 = vmatprep.mubr.f32.mxu0 0.0
  %4030 = vmatmul.mubr.f32.gmra.mrb[0].mxu0 %v3059
  %v4031 = vpop.f32.mrb[0].mxu0
  %v4032 = vadd.f32 0.0, %v4031
  %v4033 = vpop.f32.mrb[0].mxu0
  %v4034 = vadd.f32 0.0, %v4033
  %4035 = vmatprep.mubr.f32.mxu0 0.0
  %4036 = vmatmul.mubr.f32.gmra.mrb[0].mxu0 %v3062
  %v4037 = vpop.f32.mrb[0].mxu0
  %v4038 = vadd.f32 0.0, %v4037
  %v4039 = vpop.f32.mrb[0].mxu0
  %v4040 = vadd.f32 0.0, %v4039
  %4041 = vmatprep.mubr.f32.mxu0 0.0
  %4042 = vmatmul.mubr.f32.gmra.mrb[0].mxu0 %v3065
  %v4043 = vpop.f32.mrb[0].mxu0
  %v4044 = vadd.f32 0.0, %v4043
  %v4045 = vpop.f32.mrb[0].mxu0
  %v4046 = vadd.f32 0.0, %v4045
  %4047 = vmatprep.mubr.f32.mxu0 0.0
  %4048 = vmatmul.mubr.f32.gmra.mrb[0].mxu0 %v3068
  %v4049 = vpop.f32.mrb[0].mxu0
  %v4050 = vadd.f32 0.0, %v4049
  %v4051 = vpop.f32.mrb[0].mxu0
  %v4052 = vadd.f32 0.0, %v4051
  %4053 = vmatprep.mubr.f32.mxu0 0.0
  %4054 = vmatmul.mubr.f32.gmra.mrb[0].mxu0 %v3071
  %v4055 = vpop.f32.mrb[0].mxu0
  %v4056 = vadd.f32 0.0, %v4055
  %v4057 = vpop.f32.mrb[0].mxu0
  %v4058 = vadd.f32 0.0, %v4057
  %4059 = vmatprep.mubr.f32.mxu0 0.0
  %4060 = vmatmul.mubr.f32.gmra.mrb[0].mxu0 %v3074
  %v4061 = vpop.f32.mrb[0].mxu0
  %v4062 = vadd.f32 0.0, %v4061
  %v4063 = vpop.f32.mrb[0].mxu0
  %v4064 = vadd.f32 0.0, %v4063
  %4065 = vmatprep.mubr.f32.mxu0 0.0
  %4066 = vmatmul.mubr.f32.gmra.mrb[0].mxu0 %v3077
  %v4067 = vpop.f32.mrb[0].mxu0
  %v4068 = vadd.f32 0.0, %v4067
  %v4069 = vpop.f32.mrb[0].mxu0
  %v4070 = vadd.f32 0.0, %v4069
  %4071 = vmatprep.mubr.f32.mxu0 0.0
  %4072 = vmatmul.mubr.f32.gmra.mrb[0].mxu0 %v3080
  %v4073 = vpop.f32.mrb[0].mxu0
  %v4074 = vadd.f32 0.0, %v4073
  %v4075 = vpop.f32.mrb[0].mxu0
  %v4076 = vadd.f32 0.0, %v4075
  %4077 = vmatprep.mubr.f32.mxu0 0.0
  %4078 = vmatmul.mubr.f32.gmra.mrb[0].mxu0 %v3083
  %v4079 = vpop.f32.mrb[0].mxu0
  %v4080 = vadd.f32 0.0, %v4079
  %v4081 = vpop.f32.mrb[0].mxu0
  %v4082 = vadd.f32 0.0, %v4081
  %4083 = vmatprep.mubr.f32.mxu0 0.0
  %4084 = vmatmul.mubr.f32.gmra.mrb[0].mxu0 %v3086
  %v4085 = vpop.f32.mrb[0].mxu0
  %v4086 = vadd.f32 0.0, %v4085
  %v4087 = vpop.f32.mrb[0].mxu0
  %v4088 = vadd.f32 0.0, %v4087
  %4089 = vmatprep.mubr.f32.mxu0 0.0
  %4090 = vmatmul.mubr.f32.gmra.mrb[0].mxu0 %v3089
  %v4091 = vpop.f32.mrb[0].mxu0
  %v4092 = vadd.f32 0.0, %v4091
  %v4093 = vpop.f32.mrb[0].mxu0
  %v4094 = vadd.f32 0.0, %v4093
  %4095 = vmatprep.mubr.f32.mxu0 0.0
  %4096 = vmatmul.mubr.f32.gmra.mrb[0].mxu0 %v3092
  %v4097 = vpop.f32.mrb[0].mxu0
  %v4098 = vadd.f32 0.0, %v4097
  %v4099 = vpop.f32.mrb[0].mxu0
  %v4100 = vadd.f32 0.0, %v4099
  %4101 = vmatprep.mubr.f32.mxu0 0.0
  %4102 = vmatmul.mubr.f32.gmra.mrb[0].mxu0 %v3095
  %v4103 = vpop.f32.mrb[0].mxu0
  %v4104 = vadd.f32 0.0, %v4103
  %v4105 = vpop.f32.mrb[0].mxu0
  %v4106 = vadd.f32 0.0, %v4105
  %4107 = vmatprep.mubr.f32.mxu0 0.0
  %4108 = vmatmul.mubr.f32.gmra.mrb[0].mxu0 %v3098
  %v4109 = vpop.f32.mrb[0].mxu0
  %v4110 = vadd.f32 0.0, %v4109
  %v4111 = vpop.f32.mrb[0].mxu0
  %v4112 = vadd.f32 0.0, %v4111
  %4113 = vmatprep.mubr.f32.mxu0 0.0
  %4114 = vmatmul.mubr.f32.gmra.mrb[0].mxu0 %v3101
  %v4115 = vpop.f32.mrb[0].mxu0
  %v4116 = vadd.f32 0.0, %v4115
  %v4117 = vpop.f32.mrb[0].mxu0
  %v4118 = vadd.f32 0.0, %v4117
  %4119 = vmatprep.mubr.f32.mxu0 0.0
  %4120 = vmatmul.mubr.f32.gmra.mrb[0].mxu0 %v3104
  %v4121 = vpop.f32.mrb[0].mxu0
  %v4122 = vadd.f32 0.0, %v4121
  %v4123 = vpop.f32.mrb[0].mxu0
  %v4124 = vadd.f32 0.0, %v4123
  %4125 = vmatprep.mubr.f32.mxu0 0.0
  %4126 = vmatmul.mubr.f32.gmra.mrb[0].mxu0 %v3107
  %v4127 = vpop.f32.mrb[0].mxu0
  %v4128 = vadd.f32 0.0, %v4127
  %v4129 = vpop.f32.mrb[0].mxu0
  %v4130 = vadd.f32 0.0, %v4129
  %4131 = vmatprep.mubr.f32.mxu0 0.0
  %4132 = vmatmul.mubr.f32.gmra.mrb[0].mxu0 %v3110
  %v4133 = vpop.f32.mrb[0].mxu0
  %v4134 = vadd.f32 0.0, %v4133
  %v4135 = vpop.f32.mrb[0].mxu0
  %v4136 = vadd.f32 0.0, %v4135
  %4137 = vmatprep.mubr.f32.mxu0 0.0
  %4138 = vmatmul.mubr.f32.gmra.mrb[0].mxu0 %v3113
  %v4139 = vpop.f32.mrb[0].mxu0
  %v4140 = vadd.f32 0.0, %v4139
  %v4141 = vpop.f32.mrb[0].mxu0
  %v4142 = vadd.f32 0.0, %v4141
  %4143 = vdwg.mxu0
  %v4144 = vmax.f32 %v3186, 0.0
  %v4145 = vmax.f32 %v3188, 0.0
  %v4146 = vmax.f32 %v3192, 0.0
  %v4147 = vmax.f32 %v3194, 0.0
  %v4148 = vmax.f32 %v3198, 0.0
  %v4149 = vmax.f32 %v3200, 0.0
  %v4150 = vmax.f32 %v3204, 0.0
  %v4151 = vmax.f32 %v3206, 0.0
  %v4152 = vmax.f32 %v3210, 0.0
  %v4153 = vmax.f32 %v3212, 0.0
  %v4154 = vmax.f32 %v3216, 0.0
  %v4155 = vmax.f32 %v3218, 0.0
  %v4156 = vmax.f32 %v3222, 0.0
  %v4157 = vmax.f32 %v3224, 0.0
  %v4158 = vmax.f32 %v3228, 0.0
  %v4159 = vmax.f32 %v3230, 0.0
  %v4160 = vmax.f32 %v3234, 0.0
  %v4161 = vmax.f32 %v3236, 0.0
  %v4162 = vmax.f32 %v3240, 0.0
  %v4163 = vmax.f32 %v3242, 0.0
  %v4164 = vmax.f32 %v3246, 0.0
  %v4165 = vmax.f32 %v3248, 0.0
  %v4166 = vmax.f32 %v3252, 0.0
  %v4167 = vmax.f32 %v3254, 0.0
  %v4168 = vmax.f32 %v3258, 0.0
  %v4169 = vmax.f32 %v3260, 0.0
  %v4170 = vmax.f32 %v3264, 0.0
  %v4171 = vmax.f32 %v3266, 0.0
  %v4172 = vmax.f32 %v3270, 0.0
  %v4173 = vmax.f32 %v3272, 0.0
  %v4174 = vmax.f32 %v3276, 0.0
  %v4175 = vmax.f32 %v3278, 0.0
  %v4176 = vmax.f32 %v3282, 0.0
  %v4177 = vmax.f32 %v3284, 0.0
  %v4178 = vmax.f32 %v3288, 0.0
  %v4179 = vmax.f32 %v3290, 0.0
  %v4180 = vmax.f32 %v3294, 0.0
  %v4181 = vmax.f32 %v3296, 0.0
  %v4182 = vmax.f32 %v3300, 0.0
  %v4183 = vmax.f32 %v3302, 0.0
  %v4184 = vmax.f32 %v3306, 0.0
  %v4185 = vmax.f32 %v3308, 0.0
  %v4186 = vmax.f32 %v3312, 0.0
  %v4187 = vmax.f32 %v3314, 0.0
  %v4188 = vmax.f32 %v3318, 0.0
  %v4189 = vmax.f32 %v3320, 0.0
  %v4190 = vmax.f32 %v3324, 0.0
  %v4191 = vmax.f32 %v3326, 0.0
  %v4192 = vmax.f32 %v3330, 0.0
  %v4193 = vmax.f32 %v3332, 0.0
  %v4194 = vmax.f32 %v3336, 0.0
  %v4195 = vmax.f32 %v3338, 0.0
  %v4196 = vmax.f32 %v3342, 0.0
  %v4197 = vmax.f32 %v3344, 0.0
  %v4198 = vmax.f32 %v3348, 0.0
  %v4199 = vmax.f32 %v3350, 0.0
  %v4200 = vmax.f32 %v3354, 0.0
  %v4201 = vmax.f32 %v3356, 0.0
  %v4202 = vmax.f32 %v3360, 0.0
  %v4203 = vmax.f32 %v3362, 0.0
  %v4204 = vmax.f32 %v3366, 0.0
  %v4205 = vmax.f32 %v3368, 0.0
  %v4206 = vmax.f32 %v3372, 0.0
  %v4207 = vmax.f32 %v3374, 0.0
  %v4208 = vmax.f32 %v3378, 0.0
  %v4209 = vmax.f32 %v3380, 0.0
  %v4210 = vmax.f32 %v3384, 0.0
  %v4211 = vmax.f32 %v3386, 0.0
  %v4212 = vmax.f32 %v3390, 0.0
  %v4213 = vmax.f32 %v3392, 0.0
  %v4214 = vmax.f32 %v3396, 0.0
  %v4215 = vmax.f32 %v3398, 0.0
  %v4216 = vmax.f32 %v3402, 0.0
  %v4217 = vmax.f32 %v3404, 0.0
  %v4218 = vmax.f32 %v3408, 0.0
  %v4219 = vmax.f32 %v3410, 0.0
  %v4220 = vmax.f32 %v3414, 0.0
  %v4221 = vmax.f32 %v3416, 0.0
  %v4222 = vmax.f32 %v3420, 0.0
  %v4223 = vmax.f32 %v3422, 0.0
  %v4224 = vmax.f32 %v3426, 0.0
  %v4225 = vmax.f32 %v3428, 0.0
  %v4226 = vmax.f32 %v3432, 0.0
  %v4227 = vmax.f32 %v3434, 0.0
  %v4228 = vmax.f32 %v3438, 0.0
  %v4229 = vmax.f32 %v3440, 0.0
  %v4230 = vmax.f32 %v3444, 0.0
  %v4231 = vmax.f32 %v3446, 0.0
  %v4232 = vmax.f32 %v3450, 0.0
  %v4233 = vmax.f32 %v3452, 0.0
  %v4234 = vmax.f32 %v3456, 0.0
  %v4235 = vmax.f32 %v3458, 0.0
  %v4236 = vmax.f32 %v3462, 0.0
  %v4237 = vmax.f32 %v3464, 0.0
  %v4238 = vmax.f32 %v3468, 0.0
  %v4239 = vmax.f32 %v3470, 0.0
  %v4240 = vmax.f32 %v3474, 0.0
  %v4241 = vmax.f32 %v3476, 0.0
  %v4242 = vmax.f32 %v3480, 0.0
  %v4243 = vmax.f32 %v3482, 0.0
  %v4244 = vmax.f32 %v3486, 0.0
  %v4245 = vmax.f32 %v3488, 0.0
  %v4246 = vmax.f32 %v3492, 0.0
  %v4247 = vmax.f32 %v3494, 0.0
  %v4248 = vmax.f32 %v3498, 0.0
  %v4249 = vmax.f32 %v3500, 0.0
  %v4250 = vmax.f32 %v3504, 0.0
  %v4251 = vmax.f32 %v3506, 0.0
  %v4252 = vmax.f32 %v3510, 0.0
  %v4253 = vmax.f32 %v3512, 0.0
  %v4254 = vmax.f32 %v3516, 0.0
  %v4255 = vmax.f32 %v3518, 0.0
  %v4256 = vmax.f32 %v3522, 0.0
  %v4257 = vmax.f32 %v3524, 0.0
  %v4258 = vmax.f32 %v3528, 0.0
  %v4259 = vmax.f32 %v3530, 0.0
  %v4260 = vmax.f32 %v3534, 0.0
  %v4261 = vmax.f32 %v3536, 0.0
  %v4262 = vmax.f32 %v3540, 0.0
  %v4263 = vmax.f32 %v3542, 0.0
  %v4264 = vmax.f32 %v3546, 0.0
  %v4265 = vmax.f32 %v3548, 0.0
  %v4266 = vmax.f32 %v3552, 0.0
  %v4267 = vmax.f32 %v3554, 0.0
  %v4268 = vmax.f32 %v3558, 0.0
  %v4269 = vmax.f32 %v3560, 0.0
  %v4270 = vmax.f32 %v3564, 0.0
  %v4271 = vmax.f32 %v3566, 0.0
  %v4272 = vmax.f32 %v3570, 0.0
  %v4273 = vmax.f32 %v3572, 0.0
  %v4274 = vmax.f32 %v3576, 0.0
  %v4275 = vmax.f32 %v3578, 0.0
  %v4276 = vmax.f32 %v3582, 0.0
  %v4277 = vmax.f32 %v3584, 0.0
  %v4278 = vmax.f32 %v3588, 0.0
  %v4279 = vmax.f32 %v3590, 0.0
  %v4280 = vmax.f32 %v3594, 0.0
  %v4281 = vmax.f32 %v3596, 0.0
  %v4282 = vmax.f32 %v3600, 0.0
  %v4283 = vmax.f32 %v3602, 0.0
  %v4284 = vmax.f32 %v3606, 0.0
  %v4285 = vmax.f32 %v3608, 0.0
  %v4286 = vmax.f32 %v3612, 0.0
  %v4287 = vmax.f32 %v3614, 0.0
  %v4288 = vmax.f32 %v3618, 0.0
  %v4289 = vmax.f32 %v3620, 0.0
  %v4290 = vmax.f32 %v3624, 0.0
  %v4291 = vmax.f32 %v3626, 0.0
  %v4292 = vmax.f32 %v3630, 0.0
  %v4293 = vmax.f32 %v3632, 0.0
  %v4294 = vmax.f32 %v3636, 0.0
  %v4295 = vmax.f32 %v3638, 0.0
  %v4296 = vmax.f32 %v3642, 0.0
  %v4297 = vmax.f32 %v3644, 0.0
  %v4298 = vmax.f32 %v3648, 0.0
  %v4299 = vmax.f32 %v3650, 0.0
  %v4300 = vmax.f32 %v3654, 0.0
  %v4301 = vmax.f32 %v3656, 0.0
  %v4302 = vmax.f32 %v3660, 0.0
  %v4303 = vmax.f32 %v3662, 0.0
  %v4304 = vmax.f32 %v3666, 0.0
  %v4305 = vmax.f32 %v3668, 0.0
  %v4306 = vmax.f32 %v3672, 0.0
  %v4307 = vmax.f32 %v3674, 0.0
  %v4308 = vmax.f32 %v3678, 0.0
  %v4309 = vmax.f32 %v3680, 0.0
  %v4310 = vmax.f32 %v3684, 0.0
  %v4311 = vmax.f32 %v3686, 0.0
  %v4312 = vmax.f32 %v3690, 0.0
  %v4313 = vmax.f32 %v3692, 0.0
  %v4314 = vmax.f32 %v3696, 0.0
  %v4315 = vmax.f32 %v3698, 0.0
  %v4316 = vmax.f32 %v3702, 0.0
  %v4317 = vmax.f32 %v3704, 0.0
  %v4318 = vmax.f32 %v3708, 0.0
  %v4319 = vmax.f32 %v3710, 0.0
  %v4320 = vmax.f32 %v3714, 0.0
  %v4321 = vmax.f32 %v3716, 0.0
  %v4322 = vmax.f32 %v3720, 0.0
  %v4323 = vmax.f32 %v3722, 0.0
  %v4324 = vmax.f32 %v3726, 0.0
  %v4325 = vmax.f32 %v3728, 0.0
  %v4326 = vmax.f32 %v3732, 0.0
  %v4327 = vmax.f32 %v3734, 0.0
  %v4328 = vmax.f32 %v3738, 0.0
  %v4329 = vmax.f32 %v3740, 0.0
  %v4330 = vmax.f32 %v3744, 0.0
  %v4331 = vmax.f32 %v3746, 0.0
  %v4332 = vmax.f32 %v3750, 0.0
  %v4333 = vmax.f32 %v3752, 0.0
  %v4334 = vmax.f32 %v3756, 0.0
  %v4335 = vmax.f32 %v3758, 0.0
  %v4336 = vmax.f32 %v3762, 0.0
  %v4337 = vmax.f32 %v3764, 0.0
  %v4338 = vmax.f32 %v3768, 0.0
  %v4339 = vmax.f32 %v3770, 0.0
  %v4340 = vmax.f32 %v3774, 0.0
  %v4341 = vmax.f32 %v3776, 0.0
  %v4342 = vmax.f32 %v3780, 0.0
  %v4343 = vmax.f32 %v3782, 0.0
  %v4344 = vmax.f32 %v3786, 0.0
  %v4345 = vmax.f32 %v3788, 0.0
  %v4346 = vmax.f32 %v3792, 0.0
  %v4347 = vmax.f32 %v3794, 0.0
  %v4348 = vmax.f32 %v3798, 0.0
  %v4349 = vmax.f32 %v3800, 0.0
  %v4350 = vmax.f32 %v3804, 0.0
  %v4351 = vmax.f32 %v3806, 0.0
  %v4352 = vmax.f32 %v3810, 0.0
  %v4353 = vmax.f32 %v3812, 0.0
  %v4354 = vmax.f32 %v3816, 0.0
  %v4355 = vmax.f32 %v3818, 0.0
  %v4356 = vmax.f32 %v3822, 0.0
  %v4357 = vmax.f32 %v3824, 0.0
  %v4358 = vmax.f32 %v3828, 0.0
  %v4359 = vmax.f32 %v3830, 0.0
  %v4360 = vmax.f32 %v3834, 0.0
  %v4361 = vmax.f32 %v3836, 0.0
  %v4362 = vmax.f32 %v3840, 0.0
  %v4363 = vmax.f32 %v3842, 0.0
  %v4364 = vmax.f32 %v3846, 0.0
  %v4365 = vmax.f32 %v3848, 0.0
  %v4366 = vmax.f32 %v3852, 0.0
  %v4367 = vmax.f32 %v3854, 0.0
  %v4368 = vmax.f32 %v3858, 0.0
  %v4369 = vmax.f32 %v3860, 0.0
  %v4370 = vmax.f32 %v3864, 0.0
  %v4371 = vmax.f32 %v3866, 0.0
  %v4372 = vmax.f32 %v3870, 0.0
  %v4373 = vmax.f32 %v3872, 0.0
  %v4374 = vmax.f32 %v3876, 0.0
  %v4375 = vmax.f32 %v3878, 0.0
  %v4376 = vmax.f32 %v3882, 0.0
  %v4377 = vmax.f32 %v3884, 0.0
  %v4378 = vmax.f32 %v3888, 0.0
  %v4379 = vmax.f32 %v3890, 0.0
  %v4380 = vmax.f32 %v3894, 0.0
  %v4381 = vmax.f32 %v3896, 0.0
  %v4382 = vmax.f32 %v3900, 0.0
  %v4383 = vmax.f32 %v3902, 0.0
  %v4384 = vmax.f32 %v3906, 0.0
  %v4385 = vmax.f32 %v3908, 0.0
  %v4386 = vmax.f32 %v3912, 0.0
  %v4387 = vmax.f32 %v3914, 0.0
  %v4388 = vmax.f32 %v3918, 0.0
  %v4389 = vmax.f32 %v3920, 0.0
  %v4390 = vmax.f32 %v3924, 0.0
  %v4391 = vmax.f32 %v3926, 0.0
  %v4392 = vmax.f32 %v3930, 0.0
  %v4393 = vmax.f32 %v3932, 0.0
  %v4394 = vmax.f32 %v3936, 0.0
  %v4395 = vmax.f32 %v3938, 0.0
  %v4396 = vmax.f32 %v3942, 0.0
  %v4397 = vmax.f32 %v3944, 0.0
  %v4398 = vmax.f32 %v3948, 0.0
  %v4399 = vmax.f32 %v3950, 0.0
  %v4400 = vmax.f32 %v3954, 0.0
  %v4401 = vmax.f32 %v3956, 0.0
  %v4402 = vmax.f32 %v3960, 0.0
  %v4403 = vmax.f32 %v3962, 0.0
  %v4404 = vmax.f32 %v3966, 0.0
  %v4405 = vmax.f32 %v3968, 0.0
  %v4406 = vmax.f32 %v3972, 0.0
  %v4407 = vmax.f32 %v3974, 0.0
  %v4408 = vmax.f32 %v3978, 0.0
  %v4409 = vmax.f32 %v3980, 0.0
  %v4410 = vmax.f32 %v3984, 0.0
  %v4411 = vmax.f32 %v3986, 0.0
  %v4412 = vmax.f32 %v3990, 0.0
  %v4413 = vmax.f32 %v3992, 0.0
  %v4414 = vmax.f32 %v3996, 0.0
  %v4415 = vmax.f32 %v3998, 0.0
  %v4416 = vmax.f32 %v4002, 0.0
  %v4417 = vmax.f32 %v4004, 0.0
  %v4418 = vmax.f32 %v4008, 0.0
  %v4419 = vmax.f32 %v4010, 0.0
  %v4420 = vmax.f32 %v4014, 0.0
  %v4421 = vmax.f32 %v4016, 0.0
  %v4422 = vmax.f32 %v4020, 0.0
  %v4423 = vmax.f32 %v4022, 0.0
  %v4424 = vmax.f32 %v4026, 0.0
  %v4425 = vmax.f32 %v4028, 0.0
  %v4426 = vmax.f32 %v4032, 0.0
  %v4427 = vmax.f32 %v4034, 0.0
  %v4428 = vmax.f32 %v4038, 0.0
  %v4429 = vmax.f32 %v4040, 0.0
  %v4430 = vmax.f32 %v4044, 0.0
  %v4431 = vmax.f32 %v4046, 0.0
  %v4432 = vmax.f32 %v4050, 0.0
  %v4433 = vmax.f32 %v4052, 0.0
  %v4434 = vmax.f32 %v4056, 0.0
  %v4435 = vmax.f32 %v4058, 0.0
  %v4436 = vmax.f32 %v4062, 0.0
  %v4437 = vmax.f32 %v4064, 0.0
  %v4438 = vmax.f32 %v4068, 0.0
  %v4439 = vmax.f32 %v4070, 0.0
  %v4440 = vmax.f32 %v4074, 0.0
  %v4441 = vmax.f32 %v4076, 0.0
  %v4442 = vmax.f32 %v4080, 0.0
  %v4443 = vmax.f32 %v4082, 0.0
  %v4444 = vmax.f32 %v4086, 0.0
  %v4445 = vmax.f32 %v4088, 0.0
  %v4446 = vmax.f32 %v4092, 0.0
  %v4447 = vmax.f32 %v4094, 0.0
  %v4448 = vmax.f32 %v4098, 0.0
  %v4449 = vmax.f32 %v4100, 0.0
  %v4450 = vmax.f32 %v4104, 0.0
  %v4451 = vmax.f32 %v4106, 0.0
  %v4452 = vmax.f32 %v4110, 0.0
  %v4453 = vmax.f32 %v4112, 0.0
  %v4454 = vmax.f32 %v4116, 0.0
  %v4455 = vmax.f32 %v4118, 0.0
  %v4456 = vmax.f32 %v4122, 0.0
  %v4457 = vmax.f32 %v4124, 0.0
  %v4458 = vmax.f32 %v4128, 0.0
  %v4459 = vmax.f32 %v4130, 0.0
  %v4460 = vmax.f32 %v4134, 0.0
  %v4461 = vmax.f32 %v4136, 0.0
  %v4462 = vmax.f32 %v4140, 0.0
  %v4463 = vmax.f32 %v4142, 0.0
  %4464 = vmatprep.subr.mxu0 %v4145
  %4465 = vmatpush1.xpose.msra.mxu0 %v4144
  %4466 = vmatprep.subr.mxu0 %v4147
  %4467 = vmatpush1.xpose.msra.mxu0 %v4146
  %4468 = vmatprep.subr.mxu0 %v4149
  %4469 = vmatpush1.xpose.msra.mxu0 %v4148
  %4470 = vmatprep.subr.mxu0 %v4151
  %4471 = vmatpush1.xpose.msra.mxu0 %v4150
  %4472 = vmatprep.subr.mxu0 %v4153
  %4473 = vmatpush1.xpose.msra.mxu0 %v4152
  %4474 = vmatprep.subr.mxu0 %v4155
  %4475 = vmatpush1.xpose.msra.mxu0 %v4154
  %4476 = vmatprep.subr.mxu0 %v4157
  %4477 = vmatpush1.xpose.msra.mxu0 %v4156
  %4478 = vmatprep.subr.mxu0 %v4159
  %4479 = vmatpush1.xpose.msra.mxu0 %v4158
  %4480 = vmatprep.subr.mxu0 %v4161
  %4481 = vmatpush1.xpose.msra.mxu0 %v4160
  %4482 = vmatprep.subr.mxu0 %v4163
  %4483 = vmatpush1.xpose.msra.mxu0 %v4162
  %4484 = vmatprep.subr.mxu0 %v4165
  %4485 = vmatpush1.xpose.msra.mxu0 %v4164
  %4486 = vmatprep.subr.mxu0 %v4167
  %4487 = vmatpush1.xpose.msra.mxu0 %v4166
  %4488 = vmatprep.subr.mxu0 %v4169
  %4489 = vmatpush1.xpose.msra.mxu0 %v4168
  %4490 = vmatprep.subr.mxu0 %v4171
  %4491 = vmatpush1.xpose.msra.mxu0 %v4170
  %4492 = vmatprep.subr.mxu0 %v4173
  %4493 = vmatpush1.xpose.msra.mxu0 %v4172
  %4494 = vmatprep.subr.mxu0 %v4175
  %4495 = vmatpush1.xpose.msra.mxu0 %v4174
  %4496 = vmatprep.subr.mxu0 %v4177
  %4497 = vmatpush1.xpose.msra.mxu0 %v4176
  %4498 = vmatprep.subr.mxu0 %v4179
  %4499 = vmatpush1.xpose.msra.mxu0 %v4178
  %4500 = vmatprep.subr.mxu0 %v4181
  %4501 = vmatpush1.xpose.msra.mxu0 %v4180
  %4502 = vmatprep.subr.mxu0 %v4183
  %4503 = vmatpush1.xpose.msra.mxu0 %v4182
  %4504 = vmatprep.subr.mxu0 %v4185
  %4505 = vmatpush1.xpose.msra.mxu0 %v4184
  %4506 = vmatprep.subr.mxu0 %v4187
  %4507 = vmatpush1.xpose.msra.mxu0 %v4186
  %4508 = vmatprep.subr.mxu0 %v4189
  %4509 = vmatpush1.xpose.msra.mxu0 %v4188
  %4510 = vmatprep.subr.mxu0 %v4191
  %4511 = vmatpush1.xpose.msra.mxu0 %v4190
  %4512 = vmatprep.subr.mxu0 %v4193
  %4513 = vmatpush1.xpose.msra.mxu0 %v4192
  %4514 = vmatprep.subr.mxu0 %v4195
  %4515 = vmatpush1.xpose.msra.mxu0 %v4194
  %4516 = vmatprep.subr.mxu0 %v4197
  %4517 = vmatpush1.xpose.msra.mxu0 %v4196
  %4518 = vmatprep.subr.mxu0 %v4199
  %4519 = vmatpush1.xpose.msra.mxu0 %v4198
  %4520 = vmatprep.subr.mxu0 %v4201
  %4521 = vmatpush1.xpose.msra.mxu0 %v4200
  %4522 = vmatprep.subr.mxu0 %v4203
  %4523 = vmatpush1.xpose.msra.mxu0 %v4202
  %4524 = vmatprep.subr.mxu0 %v4205
  %4525 = vmatpush1.xpose.msra.mxu0 %v4204
  %4526 = vmatprep.subr.mxu0 %v4207
  %4527 = vmatpush1.xpose.msra.mxu0 %v4206
  %4528 = vmatprep.mubr.f32.mxu0 1.0
  %4529 = vmatmul.mubr.f32.gmra.mrb[0].mxu0 1.0
  %v4530 = vpop.f32.mrb[0].mxu0
  %v4531 = vadd.f32 0.0, %v4530
  %v4532 = vpop.f32.mrb[0].mxu0
  %v4533 = vadd.f32 0.0, %v4532
  %4534 = vdwg.mxu0
  %4535 = vmatprep.subr.mxu0 %v4209
  %4536 = vmatpush1.xpose.msra.mxu0 %v4208
  %4537 = vmatprep.subr.mxu0 %v4211
  %4538 = vmatpush1.xpose.msra.mxu0 %v4210
  %4539 = vmatprep.subr.mxu0 %v4213
  %4540 = vmatpush1.xpose.msra.mxu0 %v4212
  %4541 = vmatprep.subr.mxu0 %v4215
  %4542 = vmatpush1.xpose.msra.mxu0 %v4214
  %4543 = vmatprep.subr.mxu0 %v4217
  %4544 = vmatpush1.xpose.msra.mxu0 %v4216
  %4545 = vmatprep.subr.mxu0 %v4219
  %4546 = vmatpush1.xpose.msra.mxu0 %v4218
  %4547 = vmatprep.subr.mxu0 %v4221
  %4548 = vmatpush1.xpose.msra.mxu0 %v4220
  %4549 = vmatprep.subr.mxu0 %v4223
  %4550 = vmatpush1.xpose.msra.mxu0 %v4222
  %4551 = vmatprep.subr.mxu0 %v4225
  %4552 = vmatpush1.xpose.msra.mxu0 %v4224
  %4553 = vmatprep.subr.mxu0 %v4227
  %4554 = vmatpush1.xpose.msra.mxu0 %v4226
  %4555 = vmatprep.subr.mxu0 %v4229
  %4556 = vmatpush1.xpose.msra.mxu0 %v4228
  %4557 = vmatprep.subr.mxu0 %v4231
  %4558 = vmatpush1.xpose.msra.mxu0 %v4230
  %4559 = vmatprep.subr.mxu0 %v4233
  %4560 = vmatpush1.xpose.msra.mxu0 %v4232
  %4561 = vmatprep.subr.mxu0 %v4235
  %4562 = vmatpush1.xpose.msra.mxu0 %v4234
  %4563 = vmatprep.subr.mxu0 %v4237
  %4564 = vmatpush1.xpose.msra.mxu0 %v4236
  %4565 = vmatprep.subr.mxu0 %v4239
  %4566 = vmatpush1.xpose.msra.mxu0 %v4238
  %4567 = vmatprep.subr.mxu0 %v4241
  %4568 = vmatpush1.xpose.msra.mxu0 %v4240
  %4569 = vmatprep.subr.mxu0 %v4243
  %4570 = vmatpush1.xpose.msra.mxu0 %v4242
  %4571 = vmatprep.subr.mxu0 %v4245
  %4572 = vmatpush1.xpose.msra.mxu0 %v4244
  %4573 = vmatprep.subr.mxu0 %v4247
  %4574 = vmatpush1.xpose.msra.mxu0 %v4246
  %4575 = vmatprep.subr.mxu0 %v4249
  %4576 = vmatpush1.xpose.msra.mxu0 %v4248
  %4577 = vmatprep.subr.mxu0 %v4251
  %4578 = vmatpush1.xpose.msra.mxu0 %v4250
  %4579 = vmatprep.subr.mxu0 %v4253
  %4580 = vmatpush1.xpose.msra.mxu0 %v4252
  %4581 = vmatprep.subr.mxu0 %v4255
  %4582 = vmatpush1.xpose.msra.mxu0 %v4254
  %4583 = vmatprep.subr.mxu0 %v4257
  %4584 = vmatpush1.xpose.msra.mxu0 %v4256
  %4585 = vmatprep.subr.mxu0 %v4259
  %4586 = vmatpush1.xpose.msra.mxu0 %v4258
  %4587 = vmatprep.subr.mxu0 %v4261
  %4588 = vmatpush1.xpose.msra.mxu0 %v4260
  %4589 = vmatprep.subr.mxu0 %v4263
  %4590 = vmatpush1.xpose.msra.mxu0 %v4262
  %4591 = vmatprep.subr.mxu0 %v4265
  %4592 = vmatpush1.xpose.msra.mxu0 %v4264
  %4593 = vmatprep.subr.mxu0 %v4267
  %4594 = vmatpush1.xpose.msra.mxu0 %v4266
  %4595 = vmatprep.subr.mxu0 %v4269
  %4596 = vmatpush1.xpose.msra.mxu0 %v4268
  %4597 = vmatprep.subr.mxu0 %v4271
  %4598 = vmatpush1.xpose.msra.mxu0 %v4270
  %4599 = vmatprep.mubr.f32.mxu0 1.0
  %4600 = vmatmul.mubr.f32.gmra.mrb[0].mxu0 1.0
  %v4601 = vpop.f32.mrb[0].mxu0
  %v4602 = vadd.f32 0.0, %v4601
  %v4603 = vpop.f32.mrb[0].mxu0
  %v4604 = vadd.f32 0.0, %v4603
  %4605 = vdwg.mxu0
  %4606 = vmatprep.subr.mxu0 %v4273
  %4607 = vmatpush1.xpose.msra.mxu0 %v4272
  %4608 = vmatprep.subr.mxu0 %v4275
  %4609 = vmatpush1.xpose.msra.mxu0 %v4274
  %4610 = vmatprep.subr.mxu0 %v4277
  %4611 = vmatpush1.xpose.msra.mxu0 %v4276
  %4612 = vmatprep.subr.mxu0 %v4279
  %4613 = vmatpush1.xpose.msra.mxu0 %v4278
  %4614 = vmatprep.subr.mxu0 %v4281
  %4615 = vmatpush1.xpose.msra.mxu0 %v4280
  %4616 = vmatprep.subr.mxu0 %v4283
  %4617 = vmatpush1.xpose.msra.mxu0 %v4282
  %4618 = vmatprep.subr.mxu0 %v4285
  %4619 = vmatpush1.xpose.msra.mxu0 %v4284
  %4620 = vmatprep.subr.mxu0 %v4287
  %4621 = vmatpush1.xpose.msra.mxu0 %v4286
  %4622 = vmatprep.subr.mxu0 %v4289
  %4623 = vmatpush1.xpose.msra.mxu0 %v4288
  %4624 = vmatprep.subr.mxu0 %v4291
  %4625 = vmatpush1.xpose.msra.mxu0 %v4290
  %4626 = vmatprep.subr.mxu0 %v4293
  %4627 = vmatpush1.xpose.msra.mxu0 %v4292
  %4628 = vmatprep.subr.mxu0 %v4295
  %4629 = vmatpush1.xpose.msra.mxu0 %v4294
  %4630 = vmatprep.subr.mxu0 %v4297
  %4631 = vmatpush1.xpose.msra.mxu0 %v4296
  %4632 = vmatprep.subr.mxu0 %v4299
  %4633 = vmatpush1.xpose.msra.mxu0 %v4298
  %4634 = vmatprep.subr.mxu0 %v4301
  %4635 = vmatpush1.xpose.msra.mxu0 %v4300
  %4636 = vmatprep.subr.mxu0 %v4303
  %4637 = vmatpush1.xpose.msra.mxu0 %v4302
  %4638 = vmatprep.subr.mxu0 %v4305
  %4639 = vmatpush1.xpose.msra.mxu0 %v4304
  %4640 = vmatprep.subr.mxu0 %v4307
  %4641 = vmatpush1.xpose.msra.mxu0 %v4306
  %4642 = vmatprep.subr.mxu0 %v4309
  %4643 = vmatpush1.xpose.msra.mxu0 %v4308
  %4644 = vmatprep.subr.mxu0 %v4311
  %4645 = vmatpush1.xpose.msra.mxu0 %v4310
  %4646 = vmatprep.subr.mxu0 %v4313
  %4647 = vmatpush1.xpose.msra.mxu0 %v4312
  %4648 = vmatprep.subr.mxu0 %v4315
  %4649 = vmatpush1.xpose.msra.mxu0 %v4314
  %4650 = vmatprep.subr.mxu0 %v4317
  %4651 = vmatpush1.xpose.msra.mxu0 %v4316
  %4652 = vmatprep.subr.mxu0 %v4319
  %4653 = vmatpush1.xpose.msra.mxu0 %v4318
  %4654 = vmatprep.subr.mxu0 %v4321
  %4655 = vmatpush1.xpose.msra.mxu0 %v4320
  %4656 = vmatprep.subr.mxu0 %v4323
  %4657 = vmatpush1.xpose.msra.mxu0 %v4322
  %4658 = vmatprep.subr.mxu0 %v4325
  %4659 = vmatpush1.xpose.msra.mxu0 %v4324
  %4660 = vmatprep.subr.mxu0 %v4327
  %4661 = vmatpush1.xpose.msra.mxu0 %v4326
  %4662 = vmatprep.subr.mxu0 %v4329
  %4663 = vmatpush1.xpose.msra.mxu0 %v4328
  %4664 = vmatprep.subr.mxu0 %v4331
  %4665 = vmatpush1.xpose.msra.mxu0 %v4330
  %4666 = vmatprep.subr.mxu0 %v4333
  %4667 = vmatpush1.xpose.msra.mxu0 %v4332
  %4668 = vmatprep.subr.mxu0 %v4335
  %4669 = vmatpush1.xpose.msra.mxu0 %v4334
  %4670 = vmatprep.mubr.f32.mxu0 1.0
  %4671 = vmatmul.mubr.f32.gmra.mrb[0].mxu0 1.0
  %v4672 = vpop.f32.mrb[0].mxu0
  %v4673 = vadd.f32 0.0, %v4672
  %v4674 = vpop.f32.mrb[0].mxu0
  %v4675 = vadd.f32 0.0, %v4674
  %4676 = vdwg.mxu0
  %4677 = vmatprep.subr.mxu0 %v4337
  %4678 = vmatpush1.xpose.msra.mxu0 %v4336
  %4679 = vmatprep.subr.mxu0 %v4339
  %4680 = vmatpush1.xpose.msra.mxu0 %v4338
  %4681 = vmatprep.subr.mxu0 %v4341
  %4682 = vmatpush1.xpose.msra.mxu0 %v4340
  %4683 = vmatprep.subr.mxu0 %v4343
  %4684 = vmatpush1.xpose.msra.mxu0 %v4342
  %4685 = vmatprep.subr.mxu0 %v4345
  %4686 = vmatpush1.xpose.msra.mxu0 %v4344
  %4687 = vmatprep.subr.mxu0 %v4347
  %4688 = vmatpush1.xpose.msra.mxu0 %v4346
  %4689 = vmatprep.subr.mxu0 %v4349
  %4690 = vmatpush1.xpose.msra.mxu0 %v4348
  %4691 = vmatprep.subr.mxu0 %v4351
  %4692 = vmatpush1.xpose.msra.mxu0 %v4350
  %4693 = vmatprep.subr.mxu0 %v4353
  %4694 = vmatpush1.xpose.msra.mxu0 %v4352
  %4695 = vmatprep.subr.mxu0 %v4355
  %4696 = vmatpush1.xpose.msra.mxu0 %v4354
  %4697 = vmatprep.subr.mxu0 %v4357
  %4698 = vmatpush1.xpose.msra.mxu0 %v4356
  %4699 = vmatprep.subr.mxu0 %v4359
  %4700 = vmatpush1.xpose.msra.mxu0 %v4358
  %4701 = vmatprep.subr.mxu0 %v4361
  %4702 = vmatpush1.xpose.msra.mxu0 %v4360
  %4703 = vmatprep.subr.mxu0 %v4363
  %4704 = vmatpush1.xpose.msra.mxu0 %v4362
  %4705 = vmatprep.subr.mxu0 %v4365
  %4706 = vmatpush1.xpose.msra.mxu0 %v4364
  %4707 = vmatprep.subr.mxu0 %v4367
  %4708 = vmatpush1.xpose.msra.mxu0 %v4366
  %4709 = vmatprep.subr.mxu0 %v4369
  %4710 = vmatpush1.xpose.msra.mxu0 %v4368
  %4711 = vmatprep.subr.mxu0 %v4371
  %4712 = vmatpush1.xpose.msra.mxu0 %v4370
  %4713 = vmatprep.subr.mxu0 %v4373
  %4714 = vmatpush1.xpose.msra.mxu0 %v4372
  %4715 = vmatprep.subr.mxu0 %v4375
  %4716 = vmatpush1.xpose.msra.mxu0 %v4374
  %4717 = vmatprep.subr.mxu0 %v4377
  %4718 = vmatpush1.xpose.msra.mxu0 %v4376
  %4719 = vmatprep.subr.mxu0 %v4379
  %4720 = vmatpush1.xpose.msra.mxu0 %v4378
  %4721 = vmatprep.subr.mxu0 %v4381
  %4722 = vmatpush1.xpose.msra.mxu0 %v4380
  %4723 = vmatprep.subr.mxu0 %v4383
  %4724 = vmatpush1.xpose.msra.mxu0 %v4382
  %4725 = vmatprep.subr.mxu0 %v4385
  %4726 = vmatpush1.xpose.msra.mxu0 %v4384
  %4727 = vmatprep.subr.mxu0 %v4387
  %4728 = vmatpush1.xpose.msra.mxu0 %v4386
  %4729 = vmatprep.subr.mxu0 %v4389
  %4730 = vmatpush1.xpose.msra.mxu0 %v4388
  %4731 = vmatprep.subr.mxu0 %v4391
  %4732 = vmatpush1.xpose.msra.mxu0 %v4390
  %4733 = vmatprep.subr.mxu0 %v4393
  %4734 = vmatpush1.xpose.msra.mxu0 %v4392
  %4735 = vmatprep.subr.mxu0 %v4395
  %4736 = vmatpush1.xpose.msra.mxu0 %v4394
  %4737 = vmatprep.subr.mxu0 %v4397
  %4738 = vmatpush1.xpose.msra.mxu0 %v4396
  %4739 = vmatprep.subr.mxu0 %v4399
  %4740 = vmatpush1.xpose.msra.mxu0 %v4398
  %4741 = vmatprep.mubr.f32.mxu0 1.0
  %4742 = vmatmul.mubr.f32.gmra.mrb[0].mxu0 1.0
  %v4743 = vpop.f32.mrb[0].mxu0
  %v4744 = vadd.f32 0.0, %v4743
  %v4745 = vpop.f32.mrb[0].mxu0
  %v4746 = vadd.f32 0.0, %v4745
  %4747 = vdwg.mxu0
  %4748 = vmatprep.subr.mxu0 %v4401
  %4749 = vmatpush1.xpose.msra.mxu0 %v4400
  %4750 = vmatprep.subr.mxu0 %v4403
  %4751 = vmatpush1.xpose.msra.mxu0 %v4402
  %4752 = vmatprep.subr.mxu0 %v4405
  %4753 = vmatpush1.xpose.msra.mxu0 %v4404
  %4754 = vmatprep.subr.mxu0 %v4407
  %4755 = vmatpush1.xpose.msra.mxu0 %v4406
  %4756 = vmatprep.subr.mxu0 %v4409
  %4757 = vmatpush1.xpose.msra.mxu0 %v4408
  %4758 = vmatprep.subr.mxu0 %v4411
  %4759 = vmatpush1.xpose.msra.mxu0 %v4410
  %4760 = vmatprep.subr.mxu0 %v4413
  %4761 = vmatpush1.xpose.msra.mxu0 %v4412
  %4762 = vmatprep.subr.mxu0 %v4415
  %4763 = vmatpush1.xpose.msra.mxu0 %v4414
  %4764 = vmatprep.subr.mxu0 %v4417
  %4765 = vmatpush1.xpose.msra.mxu0 %v4416
  %4766 = vmatprep.subr.mxu0 %v4419
  %4767 = vmatpush1.xpose.msra.mxu0 %v4418
  %4768 = vmatprep.subr.mxu0 %v4421
  %4769 = vmatpush1.xpose.msra.mxu0 %v4420
  %4770 = vmatprep.subr.mxu0 %v4423
  %4771 = vmatpush1.xpose.msra.mxu0 %v4422
  %4772 = vmatprep.subr.mxu0 %v4425
  %4773 = vmatpush1.xpose.msra.mxu0 %v4424
  %4774 = vmatprep.subr.mxu0 %v4427
  %4775 = vmatpush1.xpose.msra.mxu0 %v4426
  %4776 = vmatprep.subr.mxu0 %v4429
  %4777 = vmatpush1.xpose.msra.mxu0 %v4428
  %4778 = vmatprep.subr.mxu0 %v4431
  %4779 = vmatpush1.xpose.msra.mxu0 %v4430
  %4780 = vmatprep.subr.mxu0 %v4433
  %4781 = vmatpush1.xpose.msra.mxu0 %v4432
  %4782 = vmatprep.subr.mxu0 %v4435
  %4783 = vmatpush1.xpose.msra.mxu0 %v4434
  %4784 = vmatprep.subr.mxu0 %v4437
  %4785 = vmatpush1.xpose.msra.mxu0 %v4436
  %4786 = vmatprep.subr.mxu0 %v4439
  %4787 = vmatpush1.xpose.msra.mxu0 %v4438
  %4788 = vmatprep.subr.mxu0 %v4441
  %4789 = vmatpush1.xpose.msra.mxu0 %v4440
  %4790 = vmatprep.subr.mxu0 %v4443
  %4791 = vmatpush1.xpose.msra.mxu0 %v4442
  %4792 = vmatprep.subr.mxu0 %v4445
  %4793 = vmatpush1.xpose.msra.mxu0 %v4444
  %4794 = vmatprep.subr.mxu0 %v4447
  %4795 = vmatpush1.xpose.msra.mxu0 %v4446
  %4796 = vmatprep.subr.mxu0 %v4449
  %4797 = vmatpush1.xpose.msra.mxu0 %v4448
  %4798 = vmatprep.subr.mxu0 %v4451
  %4799 = vmatpush1.xpose.msra.mxu0 %v4450
  %4800 = vmatprep.subr.mxu0 %v4453
  %4801 = vmatpush1.xpose.msra.mxu0 %v4452
  %4802 = vmatprep.subr.mxu0 %v4455
  %4803 = vmatpush1.xpose.msra.mxu0 %v4454
  %4804 = vmatprep.subr.mxu0 %v4457
  %4805 = vmatpush1.xpose.msra.mxu0 %v4456
  %4806 = vmatprep.subr.mxu0 %v4459
  %4807 = vmatpush1.xpose.msra.mxu0 %v4458
  %4808 = vmatprep.subr.mxu0 %v4461
  %4809 = vmatpush1.xpose.msra.mxu0 %v4460
  %4810 = vmatprep.subr.mxu0 %v4463
  %4811 = vmatpush1.xpose.msra.mxu0 %v4462
  %4812 = vmatprep.mubr.f32.mxu0 1.0
  %4813 = vmatmul.mubr.f32.gmra.mrb[0].mxu0 1.0
  %v4814 = vpop.f32.mrb[0].mxu0
  %v4815 = vadd.f32 0.0, %v4814
  %v4816 = vpop.f32.mrb[0].mxu0
  %v4817 = vadd.f32 0.0, %v4816
  %4818 = vdwg.mxu0
  %v4819 = vmul.f32 %v4531, 0.00390625
  %v4820 = vmul.f32 %v4533, 0.00390625
  %v4821 = vmul.f32 %v4602, 0.00390625
  %v4822 = vmul.f32 %v4604, 0.00390625
  %v4823 = vmul.f32 %v4673, 0.00390625
  %v4824 = vmul.f32 %v4675, 0.00390625
  %v4825 = vmul.f32 %v4744, 0.00390625
  %v4826 = vmul.f32 %v4746, 0.00390625
  %v4827 = vmul.f32 %v4815, 0.00390625
  %v4828 = vmul.f32 %v4817, 0.00390625
  %v4839 = vcombine.low %v4819, %v4820
  %v4840 = vcombine.low %v4821, %v4822
  %v4841 = vcombine.low %v4823, %v4824
  %v4842 = vcombine.low %v4825, %v4826
  %v4844 = vunpack.c.l.s4 1966171168
  %v4845 = vunpack.c.0.s8 %v4844
  %v4846 = vlaneseq
  %v4847 = vshrl.u32 %v4846, 7
  %v4848 = vsub.s32 %v4845, %v4847
  %v4849 = vrot.slane %v4839, %v4848
  %v4851 = vunpack.c.l.s4 1966171168
  %v4852 = vunpack.c.0.s8 %v4851
  %v4853 = vlaneseq
  %v4854 = vshrl.u32 %v4853, 7
  %v4855 = vsub.s32 %v4852, %v4854
  %v4856 = vrot.slane %v4840, %v4855
  %v4858 = vunpack.c.l.s4 1966171168
  %v4859 = vunpack.c.0.s8 %v4858
  %v4860 = vlaneseq
  %v4861 = vshrl.u32 %v4860, 7
  %v4862 = vsub.s32 %v4859, %v4861
  %v4863 = vrot.slane %v4841, %v4862
  %v4865 = vunpack.c.l.s4 1966171168
  %v4866 = vunpack.c.0.s8 %v4865
  %v4867 = vlaneseq
  %v4868 = vshrl.u32 %v4867, 7
  %v4869 = vsub.s32 %v4866, %v4868
  %v4870 = vrot.slane %v4842, %v4869
  %v4871 = vcombine.low %v4849, %v4856
  %v4872 = vcombine.low %v4863, %v4870
  %v4874 = vunpack.c.l.s4 1966171168
  %v4875 = vunpack.c.0.s8 %v4874
  %v4876 = vlaneseq
  %v4877 = vshrl.u32 %v4876, 7
  %v4878 = vsub.s32 %v4875, %v4877
  %v4879 = vrot.slane %v4871, %v4878
  %v4881 = vunpack.c.l.s4 1966171168
  %v4882 = vunpack.c.0.s8 %v4881
  %v4883 = vlaneseq
  %v4884 = vshrl.u32 %v4883, 7
  %v4885 = vsub.s32 %v4882, %v4884
  %v4886 = vrot.slane %v4872, %v4885
  %v4887 = vcombine.low %v4879, %v4886
  %v4888 = vcombine.low %v4827, %v4828
  %v4890 = vunpack.c.l.s4 1966171168
  %v4891 = vunpack.c.0.s8 %v4890
  %v4892 = vlaneseq
  %v4893 = vshrl.u32 %v4892, 7
  %v4894 = vsub.s32 %v4891, %v4893
  %v4895 = vrot.slane %v4888, %v4894
  %v4897 = vunpack.c.l.s4 1966171168
  %v4898 = vunpack.c.0.s8 %v4897
  %v4899 = vlaneseq
  %v4900 = vshrl.u32 %v4899, 7
  %v4901 = vsub.s32 %v4898, %v4900
  %v4902 = vrot.slane %v4895, %v4901
  %s4905 = scalar_lea.vmem [#allocation2], 1
  %4906 = vst [vmem:[%s4905] ss:$8 sm:$0xf] %v4887
  %4907 = vst [vmem:[%s4905] ss:$8 sm:$0xf0] %v4887
  %s4908 = scalar_lea.vmem [#allocation2], 65
  %4909 = vst.msk [vmem:[%s4908] ss:$8 sm:$0x3] %vm2467, %v4902
  %4910 = vst.msk [vmem:[%s4908] ss:$8 sm:$0x0] %vm2467, %v4902
  %v4911 = vld [vmem:[#allocation2] sm:$0xff]
  %v4912 = vld [vmem:[#allocation2 + $0x8] sm:$0xff]
  %v4913 = vld [vmem:[#allocation2 + $0x10] sm:$0xff]
  %v4914 = vld [vmem:[#allocation2 + $0x18] sm:$0xff]
  %v4915 = vld [vmem:[#allocation2 + $0x20] sm:$0xff]
  %v4916 = vld [vmem:[#allocation2 + $0x28] sm:$0xff]
  %v4917 = vld [vmem:[#allocation2 + $0x30] sm:$0xff]
  %v4918 = vld [vmem:[#allocation2 + $0x38] sm:$0xff]
  %v4919 = vld [vmem:[#allocation2 + $0x40] sm:$0xff]
  %v4920 = vld [vmem:[#allocation2 + $0x48] sm:$0xff]
  %v4921 = vld [vmem:[%s2] sm:$0xff]
  %v4922 = vld [vmem:[%s2 + $0x8] sm:$0xff]
  %v4923 = vld [vmem:[%s2 + $0x10] sm:$0xff]
  %v4924 = vld [vmem:[%s2 + $0x18] sm:$0xff]
  %v4925 = vld [vmem:[%s2 + $0x20] sm:$0xff]
  %v4926 = vld [vmem:[%s2 + $0x28] sm:$0xff]
  %v4927 = vld [vmem:[%s2 + $0x30] sm:$0xff]
  %v4928 = vld [vmem:[%s2 + $0x38] sm:$0xff]
  %v4929 = vld [vmem:[%s2 + $0x40] sm:$0xff]
  %v4930 = vld [vmem:[%s2 + $0x48] sm:$0xff]
  %v4931 = vld [vmem:[%s2 + $0x50] sm:$0xff]
  %v4932 = vld [vmem:[%s2 + $0x58] sm:$0xff]
  %v4933 = vld [vmem:[%s2 + $0x60] sm:$0xff]
  %v4934 = vld [vmem:[%s2 + $0x68] sm:$0xff]
  %v4935 = vld [vmem:[%s2 + $0x70] sm:$0xff]
  %v4936 = vld [vmem:[%s2 + $0x78] sm:$0xff]
  %v4937 = vld [vmem:[%s2 + $0x80] sm:$0xff]
  %v4938 = vld [vmem:[%s2 + $0x88] sm:$0xff]
  %v4939 = vld [vmem:[%s2 + $0x90] sm:$0xff]
  %v4940 = vld [vmem:[%s2 + $0x98] sm:$0xff]
  %v4941 = vld [vmem:[%s2 + $0xa0] sm:$0xff]
  %v4942 = vld [vmem:[%s2 + $0xa8] sm:$0xff]
  %v4943 = vld [vmem:[%s2 + $0xb0] sm:$0xff]
  %v4944 = vld [vmem:[%s2 + $0xb8] sm:$0xff]
  %v4945 = vld [vmem:[%s2 + $0xc0] sm:$0xff]
  %v4946 = vld [vmem:[%s2 + $0xc8] sm:$0xff]
  %v4947 = vld [vmem:[%s2 + $0xd0] sm:$0xff]
  %v4948 = vld [vmem:[%s2 + $0xd8] sm:$0xff]
  %v4949 = vld [vmem:[%s2 + $0xe0] sm:$0xff]
  %v4950 = vld [vmem:[%s2 + $0xe8] sm:$0xff]
  %v4951 = vld [vmem:[%s2 + $0xf0] sm:$0xff]
  %v4952 = vld [vmem:[%s2 + $0xf8] sm:$0xff]
  %v4953 = vld [vmem:[%s2 + $0x100] sm:$0xff]
  %v4954 = vld [vmem:[%s2 + $0x108] sm:$0xff]
  %v4955 = vld [vmem:[%s2 + $0x110] sm:$0xff]
  %v4956 = vld [vmem:[%s2 + $0x118] sm:$0xff]
  %v4957 = vld [vmem:[%s2 + $0x120] sm:$0xff]
  %v4958 = vld [vmem:[%s2 + $0x128] sm:$0xff]
  %v4959 = vld [vmem:[%s2 + $0x130] sm:$0xff]
  %v4960 = vld [vmem:[%s2 + $0x138] sm:$0xff]
  %v4961 = vld [vmem:[%s2 + $0x140] sm:$0xff]
  %v4962 = vld [vmem:[%s2 + $0x148] sm:$0xff]
  %v4963 = vld [vmem:[%s2 + $0x150] sm:$0xff]
  %v4964 = vld [vmem:[%s2 + $0x158] sm:$0xff]
  %v4965 = vld [vmem:[%s2 + $0x160] sm:$0xff]
  %v4966 = vld [vmem:[%s2 + $0x168] sm:$0xff]
  %v4967 = vld [vmem:[%s2 + $0x170] sm:$0xff]
  %v4968 = vld [vmem:[%s2 + $0x178] sm:$0xff]
  %v4969 = vld [vmem:[%s2 + $0x180] sm:$0xff]
  %v4970 = vld [vmem:[%s2 + $0x188] sm:$0xff]
  %v4971 = vld [vmem:[%s2 + $0x190] sm:$0xff]
  %v4972 = vld [vmem:[%s2 + $0x198] sm:$0xff]
  %v4973 = vld [vmem:[%s2 + $0x1a0] sm:$0xff]
  %v4974 = vld [vmem:[%s2 + $0x1a8] sm:$0xff]
  %v4975 = vld [vmem:[%s2 + $0x1b0] sm:$0xff]
  %v4976 = vld [vmem:[%s2 + $0x1b8] sm:$0xff]
  %v4977 = vld [vmem:[%s2 + $0x1c0] sm:$0xff]
  %v4978 = vld [vmem:[%s2 + $0x1c8] sm:$0xff]
  %v4979 = vld [vmem:[%s2 + $0x1d0] sm:$0xff]
  %v4980 = vld [vmem:[%s2 + $0x1d8] sm:$0xff]
  %v4981 = vld [vmem:[%s2 + $0x1e0] sm:$0xff]
  %v4982 = vld [vmem:[%s2 + $0x1e8] sm:$0xff]
  %v4983 = vld [vmem:[%s2 + $0x1f0] sm:$0xff]
  %v4984 = vld [vmem:[%s2 + $0x1f8] sm:$0xff]
  %v4985 = vld [vmem:[%s2 + $0x200] sm:$0xff]
  %v4986 = vld [vmem:[%s2 + $0x208] sm:$0xff]
  %v4987 = vld [vmem:[%s2 + $0x210] sm:$0xff]
  %v4988 = vld [vmem:[%s2 + $0x218] sm:$0xff]
  %v4989 = vld [vmem:[%s2 + $0x220] sm:$0xff]
  %v4990 = vld [vmem:[%s2 + $0x228] sm:$0xff]
  %v4991 = vld [vmem:[%s2 + $0x230] sm:$0xff]
  %v4992 = vld [vmem:[%s2 + $0x238] sm:$0xff]
  %v4993 = vld [vmem:[%s2 + $0x240] sm:$0xff]
  %v4994 = vld [vmem:[%s2 + $0x248] sm:$0xff]
  %v4995 = vld [vmem:[%s2 + $0x250] sm:$0xff]
  %v4996 = vld [vmem:[%s2 + $0x258] sm:$0xff]
  %v4997 = vld [vmem:[%s2 + $0x260] sm:$0xff]
  %v4998 = vld [vmem:[%s2 + $0x268] sm:$0xff]
  %v4999 = vld [vmem:[%s2 + $0x270] sm:$0xff]
  %v5000 = vld [vmem:[%s2 + $0x278] sm:$0xff]
  %v5001 = vld [vmem:[%s2 + $0x280] sm:$0xff]
  %v5002 = vld [vmem:[%s2 + $0x288] sm:$0xff]
  %v5003 = vld [vmem:[%s2 + $0x290] sm:$0xff]
  %v5004 = vld [vmem:[%s2 + $0x298] sm:$0xff]
  %v5005 = vld [vmem:[%s2 + $0x2a0] sm:$0xff]
  %v5006 = vld [vmem:[%s2 + $0x2a8] sm:$0xff]
  %v5007 = vld [vmem:[%s2 + $0x2b0] sm:$0xff]
  %v5008 = vld [vmem:[%s2 + $0x2b8] sm:$0xff]
  %v5009 = vld [vmem:[%s2 + $0x2c0] sm:$0xff]
  %v5010 = vld [vmem:[%s2 + $0x2c8] sm:$0xff]
  %v5011 = vld [vmem:[%s2 + $0x2d0] sm:$0xff]
  %v5012 = vld [vmem:[%s2 + $0x2d8] sm:$0xff]
  %v5013 = vld [vmem:[%s2 + $0x2e0] sm:$0xff]
  %v5014 = vld [vmem:[%s2 + $0x2e8] sm:$0xff]
  %v5015 = vld [vmem:[%s2 + $0x2f0] sm:$0xff]
  %v5016 = vld [vmem:[%s2 + $0x2f8] sm:$0xff]
  %v5017 = vld [vmem:[%s2 + $0x300] sm:$0xff]
  %v5018 = vld [vmem:[%s2 + $0x308] sm:$0xff]
  %v5019 = vld [vmem:[%s2 + $0x310] sm:$0xff]
  %v5020 = vld [vmem:[%s2 + $0x318] sm:$0xff]
  %v5021 = vld [vmem:[%s2 + $0x320] sm:$0xff]
  %v5022 = vld [vmem:[%s2 + $0x328] sm:$0xff]
  %v5023 = vld [vmem:[%s2 + $0x330] sm:$0xff]
  %v5024 = vld [vmem:[%s2 + $0x338] sm:$0xff]
  %v5025 = vld [vmem:[%s2 + $0x340] sm:$0xff]
  %v5026 = vld [vmem:[%s2 + $0x348] sm:$0xff]
  %v5027 = vld [vmem:[%s2 + $0x350] sm:$0xff]
  %v5028 = vld [vmem:[%s2 + $0x358] sm:$0xff]
  %v5029 = vld [vmem:[%s2 + $0x360] sm:$0xff]
  %v5030 = vld [vmem:[%s2 + $0x368] sm:$0xff]
  %v5031 = vld [vmem:[%s2 + $0x370] sm:$0xff]
  %v5032 = vld [vmem:[%s2 + $0x378] sm:$0xff]
  %v5033 = vld [vmem:[%s2 + $0x380] sm:$0xff]
  %v5034 = vld [vmem:[%s2 + $0x388] sm:$0xff]
  %v5035 = vld [vmem:[%s2 + $0x390] sm:$0xff]
  %v5036 = vld [vmem:[%s2 + $0x398] sm:$0xff]
  %v5037 = vld [vmem:[%s2 + $0x3a0] sm:$0xff]
  %v5038 = vld [vmem:[%s2 + $0x3a8] sm:$0xff]
  %v5039 = vld [vmem:[%s2 + $0x3b0] sm:$0xff]
  %v5040 = vld [vmem:[%s2 + $0x3b8] sm:$0xff]
  %v5041 = vld [vmem:[%s2 + $0x3c0] sm:$0xff]
  %v5042 = vld [vmem:[%s2 + $0x3c8] sm:$0xff]
  %v5043 = vld [vmem:[%s2 + $0x3d0] sm:$0xff]
  %v5044 = vld [vmem:[%s2 + $0x3d8] sm:$0xff]
  %v5045 = vld [vmem:[%s2 + $0x3e0] sm:$0xff]
  %v5046 = vld [vmem:[%s2 + $0x3e8] sm:$0xff]
  %v5047 = vld [vmem:[%s2 + $0x3f0] sm:$0xff]
  %v5048 = vld [vmem:[%s2 + $0x3f8] sm:$0xff]
  %v5049 = vld [vmem:[%s2 + $0x400] sm:$0xff]
  %v5050 = vld [vmem:[%s2 + $0x408] sm:$0xff]
  %v5051 = vld [vmem:[%s2 + $0x410] sm:$0xff]
  %v5052 = vld [vmem:[%s2 + $0x418] sm:$0xff]
  %v5053 = vld [vmem:[%s2 + $0x420] sm:$0xff]
  %v5054 = vld [vmem:[%s2 + $0x428] sm:$0xff]
  %v5055 = vld [vmem:[%s2 + $0x430] sm:$0xff]
  %v5056 = vld [vmem:[%s2 + $0x438] sm:$0xff]
  %v5057 = vld [vmem:[%s2 + $0x440] sm:$0xff]
  %v5058 = vld [vmem:[%s2 + $0x448] sm:$0xff]
  %v5059 = vld [vmem:[%s2 + $0x450] sm:$0xff]
  %v5060 = vld [vmem:[%s2 + $0x458] sm:$0xff]
  %v5061 = vld [vmem:[%s2 + $0x460] sm:$0xff]
  %v5062 = vld [vmem:[%s2 + $0x468] sm:$0xff]
  %v5063 = vld [vmem:[%s2 + $0x470] sm:$0xff]
  %v5064 = vld [vmem:[%s2 + $0x478] sm:$0xff]
  %v5065 = vld [vmem:[%s2 + $0x480] sm:$0xff]
  %v5066 = vld [vmem:[%s2 + $0x488] sm:$0xff]
  %v5067 = vld [vmem:[%s2 + $0x490] sm:$0xff]
  %v5068 = vld [vmem:[%s2 + $0x498] sm:$0xff]
  %v5069 = vld [vmem:[%s2 + $0x4a0] sm:$0xff]
  %v5070 = vld [vmem:[%s2 + $0x4a8] sm:$0xff]
  %v5071 = vld [vmem:[%s2 + $0x4b0] sm:$0xff]
  %v5072 = vld [vmem:[%s2 + $0x4b8] sm:$0xff]
  %v5073 = vld [vmem:[%s2 + $0x4c0] sm:$0xff]
  %v5074 = vld [vmem:[%s2 + $0x4c8] sm:$0xff]
  %v5075 = vld [vmem:[%s2 + $0x4d0] sm:$0xff]
  %v5076 = vld [vmem:[%s2 + $0x4d8] sm:$0xff]
  %v5077 = vld [vmem:[%s2 + $0x4e0] sm:$0xff]
  %v5078 = vld [vmem:[%s2 + $0x4e8] sm:$0xff]
  %v5079 = vld [vmem:[%s2 + $0x4f0] sm:$0xff]
  %v5080 = vld [vmem:[%s2 + $0x4f8] sm:$0xff]
  %v5081 = vld [vmem:[%s3] sm:$0x1]
  %v5083 = vlaneseq
  %v5084 = vshrl.u32 %v5083, 7
  %v5085 = vsub.s32 0, %v5084
  %v5086 = vrot.slane %v5081, %v5085
  %5088 = vmatprep.subr.mxu0 0.0
  %5089 = vmatpush1.msra.mxu0 %v4921
  %5090 = vmatprep.subr.mxu0 0.0
  %5091 = vmatpush1.msra.mxu0 %v4922
  %5092 = vmatprep.subr.mxu0 0.0
  %5093 = vmatpush1.msra.mxu0 %v4923
  %5094 = vmatprep.subr.mxu0 0.0
  %5095 = vmatpush1.msra.mxu0 %v4924
  %5096 = vmatprep.subr.mxu0 0.0
  %5097 = vmatpush1.msra.mxu0 %v4925
  %5098 = vmatprep.subr.mxu0 0.0
  %5099 = vmatpush1.msra.mxu0 %v4926
  %5100 = vmatprep.subr.mxu0 0.0
  %5101 = vmatpush1.msra.mxu0 %v4927
  %5102 = vmatprep.subr.mxu0 0.0
  %5103 = vmatpush1.msra.mxu0 %v4928
  %5104 = vmatprep.subr.mxu0 0.0
  %5105 = vmatpush1.msra.mxu0 %v4929
  %5106 = vmatprep.subr.mxu0 0.0
  %5107 = vmatpush1.msra.mxu0 %v4930
  %5108 = vmatprep.subr.mxu0 0.0
  %5109 = vmatpush1.msra.mxu0 %v4931
  %5110 = vmatprep.subr.mxu0 0.0
  %5111 = vmatpush1.msra.mxu0 %v4932
  %5112 = vmatprep.subr.mxu0 0.0
  %5113 = vmatpush1.msra.mxu0 %v4933
  %5114 = vmatprep.subr.mxu0 0.0
  %5115 = vmatpush1.msra.mxu0 %v4934
  %5116 = vmatprep.subr.mxu0 0.0
  %5117 = vmatpush1.msra.mxu0 %v4935
  %5118 = vmatprep.subr.mxu0 0.0
  %5119 = vmatpush1.msra.mxu0 %v4936
  %5120 = vmatprep.subr.mxu0 0.0
  %5121 = vmatpush1.msra.mxu0 %v4937
  %5122 = vmatprep.subr.mxu0 0.0
  %5123 = vmatpush1.msra.mxu0 %v4938
  %5124 = vmatprep.subr.mxu0 0.0
  %5125 = vmatpush1.msra.mxu0 %v4939
  %5126 = vmatprep.subr.mxu0 0.0
  %5127 = vmatpush1.msra.mxu0 %v4940
  %5128 = vmatprep.subr.mxu0 0.0
  %5129 = vmatpush1.msra.mxu0 %v4941
  %5130 = vmatprep.subr.mxu0 0.0
  %5131 = vmatpush1.msra.mxu0 %v4942
  %5132 = vmatprep.subr.mxu0 0.0
  %5133 = vmatpush1.msra.mxu0 %v4943
  %5134 = vmatprep.subr.mxu0 0.0
  %5135 = vmatpush1.msra.mxu0 %v4944
  %5136 = vmatprep.subr.mxu0 0.0
  %5137 = vmatpush1.msra.mxu0 %v4945
  %5138 = vmatprep.subr.mxu0 0.0
  %5139 = vmatpush1.msra.mxu0 %v4946
  %5140 = vmatprep.subr.mxu0 0.0
  %5141 = vmatpush1.msra.mxu0 %v4947
  %5142 = vmatprep.subr.mxu0 0.0
  %5143 = vmatpush1.msra.mxu0 %v4948
  %5144 = vmatprep.subr.mxu0 0.0
  %5145 = vmatpush1.msra.mxu0 %v4949
  %5146 = vmatprep.subr.mxu0 0.0
  %5147 = vmatpush1.msra.mxu0 %v4950
  %5148 = vmatprep.subr.mxu0 0.0
  %5149 = vmatpush1.msra.mxu0 %v4951
  %5150 = vmatprep.subr.mxu0 0.0
  %5151 = vmatpush1.msra.mxu0 %v4952
  %5152 = vmatprep.mubr.f32.mxu0 %v4912
  %5153 = vmatmul.mubr.f32.gmra.mrb[0].mxu0 %v4911
  %v5154 = vpop.f32.mrb[0].mxu0
  %v5155 = vadd.f32 %v5086, %v5154
  %v5156 = vpop.f32.mrb[0].mxu0
  %5157 = vdwg.mxu0
  %5158 = vmatprep.subr.mxu0 0.0
  %5159 = vmatpush1.msra.mxu0 %v4953
  %5160 = vmatprep.subr.mxu0 0.0
  %5161 = vmatpush1.msra.mxu0 %v4954
  %5162 = vmatprep.subr.mxu0 0.0
  %5163 = vmatpush1.msra.mxu0 %v4955
  %5164 = vmatprep.subr.mxu0 0.0
  %5165 = vmatpush1.msra.mxu0 %v4956
  %5166 = vmatprep.subr.mxu0 0.0
  %5167 = vmatpush1.msra.mxu0 %v4957
  %5168 = vmatprep.subr.mxu0 0.0
  %5169 = vmatpush1.msra.mxu0 %v4958
  %5170 = vmatprep.subr.mxu0 0.0
  %5171 = vmatpush1.msra.mxu0 %v4959
  %5172 = vmatprep.subr.mxu0 0.0
  %5173 = vmatpush1.msra.mxu0 %v4960
  %5174 = vmatprep.subr.mxu0 0.0
  %5175 = vmatpush1.msra.mxu0 %v4961
  %5176 = vmatprep.subr.mxu0 0.0
  %5177 = vmatpush1.msra.mxu0 %v4962
  %5178 = vmatprep.subr.mxu0 0.0
  %5179 = vmatpush1.msra.mxu0 %v4963
  %5180 = vmatprep.subr.mxu0 0.0
  %5181 = vmatpush1.msra.mxu0 %v4964
  %5182 = vmatprep.subr.mxu0 0.0
  %5183 = vmatpush1.msra.mxu0 %v4965
  %5184 = vmatprep.subr.mxu0 0.0
  %5185 = vmatpush1.msra.mxu0 %v4966
  %5186 = vmatprep.subr.mxu0 0.0
  %5187 = vmatpush1.msra.mxu0 %v4967
  %5188 = vmatprep.subr.mxu0 0.0
  %5189 = vmatpush1.msra.mxu0 %v4968
  %5190 = vmatprep.subr.mxu0 0.0
  %5191 = vmatpush1.msra.mxu0 %v4969
  %5192 = vmatprep.subr.mxu0 0.0
  %5193 = vmatpush1.msra.mxu0 %v4970
  %5194 = vmatprep.subr.mxu0 0.0
  %5195 = vmatpush1.msra.mxu0 %v4971
  %5196 = vmatprep.subr.mxu0 0.0
  %5197 = vmatpush1.msra.mxu0 %v4972
  %5198 = vmatprep.subr.mxu0 0.0
  %5199 = vmatpush1.msra.mxu0 %v4973
  %5200 = vmatprep.subr.mxu0 0.0
  %5201 = vmatpush1.msra.mxu0 %v4974
  %5202 = vmatprep.subr.mxu0 0.0
  %5203 = vmatpush1.msra.mxu0 %v4975
  %5204 = vmatprep.subr.mxu0 0.0
  %5205 = vmatpush1.msra.mxu0 %v4976
  %5206 = vmatprep.subr.mxu0 0.0
  %5207 = vmatpush1.msra.mxu0 %v4977
  %5208 = vmatprep.subr.mxu0 0.0
  %5209 = vmatpush1.msra.mxu0 %v4978
  %5210 = vmatprep.subr.mxu0 0.0
  %5211 = vmatpush1.msra.mxu0 %v4979
  %5212 = vmatprep.subr.mxu0 0.0
  %5213 = vmatpush1.msra.mxu0 %v4980
  %5214 = vmatprep.subr.mxu0 0.0
  %5215 = vmatpush1.msra.mxu0 %v4981
  %5216 = vmatprep.subr.mxu0 0.0
  %5217 = vmatpush1.msra.mxu0 %v4982
  %5218 = vmatprep.subr.mxu0 0.0
  %5219 = vmatpush1.msra.mxu0 %v4983
  %5220 = vmatprep.subr.mxu0 0.0
  %5221 = vmatpush1.msra.mxu0 %v4984
  %5222 = vmatprep.mubr.f32.mxu0 %v4914
  %5223 = vmatmul.mubr.f32.gmra.mrb[0].mxu0 %v4913
  %v5224 = vpop.f32.mrb[0].mxu0
  %v5225 = vadd.f32 %v5155, %v5224
  %v5226 = vpop.f32.mrb[0].mxu0
  %5227 = vdwg.mxu0
  %5228 = vmatprep.subr.mxu0 0.0
  %5229 = vmatpush1.msra.mxu0 %v4985
  %5230 = vmatprep.subr.mxu0 0.0
  %5231 = vmatpush1.msra.mxu0 %v4986
  %5232 = vmatprep.subr.mxu0 0.0
  %5233 = vmatpush1.msra.mxu0 %v4987
  %5234 = vmatprep.subr.mxu0 0.0
  %5235 = vmatpush1.msra.mxu0 %v4988
  %5236 = vmatprep.subr.mxu0 0.0
  %5237 = vmatpush1.msra.mxu0 %v4989
  %5238 = vmatprep.subr.mxu0 0.0
  %5239 = vmatpush1.msra.mxu0 %v4990
  %5240 = vmatprep.subr.mxu0 0.0
  %5241 = vmatpush1.msra.mxu0 %v4991
  %5242 = vmatprep.subr.mxu0 0.0
  %5243 = vmatpush1.msra.mxu0 %v4992
  %5244 = vmatprep.subr.mxu0 0.0
  %5245 = vmatpush1.msra.mxu0 %v4993
  %5246 = vmatprep.subr.mxu0 0.0
  %5247 = vmatpush1.msra.mxu0 %v4994
  %5248 = vmatprep.subr.mxu0 0.0
  %5249 = vmatpush1.msra.mxu0 %v4995
  %5250 = vmatprep.subr.mxu0 0.0
  %5251 = vmatpush1.msra.mxu0 %v4996
  %5252 = vmatprep.subr.mxu0 0.0
  %5253 = vmatpush1.msra.mxu0 %v4997
  %5254 = vmatprep.subr.mxu0 0.0
  %5255 = vmatpush1.msra.mxu0 %v4998
  %5256 = vmatprep.subr.mxu0 0.0
  %5257 = vmatpush1.msra.mxu0 %v4999
  %5258 = vmatprep.subr.mxu0 0.0
  %5259 = vmatpush1.msra.mxu0 %v5000
  %5260 = vmatprep.subr.mxu0 0.0
  %5261 = vmatpush1.msra.mxu0 %v5001
  %5262 = vmatprep.subr.mxu0 0.0
  %5263 = vmatpush1.msra.mxu0 %v5002
  %5264 = vmatprep.subr.mxu0 0.0
  %5265 = vmatpush1.msra.mxu0 %v5003
  %5266 = vmatprep.subr.mxu0 0.0
  %5267 = vmatpush1.msra.mxu0 %v5004
  %5268 = vmatprep.subr.mxu0 0.0
  %5269 = vmatpush1.msra.mxu0 %v5005
  %5270 = vmatprep.subr.mxu0 0.0
  %5271 = vmatpush1.msra.mxu0 %v5006
  %5272 = vmatprep.subr.mxu0 0.0
  %5273 = vmatpush1.msra.mxu0 %v5007
  %5274 = vmatprep.subr.mxu0 0.0
  %5275 = vmatpush1.msra.mxu0 %v5008
  %5276 = vmatprep.subr.mxu0 0.0
  %5277 = vmatpush1.msra.mxu0 %v5009
  %5278 = vmatprep.subr.mxu0 0.0
  %5279 = vmatpush1.msra.mxu0 %v5010
  %5280 = vmatprep.subr.mxu0 0.0
  %5281 = vmatpush1.msra.mxu0 %v5011
  %5282 = vmatprep.subr.mxu0 0.0
  %5283 = vmatpush1.msra.mxu0 %v5012
  %5284 = vmatprep.subr.mxu0 0.0
  %5285 = vmatpush1.msra.mxu0 %v5013
  %5286 = vmatprep.subr.mxu0 0.0
  %5287 = vmatpush1.msra.mxu0 %v5014
  %5288 = vmatprep.subr.mxu0 0.0
  %5289 = vmatpush1.msra.mxu0 %v5015
  %5290 = vmatprep.subr.mxu0 0.0
  %5291 = vmatpush1.msra.mxu0 %v5016
  %5292 = vmatprep.mubr.f32.mxu0 %v4916
  %5293 = vmatmul.mubr.f32.gmra.mrb[0].mxu0 %v4915
  %v5294 = vpop.f32.mrb[0].mxu0
  %v5295 = vadd.f32 %v5225, %v5294
  %v5296 = vpop.f32.mrb[0].mxu0
  %5297 = vdwg.mxu0
  %5298 = vmatprep.subr.mxu0 0.0
  %5299 = vmatpush1.msra.mxu0 %v5017
  %5300 = vmatprep.subr.mxu0 0.0
  %5301 = vmatpush1.msra.mxu0 %v5018
  %5302 = vmatprep.subr.mxu0 0.0
  %5303 = vmatpush1.msra.mxu0 %v5019
  %5304 = vmatprep.subr.mxu0 0.0
  %5305 = vmatpush1.msra.mxu0 %v5020
  %5306 = vmatprep.subr.mxu0 0.0
  %5307 = vmatpush1.msra.mxu0 %v5021
  %5308 = vmatprep.subr.mxu0 0.0
  %5309 = vmatpush1.msra.mxu0 %v5022
  %5310 = vmatprep.subr.mxu0 0.0
  %5311 = vmatpush1.msra.mxu0 %v5023
  %5312 = vmatprep.subr.mxu0 0.0
  %5313 = vmatpush1.msra.mxu0 %v5024
  %5314 = vmatprep.subr.mxu0 0.0
  %5315 = vmatpush1.msra.mxu0 %v5025
  %5316 = vmatprep.subr.mxu0 0.0
  %5317 = vmatpush1.msra.mxu0 %v5026
  %5318 = vmatprep.subr.mxu0 0.0
  %5319 = vmatpush1.msra.mxu0 %v5027
  %5320 = vmatprep.subr.mxu0 0.0
  %5321 = vmatpush1.msra.mxu0 %v5028
  %5322 = vmatprep.subr.mxu0 0.0
  %5323 = vmatpush1.msra.mxu0 %v5029
  %5324 = vmatprep.subr.mxu0 0.0
  %5325 = vmatpush1.msra.mxu0 %v5030
  %5326 = vmatprep.subr.mxu0 0.0
  %5327 = vmatpush1.msra.mxu0 %v5031
  %5328 = vmatprep.subr.mxu0 0.0
  %5329 = vmatpush1.msra.mxu0 %v5032
  %5330 = vmatprep.subr.mxu0 0.0
  %5331 = vmatpush1.msra.mxu0 %v5033
  %5332 = vmatprep.subr.mxu0 0.0
  %5333 = vmatpush1.msra.mxu0 %v5034
  %5334 = vmatprep.subr.mxu0 0.0
  %5335 = vmatpush1.msra.mxu0 %v5035
  %5336 = vmatprep.subr.mxu0 0.0
  %5337 = vmatpush1.msra.mxu0 %v5036
  %5338 = vmatprep.subr.mxu0 0.0
  %5339 = vmatpush1.msra.mxu0 %v5037
  %5340 = vmatprep.subr.mxu0 0.0
  %5341 = vmatpush1.msra.mxu0 %v5038
  %5342 = vmatprep.subr.mxu0 0.0
  %5343 = vmatpush1.msra.mxu0 %v5039
  %5344 = vmatprep.subr.mxu0 0.0
  %5345 = vmatpush1.msra.mxu0 %v5040
  %5346 = vmatprep.subr.mxu0 0.0
  %5347 = vmatpush1.msra.mxu0 %v5041
  %5348 = vmatprep.subr.mxu0 0.0
  %5349 = vmatpush1.msra.mxu0 %v5042
  %5350 = vmatprep.subr.mxu0 0.0
  %5351 = vmatpush1.msra.mxu0 %v5043
  %5352 = vmatprep.subr.mxu0 0.0
  %5353 = vmatpush1.msra.mxu0 %v5044
  %5354 = vmatprep.subr.mxu0 0.0
  %5355 = vmatpush1.msra.mxu0 %v5045
  %5356 = vmatprep.subr.mxu0 0.0
  %5357 = vmatpush1.msra.mxu0 %v5046
  %5358 = vmatprep.subr.mxu0 0.0
  %5359 = vmatpush1.msra.mxu0 %v5047
  %5360 = vmatprep.subr.mxu0 0.0
  %5361 = vmatpush1.msra.mxu0 %v5048
  %5362 = vmatprep.mubr.f32.mxu0 %v4918
  %5363 = vmatmul.mubr.f32.gmra.mrb[0].mxu0 %v4917
  %v5364 = vpop.f32.mrb[0].mxu0
  %v5365 = vadd.f32 %v5295, %v5364
  %v5366 = vpop.f32.mrb[0].mxu0
  %5367 = vdwg.mxu0
  %5368 = vmatprep.subr.mxu0 0.0
  %5369 = vmatpush1.msra.mxu0 %v5049
  %5370 = vmatprep.subr.mxu0 0.0
  %5371 = vmatpush1.msra.mxu0 %v5050
  %5372 = vmatprep.subr.mxu0 0.0
  %5373 = vmatpush1.msra.mxu0 %v5051
  %5374 = vmatprep.subr.mxu0 0.0
  %5375 = vmatpush1.msra.mxu0 %v5052
  %5376 = vmatprep.subr.mxu0 0.0
  %5377 = vmatpush1.msra.mxu0 %v5053
  %5378 = vmatprep.subr.mxu0 0.0
  %5379 = vmatpush1.msra.mxu0 %v5054
  %5380 = vmatprep.subr.mxu0 0.0
  %5381 = vmatpush1.msra.mxu0 %v5055
  %5382 = vmatprep.subr.mxu0 0.0
  %5383 = vmatpush1.msra.mxu0 %v5056
  %5384 = vmatprep.subr.mxu0 0.0
  %5385 = vmatpush1.msra.mxu0 %v5057
  %5386 = vmatprep.subr.mxu0 0.0
  %5387 = vmatpush1.msra.mxu0 %v5058
  %5388 = vmatprep.subr.mxu0 0.0
  %5389 = vmatpush1.msra.mxu0 %v5059
  %5390 = vmatprep.subr.mxu0 0.0
  %5391 = vmatpush1.msra.mxu0 %v5060
  %5392 = vmatprep.subr.mxu0 0.0
  %5393 = vmatpush1.msra.mxu0 %v5061
  %5394 = vmatprep.subr.mxu0 0.0
  %5395 = vmatpush1.msra.mxu0 %v5062
  %5396 = vmatprep.subr.mxu0 0.0
  %5397 = vmatpush1.msra.mxu0 %v5063
  %5398 = vmatprep.subr.mxu0 0.0
  %5399 = vmatpush1.msra.mxu0 %v5064
  %5400 = vmatprep.subr.mxu0 0.0
  %5401 = vmatpush1.msra.mxu0 %v5065
  %5402 = vmatprep.subr.mxu0 0.0
  %5403 = vmatpush1.msra.mxu0 %v5066
  %5404 = vmatprep.subr.mxu0 0.0
  %5405 = vmatpush1.msra.mxu0 %v5067
  %5406 = vmatprep.subr.mxu0 0.0
  %5407 = vmatpush1.msra.mxu0 %v5068
  %5408 = vmatprep.subr.mxu0 0.0
  %5409 = vmatpush1.msra.mxu0 %v5069
  %5410 = vmatprep.subr.mxu0 0.0
  %5411 = vmatpush1.msra.mxu0 %v5070
  %5412 = vmatprep.subr.mxu0 0.0
  %5413 = vmatpush1.msra.mxu0 %v5071
  %5414 = vmatprep.subr.mxu0 0.0
  %5415 = vmatpush1.msra.mxu0 %v5072
  %5416 = vmatprep.subr.mxu0 0.0
  %5417 = vmatpush1.msra.mxu0 %v5073
  %5418 = vmatprep.subr.mxu0 0.0
  %5419 = vmatpush1.msra.mxu0 %v5074
  %5420 = vmatprep.subr.mxu0 0.0
  %5421 = vmatpush1.msra.mxu0 %v5075
  %5422 = vmatprep.subr.mxu0 0.0
  %5423 = vmatpush1.msra.mxu0 %v5076
  %5424 = vmatprep.subr.mxu0 0.0
  %5425 = vmatpush1.msra.mxu0 %v5077
  %5426 = vmatprep.subr.mxu0 0.0
  %5427 = vmatpush1.msra.mxu0 %v5078
  %5428 = vmatprep.subr.mxu0 0.0
  %5429 = vmatpush1.msra.mxu0 %v5079
  %5430 = vmatprep.subr.mxu0 0.0
  %5431 = vmatpush1.msra.mxu0 %v5080
  %5432 = vmatprep.mubr.f32.mxu0 %v4920
  %5433 = vmatmul.mubr.f32.gmra.mrb[0].mxu0 %v4919
  %v5434 = vpop.f32.mrb[0].mxu0
  %v5435 = vadd.f32 %v5365, %v5434
  %v5436 = vpop.f32.mrb[0].mxu0
  %5437 = vdwg.mxu0
  %v5438 = vmax.f32 %v5435, 0.0
  %v5439 = vlaneseq
  %v5440 = vshrl.u32 %v5439, 7
  %vm5441 = vcmp.lt.s32.totalorder %v5440, 2
  %v5442 = vsel %vm5441, %v5438, 0.0
  %5443 = vst [vmem:[%s4] sm:$0xff] %v5442
  // Predicated region
  $region18: #{_lambda_.2} parent=0 // pred_check
    _
  $region19: #{_lambda_.2} parent=0 // pred_check_branch
    %5445 = sbr.rel (0) target = $region21
  $region20: #{_lambda_.2} parent=0 // pred_region
    _
  $region21: #{_lambda_.2} parent=0 // pred_fallthru
    _
  // Predicated region
  $region22: #{_lambda_.2} parent=0 // pred_check
    _
  $region23: #{_lambda_.2} parent=0 // pred_check_branch
    %5447 = sbr.rel (0) target = $region25
  $region24: #{_lambda_.2} parent=0 // pred_region
    _
  $region25: #{_lambda_.2} parent=0 // pred_fallthru
    _

// kernel: _lambda_.3
$region0: #{_lambda_.3}
  #allocation0 [shape = 'u32[]', space=smem, size = 0x4, offset = 0x4, fixed_abs, tag = 'smem constant byte address 0x4 - core index']
  #allocation1 [shape = 'u32[144,128]{1,0:T(1,128)}', space=vmem, size = 0x12000, scoped, tag = 'internal scratch']
  #allocation2 [shape = 'f32[2,8,128]{2,1,0:T(8,128)}', space=vmem, size = 0x2000, scoped, tag = 'scratch operand']
  #allocation3 [shape = 'f32[2,8,128]{2,1,0:T(8,128)}', space=vmem, size = 0x2000, scoped, tag = 'scratch operand']
  #allocation4 [shape = 'f32[8,128]{1,0:T(8,128)}', space=vmem, size = 0x1000, scoped, tag = 'scratch operand']
  #allocation5 [shape = 's32[1]{0}', space=sflag, size = 0x4, scoped, tag = 'scoped memory for _lambda_.3']
  #allocation6 [shape = 'u8[512]{0}', space=smem, size = 0x200, scoped, tag = 'prefetched SMEM operand 0']
  %s0 = inlined_call_operand.vmem [shape: s32[8], index: 0, kind: input, shape index: {}]
  %s1 = inlined_call_operand.vmem [shape: f32[8,8,128], index: 1, kind: input, shape index: {}]
  %s2 = inlined_call_operand.vmem [shape: f32[8,128], index: 2, kind: input, shape index: {}]
  %s3 = inlined_call_operand.vmem [shape: bf16[256,512], index: 3, kind: input, shape index: {}]
  %s4 = inlined_call_operand.vmem [shape: f32[1,512], index: 4, kind: input, shape index: {}]
  %s5 = inlined_call_operand.vmem [shape: bf16[256,512], index: 5, kind: input, shape index: {}]
  %s6 = inlined_call_operand.vmem [shape: f32[1,512], index: 6, kind: input, shape index: {}]
  %s7 = inlined_call_operand.vmem [shape: bf16[128,128], index: 7, kind: input, shape index: {}]
  %s8 = inlined_call_operand.vmem [shape: f32[1,128], index: 8, kind: input, shape index: {}]
  %s9 = inlined_call_operand.vmem [shape: f32[128,128], index: 9, kind: input, shape index: {}]
  %s10 = inlined_call_operand.vmem [shape: f32[8,8,128], index: 10, kind: output, shape index: {}]
  %s11 = sld [smem:[#allocation0]]
  $region89: #{_lambda_.3} parent=0
    _
  %s13 = ssub.s32 1, %s11
  %s14 = scalar_select 0, %s13, %s11
  %s15 = sshll.u32 %s0, 4
  %s16 = int_to_ptr.vmem [resolvable:$true] %s15
  %18 = dma.vmem_to_smem %s16, 16, [#allocation6], [#allocation5]
  %19 = dma.done [#allocation5], 16
  %20 = sfence
  loop: start=0, step=1, limit=4
  $region2: #{_lambda_.3} parent=0 // loop_pre_header
    _
  $region3: #{_lambda_.3} parent=0 // loop_header
    %s22 = sphi 0, %s26
    %p23 = scmp.ge.s32.totalorder %s22, 4
    %s32 = sphi 0, %s34
    %s35 = sphi 0, %s32
    %s36 = sphi 0, %s35
    %s52 = sphi 0, %s36
    %s56 = sphi 0, %s56
    %s58 = sphi 0, %s56
    %s59 = sphi 0, %s58
    %s73 = sphi 0, %s59
    %s77 = sphi 0, %s77
    %s79 = sphi 0, %s77
    %s80 = sphi 0, %s79
    %s94 = sphi 0, %s80
    %s98 = sphi 0, %s98
    %s100 = sphi 0, %s98
    %s101 = sphi 0, %s100
    %s115 = sphi 0, %s101
    %s119 = sphi 0, %s119
    %s121 = sphi 0, %s119
    %s122 = sphi 0, %s121
    %s136 = sphi 0, %s122
    %s140 = sphi 0, %s140
    %s142 = sphi 0, %s140
    %s143 = sphi 0, %s142
    %s157 = sphi 0, %s143
    %s161 = sphi 0, %s161
    %s163 = sphi 0, %s161
    %s164 = sphi 0, %s163
    %s178 = sphi 0, %s164
    %s182 = sphi 0, %s182
    %s184 = sphi 0, %s182
    %s185 = sphi 0, %s184
    %s199 = sphi 0, %s185
    %s203 = sphi 0, %s203
    %s205 = sphi 0, %s203
    %s206 = sphi 0, %s205
    %s220 = sphi 0, %s206
    %s226 = sphi 0, %s228
    %s229 = sphi 0, %s226
    %s230 = sphi 0, %s229
    %s246 = sphi 0, %s230
  $region4: #{_lambda_.3} parent=0 // loop_header_branch
    %25 = sbr.rel (%p23) target = $region8
  $region5: #{_lambda_.3} parent=0 // loop_body
    %s27 = ssub.s32 %s22, 1
    %s28 = ssub.s32 %s22, 2
    %s29 = sadd.s32 %s22, 1
    %s30 = ssub.s32 %s22, %s29
    %p31 = scmp.eq.s32.totalorder %s30, 0
    %s33 = sadd.s32 %s32, 1
    %s34 = scalar_select %p31, %s32, %s33
    %p37 = pneg %p31
    %p38 = scmp.eq.s32.totalorder %s22, 1
    %p39 = por %p37, %p38
    %p40 = scmp.ne.s32.totalorder %s32, %s35
    %p41 = scmp.eq.s32.totalorder %s22, 0
    %p42 = por %p40, %p41
    %p43 = scmp.ne.s32.totalorder %s32, %s35
    %p44 = scmp.eq.s32.totalorder %s27, 1
    %p45 = por %p43, %p44
    %p46 = scmp.ne.s32.totalorder %s35, %s36
    %p47 = scmp.eq.s32.totalorder %s27, 0
    %p48 = por %p46, %p47
    %p49 = scmp.ne.s32.totalorder %s35, %s36
    %p50 = scmp.eq.s32.totalorder %s28, 1
    %p51 = por %p49, %p50
    %p53 = scmp.ne.s32.totalorder %s36, %s52
    %p54 = scmp.eq.s32.totalorder %s28, 0
    %p55 = por %p53, %p54
    %s57 = sadd.s32 %s56, 1
    %p60 = scmp.eq.s32.totalorder %s22, 1
    %p61 = scmp.ne.s32.totalorder %s56, %s58
    %p62 = scmp.eq.s32.totalorder %s22, 0
    %p63 = por %p61, %p62
    %p64 = scmp.ne.s32.totalorder %s56, %s58
    %p65 = scmp.eq.s32.totalorder %s27, 1
    %p66 = por %p64, %p65
    %p67 = scmp.ne.s32.totalorder %s58, %s59
    %p68 = scmp.eq.s32.totalorder %s27, 0
    %p69 = por %p67, %p68
    %p70 = scmp.ne.s32.totalorder %s58, %s59
    %p71 = scmp.eq.s32.totalorder %s28, 1
    %p72 = por %p70, %p71
    %p74 = scmp.ne.s32.totalorder %s59, %s73
    %p75 = scmp.eq.s32.totalorder %s28, 0
    %p76 = por %p74, %p75
    %s78 = sadd.s32 %s77, 1
    %p81 = scmp.eq.s32.totalorder %s22, 1
    %p82 = scmp.ne.s32.totalorder %s77, %s79
    %p83 = scmp.eq.s32.totalorder %s22, 0
    %p84 = por %p82, %p83
    %p85 = scmp.ne.s32.totalorder %s77, %s79
    %p86 = scmp.eq.s32.totalorder %s27, 1
    %p87 = por %p85, %p86
    %p88 = scmp.ne.s32.totalorder %s79, %s80
    %p89 = scmp.eq.s32.totalorder %s27, 0
    %p90 = por %p88, %p89
    %p91 = scmp.ne.s32.totalorder %s79, %s80
    %p92 = scmp.eq.s32.totalorder %s28, 1
    %p93 = por %p91, %p92
    %p95 = scmp.ne.s32.totalorder %s80, %s94
    %p96 = scmp.eq.s32.totalorder %s28, 0
    %p97 = por %p95, %p96
    %s99 = sadd.s32 %s98, 1
    %p102 = scmp.eq.s32.totalorder %s22, 1
    %p103 = scmp.ne.s32.totalorder %s98, %s100
    %p104 = scmp.eq.s32.totalorder %s22, 0
    %p105 = por %p103, %p104
    %p106 = scmp.ne.s32.totalorder %s98, %s100
    %p107 = scmp.eq.s32.totalorder %s27, 1
    %p108 = por %p106, %p107
    %p109 = scmp.ne.s32.totalorder %s100, %s101
    %p110 = scmp.eq.s32.totalorder %s27, 0
    %p111 = por %p109, %p110
    %p112 = scmp.ne.s32.totalorder %s100, %s101
    %p113 = scmp.eq.s32.totalorder %s28, 1
    %p114 = por %p112, %p113
    %p116 = scmp.ne.s32.totalorder %s101, %s115
    %p117 = scmp.eq.s32.totalorder %s28, 0
    %p118 = por %p116, %p117
    %s120 = sadd.s32 %s119, 1
    %p123 = scmp.eq.s32.totalorder %s22, 1
    %p124 = scmp.ne.s32.totalorder %s119, %s121
    %p125 = scmp.eq.s32.totalorder %s22, 0
    %p126 = por %p124, %p125
    %p127 = scmp.ne.s32.totalorder %s119, %s121
    %p128 = scmp.eq.s32.totalorder %s27, 1
    %p129 = por %p127, %p128
    %p130 = scmp.ne.s32.totalorder %s121, %s122
    %p131 = scmp.eq.s32.totalorder %s27, 0
    %p132 = por %p130, %p131
    %p133 = scmp.ne.s32.totalorder %s121, %s122
    %p134 = scmp.eq.s32.totalorder %s28, 1
    %p135 = por %p133, %p134
    %p137 = scmp.ne.s32.totalorder %s122, %s136
    %p138 = scmp.eq.s32.totalorder %s28, 0
    %p139 = por %p137, %p138
    %s141 = sadd.s32 %s140, 1
    %p144 = scmp.eq.s32.totalorder %s22, 1
    %p145 = scmp.ne.s32.totalorder %s140, %s142
    %p146 = scmp.eq.s32.totalorder %s22, 0
    %p147 = por %p145, %p146
    %p148 = scmp.ne.s32.totalorder %s140, %s142
    %p149 = scmp.eq.s32.totalorder %s27, 1
    %p150 = por %p148, %p149
    %p151 = scmp.ne.s32.totalorder %s142, %s143
    %p152 = scmp.eq.s32.totalorder %s27, 0
    %p153 = por %p151, %p152
    %p154 = scmp.ne.s32.totalorder %s142, %s143
    %p155 = scmp.eq.s32.totalorder %s28, 1
    %p156 = por %p154, %p155
    %p158 = scmp.ne.s32.totalorder %s143, %s157
    %p159 = scmp.eq.s32.totalorder %s28, 0
    %p160 = por %p158, %p159
    %s162 = sadd.s32 %s161, 1
    %p165 = scmp.eq.s32.totalorder %s22, 1
    %p166 = scmp.ne.s32.totalorder %s161, %s163
    %p167 = scmp.eq.s32.totalorder %s22, 0
    %p168 = por %p166, %p167
    %p169 = scmp.ne.s32.totalorder %s161, %s163
    %p170 = scmp.eq.s32.totalorder %s27, 1
    %p171 = por %p169, %p170
    %p172 = scmp.ne.s32.totalorder %s163, %s164
    %p173 = scmp.eq.s32.totalorder %s27, 0
    %p174 = por %p172, %p173
    %p175 = scmp.ne.s32.totalorder %s163, %s164
    %p176 = scmp.eq.s32.totalorder %s28, 1
    %p177 = por %p175, %p176
    %p179 = scmp.ne.s32.totalorder %s164, %s178
    %p180 = scmp.eq.s32.totalorder %s28, 0
    %p181 = por %p179, %p180
    %s183 = sadd.s32 %s182, 1
    %p186 = scmp.eq.s32.totalorder %s22, 1
    %p187 = scmp.ne.s32.totalorder %s182, %s184
    %p188 = scmp.eq.s32.totalorder %s22, 0
    %p189 = por %p187, %p188
    %p190 = scmp.ne.s32.totalorder %s182, %s184
    %p191 = scmp.eq.s32.totalorder %s27, 1
    %p192 = por %p190, %p191
    %p193 = scmp.ne.s32.totalorder %s184, %s185
    %p194 = scmp.eq.s32.totalorder %s27, 0
    %p195 = por %p193, %p194
    %p196 = scmp.ne.s32.totalorder %s184, %s185
    %p197 = scmp.eq.s32.totalorder %s28, 1
    %p198 = por %p196, %p197
    %p200 = scmp.ne.s32.totalorder %s185, %s199
    %p201 = scmp.eq.s32.totalorder %s28, 0
    %p202 = por %p200, %p201
    %s204 = sadd.s32 %s203, 1
    %p207 = scmp.eq.s32.totalorder %s22, 1
    %p208 = scmp.ne.s32.totalorder %s203, %s205
    %p209 = scmp.eq.s32.totalorder %s22, 0
    %p210 = por %p208, %p209
    %p211 = scmp.ne.s32.totalorder %s203, %s205
    %p212 = scmp.eq.s32.totalorder %s27, 1
    %p213 = por %p211, %p212
    %p214 = scmp.ne.s32.totalorder %s205, %s206
    %p215 = scmp.eq.s32.totalorder %s27, 0
    %p216 = por %p214, %p215
    %p217 = scmp.ne.s32.totalorder %s205, %s206
    %p218 = scmp.eq.s32.totalorder %s28, 1
    %p219 = por %p217, %p218
    %p221 = scmp.ne.s32.totalorder %s206, %s220
    %p222 = scmp.eq.s32.totalorder %s28, 0
    %p223 = por %p221, %p222
    %s224 = ssub.s32 %s22, %s29
    %p225 = scmp.eq.s32.totalorder %s224, 0
    %s227 = sadd.s32 %s226, 1
    %s228 = scalar_select %p225, %s226, %s227
    %p231 = pneg %p225
    %p232 = scmp.eq.s32.totalorder %s22, 1
    %p233 = por %p231, %p232
    %p234 = scmp.ne.s32.totalorder %s226, %s229
    %p235 = scmp.eq.s32.totalorder %s22, 0
    %p236 = por %p234, %p235
    %p237 = scmp.ne.s32.totalorder %s226, %s229
    %p238 = scmp.eq.s32.totalorder %s27, 1
    %p239 = por %p237, %p238
    %p240 = scmp.ne.s32.totalorder %s229, %s230
    %p241 = scmp.eq.s32.totalorder %s27, 0
    %p242 = por %p240, %p241
    %p243 = scmp.ne.s32.totalorder %s229, %s230
    %p244 = scmp.eq.s32.totalorder %s28, 1
    %p245 = por %p243, %p244
    %p247 = scmp.ne.s32.totalorder %s230, %s246
    %p248 = scmp.eq.s32.totalorder %s28, 0
    %p249 = por %p247, %p248
    %p250 = scmp.le.s32.totalorder 1, %s22
    %p251 = scmp.lt.s32.totalorder %s22, 3
    %p252 = pnand %p250, %p251
    %p253 = pneg %p252
    // Predicated region
    $region9: #{_lambda_.3} parent=5 // pred_check
      _
    $region10: #{_lambda_.3} parent=5 // pred_check_branch
      %255 = sbr.rel (%p252) target = $region12
    $region11: #{_lambda_.3} parent=5 // pred_region
      %s256 = ssub.s32 %s22, 1
      // Predicated region
      $region13: #{_lambda_.3} parent=11 // pred_check
        %p257 = pneg %p69
      $region14: #{_lambda_.3} parent=11 // pred_check_branch
        %259 = sbr.rel (%p257) target = $region16
      $region15: #{_lambda_.3} parent=11 // pred_region
        _
      $region16: #{_lambda_.3} parent=11 // pred_fallthru
        _
      // Predicated region
      $region17: #{_lambda_.3} parent=11 // pred_check
        %p260 = pneg %p90
      $region18: #{_lambda_.3} parent=11 // pred_check_branch
        %262 = sbr.rel (%p260) target = $region20
      $region19: #{_lambda_.3} parent=11 // pred_region
        _
      $region20: #{_lambda_.3} parent=11 // pred_fallthru
        _
      // Predicated region
      $region21: #{_lambda_.3} parent=11 // pred_check
        %p263 = pneg %p111
      $region22: #{_lambda_.3} parent=11 // pred_check_branch
        %265 = sbr.rel (%p263) target = $region24
      $region23: #{_lambda_.3} parent=11 // pred_region
        _
      $region24: #{_lambda_.3} parent=11 // pred_fallthru
        _
      // Predicated region
      $region25: #{_lambda_.3} parent=11 // pred_check
        %p266 = pneg %p132
      $region26: #{_lambda_.3} parent=11 // pred_check_branch
        %268 = sbr.rel (%p266) target = $region28
      $region27: #{_lambda_.3} parent=11 // pred_region
        _
      $region28: #{_lambda_.3} parent=11 // pred_fallthru
        _
      // Predicated region
      $region29: #{_lambda_.3} parent=11 // pred_check
        %p269 = pneg %p153
      $region30: #{_lambda_.3} parent=11 // pred_check_branch
        %271 = sbr.rel (%p269) target = $region32
      $region31: #{_lambda_.3} parent=11 // pred_region
        _
      $region32: #{_lambda_.3} parent=11 // pred_fallthru
        _
      // Predicated region
      $region33: #{_lambda_.3} parent=11 // pred_check
        %p272 = pneg %p174
      $region34: #{_lambda_.3} parent=11 // pred_check_branch
        %274 = sbr.rel (%p272) target = $region36
      $region35: #{_lambda_.3} parent=11 // pred_region
        _
      $region36: #{_lambda_.3} parent=11 // pred_fallthru
        _
      // Predicated region
      $region37: #{_lambda_.3} parent=11 // pred_check
        %p275 = pneg %p195
      $region38: #{_lambda_.3} parent=11 // pred_check_branch
        %277 = sbr.rel (%p275) target = $region40
      $region39: #{_lambda_.3} parent=11 // pred_region
        _
      $region40: #{_lambda_.3} parent=11 // pred_fallthru
        _
      // Predicated region
      $region41: #{_lambda_.3} parent=11 // pred_check
        %p278 = pneg %p216
      $region42: #{_lambda_.3} parent=11 // pred_check_branch
        %280 = sbr.rel (%p278) target = $region44
      $region43: #{_lambda_.3} parent=11 // pred_region
        _
      $region44: #{_lambda_.3} parent=11 // pred_fallthru
        _
    $region12: #{_lambda_.3} parent=5 // pred_fallthru
      _
    %p281 = scmp.lt.s32.totalorder %s22, 2
    // Predicated region
    $region45: #{_lambda_.3} parent=5 // pred_check
      %p282 = pneg %p281
    $region46: #{_lambda_.3} parent=5 // pred_check_branch
      %284 = sbr.rel (%p282) target = $region48
    $region47: #{_lambda_.3} parent=5 // pred_region
      // Predicated region
      $region49: #{_lambda_.3} parent=47 // pred_check
        %p285 = pneg %p42
      $region50: #{_lambda_.3} parent=47 // pred_check_branch
        %287 = sbr.rel (%p285) target = $region52
      $region51: #{_lambda_.3} parent=47 // pred_region
        %s288 = smul.u32 4, %s22
        %p289 = scmp.lt.s32.totalorder %s288, 7
        %s290 = scalar_select %p289, %s288, 7
        %s291 = smul.addr %s290, 8
        %s292 = scalar_lea.vmem %s1, %s291
        %s293 = smul.u32 4, %s22
      $region52: #{_lambda_.3} parent=47 // pred_fallthru
        _
    $region48: #{_lambda_.3} parent=5 // pred_fallthru
      _
    %p294 = scmp.le.s32.totalorder 1, %s22
    %p295 = scmp.lt.s32.totalorder %s22, 3
    %p296 = pnand %p294, %p295
    %p297 = pneg %p296
    // Predicated region
    $region53: #{_lambda_.3} parent=5 // pred_check
      _
    $region54: #{_lambda_.3} parent=5 // pred_check_branch
      %299 = sbr.rel (%p296) target = $region56
    $region55: #{_lambda_.3} parent=5 // pred_region
      %s300 = ssub.s32 %s22, 1
      %s301 = smul.u32 4, %s27
      %p302 = scmp.lt.s32.totalorder %s301, 7
      %s303 = scalar_select %p302, %s301, 7
      %s304 = smul.addr %s303, 8
      %s305 = scalar_lea.vmem %s1, %s304
      %p306 = pneg %p48
      %p307 = pneg %p45
      %p308 = pneg %p69
      %p309 = pneg %p66
      %p310 = pneg %p90
      %p311 = pneg %p87
      %p312 = pneg %p111
      %p313 = pneg %p108
      %p314 = pneg %p132
      %p315 = pneg %p129
      %p316 = pneg %p153
      %p317 = pneg %p150
      %p318 = pneg %p174
      %p319 = pneg %p171
      %p320 = pneg %p195
      %p321 = pneg %p192
      %p322 = pneg %p216
      %p323 = pneg %p213
      %p324 = pneg %p242
      %p325 = pneg %p239
      %s326 = smul.u32 4, %s27
      %p327 = scmp.lt.s32.totalorder %s326, 7
      %s328 = scalar_select %p327, %s326, 7
      %s329 = smul.addr %s328, 8
      %s330 = scalar_lea.vmem %s10, %s329
      %s331 = smul.u32 4, %s27
      %p332 = scmp.lt.s32.totalorder %s331, 7
      %s333 = scalar_select %p332, %s331, 7
      %s334 = smul.addr %s333, 8
      %s335 = scalar_lea.vmem %s1, %s334
      %s336 = smul.u32 4, %s27
      %s337 = smul.u32 4, %s27
      %p338 = scmp.lt.s32.totalorder %s337, 7
      %s339 = scalar_select %p338, %s337, 7
      %s340 = smul.addr %s339, 8
      %s341 = scalar_lea.vmem %s10, %s340
      %s342 = smul.u32 4, %s27
      %p344 = scmp.eq.s32.totalorder %s27, 0
      // Predicated region
      $region57: #{_lambda_.3} parent=55 // pred_check
        %p345 = pneg %p344
      $region58: #{_lambda_.3} parent=55 // pred_check_branch
        %347 = sbr.rel (%p345) target = $region60
      $region59: #{_lambda_.3} parent=55 // pred_region
        %348 = vst [vmem:[#allocation2] sm:$0xff] 0.0
        %349 = vst [vmem:[#allocation2 + $0x8] sm:$0xff] 0.0
        %350 = vst [vmem:[#allocation3] sm:$0xff] 0.0
        %351 = vst [vmem:[#allocation3 + $0x8] sm:$0xff] 0.0
        %v352 = vld [vmem:[%s2] sm:$0xff]
        %v353 = vld [vmem:[#allocation2] sm:$0xff]
        %v354 = vld [vmem:[#allocation3] sm:$0xff]
        %v355 = vpack.c.bf16 %v352, %v352
        %v356 = vpack.c.bf16 %v353, %v353
        %v357 = vld [vmem:[%s3] sm:$0xff]
        %v358 = vld [vmem:[%s3 + $0x8] sm:$0xff]
        %v359 = vld [vmem:[%s3 + $0x10] sm:$0xff]
        %v360 = vld [vmem:[%s3 + $0x18] sm:$0xff]
        %v361 = vld [vmem:[%s3 + $0x20] sm:$0xff]
        %v362 = vld [vmem:[%s3 + $0x28] sm:$0xff]
        %v363 = vld [vmem:[%s3 + $0x30] sm:$0xff]
        %v364 = vld [vmem:[%s3 + $0x38] sm:$0xff]
        %v365 = vld [vmem:[%s3 + $0x40] sm:$0xff]
        %v366 = vld [vmem:[%s3 + $0x48] sm:$0xff]
        %v367 = vld [vmem:[%s3 + $0x50] sm:$0xff]
        %v368 = vld [vmem:[%s3 + $0x58] sm:$0xff]
        %v369 = vld [vmem:[%s3 + $0x60] sm:$0xff]
        %v370 = vld [vmem:[%s3 + $0x68] sm:$0xff]
        %v371 = vld [vmem:[%s3 + $0x70] sm:$0xff]
        %v372 = vld [vmem:[%s3 + $0x78] sm:$0xff]
        %v373 = vld [vmem:[%s3 + $0x80] sm:$0xff]
        %v374 = vld [vmem:[%s3 + $0x88] sm:$0xff]
        %v375 = vld [vmem:[%s3 + $0x90] sm:$0xff]
        %v376 = vld [vmem:[%s3 + $0x98] sm:$0xff]
        %v377 = vld [vmem:[%s3 + $0xa0] sm:$0xff]
        %v378 = vld [vmem:[%s3 + $0xa8] sm:$0xff]
        %v379 = vld [vmem:[%s3 + $0xb0] sm:$0xff]
        %v380 = vld [vmem:[%s3 + $0xb8] sm:$0xff]
        %v381 = vld [vmem:[%s3 + $0xc0] sm:$0xff]
        %v382 = vld [vmem:[%s3 + $0xc8] sm:$0xff]
        %v383 = vld [vmem:[%s3 + $0xd0] sm:$0xff]
        %v384 = vld [vmem:[%s3 + $0xd8] sm:$0xff]
        %v385 = vld [vmem:[%s3 + $0xe0] sm:$0xff]
        %v386 = vld [vmem:[%s3 + $0xe8] sm:$0xff]
        %v387 = vld [vmem:[%s3 + $0xf0] sm:$0xff]
        %v388 = vld [vmem:[%s3 + $0xf8] sm:$0xff]
        %v389 = vld [vmem:[%s3 + $0x100] sm:$0xff]
        %v390 = vld [vmem:[%s3 + $0x108] sm:$0xff]
        %v391 = vld [vmem:[%s3 + $0x110] sm:$0xff]
        %v392 = vld [vmem:[%s3 + $0x118] sm:$0xff]
        %v393 = vld [vmem:[%s3 + $0x120] sm:$0xff]
        %v394 = vld [vmem:[%s3 + $0x128] sm:$0xff]
        %v395 = vld [vmem:[%s3 + $0x130] sm:$0xff]
        %v396 = vld [vmem:[%s3 + $0x138] sm:$0xff]
        %v397 = vld [vmem:[%s3 + $0x140] sm:$0xff]
        %v398 = vld [vmem:[%s3 + $0x148] sm:$0xff]
        %v399 = vld [vmem:[%s3 + $0x150] sm:$0xff]
        %v400 = vld [vmem:[%s3 + $0x158] sm:$0xff]
        %v401 = vld [vmem:[%s3 + $0x160] sm:$0xff]
        %v402 = vld [vmem:[%s3 + $0x168] sm:$0xff]
        %v403 = vld [vmem:[%s3 + $0x170] sm:$0xff]
        %v404 = vld [vmem:[%s3 + $0x178] sm:$0xff]
        %v405 = vld [vmem:[%s3 + $0x180] sm:$0xff]
        %v406 = vld [vmem:[%s3 + $0x188] sm:$0xff]
        %v407 = vld [vmem:[%s3 + $0x190] sm:$0xff]
        %v408 = vld [vmem:[%s3 + $0x198] sm:$0xff]
        %v409 = vld [vmem:[%s3 + $0x1a0] sm:$0xff]
        %v410 = vld [vmem:[%s3 + $0x1a8] sm:$0xff]
        %v411 = vld [vmem:[%s3 + $0x1b0] sm:$0xff]
        %v412 = vld [vmem:[%s3 + $0x1b8] sm:$0xff]
        %v413 = vld [vmem:[%s3 + $0x1c0] sm:$0xff]
        %v414 = vld [vmem:[%s3 + $0x1c8] sm:$0xff]
        %v415 = vld [vmem:[%s3 + $0x1d0] sm:$0xff]
        %v416 = vld [vmem:[%s3 + $0x1d8] sm:$0xff]
        %v417 = vld [vmem:[%s3 + $0x1e0] sm:$0xff]
        %v418 = vld [vmem:[%s3 + $0x1e8] sm:$0xff]
        %v419 = vld [vmem:[%s3 + $0x1f0] sm:$0xff]
        %v420 = vld [vmem:[%s3 + $0x1f8] sm:$0xff]
        %v421 = vld [vmem:[%s4] sm:$0xf]
        %v423 = vlaneseq
        %v424 = vshrl.u32 %v423, 7
        %v425 = vsub.s32 0, %v424
        %v426 = vrot.slane %v421, %v425
        %v427 = vlaneseq
        %v428 = vshrl.u32 %v427, 7
        %v429 = vsub.s32 1, %v428
        %v430 = vrot.slane %v421, %v429
        %v431 = vlaneseq
        %v432 = vshrl.u32 %v431, 7
        %v433 = vsub.s32 2, %v432
        %v434 = vrot.slane %v421, %v433
        %v435 = vlaneseq
        %v436 = vshrl.u32 %v435, 7
        %v437 = vsub.s32 3, %v436
        %v438 = vrot.slane %v421, %v437
        %v507 = vunpack.c.l.b16 %v357
        %v508 = vunpack.c.h.b16 %v357
        %v509 = vunpack.c.l.b16 %v358
        %v510 = vunpack.c.h.b16 %v358
        %v511 = vunpack.c.l.b16 %v359
        %v512 = vunpack.c.h.b16 %v359
        %v513 = vunpack.c.l.b16 %v360
        %v514 = vunpack.c.h.b16 %v360
        %v515 = vunpack.c.l.b16 %v361
        %v516 = vunpack.c.h.b16 %v361
        %v517 = vunpack.c.l.b16 %v362
        %v518 = vunpack.c.h.b16 %v362
        %v519 = vunpack.c.l.b16 %v363
        %v520 = vunpack.c.h.b16 %v363
        %v521 = vunpack.c.l.b16 %v364
        %v522 = vunpack.c.h.b16 %v364
        %v523 = vunpack.c.l.b16 %v365
        %v524 = vunpack.c.h.b16 %v365
        %v525 = vunpack.c.l.b16 %v366
        %v526 = vunpack.c.h.b16 %v366
        %v527 = vunpack.c.l.b16 %v367
        %v528 = vunpack.c.h.b16 %v367
        %v529 = vunpack.c.l.b16 %v368
        %v530 = vunpack.c.h.b16 %v368
        %v531 = vunpack.c.l.b16 %v369
        %v532 = vunpack.c.h.b16 %v369
        %v533 = vunpack.c.l.b16 %v370
        %v534 = vunpack.c.h.b16 %v370
        %v535 = vunpack.c.l.b16 %v371
        %v536 = vunpack.c.h.b16 %v371
        %v537 = vunpack.c.l.b16 %v372
        %v538 = vunpack.c.h.b16 %v372
        %v539 = vunpack.c.l.b16 %v373
        %v540 = vunpack.c.h.b16 %v373
        %v541 = vunpack.c.l.b16 %v374
        %v542 = vunpack.c.h.b16 %v374
        %v543 = vunpack.c.l.b16 %v375
        %v544 = vunpack.c.h.b16 %v375
        %v545 = vunpack.c.l.b16 %v376
        %v546 = vunpack.c.h.b16 %v376
        %v547 = vunpack.c.l.b16 %v377
        %v548 = vunpack.c.h.b16 %v377
        %v549 = vunpack.c.l.b16 %v378
        %v550 = vunpack.c.h.b16 %v378
        %v551 = vunpack.c.l.b16 %v379
        %v552 = vunpack.c.h.b16 %v379
        %v553 = vunpack.c.l.b16 %v380
        %v554 = vunpack.c.h.b16 %v380
        %v555 = vunpack.c.l.b16 %v381
        %v556 = vunpack.c.h.b16 %v381
        %v557 = vunpack.c.l.b16 %v382
        %v558 = vunpack.c.h.b16 %v382
        %v559 = vunpack.c.l.b16 %v383
        %v560 = vunpack.c.h.b16 %v383
        %v561 = vunpack.c.l.b16 %v384
        %v562 = vunpack.c.h.b16 %v384
        %v563 = vunpack.c.l.b16 %v385
        %v564 = vunpack.c.h.b16 %v385
        %v565 = vunpack.c.l.b16 %v386
        %v566 = vunpack.c.h.b16 %v386
        %v567 = vunpack.c.l.b16 %v387
        %v568 = vunpack.c.h.b16 %v387
        %v569 = vunpack.c.l.b16 %v388
        %v570 = vunpack.c.h.b16 %v388
        %v571 = vunpack.c.l.b16 %v389
        %v572 = vunpack.c.h.b16 %v389
        %v573 = vunpack.c.l.b16 %v390
        %v574 = vunpack.c.h.b16 %v390
        %v575 = vunpack.c.l.b16 %v391
        %v576 = vunpack.c.h.b16 %v391
        %v577 = vunpack.c.l.b16 %v392
        %v578 = vunpack.c.h.b16 %v392
        %v579 = vunpack.c.l.b16 %v393
        %v580 = vunpack.c.h.b16 %v393
        %v581 = vunpack.c.l.b16 %v394
        %v582 = vunpack.c.h.b16 %v394
        %v583 = vunpack.c.l.b16 %v395
        %v584 = vunpack.c.h.b16 %v395
        %v585 = vunpack.c.l.b16 %v396
        %v586 = vunpack.c.h.b16 %v396
        %v587 = vunpack.c.l.b16 %v397
        %v588 = vunpack.c.h.b16 %v397
        %v589 = vunpack.c.l.b16 %v398
        %v590 = vunpack.c.h.b16 %v398
        %v591 = vunpack.c.l.b16 %v399
        %v592 = vunpack.c.h.b16 %v399
        %v593 = vunpack.c.l.b16 %v400
        %v594 = vunpack.c.h.b16 %v400
        %v595 = vunpack.c.l.b16 %v401
        %v596 = vunpack.c.h.b16 %v401
        %v597 = vunpack.c.l.b16 %v402
        %v598 = vunpack.c.h.b16 %v402
        %v599 = vunpack.c.l.b16 %v403
        %v600 = vunpack.c.h.b16 %v403
        %v601 = vunpack.c.l.b16 %v404
        %v602 = vunpack.c.h.b16 %v404
        %v603 = vunpack.c.l.b16 %v405
        %v604 = vunpack.c.h.b16 %v405
        %v605 = vunpack.c.l.b16 %v406
        %v606 = vunpack.c.h.b16 %v406
        %v607 = vunpack.c.l.b16 %v407
        %v608 = vunpack.c.h.b16 %v407
        %v609 = vunpack.c.l.b16 %v408
        %v610 = vunpack.c.h.b16 %v408
        %v611 = vunpack.c.l.b16 %v409
        %v612 = vunpack.c.h.b16 %v409
        %v613 = vunpack.c.l.b16 %v410
        %v614 = vunpack.c.h.b16 %v410
        %v615 = vunpack.c.l.b16 %v411
        %v616 = vunpack.c.h.b16 %v411
        %v617 = vunpack.c.l.b16 %v412
        %v618 = vunpack.c.h.b16 %v412
        %v619 = vunpack.c.l.b16 %v413
        %v620 = vunpack.c.h.b16 %v413
        %v621 = vunpack.c.l.b16 %v414
        %v622 = vunpack.c.h.b16 %v414
        %v623 = vunpack.c.l.b16 %v415
        %v624 = vunpack.c.h.b16 %v415
        %v625 = vunpack.c.l.b16 %v416
        %v626 = vunpack.c.h.b16 %v416
        %v627 = vunpack.c.l.b16 %v417
        %v628 = vunpack.c.h.b16 %v417
        %v629 = vunpack.c.l.b16 %v418
        %v630 = vunpack.c.h.b16 %v418
        %v631 = vunpack.c.l.b16 %v419
        %v632 = vunpack.c.h.b16 %v419
        %v633 = vunpack.c.l.b16 %v420
        %v634 = vunpack.c.h.b16 %v420
        %v635 = vpack.c.b16 %v511, %v507
        %v636 = vpack.c.b16 %v512, %v508
        %v637 = vpack.c.b16 %v513, %v509
        %v638 = vpack.c.b16 %v514, %v510
        %v639 = vpack.c.b16 %v519, %v515
        %v640 = vpack.c.b16 %v520, %v516
        %v641 = vpack.c.b16 %v521, %v517
        %v642 = vpack.c.b16 %v522, %v518
        %v643 = vpack.c.b16 %v527, %v523
        %v644 = vpack.c.b16 %v528, %v524
        %v645 = vpack.c.b16 %v529, %v525
        %v646 = vpack.c.b16 %v530, %v526
        %v647 = vpack.c.b16 %v535, %v531
        %v648 = vpack.c.b16 %v536, %v532
        %v649 = vpack.c.b16 %v537, %v533
        %v650 = vpack.c.b16 %v538, %v534
        %v651 = vpack.c.b16 %v543, %v539
        %v652 = vpack.c.b16 %v544, %v540
        %v653 = vpack.c.b16 %v545, %v541
        %v654 = vpack.c.b16 %v546, %v542
        %v655 = vpack.c.b16 %v551, %v547
        %v656 = vpack.c.b16 %v552, %v548
        %v657 = vpack.c.b16 %v553, %v549
        %v658 = vpack.c.b16 %v554, %v550
        %v659 = vpack.c.b16 %v559, %v555
        %v660 = vpack.c.b16 %v560, %v556
        %v661 = vpack.c.b16 %v561, %v557
        %v662 = vpack.c.b16 %v562, %v558
        %v663 = vpack.c.b16 %v567, %v563
        %v664 = vpack.c.b16 %v568, %v564
        %v665 = vpack.c.b16 %v569, %v565
        %v666 = vpack.c.b16 %v570, %v566
        %v667 = vpack.c.b16 %v575, %v571
        %v668 = vpack.c.b16 %v576, %v572
        %v669 = vpack.c.b16 %v577, %v573
        %v670 = vpack.c.b16 %v578, %v574
        %v671 = vpack.c.b16 %v583, %v579
        %v672 = vpack.c.b16 %v584, %v580
        %v673 = vpack.c.b16 %v585, %v581
        %v674 = vpack.c.b16 %v586, %v582
        %v675 = vpack.c.b16 %v591, %v587
        %v676 = vpack.c.b16 %v592, %v588
        %v677 = vpack.c.b16 %v593, %v589
        %v678 = vpack.c.b16 %v594, %v590
        %v679 = vpack.c.b16 %v599, %v595
        %v680 = vpack.c.b16 %v600, %v596
        %v681 = vpack.c.b16 %v601, %v597
        %v682 = vpack.c.b16 %v602, %v598
        %v683 = vpack.c.b16 %v607, %v603
        %v684 = vpack.c.b16 %v608, %v604
        %v685 = vpack.c.b16 %v609, %v605
        %v686 = vpack.c.b16 %v610, %v606
        %v687 = vpack.c.b16 %v615, %v611
        %v688 = vpack.c.b16 %v616, %v612
        %v689 = vpack.c.b16 %v617, %v613
        %v690 = vpack.c.b16 %v618, %v614
        %v691 = vpack.c.b16 %v623, %v619
        %v692 = vpack.c.b16 %v624, %v620
        %v693 = vpack.c.b16 %v625, %v621
        %v694 = vpack.c.b16 %v626, %v622
        %v695 = vpack.c.b16 %v631, %v627
        %v696 = vpack.c.b16 %v632, %v628
        %v697 = vpack.c.b16 %v633, %v629
        %v698 = vpack.c.b16 %v634, %v630
        %763 = vmatprep.subr.bf16.mxu0 %v636
        %764 = vmatpush1.bf16.msra.mxu0 %v635
        %765 = vmatprep.subr.bf16.mxu0 %v640
        %766 = vmatpush1.bf16.msra.mxu0 %v639
        %767 = vmatprep.subr.bf16.mxu0 %v644
        %768 = vmatpush1.bf16.msra.mxu0 %v643
        %769 = vmatprep.subr.bf16.mxu0 %v648
        %770 = vmatpush1.bf16.msra.mxu0 %v647
        %771 = vmatprep.subr.bf16.mxu0 %v652
        %772 = vmatpush1.bf16.msra.mxu0 %v651
        %773 = vmatprep.subr.bf16.mxu0 %v656
        %774 = vmatpush1.bf16.msra.mxu0 %v655
        %775 = vmatprep.subr.bf16.mxu0 %v660
        %776 = vmatpush1.bf16.msra.mxu0 %v659
        %777 = vmatprep.subr.bf16.mxu0 %v664
        %778 = vmatpush1.bf16.msra.mxu0 %v663
        %779 = vmatprep.subr.bf16.mxu0 %v668
        %780 = vmatpush1.bf16.msra.mxu0 %v667
        %781 = vmatprep.subr.bf16.mxu0 %v672
        %782 = vmatpush1.bf16.msra.mxu0 %v671
        %783 = vmatprep.subr.bf16.mxu0 %v676
        %784 = vmatpush1.bf16.msra.mxu0 %v675
        %785 = vmatprep.subr.bf16.mxu0 %v680
        %786 = vmatpush1.bf16.msra.mxu0 %v679
        %787 = vmatprep.subr.bf16.mxu0 %v684
        %788 = vmatpush1.bf16.msra.mxu0 %v683
        %789 = vmatprep.subr.bf16.mxu0 %v688
        %790 = vmatpush1.bf16.msra.mxu0 %v687
        %791 = vmatprep.subr.bf16.mxu0 %v692
        %792 = vmatpush1.bf16.msra.mxu0 %v691
        %793 = vmatprep.subr.bf16.mxu0 %v696
        %794 = vmatpush1.bf16.msra.mxu0 %v695
        %795 = vmatprep.mubr.bf16.mxu0 %v356
        %796 = vmatmul.mubr.bf16.gmra.mrb[0].mxu0 %v355
        %v797 = vpop.f32.mrb[0].mxu0
        %v798 = vadd.f32 %v426, %v797
        %v799 = vpop.f32.mrb[0].mxu0
        %v800 = vadd.f32 %v430, %v799
        %v801 = vpop.f32.mrb[0].mxu0
        %v802 = vpop.f32.mrb[0].mxu0
        %803 = vdwg.mxu0
        %804 = vmatprep.subr.bf16.mxu0 %v638
        %805 = vmatpush1.bf16.msra.mxu0 %v637
        %806 = vmatprep.subr.bf16.mxu0 %v642
        %807 = vmatpush1.bf16.msra.mxu0 %v641
        %808 = vmatprep.subr.bf16.mxu0 %v646
        %809 = vmatpush1.bf16.msra.mxu0 %v645
        %810 = vmatprep.subr.bf16.mxu0 %v650
        %811 = vmatpush1.bf16.msra.mxu0 %v649
        %812 = vmatprep.subr.bf16.mxu0 %v654
        %813 = vmatpush1.bf16.msra.mxu0 %v653
        %814 = vmatprep.subr.bf16.mxu0 %v658
        %815 = vmatpush1.bf16.msra.mxu0 %v657
        %816 = vmatprep.subr.bf16.mxu0 %v662
        %817 = vmatpush1.bf16.msra.mxu0 %v661
        %818 = vmatprep.subr.bf16.mxu0 %v666
        %819 = vmatpush1.bf16.msra.mxu0 %v665
        %820 = vmatprep.subr.bf16.mxu0 %v670
        %821 = vmatpush1.bf16.msra.mxu0 %v669
        %822 = vmatprep.subr.bf16.mxu0 %v674
        %823 = vmatpush1.bf16.msra.mxu0 %v673
        %824 = vmatprep.subr.bf16.mxu0 %v678
        %825 = vmatpush1.bf16.msra.mxu0 %v677
        %826 = vmatprep.subr.bf16.mxu0 %v682
        %827 = vmatpush1.bf16.msra.mxu0 %v681
        %828 = vmatprep.subr.bf16.mxu0 %v686
        %829 = vmatpush1.bf16.msra.mxu0 %v685
        %830 = vmatprep.subr.bf16.mxu0 %v690
        %831 = vmatpush1.bf16.msra.mxu0 %v689
        %832 = vmatprep.subr.bf16.mxu0 %v694
        %833 = vmatpush1.bf16.msra.mxu0 %v693
        %834 = vmatprep.subr.bf16.mxu0 %v698
        %835 = vmatpush1.bf16.msra.mxu0 %v697
        %836 = vmatprep.mubr.bf16.mxu0 %v356
        %837 = vmatmul.mubr.bf16.gmra.mrb[0].mxu0 %v355
        %v838 = vpop.f32.mrb[0].mxu0
        %v839 = vadd.f32 %v434, %v838
        %v840 = vpop.f32.mrb[0].mxu0
        %v841 = vadd.f32 %v438, %v840
        %v842 = vpop.f32.mrb[0].mxu0
        %v843 = vpop.f32.mrb[0].mxu0
        %844 = vdwg.mxu0
        %v845 = vxor.u32 %v798, 2147483648
        %v846 = vmul.f32 %v845, 1.442695
        %v847 = vpow.pop %v846
        %v848 = vadd.f32 %v847, 1.0
        %v849 = vrcp.pop %v848
        %v850 = vmul.f32 1.0, %v849
        %v851 = vxor.u32 %v800, 2147483648
        %v852 = vmul.f32 %v851, 1.442695
        %v853 = vpow.pop %v852
        %v854 = vadd.f32 %v853, 1.0
        %v855 = vrcp.pop %v854
        %v856 = vmul.f32 1.0, %v855
        %v857 = vtanh.pop %v839
        %v858 = vxor.u32 %v841, 2147483648
        %v859 = vmul.f32 %v858, 1.442695
        %v860 = vpow.pop %v859
        %v861 = vadd.f32 %v860, 1.0
        %v862 = vrcp.pop %v861
        %v863 = vmul.f32 1.0, %v862
        %v864 = vmul.f32 %v856, %v354
        %v865 = vmul.f32 %v850, %v857
        %v866 = vadd.f32 %v864, %v865
        %v867 = vtanh.pop %v866
        %v868 = vmul.f32 %v863, %v867
        %869 = vst [vmem:[#allocation2] sm:$0xff] %v868
        %870 = vst [vmem:[#allocation3] sm:$0xff] %v866
        %s871 = scalar_lea.vmem [#allocation2], 8
        %v872 = vld [vmem:[%s871] sm:$0xff]
        %s873 = scalar_lea.vmem [#allocation3], 8
        %v874 = vld [vmem:[%s873] sm:$0xff]
        %v875 = vpack.c.bf16 %v868, %v868
        %v876 = vpack.c.bf16 %v872, %v872
        %v877 = vld [vmem:[%s5] sm:$0xff]
        %v878 = vld [vmem:[%s5 + $0x8] sm:$0xff]
        %v879 = vld [vmem:[%s5 + $0x10] sm:$0xff]
        %v880 = vld [vmem:[%s5 + $0x18] sm:$0xff]
        %v881 = vld [vmem:[%s5 + $0x20] sm:$0xff]
        %v882 = vld [vmem:[%s5 + $0x28] sm:$0xff]
        %v883 = vld [vmem:[%s5 + $0x30] sm:$0xff]
        %v884 = vld [vmem:[%s5 + $0x38] sm:$0xff]
        %v885 = vld [vmem:[%s5 + $0x40] sm:$0xff]
        %v886 = vld [vmem:[%s5 + $0x48] sm:$0xff]
        %v887 = vld [vmem:[%s5 + $0x50] sm:$0xff]
        %v888 = vld [vmem:[%s5 + $0x58] sm:$0xff]
        %v889 = vld [vmem:[%s5 + $0x60] sm:$0xff]
        %v890 = vld [vmem:[%s5 + $0x68] sm:$0xff]
        %v891 = vld [vmem:[%s5 + $0x70] sm:$0xff]
        %v892 = vld [vmem:[%s5 + $0x78] sm:$0xff]
        %v893 = vld [vmem:[%s5 + $0x80] sm:$0xff]
        %v894 = vld [vmem:[%s5 + $0x88] sm:$0xff]
        %v895 = vld [vmem:[%s5 + $0x90] sm:$0xff]
        %v896 = vld [vmem:[%s5 + $0x98] sm:$0xff]
        %v897 = vld [vmem:[%s5 + $0xa0] sm:$0xff]
        %v898 = vld [vmem:[%s5 + $0xa8] sm:$0xff]
        %v899 = vld [vmem:[%s5 + $0xb0] sm:$0xff]
        %v900 = vld [vmem:[%s5 + $0xb8] sm:$0xff]
        %v901 = vld [vmem:[%s5 + $0xc0] sm:$0xff]
        %v902 = vld [vmem:[%s5 + $0xc8] sm:$0xff]
        %v903 = vld [vmem:[%s5 + $0xd0] sm:$0xff]
        %v904 = vld [vmem:[%s5 + $0xd8] sm:$0xff]
        %v905 = vld [vmem:[%s5 + $0xe0] sm:$0xff]
        %v906 = vld [vmem:[%s5 + $0xe8] sm:$0xff]
        %v907 = vld [vmem:[%s5 + $0xf0] sm:$0xff]
        %v908 = vld [vmem:[%s5 + $0xf8] sm:$0xff]
        %v909 = vld [vmem:[%s5 + $0x100] sm:$0xff]
        %v910 = vld [vmem:[%s5 + $0x108] sm:$0xff]
        %v911 = vld [vmem:[%s5 + $0x110] sm:$0xff]
        %v912 = vld [vmem:[%s5 + $0x118] sm:$0xff]
        %v913 = vld [vmem:[%s5 + $0x120] sm:$0xff]
        %v914 = vld [vmem:[%s5 + $0x128] sm:$0xff]
        %v915 = vld [vmem:[%s5 + $0x130] sm:$0xff]
        %v916 = vld [vmem:[%s5 + $0x138] sm:$0xff]
        %v917 = vld [vmem:[%s5 + $0x140] sm:$0xff]
        %v918 = vld [vmem:[%s5 + $0x148] sm:$0xff]
        %v919 = vld [vmem:[%s5 + $0x150] sm:$0xff]
        %v920 = vld [vmem:[%s5 + $0x158] sm:$0xff]
        %v921 = vld [vmem:[%s5 + $0x160] sm:$0xff]
        %v922 = vld [vmem:[%s5 + $0x168] sm:$0xff]
        %v923 = vld [vmem:[%s5 + $0x170] sm:$0xff]
        %v924 = vld [vmem:[%s5 + $0x178] sm:$0xff]
        %v925 = vld [vmem:[%s5 + $0x180] sm:$0xff]
        %v926 = vld [vmem:[%s5 + $0x188] sm:$0xff]
        %v927 = vld [vmem:[%s5 + $0x190] sm:$0xff]
        %v928 = vld [vmem:[%s5 + $0x198] sm:$0xff]
        %v929 = vld [vmem:[%s5 + $0x1a0] sm:$0xff]
        %v930 = vld [vmem:[%s5 + $0x1a8] sm:$0xff]
        %v931 = vld [vmem:[%s5 + $0x1b0] sm:$0xff]
        %v932 = vld [vmem:[%s5 + $0x1b8] sm:$0xff]
        %v933 = vld [vmem:[%s5 + $0x1c0] sm:$0xff]
        %v934 = vld [vmem:[%s5 + $0x1c8] sm:$0xff]
        %v935 = vld [vmem:[%s5 + $0x1d0] sm:$0xff]
        %v936 = vld [vmem:[%s5 + $0x1d8] sm:$0xff]
        %v937 = vld [vmem:[%s5 + $0x1e0] sm:$0xff]
        %v938 = vld [vmem:[%s5 + $0x1e8] sm:$0xff]
        %v939 = vld [vmem:[%s5 + $0x1f0] sm:$0xff]
        %v940 = vld [vmem:[%s5 + $0x1f8] sm:$0xff]
        %v941 = vld [vmem:[%s6] sm:$0xf]
        %v943 = vlaneseq
        %v944 = vshrl.u32 %v943, 7
        %v945 = vsub.s32 0, %v944
        %v946 = vrot.slane %v941, %v945
        %v947 = vlaneseq
        %v948 = vshrl.u32 %v947, 7
        %v949 = vsub.s32 1, %v948
        %v950 = vrot.slane %v941, %v949
        %v951 = vlaneseq
        %v952 = vshrl.u32 %v951, 7
        %v953 = vsub.s32 2, %v952
        %v954 = vrot.slane %v941, %v953
        %v955 = vlaneseq
        %v956 = vshrl.u32 %v955, 7
        %v957 = vsub.s32 3, %v956
        %v958 = vrot.slane %v941, %v957
        %v1027 = vunpack.c.l.b16 %v877
        %v1028 = vunpack.c.h.b16 %v877
        %v1029 = vunpack.c.l.b16 %v878
        %v1030 = vunpack.c.h.b16 %v878
        %v1031 = vunpack.c.l.b16 %v879
        %v1032 = vunpack.c.h.b16 %v879
        %v1033 = vunpack.c.l.b16 %v880
        %v1034 = vunpack.c.h.b16 %v880
        %v1035 = vunpack.c.l.b16 %v881
        %v1036 = vunpack.c.h.b16 %v881
        %v1037 = vunpack.c.l.b16 %v882
        %v1038 = vunpack.c.h.b16 %v882
        %v1039 = vunpack.c.l.b16 %v883
        %v1040 = vunpack.c.h.b16 %v883
        %v1041 = vunpack.c.l.b16 %v884
        %v1042 = vunpack.c.h.b16 %v884
        %v1043 = vunpack.c.l.b16 %v885
        %v1044 = vunpack.c.h.b16 %v885
        %v1045 = vunpack.c.l.b16 %v886
        %v1046 = vunpack.c.h.b16 %v886
        %v1047 = vunpack.c.l.b16 %v887
        %v1048 = vunpack.c.h.b16 %v887
        %v1049 = vunpack.c.l.b16 %v888
        %v1050 = vunpack.c.h.b16 %v888
        %v1051 = vunpack.c.l.b16 %v889
        %v1052 = vunpack.c.h.b16 %v889
        %v1053 = vunpack.c.l.b16 %v890
        %v1054 = vunpack.c.h.b16 %v890
        %v1055 = vunpack.c.l.b16 %v891
        %v1056 = vunpack.c.h.b16 %v891
        %v1057 = vunpack.c.l.b16 %v892
        %v1058 = vunpack.c.h.b16 %v892
        %v1059 = vunpack.c.l.b16 %v893
        %v1060 = vunpack.c.h.b16 %v893
        %v1061 = vunpack.c.l.b16 %v894
        %v1062 = vunpack.c.h.b16 %v894
        %v1063 = vunpack.c.l.b16 %v895
        %v1064 = vunpack.c.h.b16 %v895
        %v1065 = vunpack.c.l.b16 %v896
        %v1066 = vunpack.c.h.b16 %v896
        %v1067 = vunpack.c.l.b16 %v897
        %v1068 = vunpack.c.h.b16 %v897
        %v1069 = vunpack.c.l.b16 %v898
        %v1070 = vunpack.c.h.b16 %v898
        %v1071 = vunpack.c.l.b16 %v899
        %v1072 = vunpack.c.h.b16 %v899
        %v1073 = vunpack.c.l.b16 %v900
        %v1074 = vunpack.c.h.b16 %v900
        %v1075 = vunpack.c.l.b16 %v901
        %v1076 = vunpack.c.h.b16 %v901
        %v1077 = vunpack.c.l.b16 %v902
        %v1078 = vunpack.c.h.b16 %v902
        %v1079 = vunpack.c.l.b16 %v903
        %v1080 = vunpack.c.h.b16 %v903
        %v1081 = vunpack.c.l.b16 %v904
        %v1082 = vunpack.c.h.b16 %v904
        %v1083 = vunpack.c.l.b16 %v905
        %v1084 = vunpack.c.h.b16 %v905
        %v1085 = vunpack.c.l.b16 %v906
        %v1086 = vunpack.c.h.b16 %v906
        %v1087 = vunpack.c.l.b16 %v907
        %v1088 = vunpack.c.h.b16 %v907
        %v1089 = vunpack.c.l.b16 %v908
        %v1090 = vunpack.c.h.b16 %v908
        %v1091 = vunpack.c.l.b16 %v909
        %v1092 = vunpack.c.h.b16 %v909
        %v1093 = vunpack.c.l.b16 %v910
        %v1094 = vunpack.c.h.b16 %v910
        %v1095 = vunpack.c.l.b16 %v911
        %v1096 = vunpack.c.h.b16 %v911
        %v1097 = vunpack.c.l.b16 %v912
        %v1098 = vunpack.c.h.b16 %v912
        %v1099 = vunpack.c.l.b16 %v913
        %v1100 = vunpack.c.h.b16 %v913
        %v1101 = vunpack.c.l.b16 %v914
        %v1102 = vunpack.c.h.b16 %v914
        %v1103 = vunpack.c.l.b16 %v915
        %v1104 = vunpack.c.h.b16 %v915
        %v1105 = vunpack.c.l.b16 %v916
        %v1106 = vunpack.c.h.b16 %v916
        %v1107 = vunpack.c.l.b16 %v917
        %v1108 = vunpack.c.h.b16 %v917
        %v1109 = vunpack.c.l.b16 %v918
        %v1110 = vunpack.c.h.b16 %v918
        %v1111 = vunpack.c.l.b16 %v919
        %v1112 = vunpack.c.h.b16 %v919
        %v1113 = vunpack.c.l.b16 %v920
        %v1114 = vunpack.c.h.b16 %v920
        %v1115 = vunpack.c.l.b16 %v921
        %v1116 = vunpack.c.h.b16 %v921
        %v1117 = vunpack.c.l.b16 %v922
        %v1118 = vunpack.c.h.b16 %v922
        %v1119 = vunpack.c.l.b16 %v923
        %v1120 = vunpack.c.h.b16 %v923
        %v1121 = vunpack.c.l.b16 %v924
        %v1122 = vunpack.c.h.b16 %v924
        %v1123 = vunpack.c.l.b16 %v925
        %v1124 = vunpack.c.h.b16 %v925
        %v1125 = vunpack.c.l.b16 %v926
        %v1126 = vunpack.c.h.b16 %v926
        %v1127 = vunpack.c.l.b16 %v927
        %v1128 = vunpack.c.h.b16 %v927
        %v1129 = vunpack.c.l.b16 %v928
        %v1130 = vunpack.c.h.b16 %v928
        %v1131 = vunpack.c.l.b16 %v929
        %v1132 = vunpack.c.h.b16 %v929
        %v1133 = vunpack.c.l.b16 %v930
        %v1134 = vunpack.c.h.b16 %v930
        %v1135 = vunpack.c.l.b16 %v931
        %v1136 = vunpack.c.h.b16 %v931
        %v1137 = vunpack.c.l.b16 %v932
        %v1138 = vunpack.c.h.b16 %v932
        %v1139 = vunpack.c.l.b16 %v933
        %v1140 = vunpack.c.h.b16 %v933
        %v1141 = vunpack.c.l.b16 %v934
        %v1142 = vunpack.c.h.b16 %v934
        %v1143 = vunpack.c.l.b16 %v935
        %v1144 = vunpack.c.h.b16 %v935
        %v1145 = vunpack.c.l.b16 %v936
        %v1146 = vunpack.c.h.b16 %v936
        %v1147 = vunpack.c.l.b16 %v937
        %v1148 = vunpack.c.h.b16 %v937
        %v1149 = vunpack.c.l.b16 %v938
        %v1150 = vunpack.c.h.b16 %v938
        %v1151 = vunpack.c.l.b16 %v939
        %v1152 = vunpack.c.h.b16 %v939
        %v1153 = vunpack.c.l.b16 %v940
        %v1154 = vunpack.c.h.b16 %v940
        %v1155 = vpack.c.b16 %v1031, %v1027
        %v1156 = vpack.c.b16 %v1032, %v1028
        %v1157 = vpack.c.b16 %v1033, %v1029
        %v1158 = vpack.c.b16 %v1034, %v1030
        %v1159 = vpack.c.b16 %v1039, %v1035
        %v1160 = vpack.c.b16 %v1040, %v1036
        %v1161 = vpack.c.b16 %v1041, %v1037
        %v1162 = vpack.c.b16 %v1042, %v1038
        %v1163 = vpack.c.b16 %v1047, %v1043
        %v1164 = vpack.c.b16 %v1048, %v1044
        %v1165 = vpack.c.b16 %v1049, %v1045
        %v1166 = vpack.c.b16 %v1050, %v1046
        %v1167 = vpack.c.b16 %v1055, %v1051
        %v1168 = vpack.c.b16 %v1056, %v1052
        %v1169 = vpack.c.b16 %v1057, %v1053
        %v1170 = vpack.c.b16 %v1058, %v1054
        %v1171 = vpack.c.b16 %v1063, %v1059
        %v1172 = vpack.c.b16 %v1064, %v1060
        %v1173 = vpack.c.b16 %v1065, %v1061
        %v1174 = vpack.c.b16 %v1066, %v1062
        %v1175 = vpack.c.b16 %v1071, %v1067
        %v1176 = vpack.c.b16 %v1072, %v1068
        %v1177 = vpack.c.b16 %v1073, %v1069
        %v1178 = vpack.c.b16 %v1074, %v1070
        %v1179 = vpack.c.b16 %v1079, %v1075
        %v1180 = vpack.c.b16 %v1080, %v1076
        %v1181 = vpack.c.b16 %v1081, %v1077
        %v1182 = vpack.c.b16 %v1082, %v1078
        %v1183 = vpack.c.b16 %v1087, %v1083
        %v1184 = vpack.c.b16 %v1088, %v1084
        %v1185 = vpack.c.b16 %v1089, %v1085
        %v1186 = vpack.c.b16 %v1090, %v1086
        %v1187 = vpack.c.b16 %v1095, %v1091
        %v1188 = vpack.c.b16 %v1096, %v1092
        %v1189 = vpack.c.b16 %v1097, %v1093
        %v1190 = vpack.c.b16 %v1098, %v1094
        %v1191 = vpack.c.b16 %v1103, %v1099
        %v1192 = vpack.c.b16 %v1104, %v1100
        %v1193 = vpack.c.b16 %v1105, %v1101
        %v1194 = vpack.c.b16 %v1106, %v1102
        %v1195 = vpack.c.b16 %v1111, %v1107
        %v1196 = vpack.c.b16 %v1112, %v1108
        %v1197 = vpack.c.b16 %v1113, %v1109
        %v1198 = vpack.c.b16 %v1114, %v1110
        %v1199 = vpack.c.b16 %v1119, %v1115
        %v1200 = vpack.c.b16 %v1120, %v1116
        %v1201 = vpack.c.b16 %v1121, %v1117
        %v1202 = vpack.c.b16 %v1122, %v1118
        %v1203 = vpack.c.b16 %v1127, %v1123
        %v1204 = vpack.c.b16 %v1128, %v1124
        %v1205 = vpack.c.b16 %v1129, %v1125
        %v1206 = vpack.c.b16 %v1130, %v1126
        %v1207 = vpack.c.b16 %v1135, %v1131
        %v1208 = vpack.c.b16 %v1136, %v1132
        %v1209 = vpack.c.b16 %v1137, %v1133
        %v1210 = vpack.c.b16 %v1138, %v1134
        %v1211 = vpack.c.b16 %v1143, %v1139
        %v1212 = vpack.c.b16 %v1144, %v1140
        %v1213 = vpack.c.b16 %v1145, %v1141
        %v1214 = vpack.c.b16 %v1146, %v1142
        %v1215 = vpack.c.b16 %v1151, %v1147
        %v1216 = vpack.c.b16 %v1152, %v1148
        %v1217 = vpack.c.b16 %v1153, %v1149
        %v1218 = vpack.c.b16 %v1154, %v1150
        %1283 = vmatprep.subr.bf16.mxu0 %v1156
        %1284 = vmatpush1.bf16.msra.mxu0 %v1155
        %1285 = vmatprep.subr.bf16.mxu0 %v1160
        %1286 = vmatpush1.bf16.msra.mxu0 %v1159
        %1287 = vmatprep.subr.bf16.mxu0 %v1164
        %1288 = vmatpush1.bf16.msra.mxu0 %v1163
        %1289 = vmatprep.subr.bf16.mxu0 %v1168
        %1290 = vmatpush1.bf16.msra.mxu0 %v1167
        %1291 = vmatprep.subr.bf16.mxu0 %v1172
        %1292 = vmatpush1.bf16.msra.mxu0 %v1171
        %1293 = vmatprep.subr.bf16.mxu0 %v1176
        %1294 = vmatpush1.bf16.msra.mxu0 %v1175
        %1295 = vmatprep.subr.bf16.mxu0 %v1180
        %1296 = vmatpush1.bf16.msra.mxu0 %v1179
        %1297 = vmatprep.subr.bf16.mxu0 %v1184
        %1298 = vmatpush1.bf16.msra.mxu0 %v1183
        %1299 = vmatprep.subr.bf16.mxu0 %v1188
        %1300 = vmatpush1.bf16.msra.mxu0 %v1187
        %1301 = vmatprep.subr.bf16.mxu0 %v1192
        %1302 = vmatpush1.bf16.msra.mxu0 %v1191
        %1303 = vmatprep.subr.bf16.mxu0 %v1196
        %1304 = vmatpush1.bf16.msra.mxu0 %v1195
        %1305 = vmatprep.subr.bf16.mxu0 %v1200
        %1306 = vmatpush1.bf16.msra.mxu0 %v1199
        %1307 = vmatprep.subr.bf16.mxu0 %v1204
        %1308 = vmatpush1.bf16.msra.mxu0 %v1203
        %1309 = vmatprep.subr.bf16.mxu0 %v1208
        %1310 = vmatpush1.bf16.msra.mxu0 %v1207
        %1311 = vmatprep.subr.bf16.mxu0 %v1212
        %1312 = vmatpush1.bf16.msra.mxu0 %v1211
        %1313 = vmatprep.subr.bf16.mxu0 %v1216
        %1314 = vmatpush1.bf16.msra.mxu0 %v1215
        %1315 = vmatprep.mubr.bf16.mxu0 %v876
        %1316 = vmatmul.mubr.bf16.gmra.mrb[0].mxu0 %v875
        %v1317 = vpop.f32.mrb[0].mxu0
        %v1318 = vadd.f32 %v946, %v1317
        %v1319 = vpop.f32.mrb[0].mxu0
        %v1320 = vadd.f32 %v950, %v1319
        %v1321 = vpop.f32.mrb[0].mxu0
        %v1322 = vpop.f32.mrb[0].mxu0
        %1323 = vdwg.mxu0
        %1324 = vmatprep.subr.bf16.mxu0 %v1158
        %1325 = vmatpush1.bf16.msra.mxu0 %v1157
        %1326 = vmatprep.subr.bf16.mxu0 %v1162
        %1327 = vmatpush1.bf16.msra.mxu0 %v1161
        %1328 = vmatprep.subr.bf16.mxu0 %v1166
        %1329 = vmatpush1.bf16.msra.mxu0 %v1165
        %1330 = vmatprep.subr.bf16.mxu0 %v1170
        %1331 = vmatpush1.bf16.msra.mxu0 %v1169
        %1332 = vmatprep.subr.bf16.mxu0 %v1174
        %1333 = vmatpush1.bf16.msra.mxu0 %v1173
        %1334 = vmatprep.subr.bf16.mxu0 %v1178
        %1335 = vmatpush1.bf16.msra.mxu0 %v1177
        %1336 = vmatprep.subr.bf16.mxu0 %v1182
        %1337 = vmatpush1.bf16.msra.mxu0 %v1181
        %1338 = vmatprep.subr.bf16.mxu0 %v1186
        %1339 = vmatpush1.bf16.msra.mxu0 %v1185
        %1340 = vmatprep.subr.bf16.mxu0 %v1190
        %1341 = vmatpush1.bf16.msra.mxu0 %v1189
        %1342 = vmatprep.subr.bf16.mxu0 %v1194
        %1343 = vmatpush1.bf16.msra.mxu0 %v1193
        %1344 = vmatprep.subr.bf16.mxu0 %v1198
        %1345 = vmatpush1.bf16.msra.mxu0 %v1197
        %1346 = vmatprep.subr.bf16.mxu0 %v1202
        %1347 = vmatpush1.bf16.msra.mxu0 %v1201
        %1348 = vmatprep.subr.bf16.mxu0 %v1206
        %1349 = vmatpush1.bf16.msra.mxu0 %v1205
        %1350 = vmatprep.subr.bf16.mxu0 %v1210
        %1351 = vmatpush1.bf16.msra.mxu0 %v1209
        %1352 = vmatprep.subr.bf16.mxu0 %v1214
        %1353 = vmatpush1.bf16.msra.mxu0 %v1213
        %1354 = vmatprep.subr.bf16.mxu0 %v1218
        %1355 = vmatpush1.bf16.msra.mxu0 %v1217
        %1356 = vmatprep.mubr.bf16.mxu0 %v876
        %1357 = vmatmul.mubr.bf16.gmra.mrb[0].mxu0 %v875
        %v1358 = vpop.f32.mrb[0].mxu0
        %v1359 = vadd.f32 %v954, %v1358
        %v1360 = vpop.f32.mrb[0].mxu0
        %v1361 = vadd.f32 %v958, %v1360
        %v1362 = vpop.f32.mrb[0].mxu0
        %v1363 = vpop.f32.mrb[0].mxu0
        %1364 = vdwg.mxu0
        %v1365 = vxor.u32 %v1318, 2147483648
        %v1366 = vmul.f32 %v1365, 1.442695
        %v1367 = vpow.pop %v1366
        %v1368 = vadd.f32 %v1367, 1.0
        %v1369 = vrcp.pop %v1368
        %v1370 = vmul.f32 1.0, %v1369
        %v1371 = vxor.u32 %v1320, 2147483648
        %v1372 = vmul.f32 %v1371, 1.442695
        %v1373 = vpow.pop %v1372
        %v1374 = vadd.f32 %v1373, 1.0
        %v1375 = vrcp.pop %v1374
        %v1376 = vmul.f32 1.0, %v1375
        %v1377 = vtanh.pop %v1359
        %v1378 = vxor.u32 %v1361, 2147483648
        %v1379 = vmul.f32 %v1378, 1.442695
        %v1380 = vpow.pop %v1379
        %v1381 = vadd.f32 %v1380, 1.0
        %v1382 = vrcp.pop %v1381
        %v1383 = vmul.f32 1.0, %v1382
        %v1384 = vmul.f32 %v1376, %v874
        %v1385 = vmul.f32 %v1370, %v1377
        %v1386 = vadd.f32 %v1384, %v1385
        %v1387 = vtanh.pop %v1386
        %v1388 = vmul.f32 %v1383, %v1387
        %1389 = vst [vmem:[%s871] sm:$0xff] %v1388
        %1390 = vst [vmem:[%s873] sm:$0xff] %v1386
      $region60: #{_lambda_.3} parent=55 // pred_fallthru
        _
      %s1391 = smul.u32 %s27, 4
      %s1392 = sadd.s32 %s1391, 4294967295
      %p1393 = scmp.gt.s32.totalorder %s1392, 0
      %s1394 = scalar_select %p1393, %s1392, 0
      %s1395 = sld [smem:[#allocation6 + %s1394]]
      %p1396 = scmp.gt.s32.totalorder %s1395, 0
      %p1397 = scmp.eq.s32.totalorder %s1391, 0
      %p1398 = por %p1397, %p1396
      // Predicated region
      $region61: #{_lambda_.3} parent=55 // pred_check
        %p1399 = pneg %p1398
      $region62: #{_lambda_.3} parent=55 // pred_check_branch
        %1401 = sbr.rel (%p1399) target = $region64
      $region63: #{_lambda_.3} parent=55 // pred_region
        %v1402 = vld [vmem:[%s335] sm:$0xff]
        %1403 = vst [vmem:[#allocation4] sm:$0xff] %v1402
      $region64: #{_lambda_.3} parent=55 // pred_fallthru
        _
      %v1404 = vld [vmem:[#allocation4] sm:$0xff]
      %v1405 = vld [vmem:[#allocation2] sm:$0xff]
      %v1406 = vld [vmem:[#allocation3] sm:$0xff]
      %v1407 = vpack.c.bf16 %v1404, %v1404
      %v1408 = vpack.c.bf16 %v1405, %v1405
      %v1409 = vld [vmem:[%s3] sm:$0xff]
      %v1410 = vld [vmem:[%s3 + $0x8] sm:$0xff]
      %v1411 = vld [vmem:[%s3 + $0x10] sm:$0xff]
      %v1412 = vld [vmem:[%s3 + $0x18] sm:$0xff]
      %v1413 = vld [vmem:[%s3 + $0x20] sm:$0xff]
      %v1414 = vld [vmem:[%s3 + $0x28] sm:$0xff]
      %v1415 = vld [vmem:[%s3 + $0x30] sm:$0xff]
      %v1416 = vld [vmem:[%s3 + $0x38] sm:$0xff]
      %v1417 = vld [vmem:[%s3 + $0x40] sm:$0xff]
      %v1418 = vld [vmem:[%s3 + $0x48] sm:$0xff]
      %v1419 = vld [vmem:[%s3 + $0x50] sm:$0xff]
      %v1420 = vld [vmem:[%s3 + $0x58] sm:$0xff]
      %v1421 = vld [vmem:[%s3 + $0x60] sm:$0xff]
      %v1422 = vld [vmem:[%s3 + $0x68] sm:$0xff]
      %v1423 = vld [vmem:[%s3 + $0x70] sm:$0xff]
      %v1424 = vld [vmem:[%s3 + $0x78] sm:$0xff]
      %v1425 = vld [vmem:[%s3 + $0x80] sm:$0xff]
      %v1426 = vld [vmem:[%s3 + $0x88] sm:$0xff]
      %v1427 = vld [vmem:[%s3 + $0x90] sm:$0xff]
      %v1428 = vld [vmem:[%s3 + $0x98] sm:$0xff]
      %v1429 = vld [vmem:[%s3 + $0xa0] sm:$0xff]
      %v1430 = vld [vmem:[%s3 + $0xa8] sm:$0xff]
      %v1431 = vld [vmem:[%s3 + $0xb0] sm:$0xff]
      %v1432 = vld [vmem:[%s3 + $0xb8] sm:$0xff]
      %v1433 = vld [vmem:[%s3 + $0xc0] sm:$0xff]
      %v1434 = vld [vmem:[%s3 + $0xc8] sm:$0xff]
      %v1435 = vld [vmem:[%s3 + $0xd0] sm:$0xff]
      %v1436 = vld [vmem:[%s3 + $0xd8] sm:$0xff]
      %v1437 = vld [vmem:[%s3 + $0xe0] sm:$0xff]
      %v1438 = vld [vmem:[%s3 + $0xe8] sm:$0xff]
      %v1439 = vld [vmem:[%s3 + $0xf0] sm:$0xff]
      %v1440 = vld [vmem:[%s3 + $0xf8] sm:$0xff]
      %v1441 = vld [vmem:[%s3 + $0x100] sm:$0xff]
      %v1442 = vld [vmem:[%s3 + $0x108] sm:$0xff]
      %v1443 = vld [vmem:[%s3 + $0x110] sm:$0xff]
      %v1444 = vld [vmem:[%s3 + $0x118] sm:$0xff]
      %v1445 = vld [vmem:[%s3 + $0x120] sm:$0xff]
      %v1446 = vld [vmem:[%s3 + $0x128] sm:$0xff]
      %v1447 = vld [vmem:[%s3 + $0x130] sm:$0xff]
      %v1448 = vld [vmem:[%s3 + $0x138] sm:$0xff]
      %v1449 = vld [vmem:[%s3 + $0x140] sm:$0xff]
      %v1450 = vld [vmem:[%s3 + $0x148] sm:$0xff]
      %v1451 = vld [vmem:[%s3 + $0x150] sm:$0xff]
      %v1452 = vld [vmem:[%s3 + $0x158] sm:$0xff]
      %v1453 = vld [vmem:[%s3 + $0x160] sm:$0xff]
      %v1454 = vld [vmem:[%s3 + $0x168] sm:$0xff]
      %v1455 = vld [vmem:[%s3 + $0x170] sm:$0xff]
      %v1456 = vld [vmem:[%s3 + $0x178] sm:$0xff]
      %v1457 = vld [vmem:[%s3 + $0x180] sm:$0xff]
      %v1458 = vld [vmem:[%s3 + $0x188] sm:$0xff]
      %v1459 = vld [vmem:[%s3 + $0x190] sm:$0xff]
      %v1460 = vld [vmem:[%s3 + $0x198] sm:$0xff]
      %v1461 = vld [vmem:[%s3 + $0x1a0] sm:$0xff]
      %v1462 = vld [vmem:[%s3 + $0x1a8] sm:$0xff]
      %v1463 = vld [vmem:[%s3 + $0x1b0] sm:$0xff]
      %v1464 = vld [vmem:[%s3 + $0x1b8] sm:$0xff]
      %v1465 = vld [vmem:[%s3 + $0x1c0] sm:$0xff]
      %v1466 = vld [vmem:[%s3 + $0x1c8] sm:$0xff]
      %v1467 = vld [vmem:[%s3 + $0x1d0] sm:$0xff]
      %v1468 = vld [vmem:[%s3 + $0x1d8] sm:$0xff]
      %v1469 = vld [vmem:[%s3 + $0x1e0] sm:$0xff]
      %v1470 = vld [vmem:[%s3 + $0x1e8] sm:$0xff]
      %v1471 = vld [vmem:[%s3 + $0x1f0] sm:$0xff]
      %v1472 = vld [vmem:[%s3 + $0x1f8] sm:$0xff]
      %v1473 = vld [vmem:[%s4] sm:$0xf]
      %v1475 = vlaneseq
      %v1476 = vshrl.u32 %v1475, 7
      %v1477 = vsub.s32 0, %v1476
      %v1478 = vrot.slane %v1473, %v1477
      %v1479 = vlaneseq
      %v1480 = vshrl.u32 %v1479, 7
      %v1481 = vsub.s32 1, %v1480
      %v1482 = vrot.slane %v1473, %v1481
      %v1483 = vlaneseq
      %v1484 = vshrl.u32 %v1483, 7
      %v1485 = vsub.s32 2, %v1484
      %v1486 = vrot.slane %v1473, %v1485
      %v1487 = vlaneseq
      %v1488 = vshrl.u32 %v1487, 7
      %v1489 = vsub.s32 3, %v1488
      %v1490 = vrot.slane %v1473, %v1489
      %v1559 = vunpack.c.l.b16 %v1409
      %v1560 = vunpack.c.h.b16 %v1409
      %v1561 = vunpack.c.l.b16 %v1410
      %v1562 = vunpack.c.h.b16 %v1410
      %v1563 = vunpack.c.l.b16 %v1411
      %v1564 = vunpack.c.h.b16 %v1411
      %v1565 = vunpack.c.l.b16 %v1412
      %v1566 = vunpack.c.h.b16 %v1412
      %v1567 = vunpack.c.l.b16 %v1413
      %v1568 = vunpack.c.h.b16 %v1413
      %v1569 = vunpack.c.l.b16 %v1414
      %v1570 = vunpack.c.h.b16 %v1414
      %v1571 = vunpack.c.l.b16 %v1415
      %v1572 = vunpack.c.h.b16 %v1415
      %v1573 = vunpack.c.l.b16 %v1416
      %v1574 = vunpack.c.h.b16 %v1416
      %v1575 = vunpack.c.l.b16 %v1417
      %v1576 = vunpack.c.h.b16 %v1417
      %v1577 = vunpack.c.l.b16 %v1418
      %v1578 = vunpack.c.h.b16 %v1418
      %v1579 = vunpack.c.l.b16 %v1419
      %v1580 = vunpack.c.h.b16 %v1419
      %v1581 = vunpack.c.l.b16 %v1420
      %v1582 = vunpack.c.h.b16 %v1420
      %v1583 = vunpack.c.l.b16 %v1421
      %v1584 = vunpack.c.h.b16 %v1421
      %v1585 = vunpack.c.l.b16 %v1422
      %v1586 = vunpack.c.h.b16 %v1422
      %v1587 = vunpack.c.l.b16 %v1423
      %v1588 = vunpack.c.h.b16 %v1423
      %v1589 = vunpack.c.l.b16 %v1424
      %v1590 = vunpack.c.h.b16 %v1424
      %v1591 = vunpack.c.l.b16 %v1425
      %v1592 = vunpack.c.h.b16 %v1425
      %v1593 = vunpack.c.l.b16 %v1426
      %v1594 = vunpack.c.h.b16 %v1426
      %v1595 = vunpack.c.l.b16 %v1427
      %v1596 = vunpack.c.h.b16 %v1427
      %v1597 = vunpack.c.l.b16 %v1428
      %v1598 = vunpack.c.h.b16 %v1428
      %v1599 = vunpack.c.l.b16 %v1429
      %v1600 = vunpack.c.h.b16 %v1429
      %v1601 = vunpack.c.l.b16 %v1430
      %v1602 = vunpack.c.h.b16 %v1430
      %v1603 = vunpack.c.l.b16 %v1431
      %v1604 = vunpack.c.h.b16 %v1431
      %v1605 = vunpack.c.l.b16 %v1432
      %v1606 = vunpack.c.h.b16 %v1432
      %v1607 = vunpack.c.l.b16 %v1433
      %v1608 = vunpack.c.h.b16 %v1433
      %v1609 = vunpack.c.l.b16 %v1434
      %v1610 = vunpack.c.h.b16 %v1434
      %v1611 = vunpack.c.l.b16 %v1435
      %v1612 = vunpack.c.h.b16 %v1435
      %v1613 = vunpack.c.l.b16 %v1436
      %v1614 = vunpack.c.h.b16 %v1436
      %v1615 = vunpack.c.l.b16 %v1437
      %v1616 = vunpack.c.h.b16 %v1437
      %v1617 = vunpack.c.l.b16 %v1438
      %v1618 = vunpack.c.h.b16 %v1438
      %v1619 = vunpack.c.l.b16 %v1439
      %v1620 = vunpack.c.h.b16 %v1439
      %v1621 = vunpack.c.l.b16 %v1440
      %v1622 = vunpack.c.h.b16 %v1440
      %v1623 = vunpack.c.l.b16 %v1441
      %v1624 = vunpack.c.h.b16 %v1441
      %v1625 = vunpack.c.l.b16 %v1442
      %v1626 = vunpack.c.h.b16 %v1442
      %v1627 = vunpack.c.l.b16 %v1443
      %v1628 = vunpack.c.h.b16 %v1443
      %v1629 = vunpack.c.l.b16 %v1444
      %v1630 = vunpack.c.h.b16 %v1444
      %v1631 = vunpack.c.l.b16 %v1445
      %v1632 = vunpack.c.h.b16 %v1445
      %v1633 = vunpack.c.l.b16 %v1446
      %v1634 = vunpack.c.h.b16 %v1446
      %v1635 = vunpack.c.l.b16 %v1447
      %v1636 = vunpack.c.h.b16 %v1447
      %v1637 = vunpack.c.l.b16 %v1448
      %v1638 = vunpack.c.h.b16 %v1448
      %v1639 = vunpack.c.l.b16 %v1449
      %v1640 = vunpack.c.h.b16 %v1449
      %v1641 = vunpack.c.l.b16 %v1450
      %v1642 = vunpack.c.h.b16 %v1450
      %v1643 = vunpack.c.l.b16 %v1451
      %v1644 = vunpack.c.h.b16 %v1451
      %v1645 = vunpack.c.l.b16 %v1452
      %v1646 = vunpack.c.h.b16 %v1452
      %v1647 = vunpack.c.l.b16 %v1453
      %v1648 = vunpack.c.h.b16 %v1453
      %v1649 = vunpack.c.l.b16 %v1454
      %v1650 = vunpack.c.h.b16 %v1454
      %v1651 = vunpack.c.l.b16 %v1455
      %v1652 = vunpack.c.h.b16 %v1455
      %v1653 = vunpack.c.l.b16 %v1456
      %v1654 = vunpack.c.h.b16 %v1456
      %v1655 = vunpack.c.l.b16 %v1457
      %v1656 = vunpack.c.h.b16 %v1457
      %v1657 = vunpack.c.l.b16 %v1458
      %v1658 = vunpack.c.h.b16 %v1458
      %v1659 = vunpack.c.l.b16 %v1459
      %v1660 = vunpack.c.h.b16 %v1459
      %v1661 = vunpack.c.l.b16 %v1460
      %v1662 = vunpack.c.h.b16 %v1460
      %v1663 = vunpack.c.l.b16 %v1461
      %v1664 = vunpack.c.h.b16 %v1461
      %v1665 = vunpack.c.l.b16 %v1462
      %v1666 = vunpack.c.h.b16 %v1462
      %v1667 = vunpack.c.l.b16 %v1463
      %v1668 = vunpack.c.h.b16 %v1463
      %v1669 = vunpack.c.l.b16 %v1464
      %v1670 = vunpack.c.h.b16 %v1464
      %v1671 = vunpack.c.l.b16 %v1465
      %v1672 = vunpack.c.h.b16 %v1465
      %v1673 = vunpack.c.l.b16 %v1466
      %v1674 = vunpack.c.h.b16 %v1466
      %v1675 = vunpack.c.l.b16 %v1467
      %v1676 = vunpack.c.h.b16 %v1467
      %v1677 = vunpack.c.l.b16 %v1468
      %v1678 = vunpack.c.h.b16 %v1468
      %v1679 = vunpack.c.l.b16 %v1469
      %v1680 = vunpack.c.h.b16 %v1469
      %v1681 = vunpack.c.l.b16 %v1470
      %v1682 = vunpack.c.h.b16 %v1470
      %v1683 = vunpack.c.l.b16 %v1471
      %v1684 = vunpack.c.h.b16 %v1471
      %v1685 = vunpack.c.l.b16 %v1472
      %v1686 = vunpack.c.h.b16 %v1472
      %v1687 = vpack.c.b16 %v1563, %v1559
      %v1688 = vpack.c.b16 %v1564, %v1560
      %v1689 = vpack.c.b16 %v1565, %v1561
      %v1690 = vpack.c.b16 %v1566, %v1562
      %v1691 = vpack.c.b16 %v1571, %v1567
      %v1692 = vpack.c.b16 %v1572, %v1568
      %v1693 = vpack.c.b16 %v1573, %v1569
      %v1694 = vpack.c.b16 %v1574, %v1570
      %v1695 = vpack.c.b16 %v1579, %v1575
      %v1696 = vpack.c.b16 %v1580, %v1576
      %v1697 = vpack.c.b16 %v1581, %v1577
      %v1698 = vpack.c.b16 %v1582, %v1578
      %v1699 = vpack.c.b16 %v1587, %v1583
      %v1700 = vpack.c.b16 %v1588, %v1584
      %v1701 = vpack.c.b16 %v1589, %v1585
      %v1702 = vpack.c.b16 %v1590, %v1586
      %v1703 = vpack.c.b16 %v1595, %v1591
      %v1704 = vpack.c.b16 %v1596, %v1592
      %v1705 = vpack.c.b16 %v1597, %v1593
      %v1706 = vpack.c.b16 %v1598, %v1594
      %v1707 = vpack.c.b16 %v1603, %v1599
      %v1708 = vpack.c.b16 %v1604, %v1600
      %v1709 = vpack.c.b16 %v1605, %v1601
      %v1710 = vpack.c.b16 %v1606, %v1602
      %v1711 = vpack.c.b16 %v1611, %v1607
      %v1712 = vpack.c.b16 %v1612, %v1608
      %v1713 = vpack.c.b16 %v1613, %v1609
      %v1714 = vpack.c.b16 %v1614, %v1610
      %v1715 = vpack.c.b16 %v1619, %v1615
      %v1716 = vpack.c.b16 %v1620, %v1616
      %v1717 = vpack.c.b16 %v1621, %v1617
      %v1718 = vpack.c.b16 %v1622, %v1618
      %v1719 = vpack.c.b16 %v1627, %v1623
      %v1720 = vpack.c.b16 %v1628, %v1624
      %v1721 = vpack.c.b16 %v1629, %v1625
      %v1722 = vpack.c.b16 %v1630, %v1626
      %v1723 = vpack.c.b16 %v1635, %v1631
      %v1724 = vpack.c.b16 %v1636, %v1632
      %v1725 = vpack.c.b16 %v1637, %v1633
      %v1726 = vpack.c.b16 %v1638, %v1634
      %v1727 = vpack.c.b16 %v1643, %v1639
      %v1728 = vpack.c.b16 %v1644, %v1640
      %v1729 = vpack.c.b16 %v1645, %v1641
      %v1730 = vpack.c.b16 %v1646, %v1642
      %v1731 = vpack.c.b16 %v1651, %v1647
      %v1732 = vpack.c.b16 %v1652, %v1648
      %v1733 = vpack.c.b16 %v1653, %v1649
      %v1734 = vpack.c.b16 %v1654, %v1650
      %v1735 = vpack.c.b16 %v1659, %v1655
      %v1736 = vpack.c.b16 %v1660, %v1656
      %v1737 = vpack.c.b16 %v1661, %v1657
      %v1738 = vpack.c.b16 %v1662, %v1658
      %v1739 = vpack.c.b16 %v1667, %v1663
      %v1740 = vpack.c.b16 %v1668, %v1664
      %v1741 = vpack.c.b16 %v1669, %v1665
      %v1742 = vpack.c.b16 %v1670, %v1666
      %v1743 = vpack.c.b16 %v1675, %v1671
      %v1744 = vpack.c.b16 %v1676, %v1672
      %v1745 = vpack.c.b16 %v1677, %v1673
      %v1746 = vpack.c.b16 %v1678, %v1674
      %v1747 = vpack.c.b16 %v1683, %v1679
      %v1748 = vpack.c.b16 %v1684, %v1680
      %v1749 = vpack.c.b16 %v1685, %v1681
      %v1750 = vpack.c.b16 %v1686, %v1682
      %1815 = vmatprep.subr.bf16.mxu0 %v1688
      %1816 = vmatpush1.bf16.msra.mxu0 %v1687
      %1817 = vmatprep.subr.bf16.mxu0 %v1692
      %1818 = vmatpush1.bf16.msra.mxu0 %v1691
      %1819 = vmatprep.subr.bf16.mxu0 %v1696
      %1820 = vmatpush1.bf16.msra.mxu0 %v1695
      %1821 = vmatprep.subr.bf16.mxu0 %v1700
      %1822 = vmatpush1.bf16.msra.mxu0 %v1699
      %1823 = vmatprep.subr.bf16.mxu0 %v1704
      %1824 = vmatpush1.bf16.msra.mxu0 %v1703
      %1825 = vmatprep.subr.bf16.mxu0 %v1708
      %1826 = vmatpush1.bf16.msra.mxu0 %v1707
      %1827 = vmatprep.subr.bf16.mxu0 %v1712
      %1828 = vmatpush1.bf16.msra.mxu0 %v1711
      %1829 = vmatprep.subr.bf16.mxu0 %v1716
      %1830 = vmatpush1.bf16.msra.mxu0 %v1715
      %1831 = vmatprep.subr.bf16.mxu0 %v1720
      %1832 = vmatpush1.bf16.msra.mxu0 %v1719
      %1833 = vmatprep.subr.bf16.mxu0 %v1724
      %1834 = vmatpush1.bf16.msra.mxu0 %v1723
      %1835 = vmatprep.subr.bf16.mxu0 %v1728
      %1836 = vmatpush1.bf16.msra.mxu0 %v1727
      %1837 = vmatprep.subr.bf16.mxu0 %v1732
      %1838 = vmatpush1.bf16.msra.mxu0 %v1731
      %1839 = vmatprep.subr.bf16.mxu0 %v1736
      %1840 = vmatpush1.bf16.msra.mxu0 %v1735
      %1841 = vmatprep.subr.bf16.mxu0 %v1740
      %1842 = vmatpush1.bf16.msra.mxu0 %v1739
      %1843 = vmatprep.subr.bf16.mxu0 %v1744
      %1844 = vmatpush1.bf16.msra.mxu0 %v1743
      %1845 = vmatprep.subr.bf16.mxu0 %v1748
      %1846 = vmatpush1.bf16.msra.mxu0 %v1747
      %1847 = vmatprep.mubr.bf16.mxu0 %v1408
      %1848 = vmatmul.mubr.bf16.gmra.mrb[0].mxu0 %v1407
      %v1849 = vpop.f32.mrb[0].mxu0
      %v1850 = vadd.f32 %v1478, %v1849
      %v1851 = vpop.f32.mrb[0].mxu0
      %v1852 = vadd.f32 %v1482, %v1851
      %v1853 = vpop.f32.mrb[0].mxu0
      %v1854 = vpop.f32.mrb[0].mxu0
      %1855 = vdwg.mxu0
      %1856 = vmatprep.subr.bf16.mxu0 %v1690
      %1857 = vmatpush1.bf16.msra.mxu0 %v1689
      %1858 = vmatprep.subr.bf16.mxu0 %v1694
      %1859 = vmatpush1.bf16.msra.mxu0 %v1693
      %1860 = vmatprep.subr.bf16.mxu0 %v1698
      %1861 = vmatpush1.bf16.msra.mxu0 %v1697
      %1862 = vmatprep.subr.bf16.mxu0 %v1702
      %1863 = vmatpush1.bf16.msra.mxu0 %v1701
      %1864 = vmatprep.subr.bf16.mxu0 %v1706
      %1865 = vmatpush1.bf16.msra.mxu0 %v1705
      %1866 = vmatprep.subr.bf16.mxu0 %v1710
      %1867 = vmatpush1.bf16.msra.mxu0 %v1709
      %1868 = vmatprep.subr.bf16.mxu0 %v1714
      %1869 = vmatpush1.bf16.msra.mxu0 %v1713
      %1870 = vmatprep.subr.bf16.mxu0 %v1718
      %1871 = vmatpush1.bf16.msra.mxu0 %v1717
      %1872 = vmatprep.subr.bf16.mxu0 %v1722
      %1873 = vmatpush1.bf16.msra.mxu0 %v1721
      %1874 = vmatprep.subr.bf16.mxu0 %v1726
      %1875 = vmatpush1.bf16.msra.mxu0 %v1725
      %1876 = vmatprep.subr.bf16.mxu0 %v1730
      %1877 = vmatpush1.bf16.msra.mxu0 %v1729
      %1878 = vmatprep.subr.bf16.mxu0 %v1734
      %1879 = vmatpush1.bf16.msra.mxu0 %v1733
      %1880 = vmatprep.subr.bf16.mxu0 %v1738
      %1881 = vmatpush1.bf16.msra.mxu0 %v1737
      %1882 = vmatprep.subr.bf16.mxu0 %v1742
      %1883 = vmatpush1.bf16.msra.mxu0 %v1741
      %1884 = vmatprep.subr.bf16.mxu0 %v1746
      %1885 = vmatpush1.bf16.msra.mxu0 %v1745
      %1886 = vmatprep.subr.bf16.mxu0 %v1750
      %1887 = vmatpush1.bf16.msra.mxu0 %v1749
      %1888 = vmatprep.mubr.bf16.mxu0 %v1408
      %1889 = vmatmul.mubr.bf16.gmra.mrb[0].mxu0 %v1407
      %v1890 = vpop.f32.mrb[0].mxu0
      %v1891 = vadd.f32 %v1486, %v1890
      %v1892 = vpop.f32.mrb[0].mxu0
      %v1893 = vadd.f32 %v1490, %v1892
      %v1894 = vpop.f32.mrb[0].mxu0
      %v1895 = vpop.f32.mrb[0].mxu0
      %1896 = vdwg.mxu0
      %v1897 = vxor.u32 %v1850, 2147483648
      %v1898 = vmul.f32 %v1897, 1.442695
      %v1899 = vpow.pop %v1898
      %v1900 = vadd.f32 %v1899, 1.0
      %v1901 = vrcp.pop %v1900
      %v1902 = vmul.f32 1.0, %v1901
      %v1903 = vxor.u32 %v1852, 2147483648
      %v1904 = vmul.f32 %v1903, 1.442695
      %v1905 = vpow.pop %v1904
      %v1906 = vadd.f32 %v1905, 1.0
      %v1907 = vrcp.pop %v1906
      %v1908 = vmul.f32 1.0, %v1907
      %v1909 = vtanh.pop %v1891
      %v1910 = vxor.u32 %v1893, 2147483648
      %v1911 = vmul.f32 %v1910, 1.442695
      %v1912 = vpow.pop %v1911
      %v1913 = vadd.f32 %v1912, 1.0
      %v1914 = vrcp.pop %v1913
      %v1915 = vmul.f32 1.0, %v1914
      %v1916 = vmul.f32 %v1908, %v1406
      %v1917 = vmul.f32 %v1902, %v1909
      %v1918 = vadd.f32 %v1916, %v1917
      %v1919 = vtanh.pop %v1918
      %v1920 = vmul.f32 %v1915, %v1919
      %1921 = vst [vmem:[#allocation2] sm:$0xff] %v1920
      %1922 = vst [vmem:[#allocation3] sm:$0xff] %v1918
      %s1923 = scalar_lea.vmem [#allocation2], 8
      %v1924 = vld [vmem:[%s1923] sm:$0xff]
      %s1925 = scalar_lea.vmem [#allocation3], 8
      %v1926 = vld [vmem:[%s1925] sm:$0xff]
      %v1927 = vpack.c.bf16 %v1920, %v1920
      %v1928 = vpack.c.bf16 %v1924, %v1924
      %v1929 = vld [vmem:[%s5] sm:$0xff]
      %v1930 = vld [vmem:[%s5 + $0x8] sm:$0xff]
      %v1931 = vld [vmem:[%s5 + $0x10] sm:$0xff]
      %v1932 = vld [vmem:[%s5 + $0x18] sm:$0xff]
      %v1933 = vld [vmem:[%s5 + $0x20] sm:$0xff]
      %v1934 = vld [vmem:[%s5 + $0x28] sm:$0xff]
      %v1935 = vld [vmem:[%s5 + $0x30] sm:$0xff]
      %v1936 = vld [vmem:[%s5 + $0x38] sm:$0xff]
      %v1937 = vld [vmem:[%s5 + $0x40] sm:$0xff]
      %v1938 = vld [vmem:[%s5 + $0x48] sm:$0xff]
      %v1939 = vld [vmem:[%s5 + $0x50] sm:$0xff]
      %v1940 = vld [vmem:[%s5 + $0x58] sm:$0xff]
      %v1941 = vld [vmem:[%s5 + $0x60] sm:$0xff]
      %v1942 = vld [vmem:[%s5 + $0x68] sm:$0xff]
      %v1943 = vld [vmem:[%s5 + $0x70] sm:$0xff]
      %v1944 = vld [vmem:[%s5 + $0x78] sm:$0xff]
      %v1945 = vld [vmem:[%s5 + $0x80] sm:$0xff]
      %v1946 = vld [vmem:[%s5 + $0x88] sm:$0xff]
      %v1947 = vld [vmem:[%s5 + $0x90] sm:$0xff]
      %v1948 = vld [vmem:[%s5 + $0x98] sm:$0xff]
      %v1949 = vld [vmem:[%s5 + $0xa0] sm:$0xff]
      %v1950 = vld [vmem:[%s5 + $0xa8] sm:$0xff]
      %v1951 = vld [vmem:[%s5 + $0xb0] sm:$0xff]
      %v1952 = vld [vmem:[%s5 + $0xb8] sm:$0xff]
      %v1953 = vld [vmem:[%s5 + $0xc0] sm:$0xff]
      %v1954 = vld [vmem:[%s5 + $0xc8] sm:$0xff]
      %v1955 = vld [vmem:[%s5 + $0xd0] sm:$0xff]
      %v1956 = vld [vmem:[%s5 + $0xd8] sm:$0xff]
      %v1957 = vld [vmem:[%s5 + $0xe0] sm:$0xff]
      %v1958 = vld [vmem:[%s5 + $0xe8] sm:$0xff]
      %v1959 = vld [vmem:[%s5 + $0xf0] sm:$0xff]
      %v1960 = vld [vmem:[%s5 + $0xf8] sm:$0xff]
      %v1961 = vld [vmem:[%s5 + $0x100] sm:$0xff]
      %v1962 = vld [vmem:[%s5 + $0x108] sm:$0xff]
      %v1963 = vld [vmem:[%s5 + $0x110] sm:$0xff]
      %v1964 = vld [vmem:[%s5 + $0x118] sm:$0xff]
      %v1965 = vld [vmem:[%s5 + $0x120] sm:$0xff]
      %v1966 = vld [vmem:[%s5 + $0x128] sm:$0xff]
      %v1967 = vld [vmem:[%s5 + $0x130] sm:$0xff]
      %v1968 = vld [vmem:[%s5 + $0x138] sm:$0xff]
      %v1969 = vld [vmem:[%s5 + $0x140] sm:$0xff]
      %v1970 = vld [vmem:[%s5 + $0x148] sm:$0xff]
      %v1971 = vld [vmem:[%s5 + $0x150] sm:$0xff]
      %v1972 = vld [vmem:[%s5 + $0x158] sm:$0xff]
      %v1973 = vld [vmem:[%s5 + $0x160] sm:$0xff]
      %v1974 = vld [vmem:[%s5 + $0x168] sm:$0xff]
      %v1975 = vld [vmem:[%s5 + $0x170] sm:$0xff]
      %v1976 = vld [vmem:[%s5 + $0x178] sm:$0xff]
      %v1977 = vld [vmem:[%s5 + $0x180] sm:$0xff]
      %v1978 = vld [vmem:[%s5 + $0x188] sm:$0xff]
      %v1979 = vld [vmem:[%s5 + $0x190] sm:$0xff]
      %v1980 = vld [vmem:[%s5 + $0x198] sm:$0xff]
      %v1981 = vld [vmem:[%s5 + $0x1a0] sm:$0xff]
      %v1982 = vld [vmem:[%s5 + $0x1a8] sm:$0xff]
      %v1983 = vld [vmem:[%s5 + $0x1b0] sm:$0xff]
      %v1984 = vld [vmem:[%s5 + $0x1b8] sm:$0xff]
      %v1985 = vld [vmem:[%s5 + $0x1c0] sm:$0xff]
      %v1986 = vld [vmem:[%s5 + $0x1c8] sm:$0xff]
      %v1987 = vld [vmem:[%s5 + $0x1d0] sm:$0xff]
      %v1988 = vld [vmem:[%s5 + $0x1d8] sm:$0xff]
      %v1989 = vld [vmem:[%s5 + $0x1e0] sm:$0xff]
      %v1990 = vld [vmem:[%s5 + $0x1e8] sm:$0xff]
      %v1991 = vld [vmem:[%s5 + $0x1f0] sm:$0xff]
      %v1992 = vld [vmem:[%s5 + $0x1f8] sm:$0xff]
      %v1993 = vld [vmem:[%s6] sm:$0xf]
      %v1995 = vlaneseq
      %v1996 = vshrl.u32 %v1995, 7
      %v1997 = vsub.s32 0, %v1996
      %v1998 = vrot.slane %v1993, %v1997
      %v1999 = vlaneseq
      %v2000 = vshrl.u32 %v1999, 7
      %v2001 = vsub.s32 1, %v2000
      %v2002 = vrot.slane %v1993, %v2001
      %v2003 = vlaneseq
      %v2004 = vshrl.u32 %v2003, 7
      %v2005 = vsub.s32 2, %v2004
      %v2006 = vrot.slane %v1993, %v2005
      %v2007 = vlaneseq
      %v2008 = vshrl.u32 %v2007, 7
      %v2009 = vsub.s32 3, %v2008
      %v2010 = vrot.slane %v1993, %v2009
      %v2079 = vunpack.c.l.b16 %v1929
      %v2080 = vunpack.c.h.b16 %v1929
      %v2081 = vunpack.c.l.b16 %v1930
      %v2082 = vunpack.c.h.b16 %v1930
      %v2083 = vunpack.c.l.b16 %v1931
      %v2084 = vunpack.c.h.b16 %v1931
      %v2085 = vunpack.c.l.b16 %v1932
      %v2086 = vunpack.c.h.b16 %v1932
      %v2087 = vunpack.c.l.b16 %v1933
      %v2088 = vunpack.c.h.b16 %v1933
      %v2089 = vunpack.c.l.b16 %v1934
      %v2090 = vunpack.c.h.b16 %v1934
      %v2091 = vunpack.c.l.b16 %v1935
      %v2092 = vunpack.c.h.b16 %v1935
      %v2093 = vunpack.c.l.b16 %v1936
      %v2094 = vunpack.c.h.b16 %v1936
      %v2095 = vunpack.c.l.b16 %v1937
      %v2096 = vunpack.c.h.b16 %v1937
      %v2097 = vunpack.c.l.b16 %v1938
      %v2098 = vunpack.c.h.b16 %v1938
      %v2099 = vunpack.c.l.b16 %v1939
      %v2100 = vunpack.c.h.b16 %v1939
      %v2101 = vunpack.c.l.b16 %v1940
      %v2102 = vunpack.c.h.b16 %v1940
      %v2103 = vunpack.c.l.b16 %v1941
      %v2104 = vunpack.c.h.b16 %v1941
      %v2105 = vunpack.c.l.b16 %v1942
      %v2106 = vunpack.c.h.b16 %v1942
      %v2107 = vunpack.c.l.b16 %v1943
      %v2108 = vunpack.c.h.b16 %v1943
      %v2109 = vunpack.c.l.b16 %v1944
      %v2110 = vunpack.c.h.b16 %v1944
      %v2111 = vunpack.c.l.b16 %v1945
      %v2112 = vunpack.c.h.b16 %v1945
      %v2113 = vunpack.c.l.b16 %v1946
      %v2114 = vunpack.c.h.b16 %v1946
      %v2115 = vunpack.c.l.b16 %v1947
      %v2116 = vunpack.c.h.b16 %v1947
      %v2117 = vunpack.c.l.b16 %v1948
      %v2118 = vunpack.c.h.b16 %v1948
      %v2119 = vunpack.c.l.b16 %v1949
      %v2120 = vunpack.c.h.b16 %v1949
      %v2121 = vunpack.c.l.b16 %v1950
      %v2122 = vunpack.c.h.b16 %v1950
      %v2123 = vunpack.c.l.b16 %v1951
      %v2124 = vunpack.c.h.b16 %v1951
      %v2125 = vunpack.c.l.b16 %v1952
      %v2126 = vunpack.c.h.b16 %v1952
      %v2127 = vunpack.c.l.b16 %v1953
      %v2128 = vunpack.c.h.b16 %v1953
      %v2129 = vunpack.c.l.b16 %v1954
      %v2130 = vunpack.c.h.b16 %v1954
      %v2131 = vunpack.c.l.b16 %v1955
      %v2132 = vunpack.c.h.b16 %v1955
      %v2133 = vunpack.c.l.b16 %v1956
      %v2134 = vunpack.c.h.b16 %v1956
      %v2135 = vunpack.c.l.b16 %v1957
      %v2136 = vunpack.c.h.b16 %v1957
      %v2137 = vunpack.c.l.b16 %v1958
      %v2138 = vunpack.c.h.b16 %v1958
      %v2139 = vunpack.c.l.b16 %v1959
      %v2140 = vunpack.c.h.b16 %v1959
      %v2141 = vunpack.c.l.b16 %v1960
      %v2142 = vunpack.c.h.b16 %v1960
      %v2143 = vunpack.c.l.b16 %v1961
      %v2144 = vunpack.c.h.b16 %v1961
      %v2145 = vunpack.c.l.b16 %v1962
      %v2146 = vunpack.c.h.b16 %v1962
      %v2147 = vunpack.c.l.b16 %v1963
      %v2148 = vunpack.c.h.b16 %v1963
      %v2149 = vunpack.c.l.b16 %v1964
      %v2150 = vunpack.c.h.b16 %v1964
      %v2151 = vunpack.c.l.b16 %v1965
      %v2152 = vunpack.c.h.b16 %v1965
      %v2153 = vunpack.c.l.b16 %v1966
      %v2154 = vunpack.c.h.b16 %v1966
      %v2155 = vunpack.c.l.b16 %v1967
      %v2156 = vunpack.c.h.b16 %v1967
      %v2157 = vunpack.c.l.b16 %v1968
      %v2158 = vunpack.c.h.b16 %v1968
      %v2159 = vunpack.c.l.b16 %v1969
      %v2160 = vunpack.c.h.b16 %v1969
      %v2161 = vunpack.c.l.b16 %v1970
      %v2162 = vunpack.c.h.b16 %v1970
      %v2163 = vunpack.c.l.b16 %v1971
      %v2164 = vunpack.c.h.b16 %v1971
      %v2165 = vunpack.c.l.b16 %v1972
      %v2166 = vunpack.c.h.b16 %v1972
      %v2167 = vunpack.c.l.b16 %v1973
      %v2168 = vunpack.c.h.b16 %v1973
      %v2169 = vunpack.c.l.b16 %v1974
      %v2170 = vunpack.c.h.b16 %v1974
      %v2171 = vunpack.c.l.b16 %v1975
      %v2172 = vunpack.c.h.b16 %v1975
      %v2173 = vunpack.c.l.b16 %v1976
      %v2174 = vunpack.c.h.b16 %v1976
      %v2175 = vunpack.c.l.b16 %v1977
      %v2176 = vunpack.c.h.b16 %v1977
      %v2177 = vunpack.c.l.b16 %v1978
      %v2178 = vunpack.c.h.b16 %v1978
      %v2179 = vunpack.c.l.b16 %v1979
      %v2180 = vunpack.c.h.b16 %v1979
      %v2181 = vunpack.c.l.b16 %v1980
      %v2182 = vunpack.c.h.b16 %v1980
      %v2183 = vunpack.c.l.b16 %v1981
      %v2184 = vunpack.c.h.b16 %v1981
      %v2185 = vunpack.c.l.b16 %v1982
      %v2186 = vunpack.c.h.b16 %v1982
      %v2187 = vunpack.c.l.b16 %v1983
      %v2188 = vunpack.c.h.b16 %v1983
      %v2189 = vunpack.c.l.b16 %v1984
      %v2190 = vunpack.c.h.b16 %v1984
      %v2191 = vunpack.c.l.b16 %v1985
      %v2192 = vunpack.c.h.b16 %v1985
      %v2193 = vunpack.c.l.b16 %v1986
      %v2194 = vunpack.c.h.b16 %v1986
      %v2195 = vunpack.c.l.b16 %v1987
      %v2196 = vunpack.c.h.b16 %v1987
      %v2197 = vunpack.c.l.b16 %v1988
      %v2198 = vunpack.c.h.b16 %v1988
      %v2199 = vunpack.c.l.b16 %v1989
      %v2200 = vunpack.c.h.b16 %v1989
      %v2201 = vunpack.c.l.b16 %v1990
      %v2202 = vunpack.c.h.b16 %v1990
      %v2203 = vunpack.c.l.b16 %v1991
      %v2204 = vunpack.c.h.b16 %v1991
      %v2205 = vunpack.c.l.b16 %v1992
      %v2206 = vunpack.c.h.b16 %v1992
      %v2207 = vpack.c.b16 %v2083, %v2079
      %v2208 = vpack.c.b16 %v2084, %v2080
      %v2209 = vpack.c.b16 %v2085, %v2081
      %v2210 = vpack.c.b16 %v2086, %v2082
      %v2211 = vpack.c.b16 %v2091, %v2087
      %v2212 = vpack.c.b16 %v2092, %v2088
      %v2213 = vpack.c.b16 %v2093, %v2089
      %v2214 = vpack.c.b16 %v2094, %v2090
      %v2215 = vpack.c.b16 %v2099, %v2095
      %v2216 = vpack.c.b16 %v2100, %v2096
      %v2217 = vpack.c.b16 %v2101, %v2097
      %v2218 = vpack.c.b16 %v2102, %v2098
      %v2219 = vpack.c.b16 %v2107, %v2103
      %v2220 = vpack.c.b16 %v2108, %v2104
      %v2221 = vpack.c.b16 %v2109, %v2105
      %v2222 = vpack.c.b16 %v2110, %v2106
      %v2223 = vpack.c.b16 %v2115, %v2111
      %v2224 = vpack.c.b16 %v2116, %v2112
      %v2225 = vpack.c.b16 %v2117, %v2113
      %v2226 = vpack.c.b16 %v2118, %v2114
      %v2227 = vpack.c.b16 %v2123, %v2119
      %v2228 = vpack.c.b16 %v2124, %v2120
      %v2229 = vpack.c.b16 %v2125, %v2121
      %v2230 = vpack.c.b16 %v2126, %v2122
      %v2231 = vpack.c.b16 %v2131, %v2127
      %v2232 = vpack.c.b16 %v2132, %v2128
      %v2233 = vpack.c.b16 %v2133, %v2129
      %v2234 = vpack.c.b16 %v2134, %v2130
      %v2235 = vpack.c.b16 %v2139, %v2135
      %v2236 = vpack.c.b16 %v2140, %v2136
      %v2237 = vpack.c.b16 %v2141, %v2137
      %v2238 = vpack.c.b16 %v2142, %v2138
      %v2239 = vpack.c.b16 %v2147, %v2143
      %v2240 = vpack.c.b16 %v2148, %v2144
      %v2241 = vpack.c.b16 %v2149, %v2145
      %v2242 = vpack.c.b16 %v2150, %v2146
      %v2243 = vpack.c.b16 %v2155, %v2151
      %v2244 = vpack.c.b16 %v2156, %v2152
      %v2245 = vpack.c.b16 %v2157, %v2153
      %v2246 = vpack.c.b16 %v2158, %v2154
      %v2247 = vpack.c.b16 %v2163, %v2159
      %v2248 = vpack.c.b16 %v2164, %v2160
      %v2249 = vpack.c.b16 %v2165, %v2161
      %v2250 = vpack.c.b16 %v2166, %v2162
      %v2251 = vpack.c.b16 %v2171, %v2167
      %v2252 = vpack.c.b16 %v2172, %v2168
      %v2253 = vpack.c.b16 %v2173, %v2169
      %v2254 = vpack.c.b16 %v2174, %v2170
      %v2255 = vpack.c.b16 %v2179, %v2175
      %v2256 = vpack.c.b16 %v2180, %v2176
      %v2257 = vpack.c.b16 %v2181, %v2177
      %v2258 = vpack.c.b16 %v2182, %v2178
      %v2259 = vpack.c.b16 %v2187, %v2183
      %v2260 = vpack.c.b16 %v2188, %v2184
      %v2261 = vpack.c.b16 %v2189, %v2185
      %v2262 = vpack.c.b16 %v2190, %v2186
      %v2263 = vpack.c.b16 %v2195, %v2191
      %v2264 = vpack.c.b16 %v2196, %v2192
      %v2265 = vpack.c.b16 %v2197, %v2193
      %v2266 = vpack.c.b16 %v2198, %v2194
      %v2267 = vpack.c.b16 %v2203, %v2199
      %v2268 = vpack.c.b16 %v2204, %v2200
      %v2269 = vpack.c.b16 %v2205, %v2201
      %v2270 = vpack.c.b16 %v2206, %v2202
      %2335 = vmatprep.subr.bf16.mxu0 %v2208
      %2336 = vmatpush1.bf16.msra.mxu0 %v2207
      %2337 = vmatprep.subr.bf16.mxu0 %v2212
      %2338 = vmatpush1.bf16.msra.mxu0 %v2211
      %2339 = vmatprep.subr.bf16.mxu0 %v2216
      %2340 = vmatpush1.bf16.msra.mxu0 %v2215
      %2341 = vmatprep.subr.bf16.mxu0 %v2220
      %2342 = vmatpush1.bf16.msra.mxu0 %v2219
      %2343 = vmatprep.subr.bf16.mxu0 %v2224
      %2344 = vmatpush1.bf16.msra.mxu0 %v2223
      %2345 = vmatprep.subr.bf16.mxu0 %v2228
      %2346 = vmatpush1.bf16.msra.mxu0 %v2227
      %2347 = vmatprep.subr.bf16.mxu0 %v2232
      %2348 = vmatpush1.bf16.msra.mxu0 %v2231
      %2349 = vmatprep.subr.bf16.mxu0 %v2236
      %2350 = vmatpush1.bf16.msra.mxu0 %v2235
      %2351 = vmatprep.subr.bf16.mxu0 %v2240
      %2352 = vmatpush1.bf16.msra.mxu0 %v2239
      %2353 = vmatprep.subr.bf16.mxu0 %v2244
      %2354 = vmatpush1.bf16.msra.mxu0 %v2243
      %2355 = vmatprep.subr.bf16.mxu0 %v2248
      %2356 = vmatpush1.bf16.msra.mxu0 %v2247
      %2357 = vmatprep.subr.bf16.mxu0 %v2252
      %2358 = vmatpush1.bf16.msra.mxu0 %v2251
      %2359 = vmatprep.subr.bf16.mxu0 %v2256
      %2360 = vmatpush1.bf16.msra.mxu0 %v2255
      %2361 = vmatprep.subr.bf16.mxu0 %v2260
      %2362 = vmatpush1.bf16.msra.mxu0 %v2259
      %2363 = vmatprep.subr.bf16.mxu0 %v2264
      %2364 = vmatpush1.bf16.msra.mxu0 %v2263
      %2365 = vmatprep.subr.bf16.mxu0 %v2268
      %2366 = vmatpush1.bf16.msra.mxu0 %v2267
      %2367 = vmatprep.mubr.bf16.mxu0 %v1928
      %2368 = vmatmul.mubr.bf16.gmra.mrb[0].mxu0 %v1927
      %v2369 = vpop.f32.mrb[0].mxu0
      %v2370 = vadd.f32 %v1998, %v2369
      %v2371 = vpop.f32.mrb[0].mxu0
      %v2372 = vadd.f32 %v2002, %v2371
      %v2373 = vpop.f32.mrb[0].mxu0
      %v2374 = vpop.f32.mrb[0].mxu0
      %2375 = vdwg.mxu0
      %2376 = vmatprep.subr.bf16.mxu0 %v2210
      %2377 = vmatpush1.bf16.msra.mxu0 %v2209
      %2378 = vmatprep.subr.bf16.mxu0 %v2214
      %2379 = vmatpush1.bf16.msra.mxu0 %v2213
      %2380 = vmatprep.subr.bf16.mxu0 %v2218
      %2381 = vmatpush1.bf16.msra.mxu0 %v2217
      %2382 = vmatprep.subr.bf16.mxu0 %v2222
      %2383 = vmatpush1.bf16.msra.mxu0 %v2221
      %2384 = vmatprep.subr.bf16.mxu0 %v2226
      %2385 = vmatpush1.bf16.msra.mxu0 %v2225
      %2386 = vmatprep.subr.bf16.mxu0 %v2230
      %2387 = vmatpush1.bf16.msra.mxu0 %v2229
      %2388 = vmatprep.subr.bf16.mxu0 %v2234
      %2389 = vmatpush1.bf16.msra.mxu0 %v2233
      %2390 = vmatprep.subr.bf16.mxu0 %v2238
      %2391 = vmatpush1.bf16.msra.mxu0 %v2237
      %2392 = vmatprep.subr.bf16.mxu0 %v2242
      %2393 = vmatpush1.bf16.msra.mxu0 %v2241
      %2394 = vmatprep.subr.bf16.mxu0 %v2246
      %2395 = vmatpush1.bf16.msra.mxu0 %v2245
      %2396 = vmatprep.subr.bf16.mxu0 %v2250
      %2397 = vmatpush1.bf16.msra.mxu0 %v2249
      %2398 = vmatprep.subr.bf16.mxu0 %v2254
      %2399 = vmatpush1.bf16.msra.mxu0 %v2253
      %2400 = vmatprep.subr.bf16.mxu0 %v2258
      %2401 = vmatpush1.bf16.msra.mxu0 %v2257
      %2402 = vmatprep.subr.bf16.mxu0 %v2262
      %2403 = vmatpush1.bf16.msra.mxu0 %v2261
      %2404 = vmatprep.subr.bf16.mxu0 %v2266
      %2405 = vmatpush1.bf16.msra.mxu0 %v2265
      %2406 = vmatprep.subr.bf16.mxu0 %v2270
      %2407 = vmatpush1.bf16.msra.mxu0 %v2269
      %2408 = vmatprep.mubr.bf16.mxu0 %v1928
      %2409 = vmatmul.mubr.bf16.gmra.mrb[0].mxu0 %v1927
      %v2410 = vpop.f32.mrb[0].mxu0
      %v2411 = vadd.f32 %v2006, %v2410
      %v2412 = vpop.f32.mrb[0].mxu0
      %v2413 = vadd.f32 %v2010, %v2412
      %v2414 = vpop.f32.mrb[0].mxu0
      %v2415 = vpop.f32.mrb[0].mxu0
      %2416 = vdwg.mxu0
      %v2417 = vxor.u32 %v2370, 2147483648
      %v2418 = vmul.f32 %v2417, 1.442695
      %v2419 = vpow.pop %v2418
      %v2420 = vadd.f32 %v2419, 1.0
      %v2421 = vrcp.pop %v2420
      %v2422 = vmul.f32 1.0, %v2421
      %v2423 = vxor.u32 %v2372, 2147483648
      %v2424 = vmul.f32 %v2423, 1.442695
      %v2425 = vpow.pop %v2424
      %v2426 = vadd.f32 %v2425, 1.0
      %v2427 = vrcp.pop %v2426
      %v2428 = vmul.f32 1.0, %v2427
      %v2429 = vtanh.pop %v2411
      %v2430 = vxor.u32 %v2413, 2147483648
      %v2431 = vmul.f32 %v2430, 1.442695
      %v2432 = vpow.pop %v2431
      %v2433 = vadd.f32 %v2432, 1.0
      %v2434 = vrcp.pop %v2433
      %v2435 = vmul.f32 1.0, %v2434
      %v2436 = vmul.f32 %v2428, %v1926
      %v2437 = vmul.f32 %v2422, %v2429
      %v2438 = vadd.f32 %v2436, %v2437
      %v2439 = vtanh.pop %v2438
      %v2440 = vmul.f32 %v2435, %v2439
      %2441 = vst [vmem:[%s1923] sm:$0xff] %v2440
      %2442 = vst [vmem:[%s1925] sm:$0xff] %v2438
      %v2443 = vpack.c.bf16 %v2440, %v2440
      %v2444 = vld [vmem:[%s7] sm:$0xf]
      %v2445 = vld [vmem:[%s7 + $0x4] sm:$0xf]
      %v2446 = vld [vmem:[%s7 + $0x8] sm:$0xf]
      %v2447 = vld [vmem:[%s7 + $0xc] sm:$0xf]
      %v2448 = vld [vmem:[%s7 + $0x10] sm:$0xf]
      %v2449 = vld [vmem:[%s7 + $0x14] sm:$0xf]
      %v2450 = vld [vmem:[%s7 + $0x18] sm:$0xf]
      %v2451 = vld [vmem:[%s7 + $0x1c] sm:$0xf]
      %v2452 = vld [vmem:[%s7 + $0x20] sm:$0xf]
      %v2453 = vld [vmem:[%s7 + $0x24] sm:$0xf]
      %v2454 = vld [vmem:[%s7 + $0x28] sm:$0xf]
      %v2455 = vld [vmem:[%s7 + $0x2c] sm:$0xf]
      %v2456 = vld [vmem:[%s7 + $0x30] sm:$0xf]
      %v2457 = vld [vmem:[%s7 + $0x34] sm:$0xf]
      %v2458 = vld [vmem:[%s7 + $0x38] sm:$0xf]
      %v2459 = vld [vmem:[%s7 + $0x3c] sm:$0xf]
      %v2460 = vld [vmem:[%s8] sm:$0x1]
      %v2462 = vlaneseq
      %v2463 = vshrl.u32 %v2462, 7
      %v2464 = vsub.s32 0, %v2463
      %v2465 = vrot.slane %v2460, %v2464
      %v2483 = vunpack.c.l.b16 %v2444
      %v2484 = vunpack.c.l.b16 %v2445
      %v2485 = vunpack.c.l.b16 %v2446
      %v2486 = vunpack.c.l.b16 %v2447
      %v2487 = vunpack.c.l.b16 %v2448
      %v2488 = vunpack.c.l.b16 %v2449
      %v2489 = vunpack.c.l.b16 %v2450
      %v2490 = vunpack.c.l.b16 %v2451
      %v2491 = vunpack.c.l.b16 %v2452
      %v2492 = vunpack.c.l.b16 %v2453
      %v2493 = vunpack.c.l.b16 %v2454
      %v2494 = vunpack.c.l.b16 %v2455
      %v2495 = vunpack.c.l.b16 %v2456
      %v2496 = vunpack.c.l.b16 %v2457
      %v2497 = vunpack.c.l.b16 %v2458
      %v2498 = vunpack.c.l.b16 %v2459
      %v2499 = vpack.c.b16 %v2484, %v2483
      %v2500 = vpack.c.b16 %v2486, %v2485
      %v2501 = vpack.c.b16 %v2488, %v2487
      %v2502 = vpack.c.b16 %v2490, %v2489
      %v2503 = vpack.c.b16 %v2492, %v2491
      %v2504 = vpack.c.b16 %v2494, %v2493
      %v2505 = vpack.c.b16 %v2496, %v2495
      %v2506 = vpack.c.b16 %v2498, %v2497
      %2515 = vmatprep.subr.bf16.mxu0 0
      %2516 = vmatpush1.bf16.msra.mxu0 %v2499
      %2517 = vmatprep.subr.bf16.mxu0 0
      %2518 = vmatpush1.bf16.msra.mxu0 %v2500
      %2519 = vmatprep.subr.bf16.mxu0 0
      %2520 = vmatpush1.bf16.msra.mxu0 %v2501
      %2521 = vmatprep.subr.bf16.mxu0 0
      %2522 = vmatpush1.bf16.msra.mxu0 %v2502
      %2523 = vmatprep.subr.bf16.mxu0 0
      %2524 = vmatpush1.bf16.msra.mxu0 %v2503
      %2525 = vmatprep.subr.bf16.mxu0 0
      %2526 = vmatpush1.bf16.msra.mxu0 %v2504
      %2527 = vmatprep.subr.bf16.mxu0 0
      %2528 = vmatpush1.bf16.msra.mxu0 %v2505
      %2529 = vmatprep.subr.bf16.mxu0 0
      %2530 = vmatpush1.bf16.msra.mxu0 %v2506
      %2531 = vmatprep.subr.bf16.mxu0 0
      %2532 = vmatpush1.bf16.msra.mxu0 0
      %2533 = vmatprep.subr.bf16.mxu0 0
      %2534 = vmatpush1.bf16.msra.mxu0 0
      %2535 = vmatprep.subr.bf16.mxu0 0
      %2536 = vmatpush1.bf16.msra.mxu0 0
      %2537 = vmatprep.subr.bf16.mxu0 0
      %2538 = vmatpush1.bf16.msra.mxu0 0
      %2539 = vmatprep.subr.bf16.mxu0 0
      %2540 = vmatpush1.bf16.msra.mxu0 0
      %2541 = vmatprep.subr.bf16.mxu0 0
      %2542 = vmatpush1.bf16.msra.mxu0 0
      %2543 = vmatprep.subr.bf16.mxu0 0
      %2544 = vmatpush1.bf16.msra.mxu0 0
      %2545 = vmatprep.subr.bf16.mxu0 0
      %2546 = vmatpush1.bf16.msra.mxu0 0
      %2547 = vmatprep.mubr.bf16.mxu0 0
      %2548 = vmatmul.mubr.bf16.gmra.mrb[0].mxu0 %v2443
      %v2549 = vpop.f32.mrb[0].mxu0
      %v2550 = vadd.f32 %v2465, %v2549
      %v2551 = vpop.f32.mrb[0].mxu0
      %v2552 = vpop.f32.mrb[0].mxu0
      %v2553 = vpop.f32.mrb[0].mxu0
      %2554 = vdwg.mxu0
      %2555 = vst [vmem:[%s341] sm:$0xff] %v2550
      %v2556 = vlaneseq
      %v2557 = vand.u32 %v2556, 127
      %vm2558 = vcmask 1040384
      %v2559 = vsel %vm2558, %v2550, -inf
      %2560 = vmax.xlane.f32.xlu0 %v2559
      %v2561 = vpop.xlane.xlu0 %2560
      %vm2562 = vcmp.ge.f32.partialorder %v2550, %v2561
      %v2563 = vsel %vm2562, %v2557, 128
      %v2564 = vsel %vm2558, %v2563, 2147483647
      %v2565 = vand.u32 %v2564, 65535
      %v2566 = vshra.s32 %v2564, 16
      %v2567 = vcvt.s32.f32 %v2565
      %v2568 = vcvt.s32.f32 %v2566
      %2569 = vmin.xlane.f32.xlu0 %v2568
      %v2570 = vpop.xlane.xlu0 %2569
      %vm2571 = vcmp.eq.f32.partialorder %v2568, %v2570
      %v2572 = vsel %vm2571, %v2567, inf
      %2573 = vmin.xlane.f32.xlu0 %v2572
      %v2574 = vpop.xlane.xlu0 %2573
      %v2575 = vcvt.f32.s32 %v2574
      %v2576 = vcvt.f32.s32 %v2570
      %v2577 = vshll.u32 %v2576, 16
      %v2578 = vadd.s32 %v2577, %v2575
      %v2579 = vrot.slane %v2578, 4
      %vm2580 = vcmp.lt.s32.totalorder %v2578, %v2579
      %v2581 = vsel %vm2580, %v2578, %v2579
      %v2582 = vrot.slane %v2581, 2
      %vm2583 = vcmp.lt.s32.totalorder %v2581, %v2582
      %v2584 = vsel %vm2583, %v2581, %v2582
      %v2585 = vrot.slane %v2584, 1
      %vm2586 = vcmp.lt.s32.totalorder %v2584, %v2585
      %v2587 = vsel %vm2586, %v2584, %v2585
      %s2588 = vtos %v2587
      %p2589 = scmp.lt.s32.totalorder %s2588, 127
      %s2590 = scalar_select %p2589, %s2588, 127
      %s2591 = scalar_lea.vmem %s9, %s2590
      %v2592 = vld [vmem:[%s2591] sm:$0x1]
      %2593 = vst [vmem:[#allocation4] sm:$0x1] %v2592
      %vm2594 = vcmask 1041409
      %v2595 = vsel %vm2594, %v2550, -inf
      %2596 = vmax.xlane.f32.xlu0 %v2595
      %v2597 = vpop.xlane.xlu0 %2596
      %vm2598 = vcmp.ge.f32.partialorder %v2550, %v2597
      %v2599 = vsel %vm2598, %v2557, 128
      %v2600 = vsel %vm2594, %v2599, 2147483647
      %v2601 = vand.u32 %v2600, 65535
      %v2602 = vshra.s32 %v2600, 16
      %v2603 = vcvt.s32.f32 %v2601
      %v2604 = vcvt.s32.f32 %v2602
      %2605 = vmin.xlane.f32.xlu0 %v2604
      %v2606 = vpop.xlane.xlu0 %2605
      %vm2607 = vcmp.eq.f32.partialorder %v2604, %v2606
      %v2608 = vsel %vm2607, %v2603, inf
      %2609 = vmin.xlane.f32.xlu0 %v2608
      %v2610 = vpop.xlane.xlu0 %2609
      %v2611 = vcvt.f32.s32 %v2610
      %v2612 = vcvt.f32.s32 %v2606
      %v2613 = vshll.u32 %v2612, 16
      %v2614 = vadd.s32 %v2613, %v2611
      %v2615 = vrot.slane %v2614, 4
      %vm2616 = vcmp.lt.s32.totalorder %v2614, %v2615
      %v2617 = vsel %vm2616, %v2614, %v2615
      %v2618 = vrot.slane %v2617, 2
      %vm2619 = vcmp.lt.s32.totalorder %v2617, %v2618
      %v2620 = vsel %vm2619, %v2617, %v2618
      %v2621 = vrot.slane %v2620, 1
      %vm2622 = vcmp.lt.s32.totalorder %v2620, %v2621
      %v2623 = vsel %vm2622, %v2620, %v2621
      %s2624 = vtos %v2623
      %p2625 = scmp.lt.s32.totalorder %s2624, 127
      %s2626 = scalar_select %p2625, %s2624, 127
      %s2627 = scalar_lea.vmem %s9, %s2626
      %v2628 = vld [vmem:[%s2627] sm:$0x1]
      %2629 = vst [vmem:[#allocation4 + $0x1] sm:$0x1] %v2628
      %s2630 = sadd.s32 %s1391, 1
      %p2631 = scmp.gt.s32.totalorder %s1391, 0
      %s2632 = scalar_select %p2631, %s1391, 0
      %s2633 = sld [smem:[#allocation6 + %s2632]]
      %p2634 = scmp.gt.s32.totalorder %s2633, 0
      %p2635 = scmp.eq.s32.totalorder %s2630, 0
      %p2636 = por %p2635, %p2634
      // Predicated region
      $region65: #{_lambda_.3} parent=55 // pred_check
        %p2637 = pneg %p2636
      $region66: #{_lambda_.3} parent=55 // pred_check_branch
        %2639 = sbr.rel (%p2637) target = $region68
      $region67: #{_lambda_.3} parent=55 // pred_region
        %s2640 = scalar_lea.vmem %s335, 8
        %v2641 = vld [vmem:[%s2640] sm:$0xff]
        %2642 = vst [vmem:[#allocation4] sm:$0xff] %v2641
      $region68: #{_lambda_.3} parent=55 // pred_fallthru
        _
      %v2643 = vld [vmem:[#allocation4] sm:$0xff]
      %v2644 = vld [vmem:[#allocation2] sm:$0xff]
      %v2645 = vld [vmem:[#allocation3] sm:$0xff]
      %v2646 = vpack.c.bf16 %v2643, %v2643
      %v2647 = vpack.c.bf16 %v2644, %v2644
      %v2648 = vld [vmem:[%s3] sm:$0xff]
      %v2649 = vld [vmem:[%s3 + $0x8] sm:$0xff]
      %v2650 = vld [vmem:[%s3 + $0x10] sm:$0xff]
      %v2651 = vld [vmem:[%s3 + $0x18] sm:$0xff]
      %v2652 = vld [vmem:[%s3 + $0x20] sm:$0xff]
      %v2653 = vld [vmem:[%s3 + $0x28] sm:$0xff]
      %v2654 = vld [vmem:[%s3 + $0x30] sm:$0xff]
      %v2655 = vld [vmem:[%s3 + $0x38] sm:$0xff]
      %v2656 = vld [vmem:[%s3 + $0x40] sm:$0xff]
      %v2657 = vld [vmem:[%s3 + $0x48] sm:$0xff]
      %v2658 = vld [vmem:[%s3 + $0x50] sm:$0xff]
      %v2659 = vld [vmem:[%s3 + $0x58] sm:$0xff]
      %v2660 = vld [vmem:[%s3 + $0x60] sm:$0xff]
      %v2661 = vld [vmem:[%s3 + $0x68] sm:$0xff]
      %v2662 = vld [vmem:[%s3 + $0x70] sm:$0xff]
      %v2663 = vld [vmem:[%s3 + $0x78] sm:$0xff]
      %v2664 = vld [vmem:[%s3 + $0x80] sm:$0xff]
      %v2665 = vld [vmem:[%s3 + $0x88] sm:$0xff]
      %v2666 = vld [vmem:[%s3 + $0x90] sm:$0xff]
      %v2667 = vld [vmem:[%s3 + $0x98] sm:$0xff]
      %v2668 = vld [vmem:[%s3 + $0xa0] sm:$0xff]
      %v2669 = vld [vmem:[%s3 + $0xa8] sm:$0xff]
      %v2670 = vld [vmem:[%s3 + $0xb0] sm:$0xff]
      %v2671 = vld [vmem:[%s3 + $0xb8] sm:$0xff]
      %v2672 = vld [vmem:[%s3 + $0xc0] sm:$0xff]
      %v2673 = vld [vmem:[%s3 + $0xc8] sm:$0xff]
      %v2674 = vld [vmem:[%s3 + $0xd0] sm:$0xff]
      %v2675 = vld [vmem:[%s3 + $0xd8] sm:$0xff]
      %v2676 = vld [vmem:[%s3 + $0xe0] sm:$0xff]
      %v2677 = vld [vmem:[%s3 + $0xe8] sm:$0xff]
      %v2678 = vld [vmem:[%s3 + $0xf0] sm:$0xff]
      %v2679 = vld [vmem:[%s3 + $0xf8] sm:$0xff]
      %v2680 = vld [vmem:[%s3 + $0x100] sm:$0xff]
      %v2681 = vld [vmem:[%s3 + $0x108] sm:$0xff]
      %v2682 = vld [vmem:[%s3 + $0x110] sm:$0xff]
      %v2683 = vld [vmem:[%s3 + $0x118] sm:$0xff]
      %v2684 = vld [vmem:[%s3 + $0x120] sm:$0xff]
      %v2685 = vld [vmem:[%s3 + $0x128] sm:$0xff]
      %v2686 = vld [vmem:[%s3 + $0x130] sm:$0xff]
      %v2687 = vld [vmem:[%s3 + $0x138] sm:$0xff]
      %v2688 = vld [vmem:[%s3 + $0x140] sm:$0xff]
      %v2689 = vld [vmem:[%s3 + $0x148] sm:$0xff]
      %v2690 = vld [vmem:[%s3 + $0x150] sm:$0xff]
      %v2691 = vld [vmem:[%s3 + $0x158] sm:$0xff]
      %v2692 = vld [vmem:[%s3 + $0x160] sm:$0xff]
      %v2693 = vld [vmem:[%s3 + $0x168] sm:$0xff]
      %v2694 = vld [vmem:[%s3 + $0x170] sm:$0xff]
      %v2695 = vld [vmem:[%s3 + $0x178] sm:$0xff]
      %v2696 = vld [vmem:[%s3 + $0x180] sm:$0xff]
      %v2697 = vld [vmem:[%s3 + $0x188] sm:$0xff]
      %v2698 = vld [vmem:[%s3 + $0x190] sm:$0xff]
      %v2699 = vld [vmem:[%s3 + $0x198] sm:$0xff]
      %v2700 = vld [vmem:[%s3 + $0x1a0] sm:$0xff]
      %v2701 = vld [vmem:[%s3 + $0x1a8] sm:$0xff]
      %v2702 = vld [vmem:[%s3 + $0x1b0] sm:$0xff]
      %v2703 = vld [vmem:[%s3 + $0x1b8] sm:$0xff]
      %v2704 = vld [vmem:[%s3 + $0x1c0] sm:$0xff]
      %v2705 = vld [vmem:[%s3 + $0x1c8] sm:$0xff]
      %v2706 = vld [vmem:[%s3 + $0x1d0] sm:$0xff]
      %v2707 = vld [vmem:[%s3 + $0x1d8] sm:$0xff]
      %v2708 = vld [vmem:[%s3 + $0x1e0] sm:$0xff]
      %v2709 = vld [vmem:[%s3 + $0x1e8] sm:$0xff]
      %v2710 = vld [vmem:[%s3 + $0x1f0] sm:$0xff]
      %v2711 = vld [vmem:[%s3 + $0x1f8] sm:$0xff]
      %v2712 = vld [vmem:[%s4] sm:$0xf]
      %v2714 = vlaneseq
      %v2715 = vshrl.u32 %v2714, 7
      %v2716 = vsub.s32 0, %v2715
      %v2717 = vrot.slane %v2712, %v2716
      %v2718 = vlaneseq
      %v2719 = vshrl.u32 %v2718, 7
      %v2720 = vsub.s32 1, %v2719
      %v2721 = vrot.slane %v2712, %v2720
      %v2722 = vlaneseq
      %v2723 = vshrl.u32 %v2722, 7
      %v2724 = vsub.s32 2, %v2723
      %v2725 = vrot.slane %v2712, %v2724
      %v2726 = vlaneseq
      %v2727 = vshrl.u32 %v2726, 7
      %v2728 = vsub.s32 3, %v2727
      %v2729 = vrot.slane %v2712, %v2728
      %v2798 = vunpack.c.l.b16 %v2648
      %v2799 = vunpack.c.h.b16 %v2648
      %v2800 = vunpack.c.l.b16 %v2649
      %v2801 = vunpack.c.h.b16 %v2649
      %v2802 = vunpack.c.l.b16 %v2650
      %v2803 = vunpack.c.h.b16 %v2650
      %v2804 = vunpack.c.l.b16 %v2651
      %v2805 = vunpack.c.h.b16 %v2651
      %v2806 = vunpack.c.l.b16 %v2652
      %v2807 = vunpack.c.h.b16 %v2652
      %v2808 = vunpack.c.l.b16 %v2653
      %v2809 = vunpack.c.h.b16 %v2653
      %v2810 = vunpack.c.l.b16 %v2654
      %v2811 = vunpack.c.h.b16 %v2654
      %v2812 = vunpack.c.l.b16 %v2655
      %v2813 = vunpack.c.h.b16 %v2655
      %v2814 = vunpack.c.l.b16 %v2656
      %v2815 = vunpack.c.h.b16 %v2656
      %v2816 = vunpack.c.l.b16 %v2657
      %v2817 = vunpack.c.h.b16 %v2657
      %v2818 = vunpack.c.l.b16 %v2658
      %v2819 = vunpack.c.h.b16 %v2658
      %v2820 = vunpack.c.l.b16 %v2659
      %v2821 = vunpack.c.h.b16 %v2659
      %v2822 = vunpack.c.l.b16 %v2660
      %v2823 = vunpack.c.h.b16 %v2660
      %v2824 = vunpack.c.l.b16 %v2661
      %v2825 = vunpack.c.h.b16 %v2661
      %v2826 = vunpack.c.l.b16 %v2662
      %v2827 = vunpack.c.h.b16 %v2662
      %v2828 = vunpack.c.l.b16 %v2663
      %v2829 = vunpack.c.h.b16 %v2663
      %v2830 = vunpack.c.l.b16 %v2664
      %v2831 = vunpack.c.h.b16 %v2664
      %v2832 = vunpack.c.l.b16 %v2665
      %v2833 = vunpack.c.h.b16 %v2665
      %v2834 = vunpack.c.l.b16 %v2666
      %v2835 = vunpack.c.h.b16 %v2666
      %v2836 = vunpack.c.l.b16 %v2667
      %v2837 = vunpack.c.h.b16 %v2667
      %v2838 = vunpack.c.l.b16 %v2668
      %v2839 = vunpack.c.h.b16 %v2668
      %v2840 = vunpack.c.l.b16 %v2669
      %v2841 = vunpack.c.h.b16 %v2669
      %v2842 = vunpack.c.l.b16 %v2670
      %v2843 = vunpack.c.h.b16 %v2670
      %v2844 = vunpack.c.l.b16 %v2671
      %v2845 = vunpack.c.h.b16 %v2671
      %v2846 = vunpack.c.l.b16 %v2672
      %v2847 = vunpack.c.h.b16 %v2672
      %v2848 = vunpack.c.l.b16 %v2673
      %v2849 = vunpack.c.h.b16 %v2673
      %v2850 = vunpack.c.l.b16 %v2674
      %v2851 = vunpack.c.h.b16 %v2674
      %v2852 = vunpack.c.l.b16 %v2675
      %v2853 = vunpack.c.h.b16 %v2675
      %v2854 = vunpack.c.l.b16 %v2676
      %v2855 = vunpack.c.h.b16 %v2676
      %v2856 = vunpack.c.l.b16 %v2677
      %v2857 = vunpack.c.h.b16 %v2677
      %v2858 = vunpack.c.l.b16 %v2678
      %v2859 = vunpack.c.h.b16 %v2678
      %v2860 = vunpack.c.l.b16 %v2679
      %v2861 = vunpack.c.h.b16 %v2679
      %v2862 = vunpack.c.l.b16 %v2680
      %v2863 = vunpack.c.h.b16 %v2680
      %v2864 = vunpack.c.l.b16 %v2681
      %v2865 = vunpack.c.h.b16 %v2681
      %v2866 = vunpack.c.l.b16 %v2682
      %v2867 = vunpack.c.h.b16 %v2682
      %v2868 = vunpack.c.l.b16 %v2683
      %v2869 = vunpack.c.h.b16 %v2683
      %v2870 = vunpack.c.l.b16 %v2684
      %v2871 = vunpack.c.h.b16 %v2684
      %v2872 = vunpack.c.l.b16 %v2685
      %v2873 = vunpack.c.h.b16 %v2685
      %v2874 = vunpack.c.l.b16 %v2686
      %v2875 = vunpack.c.h.b16 %v2686
      %v2876 = vunpack.c.l.b16 %v2687
      %v2877 = vunpack.c.h.b16 %v2687
      %v2878 = vunpack.c.l.b16 %v2688
      %v2879 = vunpack.c.h.b16 %v2688
      %v2880 = vunpack.c.l.b16 %v2689
      %v2881 = vunpack.c.h.b16 %v2689
      %v2882 = vunpack.c.l.b16 %v2690
      %v2883 = vunpack.c.h.b16 %v2690
      %v2884 = vunpack.c.l.b16 %v2691
      %v2885 = vunpack.c.h.b16 %v2691
      %v2886 = vunpack.c.l.b16 %v2692
      %v2887 = vunpack.c.h.b16 %v2692
      %v2888 = vunpack.c.l.b16 %v2693
      %v2889 = vunpack.c.h.b16 %v2693
      %v2890 = vunpack.c.l.b16 %v2694
      %v2891 = vunpack.c.h.b16 %v2694
      %v2892 = vunpack.c.l.b16 %v2695
      %v2893 = vunpack.c.h.b16 %v2695
      %v2894 = vunpack.c.l.b16 %v2696
      %v2895 = vunpack.c.h.b16 %v2696
      %v2896 = vunpack.c.l.b16 %v2697
      %v2897 = vunpack.c.h.b16 %v2697
      %v2898 = vunpack.c.l.b16 %v2698
      %v2899 = vunpack.c.h.b16 %v2698
      %v2900 = vunpack.c.l.b16 %v2699
      %v2901 = vunpack.c.h.b16 %v2699
      %v2902 = vunpack.c.l.b16 %v2700
      %v2903 = vunpack.c.h.b16 %v2700
      %v2904 = vunpack.c.l.b16 %v2701
      %v2905 = vunpack.c.h.b16 %v2701
      %v2906 = vunpack.c.l.b16 %v2702
      %v2907 = vunpack.c.h.b16 %v2702
      %v2908 = vunpack.c.l.b16 %v2703
      %v2909 = vunpack.c.h.b16 %v2703
      %v2910 = vunpack.c.l.b16 %v2704
      %v2911 = vunpack.c.h.b16 %v2704
      %v2912 = vunpack.c.l.b16 %v2705
      %v2913 = vunpack.c.h.b16 %v2705
      %v2914 = vunpack.c.l.b16 %v2706
      %v2915 = vunpack.c.h.b16 %v2706
      %v2916 = vunpack.c.l.b16 %v2707
      %v2917 = vunpack.c.h.b16 %v2707
      %v2918 = vunpack.c.l.b16 %v2708
      %v2919 = vunpack.c.h.b16 %v2708
      %v2920 = vunpack.c.l.b16 %v2709
      %v2921 = vunpack.c.h.b16 %v2709
      %v2922 = vunpack.c.l.b16 %v2710
      %v2923 = vunpack.c.h.b16 %v2710
      %v2924 = vunpack.c.l.b16 %v2711
      %v2925 = vunpack.c.h.b16 %v2711
      %v2926 = vpack.c.b16 %v2802, %v2798
      %v2927 = vpack.c.b16 %v2803, %v2799
      %v2928 = vpack.c.b16 %v2804, %v2800
      %v2929 = vpack.c.b16 %v2805, %v2801
      %v2930 = vpack.c.b16 %v2810, %v2806
      %v2931 = vpack.c.b16 %v2811, %v2807
      %v2932 = vpack.c.b16 %v2812, %v2808
      %v2933 = vpack.c.b16 %v2813, %v2809
      %v2934 = vpack.c.b16 %v2818, %v2814
      %v2935 = vpack.c.b16 %v2819, %v2815
      %v2936 = vpack.c.b16 %v2820, %v2816
      %v2937 = vpack.c.b16 %v2821, %v2817
      %v2938 = vpack.c.b16 %v2826, %v2822
      %v2939 = vpack.c.b16 %v2827, %v2823
      %v2940 = vpack.c.b16 %v2828, %v2824
      %v2941 = vpack.c.b16 %v2829, %v2825
      %v2942 = vpack.c.b16 %v2834, %v2830
      %v2943 = vpack.c.b16 %v2835, %v2831
      %v2944 = vpack.c.b16 %v2836, %v2832
      %v2945 = vpack.c.b16 %v2837, %v2833
      %v2946 = vpack.c.b16 %v2842, %v2838
      %v2947 = vpack.c.b16 %v2843, %v2839
      %v2948 = vpack.c.b16 %v2844, %v2840
      %v2949 = vpack.c.b16 %v2845, %v2841
      %v2950 = vpack.c.b16 %v2850, %v2846
      %v2951 = vpack.c.b16 %v2851, %v2847
      %v2952 = vpack.c.b16 %v2852, %v2848
      %v2953 = vpack.c.b16 %v2853, %v2849
      %v2954 = vpack.c.b16 %v2858, %v2854
      %v2955 = vpack.c.b16 %v2859, %v2855
      %v2956 = vpack.c.b16 %v2860, %v2856
      %v2957 = vpack.c.b16 %v2861, %v2857
      %v2958 = vpack.c.b16 %v2866, %v2862
      %v2959 = vpack.c.b16 %v2867, %v2863
      %v2960 = vpack.c.b16 %v2868, %v2864
      %v2961 = vpack.c.b16 %v2869, %v2865
      %v2962 = vpack.c.b16 %v2874, %v2870
      %v2963 = vpack.c.b16 %v2875, %v2871
      %v2964 = vpack.c.b16 %v2876, %v2872
      %v2965 = vpack.c.b16 %v2877, %v2873
      %v2966 = vpack.c.b16 %v2882, %v2878
      %v2967 = vpack.c.b16 %v2883, %v2879
      %v2968 = vpack.c.b16 %v2884, %v2880
      %v2969 = vpack.c.b16 %v2885, %v2881
      %v2970 = vpack.c.b16 %v2890, %v2886
      %v2971 = vpack.c.b16 %v2891, %v2887
      %v2972 = vpack.c.b16 %v2892, %v2888
      %v2973 = vpack.c.b16 %v2893, %v2889
      %v2974 = vpack.c.b16 %v2898, %v2894
      %v2975 = vpack.c.b16 %v2899, %v2895
      %v2976 = vpack.c.b16 %v2900, %v2896
      %v2977 = vpack.c.b16 %v2901, %v2897
      %v2978 = vpack.c.b16 %v2906, %v2902
      %v2979 = vpack.c.b16 %v2907, %v2903
      %v2980 = vpack.c.b16 %v2908, %v2904
      %v2981 = vpack.c.b16 %v2909, %v2905
      %v2982 = vpack.c.b16 %v2914, %v2910
      %v2983 = vpack.c.b16 %v2915, %v2911
      %v2984 = vpack.c.b16 %v2916, %v2912
      %v2985 = vpack.c.b16 %v2917, %v2913
      %v2986 = vpack.c.b16 %v2922, %v2918
      %v2987 = vpack.c.b16 %v2923, %v2919
      %v2988 = vpack.c.b16 %v2924, %v2920
      %v2989 = vpack.c.b16 %v2925, %v2921
      %3054 = vmatprep.subr.bf16.mxu0 %v2927
      %3055 = vmatpush1.bf16.msra.mxu0 %v2926
      %3056 = vmatprep.subr.bf16.mxu0 %v2931
      %3057 = vmatpush1.bf16.msra.mxu0 %v2930
      %3058 = vmatprep.subr.bf16.mxu0 %v2935
      %3059 = vmatpush1.bf16.msra.mxu0 %v2934
      %3060 = vmatprep.subr.bf16.mxu0 %v2939
      %3061 = vmatpush1.bf16.msra.mxu0 %v2938
      %3062 = vmatprep.subr.bf16.mxu0 %v2943
      %3063 = vmatpush1.bf16.msra.mxu0 %v2942
      %3064 = vmatprep.subr.bf16.mxu0 %v2947
      %3065 = vmatpush1.bf16.msra.mxu0 %v2946
      %3066 = vmatprep.subr.bf16.mxu0 %v2951
      %3067 = vmatpush1.bf16.msra.mxu0 %v2950
      %3068 = vmatprep.subr.bf16.mxu0 %v2955
      %3069 = vmatpush1.bf16.msra.mxu0 %v2954
      %3070 = vmatprep.subr.bf16.mxu0 %v2959
      %3071 = vmatpush1.bf16.msra.mxu0 %v2958
      %3072 = vmatprep.subr.bf16.mxu0 %v2963
      %3073 = vmatpush1.bf16.msra.mxu0 %v2962
      %3074 = vmatprep.subr.bf16.mxu0 %v2967
      %3075 = vmatpush1.bf16.msra.mxu0 %v2966
      %3076 = vmatprep.subr.bf16.mxu0 %v2971
      %3077 = vmatpush1.bf16.msra.mxu0 %v2970
      %3078 = vmatprep.subr.bf16.mxu0 %v2975
      %3079 = vmatpush1.bf16.msra.mxu0 %v2974
      %3080 = vmatprep.subr.bf16.mxu0 %v2979
      %3081 = vmatpush1.bf16.msra.mxu0 %v2978
      %3082 = vmatprep.subr.bf16.mxu0 %v2983
      %3083 = vmatpush1.bf16.msra.mxu0 %v2982
      %3084 = vmatprep.subr.bf16.mxu0 %v2987
      %3085 = vmatpush1.bf16.msra.mxu0 %v2986
      %3086 = vmatprep.mubr.bf16.mxu0 %v2647
      %3087 = vmatmul.mubr.bf16.gmra.mrb[0].mxu0 %v2646
      %v3088 = vpop.f32.mrb[0].mxu0
      %v3089 = vadd.f32 %v2717, %v3088
      %v3090 = vpop.f32.mrb[0].mxu0
      %v3091 = vadd.f32 %v2721, %v3090
      %v3092 = vpop.f32.mrb[0].mxu0
      %v3093 = vpop.f32.mrb[0].mxu0
      %3094 = vdwg.mxu0
      %3095 = vmatprep.subr.bf16.mxu0 %v2929
      %3096 = vmatpush1.bf16.msra.mxu0 %v2928
      %3097 = vmatprep.subr.bf16.mxu0 %v2933
      %3098 = vmatpush1.bf16.msra.mxu0 %v2932
      %3099 = vmatprep.subr.bf16.mxu0 %v2937
      %3100 = vmatpush1.bf16.msra.mxu0 %v2936
      %3101 = vmatprep.subr.bf16.mxu0 %v2941
      %3102 = vmatpush1.bf16.msra.mxu0 %v2940
      %3103 = vmatprep.subr.bf16.mxu0 %v2945
      %3104 = vmatpush1.bf16.msra.mxu0 %v2944
      %3105 = vmatprep.subr.bf16.mxu0 %v2949
      %3106 = vmatpush1.bf16.msra.mxu0 %v2948
      %3107 = vmatprep.subr.bf16.mxu0 %v2953
      %3108 = vmatpush1.bf16.msra.mxu0 %v2952
      %3109 = vmatprep.subr.bf16.mxu0 %v2957
      %3110 = vmatpush1.bf16.msra.mxu0 %v2956
      %3111 = vmatprep.subr.bf16.mxu0 %v2961
      %3112 = vmatpush1.bf16.msra.mxu0 %v2960
      %3113 = vmatprep.subr.bf16.mxu0 %v2965
      %3114 = vmatpush1.bf16.msra.mxu0 %v2964
      %3115 = vmatprep.subr.bf16.mxu0 %v2969
      %3116 = vmatpush1.bf16.msra.mxu0 %v2968
      %3117 = vmatprep.subr.bf16.mxu0 %v2973
      %3118 = vmatpush1.bf16.msra.mxu0 %v2972
      %3119 = vmatprep.subr.bf16.mxu0 %v2977
      %3120 = vmatpush1.bf16.msra.mxu0 %v2976
      %3121 = vmatprep.subr.bf16.mxu0 %v2981
      %3122 = vmatpush1.bf16.msra.mxu0 %v2980
      %3123 = vmatprep.subr.bf16.mxu0 %v2985
      %3124 = vmatpush1.bf16.msra.mxu0 %v2984
      %3125 = vmatprep.subr.bf16.mxu0 %v2989
      %3126 = vmatpush1.bf16.msra.mxu0 %v2988
      %3127 = vmatprep.mubr.bf16.mxu0 %v2647
      %3128 = vmatmul.mubr.bf16.gmra.mrb[0].mxu0 %v2646
      %v3129 = vpop.f32.mrb[0].mxu0
      %v3130 = vadd.f32 %v2725, %v3129
      %v3131 = vpop.f32.mrb[0].mxu0
      %v3132 = vadd.f32 %v2729, %v3131
      %v3133 = vpop.f32.mrb[0].mxu0
      %v3134 = vpop.f32.mrb[0].mxu0
      %3135 = vdwg.mxu0
      %v3136 = vxor.u32 %v3089, 2147483648
      %v3137 = vmul.f32 %v3136, 1.442695
      %v3138 = vpow.pop %v3137
      %v3139 = vadd.f32 %v3138, 1.0
      %v3140 = vrcp.pop %v3139
      %v3141 = vmul.f32 1.0, %v3140
      %v3142 = vxor.u32 %v3091, 2147483648
      %v3143 = vmul.f32 %v3142, 1.442695
      %v3144 = vpow.pop %v3143
      %v3145 = vadd.f32 %v3144, 1.0
      %v3146 = vrcp.pop %v3145
      %v3147 = vmul.f32 1.0, %v3146
      %v3148 = vtanh.pop %v3130
      %v3149 = vxor.u32 %v3132, 2147483648
      %v3150 = vmul.f32 %v3149, 1.442695
      %v3151 = vpow.pop %v3150
      %v3152 = vadd.f32 %v3151, 1.0
      %v3153 = vrcp.pop %v3152
      %v3154 = vmul.f32 1.0, %v3153
      %v3155 = vmul.f32 %v3147, %v2645
      %v3156 = vmul.f32 %v3141, %v3148
      %v3157 = vadd.f32 %v3155, %v3156
      %v3158 = vtanh.pop %v3157
      %v3159 = vmul.f32 %v3154, %v3158
      %3160 = vst [vmem:[#allocation2] sm:$0xff] %v3159
      %3161 = vst [vmem:[#allocation3] sm:$0xff] %v3157
      %v3162 = vld [vmem:[%s1923] sm:$0xff]
      %v3163 = vld [vmem:[%s1925] sm:$0xff]
      %v3164 = vpack.c.bf16 %v3159, %v3159
      %v3165 = vpack.c.bf16 %v3162, %v3162
      %v3166 = vld [vmem:[%s5] sm:$0xff]
      %v3167 = vld [vmem:[%s5 + $0x8] sm:$0xff]
      %v3168 = vld [vmem:[%s5 + $0x10] sm:$0xff]
      %v3169 = vld [vmem:[%s5 + $0x18] sm:$0xff]
      %v3170 = vld [vmem:[%s5 + $0x20] sm:$0xff]
      %v3171 = vld [vmem:[%s5 + $0x28] sm:$0xff]
      %v3172 = vld [vmem:[%s5 + $0x30] sm:$0xff]
      %v3173 = vld [vmem:[%s5 + $0x38] sm:$0xff]
      %v3174 = vld [vmem:[%s5 + $0x40] sm:$0xff]
      %v3175 = vld [vmem:[%s5 + $0x48] sm:$0xff]
      %v3176 = vld [vmem:[%s5 + $0x50] sm:$0xff]
      %v3177 = vld [vmem:[%s5 + $0x58] sm:$0xff]
      %v3178 = vld [vmem:[%s5 + $0x60] sm:$0xff]
      %v3179 = vld [vmem:[%s5 + $0x68] sm:$0xff]
      %v3180 = vld [vmem:[%s5 + $0x70] sm:$0xff]
      %v3181 = vld [vmem:[%s5 + $0x78] sm:$0xff]
      %v3182 = vld [vmem:[%s5 + $0x80] sm:$0xff]
      %v3183 = vld [vmem:[%s5 + $0x88] sm:$0xff]
      %v3184 = vld [vmem:[%s5 + $0x90] sm:$0xff]
      %v3185 = vld [vmem:[%s5 + $0x98] sm:$0xff]
      %v3186 = vld [vmem:[%s5 + $0xa0] sm:$0xff]
      %v3187 = vld [vmem:[%s5 + $0xa8] sm:$0xff]
      %v3188 = vld [vmem:[%s5 + $0xb0] sm:$0xff]
      %v3189 = vld [vmem:[%s5 + $0xb8] sm:$0xff]
      %v3190 = vld [vmem:[%s5 + $0xc0] sm:$0xff]
      %v3191 = vld [vmem:[%s5 + $0xc8] sm:$0xff]
      %v3192 = vld [vmem:[%s5 + $0xd0] sm:$0xff]
      %v3193 = vld [vmem:[%s5 + $0xd8] sm:$0xff]
      %v3194 = vld [vmem:[%s5 + $0xe0] sm:$0xff]
      %v3195 = vld [vmem:[%s5 + $0xe8] sm:$0xff]
      %v3196 = vld [vmem:[%s5 + $0xf0] sm:$0xff]
      %v3197 = vld [vmem:[%s5 + $0xf8] sm:$0xff]
      %v3198 = vld [vmem:[%s5 + $0x100] sm:$0xff]
      %v3199 = vld [vmem:[%s5 + $0x108] sm:$0xff]
      %v3200 = vld [vmem:[%s5 + $0x110] sm:$0xff]
      %v3201 = vld [vmem:[%s5 + $0x118] sm:$0xff]
      %v3202 = vld [vmem:[%s5 + $0x120] sm:$0xff]
      %v3203 = vld [vmem:[%s5 + $0x128] sm:$0xff]
      %v3204 = vld [vmem:[%s5 + $0x130] sm:$0xff]
      %v3205 = vld [vmem:[%s5 + $0x138] sm:$0xff]
      %v3206 = vld [vmem:[%s5 + $0x140] sm:$0xff]
      %v3207 = vld [vmem:[%s5 + $0x148] sm:$0xff]
      %v3208 = vld [vmem:[%s5 + $0x150] sm:$0xff]
      %v3209 = vld [vmem:[%s5 + $0x158] sm:$0xff]
      %v3210 = vld [vmem:[%s5 + $0x160] sm:$0xff]
      %v3211 = vld [vmem:[%s5 + $0x168] sm:$0xff]
      %v3212 = vld [vmem:[%s5 + $0x170] sm:$0xff]
      %v3213 = vld [vmem:[%s5 + $0x178] sm:$0xff]
      %v3214 = vld [vmem:[%s5 + $0x180] sm:$0xff]
      %v3215 = vld [vmem:[%s5 + $0x188] sm:$0xff]
      %v3216 = vld [vmem:[%s5 + $0x190] sm:$0xff]
      %v3217 = vld [vmem:[%s5 + $0x198] sm:$0xff]
      %v3218 = vld [vmem:[%s5 + $0x1a0] sm:$0xff]
      %v3219 = vld [vmem:[%s5 + $0x1a8] sm:$0xff]
      %v3220 = vld [vmem:[%s5 + $0x1b0] sm:$0xff]
      %v3221 = vld [vmem:[%s5 + $0x1b8] sm:$0xff]
      %v3222 = vld [vmem:[%s5 + $0x1c0] sm:$0xff]
      %v3223 = vld [vmem:[%s5 + $0x1c8] sm:$0xff]
      %v3224 = vld [vmem:[%s5 + $0x1d0] sm:$0xff]
      %v3225 = vld [vmem:[%s5 + $0x1d8] sm:$0xff]
      %v3226 = vld [vmem:[%s5 + $0x1e0] sm:$0xff]
      %v3227 = vld [vmem:[%s5 + $0x1e8] sm:$0xff]
      %v3228 = vld [vmem:[%s5 + $0x1f0] sm:$0xff]
      %v3229 = vld [vmem:[%s5 + $0x1f8] sm:$0xff]
      %v3230 = vld [vmem:[%s6] sm:$0xf]
      %v3232 = vlaneseq
      %v3233 = vshrl.u32 %v3232, 7
      %v3234 = vsub.s32 0, %v3233
      %v3235 = vrot.slane %v3230, %v3234
      %v3236 = vlaneseq
      %v3237 = vshrl.u32 %v3236, 7
      %v3238 = vsub.s32 1, %v3237
      %v3239 = vrot.slane %v3230, %v3238
      %v3240 = vlaneseq
      %v3241 = vshrl.u32 %v3240, 7
      %v3242 = vsub.s32 2, %v3241
      %v3243 = vrot.slane %v3230, %v3242
      %v3244 = vlaneseq
      %v3245 = vshrl.u32 %v3244, 7
      %v3246 = vsub.s32 3, %v3245
      %v3247 = vrot.slane %v3230, %v3246
      %v3316 = vunpack.c.l.b16 %v3166
      %v3317 = vunpack.c.h.b16 %v3166
      %v3318 = vunpack.c.l.b16 %v3167
      %v3319 = vunpack.c.h.b16 %v3167
      %v3320 = vunpack.c.l.b16 %v3168
      %v3321 = vunpack.c.h.b16 %v3168
      %v3322 = vunpack.c.l.b16 %v3169
      %v3323 = vunpack.c.h.b16 %v3169
      %v3324 = vunpack.c.l.b16 %v3170
      %v3325 = vunpack.c.h.b16 %v3170
      %v3326 = vunpack.c.l.b16 %v3171
      %v3327 = vunpack.c.h.b16 %v3171
      %v3328 = vunpack.c.l.b16 %v3172
      %v3329 = vunpack.c.h.b16 %v3172
      %v3330 = vunpack.c.l.b16 %v3173
      %v3331 = vunpack.c.h.b16 %v3173
      %v3332 = vunpack.c.l.b16 %v3174
      %v3333 = vunpack.c.h.b16 %v3174
      %v3334 = vunpack.c.l.b16 %v3175
      %v3335 = vunpack.c.h.b16 %v3175
      %v3336 = vunpack.c.l.b16 %v3176
      %v3337 = vunpack.c.h.b16 %v3176
      %v3338 = vunpack.c.l.b16 %v3177
      %v3339 = vunpack.c.h.b16 %v3177
      %v3340 = vunpack.c.l.b16 %v3178
      %v3341 = vunpack.c.h.b16 %v3178
      %v3342 = vunpack.c.l.b16 %v3179
      %v3343 = vunpack.c.h.b16 %v3179
      %v3344 = vunpack.c.l.b16 %v3180
      %v3345 = vunpack.c.h.b16 %v3180
      %v3346 = vunpack.c.l.b16 %v3181
      %v3347 = vunpack.c.h.b16 %v3181
      %v3348 = vunpack.c.l.b16 %v3182
      %v3349 = vunpack.c.h.b16 %v3182
      %v3350 = vunpack.c.l.b16 %v3183
      %v3351 = vunpack.c.h.b16 %v3183
      %v3352 = vunpack.c.l.b16 %v3184
      %v3353 = vunpack.c.h.b16 %v3184
      %v3354 = vunpack.c.l.b16 %v3185
      %v3355 = vunpack.c.h.b16 %v3185
      %v3356 = vunpack.c.l.b16 %v3186
      %v3357 = vunpack.c.h.b16 %v3186
      %v3358 = vunpack.c.l.b16 %v3187
      %v3359 = vunpack.c.h.b16 %v3187
      %v3360 = vunpack.c.l.b16 %v3188
      %v3361 = vunpack.c.h.b16 %v3188
      %v3362 = vunpack.c.l.b16 %v3189
      %v3363 = vunpack.c.h.b16 %v3189
      %v3364 = vunpack.c.l.b16 %v3190
      %v3365 = vunpack.c.h.b16 %v3190
      %v3366 = vunpack.c.l.b16 %v3191
      %v3367 = vunpack.c.h.b16 %v3191
      %v3368 = vunpack.c.l.b16 %v3192
      %v3369 = vunpack.c.h.b16 %v3192
      %v3370 = vunpack.c.l.b16 %v3193
      %v3371 = vunpack.c.h.b16 %v3193
      %v3372 = vunpack.c.l.b16 %v3194
      %v3373 = vunpack.c.h.b16 %v3194
      %v3374 = vunpack.c.l.b16 %v3195
      %v3375 = vunpack.c.h.b16 %v3195
      %v3376 = vunpack.c.l.b16 %v3196
      %v3377 = vunpack.c.h.b16 %v3196
      %v3378 = vunpack.c.l.b16 %v3197
      %v3379 = vunpack.c.h.b16 %v3197
      %v3380 = vunpack.c.l.b16 %v3198
      %v3381 = vunpack.c.h.b16 %v3198
      %v3382 = vunpack.c.l.b16 %v3199
      %v3383 = vunpack.c.h.b16 %v3199
      %v3384 = vunpack.c.l.b16 %v3200
      %v3385 = vunpack.c.h.b16 %v3200
      %v3386 = vunpack.c.l.b16 %v3201
      %v3387 = vunpack.c.h.b16 %v3201
      %v3388 = vunpack.c.l.b16 %v3202
      %v3389 = vunpack.c.h.b16 %v3202
      %v3390 = vunpack.c.l.b16 %v3203
      %v3391 = vunpack.c.h.b16 %v3203
      %v3392 = vunpack.c.l.b16 %v3204
      %v3393 = vunpack.c.h.b16 %v3204
      %v3394 = vunpack.c.l.b16 %v3205
      %v3395 = vunpack.c.h.b16 %v3205
      %v3396 = vunpack.c.l.b16 %v3206
      %v3397 = vunpack.c.h.b16 %v3206
      %v3398 = vunpack.c.l.b16 %v3207
      %v3399 = vunpack.c.h.b16 %v3207
      %v3400 = vunpack.c.l.b16 %v3208
      %v3401 = vunpack.c.h.b16 %v3208
      %v3402 = vunpack.c.l.b16 %v3209
      %v3403 = vunpack.c.h.b16 %v3209
      %v3404 = vunpack.c.l.b16 %v3210
      %v3405 = vunpack.c.h.b16 %v3210
      %v3406 = vunpack.c.l.b16 %v3211
      %v3407 = vunpack.c.h.b16 %v3211
      %v3408 = vunpack.c.l.b16 %v3212
      %v3409 = vunpack.c.h.b16 %v3212
      %v3410 = vunpack.c.l.b16 %v3213
      %v3411 = vunpack.c.h.b16 %v3213
      %v3412 = vunpack.c.l.b16 %v3214
      %v3413 = vunpack.c.h.b16 %v3214
      %v3414 = vunpack.c.l.b16 %v3215
      %v3415 = vunpack.c.h.b16 %v3215
      %v3416 = vunpack.c.l.b16 %v3216
      %v3417 = vunpack.c.h.b16 %v3216
      %v3418 = vunpack.c.l.b16 %v3217
      %v3419 = vunpack.c.h.b16 %v3217
      %v3420 = vunpack.c.l.b16 %v3218
      %v3421 = vunpack.c.h.b16 %v3218
      %v3422 = vunpack.c.l.b16 %v3219
      %v3423 = vunpack.c.h.b16 %v3219
      %v3424 = vunpack.c.l.b16 %v3220
      %v3425 = vunpack.c.h.b16 %v3220
      %v3426 = vunpack.c.l.b16 %v3221
      %v3427 = vunpack.c.h.b16 %v3221
      %v3428 = vunpack.c.l.b16 %v3222
      %v3429 = vunpack.c.h.b16 %v3222
      %v3430 = vunpack.c.l.b16 %v3223
      %v3431 = vunpack.c.h.b16 %v3223
      %v3432 = vunpack.c.l.b16 %v3224
      %v3433 = vunpack.c.h.b16 %v3224
      %v3434 = vunpack.c.l.b16 %v3225
      %v3435 = vunpack.c.h.b16 %v3225
      %v3436 = vunpack.c.l.b16 %v3226
      %v3437 = vunpack.c.h.b16 %v3226
      %v3438 = vunpack.c.l.b16 %v3227
      %v3439 = vunpack.c.h.b16 %v3227
      %v3440 = vunpack.c.l.b16 %v3228
      %v3441 = vunpack.c.h.b16 %v3228
      %v3442 = vunpack.c.l.b16 %v3229
      %v3443 = vunpack.c.h.b16 %v3229
      %v3444 = vpack.c.b16 %v3320, %v3316
      %v3445 = vpack.c.b16 %v3321, %v3317
      %v3446 = vpack.c.b16 %v3322, %v3318
      %v3447 = vpack.c.b16 %v3323, %v3319
      %v3448 = vpack.c.b16 %v3328, %v3324
      %v3449 = vpack.c.b16 %v3329, %v3325
      %v3450 = vpack.c.b16 %v3330, %v3326
      %v3451 = vpack.c.b16 %v3331, %v3327
      %v3452 = vpack.c.b16 %v3336, %v3332
      %v3453 = vpack.c.b16 %v3337, %v3333
      %v3454 = vpack.c.b16 %v3338, %v3334
      %v3455 = vpack.c.b16 %v3339, %v3335
      %v3456 = vpack.c.b16 %v3344, %v3340
      %v3457 = vpack.c.b16 %v3345, %v3341
      %v3458 = vpack.c.b16 %v3346, %v3342
      %v3459 = vpack.c.b16 %v3347, %v3343
      %v3460 = vpack.c.b16 %v3352, %v3348
      %v3461 = vpack.c.b16 %v3353, %v3349
      %v3462 = vpack.c.b16 %v3354, %v3350
      %v3463 = vpack.c.b16 %v3355, %v3351
      %v3464 = vpack.c.b16 %v3360, %v3356
      %v3465 = vpack.c.b16 %v3361, %v3357
      %v3466 = vpack.c.b16 %v3362, %v3358
      %v3467 = vpack.c.b16 %v3363, %v3359
      %v3468 = vpack.c.b16 %v3368, %v3364
      %v3469 = vpack.c.b16 %v3369, %v3365
      %v3470 = vpack.c.b16 %v3370, %v3366
      %v3471 = vpack.c.b16 %v3371, %v3367
      %v3472 = vpack.c.b16 %v3376, %v3372
      %v3473 = vpack.c.b16 %v3377, %v3373
      %v3474 = vpack.c.b16 %v3378, %v3374
      %v3475 = vpack.c.b16 %v3379, %v3375
      %v3476 = vpack.c.b16 %v3384, %v3380
      %v3477 = vpack.c.b16 %v3385, %v3381
      %v3478 = vpack.c.b16 %v3386, %v3382
      %v3479 = vpack.c.b16 %v3387, %v3383
      %v3480 = vpack.c.b16 %v3392, %v3388
      %v3481 = vpack.c.b16 %v3393, %v3389
      %v3482 = vpack.c.b16 %v3394, %v3390
      %v3483 = vpack.c.b16 %v3395, %v3391
      %v3484 = vpack.c.b16 %v3400, %v3396
      %v3485 = vpack.c.b16 %v3401, %v3397
      %v3486 = vpack.c.b16 %v3402, %v3398
      %v3487 = vpack.c.b16 %v3403, %v3399
      %v3488 = vpack.c.b16 %v3408, %v3404
      %v3489 = vpack.c.b16 %v3409, %v3405
      %v3490 = vpack.c.b16 %v3410, %v3406
      %v3491 = vpack.c.b16 %v3411, %v3407
      %v3492 = vpack.c.b16 %v3416, %v3412
      %v3493 = vpack.c.b16 %v3417, %v3413
      %v3494 = vpack.c.b16 %v3418, %v3414
      %v3495 = vpack.c.b16 %v3419, %v3415
      %v3496 = vpack.c.b16 %v3424, %v3420
      %v3497 = vpack.c.b16 %v3425, %v3421
      %v3498 = vpack.c.b16 %v3426, %v3422
      %v3499 = vpack.c.b16 %v3427, %v3423
      %v3500 = vpack.c.b16 %v3432, %v3428
      %v3501 = vpack.c.b16 %v3433, %v3429
      %v3502 = vpack.c.b16 %v3434, %v3430
      %v3503 = vpack.c.b16 %v3435, %v3431
      %v3504 = vpack.c.b16 %v3440, %v3436
      %v3505 = vpack.c.b16 %v3441, %v3437
      %v3506 = vpack.c.b16 %v3442, %v3438
      %v3507 = vpack.c.b16 %v3443, %v3439
      %3572 = vmatprep.subr.bf16.mxu0 %v3445
      %3573 = vmatpush1.bf16.msra.mxu0 %v3444
      %3574 = vmatprep.subr.bf16.mxu0 %v3449
      %3575 = vmatpush1.bf16.msra.mxu0 %v3448
      %3576 = vmatprep.subr.bf16.mxu0 %v3453
      %3577 = vmatpush1.bf16.msra.mxu0 %v3452
      %3578 = vmatprep.subr.bf16.mxu0 %v3457
      %3579 = vmatpush1.bf16.msra.mxu0 %v3456
      %3580 = vmatprep.subr.bf16.mxu0 %v3461
      %3581 = vmatpush1.bf16.msra.mxu0 %v3460
      %3582 = vmatprep.subr.bf16.mxu0 %v3465
      %3583 = vmatpush1.bf16.msra.mxu0 %v3464
      %3584 = vmatprep.subr.bf16.mxu0 %v3469
      %3585 = vmatpush1.bf16.msra.mxu0 %v3468
      %3586 = vmatprep.subr.bf16.mxu0 %v3473
      %3587 = vmatpush1.bf16.msra.mxu0 %v3472
      %3588 = vmatprep.subr.bf16.mxu0 %v3477
      %3589 = vmatpush1.bf16.msra.mxu0 %v3476
      %3590 = vmatprep.subr.bf16.mxu0 %v3481
      %3591 = vmatpush1.bf16.msra.mxu0 %v3480
      %3592 = vmatprep.subr.bf16.mxu0 %v3485
      %3593 = vmatpush1.bf16.msra.mxu0 %v3484
      %3594 = vmatprep.subr.bf16.mxu0 %v3489
      %3595 = vmatpush1.bf16.msra.mxu0 %v3488
      %3596 = vmatprep.subr.bf16.mxu0 %v3493
      %3597 = vmatpush1.bf16.msra.mxu0 %v3492
      %3598 = vmatprep.subr.bf16.mxu0 %v3497
      %3599 = vmatpush1.bf16.msra.mxu0 %v3496
      %3600 = vmatprep.subr.bf16.mxu0 %v3501
      %3601 = vmatpush1.bf16.msra.mxu0 %v3500
      %3602 = vmatprep.subr.bf16.mxu0 %v3505
      %3603 = vmatpush1.bf16.msra.mxu0 %v3504
      %3604 = vmatprep.mubr.bf16.mxu0 %v3165
      %3605 = vmatmul.mubr.bf16.gmra.mrb[0].mxu0 %v3164
      %v3606 = vpop.f32.mrb[0].mxu0
      %v3607 = vadd.f32 %v3235, %v3606
      %v3608 = vpop.f32.mrb[0].mxu0
      %v3609 = vadd.f32 %v3239, %v3608
      %v3610 = vpop.f32.mrb[0].mxu0
      %v3611 = vpop.f32.mrb[0].mxu0
      %3612 = vdwg.mxu0
      %3613 = vmatprep.subr.bf16.mxu0 %v3447
      %3614 = vmatpush1.bf16.msra.mxu0 %v3446
      %3615 = vmatprep.subr.bf16.mxu0 %v3451
      %3616 = vmatpush1.bf16.msra.mxu0 %v3450
      %3617 = vmatprep.subr.bf16.mxu0 %v3455
      %3618 = vmatpush1.bf16.msra.mxu0 %v3454
      %3619 = vmatprep.subr.bf16.mxu0 %v3459
      %3620 = vmatpush1.bf16.msra.mxu0 %v3458
      %3621 = vmatprep.subr.bf16.mxu0 %v3463
      %3622 = vmatpush1.bf16.msra.mxu0 %v3462
      %3623 = vmatprep.subr.bf16.mxu0 %v3467
      %3624 = vmatpush1.bf16.msra.mxu0 %v3466
      %3625 = vmatprep.subr.bf16.mxu0 %v3471
      %3626 = vmatpush1.bf16.msra.mxu0 %v3470
      %3627 = vmatprep.subr.bf16.mxu0 %v3475
      %3628 = vmatpush1.bf16.msra.mxu0 %v3474
      %3629 = vmatprep.subr.bf16.mxu0 %v3479
      %3630 = vmatpush1.bf16.msra.mxu0 %v3478
      %3631 = vmatprep.subr.bf16.mxu0 %v3483
      %3632 = vmatpush1.bf16.msra.mxu0 %v3482
      %3633 = vmatprep.subr.bf16.mxu0 %v3487
      %3634 = vmatpush1.bf16.msra.mxu0 %v3486
      %3635 = vmatprep.subr.bf16.mxu0 %v3491
      %3636 = vmatpush1.bf16.msra.mxu0 %v3490
      %3637 = vmatprep.subr.bf16.mxu0 %v3495
      %3638 = vmatpush1.bf16.msra.mxu0 %v3494
      %3639 = vmatprep.subr.bf16.mxu0 %v3499
      %3640 = vmatpush1.bf16.msra.mxu0 %v3498
      %3641 = vmatprep.subr.bf16.mxu0 %v3503
      %3642 = vmatpush1.bf16.msra.mxu0 %v3502
      %3643 = vmatprep.subr.bf16.mxu0 %v3507
      %3644 = vmatpush1.bf16.msra.mxu0 %v3506
      %3645 = vmatprep.mubr.bf16.mxu0 %v3165
      %3646 = vmatmul.mubr.bf16.gmra.mrb[0].mxu0 %v3164
      %v3647 = vpop.f32.mrb[0].mxu0
      %v3648 = vadd.f32 %v3243, %v3647
      %v3649 = vpop.f32.mrb[0].mxu0
      %v3650 = vadd.f32 %v3247, %v3649
      %v3651 = vpop.f32.mrb[0].mxu0
      %v3652 = vpop.f32.mrb[0].mxu0
      %3653 = vdwg.mxu0
      %v3654 = vxor.u32 %v3607, 2147483648
      %v3655 = vmul.f32 %v3654, 1.442695
      %v3656 = vpow.pop %v3655
      %v3657 = vadd.f32 %v3656, 1.0
      %v3658 = vrcp.pop %v3657
      %v3659 = vmul.f32 1.0, %v3658
      %v3660 = vxor.u32 %v3609, 2147483648
      %v3661 = vmul.f32 %v3660, 1.442695
      %v3662 = vpow.pop %v3661
      %v3663 = vadd.f32 %v3662, 1.0
      %v3664 = vrcp.pop %v3663
      %v3665 = vmul.f32 1.0, %v3664
      %v3666 = vtanh.pop %v3648
      %v3667 = vxor.u32 %v3650, 2147483648
      %v3668 = vmul.f32 %v3667, 1.442695
      %v3669 = vpow.pop %v3668
      %v3670 = vadd.f32 %v3669, 1.0
      %v3671 = vrcp.pop %v3670
      %v3672 = vmul.f32 1.0, %v3671
      %v3673 = vmul.f32 %v3665, %v3163
      %v3674 = vmul.f32 %v3659, %v3666
      %v3675 = vadd.f32 %v3673, %v3674
      %v3676 = vtanh.pop %v3675
      %v3677 = vmul.f32 %v3672, %v3676
      %3678 = vst [vmem:[%s1923] sm:$0xff] %v3677
      %3679 = vst [vmem:[%s1925] sm:$0xff] %v3675
      %v3680 = vpack.c.bf16 %v3677, %v3677
      %v3681 = vld [vmem:[%s7] sm:$0xf]
      %v3682 = vld [vmem:[%s7 + $0x4] sm:$0xf]
      %v3683 = vld [vmem:[%s7 + $0x8] sm:$0xf]
      %v3684 = vld [vmem:[%s7 + $0xc] sm:$0xf]
      %v3685 = vld [vmem:[%s7 + $0x10] sm:$0xf]
      %v3686 = vld [vmem:[%s7 + $0x14] sm:$0xf]
      %v3687 = vld [vmem:[%s7 + $0x18] sm:$0xf]
      %v3688 = vld [vmem:[%s7 + $0x1c] sm:$0xf]
      %v3689 = vld [vmem:[%s7 + $0x20] sm:$0xf]
      %v3690 = vld [vmem:[%s7 + $0x24] sm:$0xf]
      %v3691 = vld [vmem:[%s7 + $0x28] sm:$0xf]
      %v3692 = vld [vmem:[%s7 + $0x2c] sm:$0xf]
      %v3693 = vld [vmem:[%s7 + $0x30] sm:$0xf]
      %v3694 = vld [vmem:[%s7 + $0x34] sm:$0xf]
      %v3695 = vld [vmem:[%s7 + $0x38] sm:$0xf]
      %v3696 = vld [vmem:[%s7 + $0x3c] sm:$0xf]
      %v3697 = vld [vmem:[%s8] sm:$0x1]
      %v3699 = vlaneseq
      %v3700 = vshrl.u32 %v3699, 7
      %v3701 = vsub.s32 0, %v3700
      %v3702 = vrot.slane %v3697, %v3701
      %v3720 = vunpack.c.l.b16 %v3681
      %v3721 = vunpack.c.l.b16 %v3682
      %v3722 = vunpack.c.l.b16 %v3683
      %v3723 = vunpack.c.l.b16 %v3684
      %v3724 = vunpack.c.l.b16 %v3685
      %v3725 = vunpack.c.l.b16 %v3686
      %v3726 = vunpack.c.l.b16 %v3687
      %v3727 = vunpack.c.l.b16 %v3688
      %v3728 = vunpack.c.l.b16 %v3689
      %v3729 = vunpack.c.l.b16 %v3690
      %v3730 = vunpack.c.l.b16 %v3691
      %v3731 = vunpack.c.l.b16 %v3692
      %v3732 = vunpack.c.l.b16 %v3693
      %v3733 = vunpack.c.l.b16 %v3694
      %v3734 = vunpack.c.l.b16 %v3695
      %v3735 = vunpack.c.l.b16 %v3696
      %v3736 = vpack.c.b16 %v3721, %v3720
      %v3737 = vpack.c.b16 %v3723, %v3722
      %v3738 = vpack.c.b16 %v3725, %v3724
      %v3739 = vpack.c.b16 %v3727, %v3726
      %v3740 = vpack.c.b16 %v3729, %v3728
      %v3741 = vpack.c.b16 %v3731, %v3730
      %v3742 = vpack.c.b16 %v3733, %v3732
      %v3743 = vpack.c.b16 %v3735, %v3734
      %3752 = vmatprep.subr.bf16.mxu0 0
      %3753 = vmatpush1.bf16.msra.mxu0 %v3736
      %3754 = vmatprep.subr.bf16.mxu0 0
      %3755 = vmatpush1.bf16.msra.mxu0 %v3737
      %3756 = vmatprep.subr.bf16.mxu0 0
      %3757 = vmatpush1.bf16.msra.mxu0 %v3738
      %3758 = vmatprep.subr.bf16.mxu0 0
      %3759 = vmatpush1.bf16.msra.mxu0 %v3739
      %3760 = vmatprep.subr.bf16.mxu0 0
      %3761 = vmatpush1.bf16.msra.mxu0 %v3740
      %3762 = vmatprep.subr.bf16.mxu0 0
      %3763 = vmatpush1.bf16.msra.mxu0 %v3741
      %3764 = vmatprep.subr.bf16.mxu0 0
      %3765 = vmatpush1.bf16.msra.mxu0 %v3742
      %3766 = vmatprep.subr.bf16.mxu0 0
      %3767 = vmatpush1.bf16.msra.mxu0 %v3743
      %3768 = vmatprep.subr.bf16.mxu0 0
      %3769 = vmatpush1.bf16.msra.mxu0 0
      %3770 = vmatprep.subr.bf16.mxu0 0
      %3771 = vmatpush1.bf16.msra.mxu0 0
      %3772 = vmatprep.subr.bf16.mxu0 0
      %3773 = vmatpush1.bf16.msra.mxu0 0
      %3774 = vmatprep.subr.bf16.mxu0 0
      %3775 = vmatpush1.bf16.msra.mxu0 0
      %3776 = vmatprep.subr.bf16.mxu0 0
      %3777 = vmatpush1.bf16.msra.mxu0 0
      %3778 = vmatprep.subr.bf16.mxu0 0
      %3779 = vmatpush1.bf16.msra.mxu0 0
      %3780 = vmatprep.subr.bf16.mxu0 0
      %3781 = vmatpush1.bf16.msra.mxu0 0
      %3782 = vmatprep.subr.bf16.mxu0 0
      %3783 = vmatpush1.bf16.msra.mxu0 0
      %3784 = vmatprep.mubr.bf16.mxu0 0
      %3785 = vmatmul.mubr.bf16.gmra.mrb[0].mxu0 %v3680
      %v3786 = vpop.f32.mrb[0].mxu0
      %v3787 = vadd.f32 %v3702, %v3786
      %v3788 = vpop.f32.mrb[0].mxu0
      %v3789 = vpop.f32.mrb[0].mxu0
      %v3790 = vpop.f32.mrb[0].mxu0
      %3791 = vdwg.mxu0
      %s3792 = scalar_lea.vmem %s341, 8
      %3793 = vst [vmem:[%s3792] sm:$0xff] %v3787
      %v3794 = vsel %vm2558, %v3787, -inf
      %3795 = vmax.xlane.f32.xlu0 %v3794
      %v3796 = vpop.xlane.xlu0 %3795
      %vm3797 = vcmp.ge.f32.partialorder %v3787, %v3796
      %v3798 = vsel %vm3797, %v2557, 128
      %v3799 = vsel %vm2558, %v3798, 2147483647
      %v3800 = vand.u32 %v3799, 65535
      %v3801 = vshra.s32 %v3799, 16
      %v3802 = vcvt.s32.f32 %v3800
      %v3803 = vcvt.s32.f32 %v3801
      %3804 = vmin.xlane.f32.xlu0 %v3803
      %v3805 = vpop.xlane.xlu0 %3804
      %vm3806 = vcmp.eq.f32.partialorder %v3803, %v3805
      %v3807 = vsel %vm3806, %v3802, inf
      %3808 = vmin.xlane.f32.xlu0 %v3807
      %v3809 = vpop.xlane.xlu0 %3808
      %v3810 = vcvt.f32.s32 %v3809
      %v3811 = vcvt.f32.s32 %v3805
      %v3812 = vshll.u32 %v3811, 16
      %v3813 = vadd.s32 %v3812, %v3810
      %v3814 = vrot.slane %v3813, 4
      %vm3815 = vcmp.lt.s32.totalorder %v3813, %v3814
      %v3816 = vsel %vm3815, %v3813, %v3814
      %v3817 = vrot.slane %v3816, 2
      %vm3818 = vcmp.lt.s32.totalorder %v3816, %v3817
      %v3819 = vsel %vm3818, %v3816, %v3817
      %v3820 = vrot.slane %v3819, 1
      %vm3821 = vcmp.lt.s32.totalorder %v3819, %v3820
      %v3822 = vsel %vm3821, %v3819, %v3820
      %s3823 = vtos %v3822
      %p3824 = scmp.lt.s32.totalorder %s3823, 127
      %s3825 = scalar_select %p3824, %s3823, 127
      %s3826 = scalar_lea.vmem %s9, %s3825
      %v3827 = vld [vmem:[%s3826] sm:$0x1]
      %3828 = vst [vmem:[#allocation4] sm:$0x1] %v3827
      %v3829 = vsel %vm2594, %v3787, -inf
      %3830 = vmax.xlane.f32.xlu0 %v3829
      %v3831 = vpop.xlane.xlu0 %3830
      %vm3832 = vcmp.ge.f32.partialorder %v3787, %v3831
      %v3833 = vsel %vm3832, %v2557, 128
      %v3834 = vsel %vm2594, %v3833, 2147483647
      %v3835 = vand.u32 %v3834, 65535
      %v3836 = vshra.s32 %v3834, 16
      %v3837 = vcvt.s32.f32 %v3835
      %v3838 = vcvt.s32.f32 %v3836
      %3839 = vmin.xlane.f32.xlu0 %v3838
      %v3840 = vpop.xlane.xlu0 %3839
      %vm3841 = vcmp.eq.f32.partialorder %v3838, %v3840
      %v3842 = vsel %vm3841, %v3837, inf
      %3843 = vmin.xlane.f32.xlu0 %v3842
      %v3844 = vpop.xlane.xlu0 %3843
      %v3845 = vcvt.f32.s32 %v3844
      %v3846 = vcvt.f32.s32 %v3840
      %v3847 = vshll.u32 %v3846, 16
      %v3848 = vadd.s32 %v3847, %v3845
      %v3849 = vrot.slane %v3848, 4
      %vm3850 = vcmp.lt.s32.totalorder %v3848, %v3849
      %v3851 = vsel %vm3850, %v3848, %v3849
      %v3852 = vrot.slane %v3851, 2
      %vm3853 = vcmp.lt.s32.totalorder %v3851, %v3852
      %v3854 = vsel %vm3853, %v3851, %v3852
      %v3855 = vrot.slane %v3854, 1
      %vm3856 = vcmp.lt.s32.totalorder %v3854, %v3855
      %v3857 = vsel %vm3856, %v3854, %v3855
      %s3858 = vtos %v3857
      %p3859 = scmp.lt.s32.totalorder %s3858, 127
      %s3860 = scalar_select %p3859, %s3858, 127
      %s3861 = scalar_lea.vmem %s9, %s3860
      %v3862 = vld [vmem:[%s3861] sm:$0x1]
      %3863 = vst [vmem:[#allocation4 + $0x1] sm:$0x1] %v3862
      %s3864 = sadd.s32 %s1391, 2
      %p3865 = scmp.gt.s32.totalorder %s2630, 0
      %s3866 = scalar_select %p3865, %s2630, 0
      %s3867 = sld [smem:[#allocation6 + %s3866]]
      %p3868 = scmp.gt.s32.totalorder %s3867, 0
      %p3869 = scmp.eq.s32.totalorder %s3864, 0
      %p3870 = por %p3869, %p3868
      // Predicated region
      $region69: #{_lambda_.3} parent=55 // pred_check
        %p3871 = pneg %p3870
      $region70: #{_lambda_.3} parent=55 // pred_check_branch
        %3873 = sbr.rel (%p3871) target = $region72
      $region71: #{_lambda_.3} parent=55 // pred_region
        %s3874 = scalar_lea.vmem %s335, 16
        %v3875 = vld [vmem:[%s3874] sm:$0xff]
        %3876 = vst [vmem:[#allocation4] sm:$0xff] %v3875
      $region72: #{_lambda_.3} parent=55 // pred_fallthru
        _
      %v3877 = vld [vmem:[#allocation4] sm:$0xff]
      %v3878 = vld [vmem:[#allocation2] sm:$0xff]
      %v3879 = vld [vmem:[#allocation3] sm:$0xff]
      %v3880 = vpack.c.bf16 %v3877, %v3877
      %v3881 = vpack.c.bf16 %v3878, %v3878
      %v3882 = vld [vmem:[%s3] sm:$0xff]
      %v3883 = vld [vmem:[%s3 + $0x8] sm:$0xff]
      %v3884 = vld [vmem:[%s3 + $0x10] sm:$0xff]
      %v3885 = vld [vmem:[%s3 + $0x18] sm:$0xff]
      %v3886 = vld [vmem:[%s3 + $0x20] sm:$0xff]
      %v3887 = vld [vmem:[%s3 + $0x28] sm:$0xff]
      %v3888 = vld [vmem:[%s3 + $0x30] sm:$0xff]
      %v3889 = vld [vmem:[%s3 + $0x38] sm:$0xff]
      %v3890 = vld [vmem:[%s3 + $0x40] sm:$0xff]
      %v3891 = vld [vmem:[%s3 + $0x48] sm:$0xff]
      %v3892 = vld [vmem:[%s3 + $0x50] sm:$0xff]
      %v3893 = vld [vmem:[%s3 + $0x58] sm:$0xff]
      %v3894 = vld [vmem:[%s3 + $0x60] sm:$0xff]
      %v3895 = vld [vmem:[%s3 + $0x68] sm:$0xff]
      %v3896 = vld [vmem:[%s3 + $0x70] sm:$0xff]
      %v3897 = vld [vmem:[%s3 + $0x78] sm:$0xff]
      %v3898 = vld [vmem:[%s3 + $0x80] sm:$0xff]
      %v3899 = vld [vmem:[%s3 + $0x88] sm:$0xff]
      %v3900 = vld [vmem:[%s3 + $0x90] sm:$0xff]
      %v3901 = vld [vmem:[%s3 + $0x98] sm:$0xff]
      %v3902 = vld [vmem:[%s3 + $0xa0] sm:$0xff]
      %v3903 = vld [vmem:[%s3 + $0xa8] sm:$0xff]
      %v3904 = vld [vmem:[%s3 + $0xb0] sm:$0xff]
      %v3905 = vld [vmem:[%s3 + $0xb8] sm:$0xff]
      %v3906 = vld [vmem:[%s3 + $0xc0] sm:$0xff]
      %v3907 = vld [vmem:[%s3 + $0xc8] sm:$0xff]
      %v3908 = vld [vmem:[%s3 + $0xd0] sm:$0xff]
      %v3909 = vld [vmem:[%s3 + $0xd8] sm:$0xff]
      %v3910 = vld [vmem:[%s3 + $0xe0] sm:$0xff]
      %v3911 = vld [vmem:[%s3 + $0xe8] sm:$0xff]
      %v3912 = vld [vmem:[%s3 + $0xf0] sm:$0xff]
      %v3913 = vld [vmem:[%s3 + $0xf8] sm:$0xff]
      %v3914 = vld [vmem:[%s3 + $0x100] sm:$0xff]
      %v3915 = vld [vmem:[%s3 + $0x108] sm:$0xff]
      %v3916 = vld [vmem:[%s3 + $0x110] sm:$0xff]
      %v3917 = vld [vmem:[%s3 + $0x118] sm:$0xff]
      %v3918 = vld [vmem:[%s3 + $0x120] sm:$0xff]
      %v3919 = vld [vmem:[%s3 + $0x128] sm:$0xff]
      %v3920 = vld [vmem:[%s3 + $0x130] sm:$0xff]
      %v3921 = vld [vmem:[%s3 + $0x138] sm:$0xff]
      %v3922 = vld [vmem:[%s3 + $0x140] sm:$0xff]
      %v3923 = vld [vmem:[%s3 + $0x148] sm:$0xff]
      %v3924 = vld [vmem:[%s3 + $0x150] sm:$0xff]
      %v3925 = vld [vmem:[%s3 + $0x158] sm:$0xff]
      %v3926 = vld [vmem:[%s3 + $0x160] sm:$0xff]
      %v3927 = vld [vmem:[%s3 + $0x168] sm:$0xff]
      %v3928 = vld [vmem:[%s3 + $0x170] sm:$0xff]
      %v3929 = vld [vmem:[%s3 + $0x178] sm:$0xff]
      %v3930 = vld [vmem:[%s3 + $0x180] sm:$0xff]
      %v3931 = vld [vmem:[%s3 + $0x188] sm:$0xff]
      %v3932 = vld [vmem:[%s3 + $0x190] sm:$0xff]
      %v3933 = vld [vmem:[%s3 + $0x198] sm:$0xff]
      %v3934 = vld [vmem:[%s3 + $0x1a0] sm:$0xff]
      %v3935 = vld [vmem:[%s3 + $0x1a8] sm:$0xff]
      %v3936 = vld [vmem:[%s3 + $0x1b0] sm:$0xff]
      %v3937 = vld [vmem:[%s3 + $0x1b8] sm:$0xff]
      %v3938 = vld [vmem:[%s3 + $0x1c0] sm:$0xff]
      %v3939 = vld [vmem:[%s3 + $0x1c8] sm:$0xff]
      %v3940 = vld [vmem:[%s3 + $0x1d0] sm:$0xff]
      %v3941 = vld [vmem:[%s3 + $0x1d8] sm:$0xff]
      %v3942 = vld [vmem:[%s3 + $0x1e0] sm:$0xff]
      %v3943 = vld [vmem:[%s3 + $0x1e8] sm:$0xff]
      %v3944 = vld [vmem:[%s3 + $0x1f0] sm:$0xff]
      %v3945 = vld [vmem:[%s3 + $0x1f8] sm:$0xff]
      %v3946 = vld [vmem:[%s4] sm:$0xf]
      %v3948 = vlaneseq
      %v3949 = vshrl.u32 %v3948, 7
      %v3950 = vsub.s32 0, %v3949
      %v3951 = vrot.slane %v3946, %v3950
      %v3952 = vlaneseq
      %v3953 = vshrl.u32 %v3952, 7
      %v3954 = vsub.s32 1, %v3953
      %v3955 = vrot.slane %v3946, %v3954
      %v3956 = vlaneseq
      %v3957 = vshrl.u32 %v3956, 7
      %v3958 = vsub.s32 2, %v3957
      %v3959 = vrot.slane %v3946, %v3958
      %v3960 = vlaneseq
      %v3961 = vshrl.u32 %v3960, 7
      %v3962 = vsub.s32 3, %v3961
      %v3963 = vrot.slane %v3946, %v3962
      %v4032 = vunpack.c.l.b16 %v3882
      %v4033 = vunpack.c.h.b16 %v3882
      %v4034 = vunpack.c.l.b16 %v3883
      %v4035 = vunpack.c.h.b16 %v3883
      %v4036 = vunpack.c.l.b16 %v3884
      %v4037 = vunpack.c.h.b16 %v3884
      %v4038 = vunpack.c.l.b16 %v3885
      %v4039 = vunpack.c.h.b16 %v3885
      %v4040 = vunpack.c.l.b16 %v3886
      %v4041 = vunpack.c.h.b16 %v3886
      %v4042 = vunpack.c.l.b16 %v3887
      %v4043 = vunpack.c.h.b16 %v3887
      %v4044 = vunpack.c.l.b16 %v3888
      %v4045 = vunpack.c.h.b16 %v3888
      %v4046 = vunpack.c.l.b16 %v3889
      %v4047 = vunpack.c.h.b16 %v3889
      %v4048 = vunpack.c.l.b16 %v3890
      %v4049 = vunpack.c.h.b16 %v3890
      %v4050 = vunpack.c.l.b16 %v3891
      %v4051 = vunpack.c.h.b16 %v3891
      %v4052 = vunpack.c.l.b16 %v3892
      %v4053 = vunpack.c.h.b16 %v3892
      %v4054 = vunpack.c.l.b16 %v3893
      %v4055 = vunpack.c.h.b16 %v3893
      %v4056 = vunpack.c.l.b16 %v3894
      %v4057 = vunpack.c.h.b16 %v3894
      %v4058 = vunpack.c.l.b16 %v3895
      %v4059 = vunpack.c.h.b16 %v3895
      %v4060 = vunpack.c.l.b16 %v3896
      %v4061 = vunpack.c.h.b16 %v3896
      %v4062 = vunpack.c.l.b16 %v3897
      %v4063 = vunpack.c.h.b16 %v3897
      %v4064 = vunpack.c.l.b16 %v3898
      %v4065 = vunpack.c.h.b16 %v3898
      %v4066 = vunpack.c.l.b16 %v3899
      %v4067 = vunpack.c.h.b16 %v3899
      %v4068 = vunpack.c.l.b16 %v3900
      %v4069 = vunpack.c.h.b16 %v3900
      %v4070 = vunpack.c.l.b16 %v3901
      %v4071 = vunpack.c.h.b16 %v3901
      %v4072 = vunpack.c.l.b16 %v3902
      %v4073 = vunpack.c.h.b16 %v3902
      %v4074 = vunpack.c.l.b16 %v3903
      %v4075 = vunpack.c.h.b16 %v3903
      %v4076 = vunpack.c.l.b16 %v3904
      %v4077 = vunpack.c.h.b16 %v3904
      %v4078 = vunpack.c.l.b16 %v3905
      %v4079 = vunpack.c.h.b16 %v3905
      %v4080 = vunpack.c.l.b16 %v3906
      %v4081 = vunpack.c.h.b16 %v3906
      %v4082 = vunpack.c.l.b16 %v3907
      %v4083 = vunpack.c.h.b16 %v3907
      %v4084 = vunpack.c.l.b16 %v3908
      %v4085 = vunpack.c.h.b16 %v3908
      %v4086 = vunpack.c.l.b16 %v3909
      %v4087 = vunpack.c.h.b16 %v3909
      %v4088 = vunpack.c.l.b16 %v3910
      %v4089 = vunpack.c.h.b16 %v3910
      %v4090 = vunpack.c.l.b16 %v3911
      %v4091 = vunpack.c.h.b16 %v3911
      %v4092 = vunpack.c.l.b16 %v3912
      %v4093 = vunpack.c.h.b16 %v3912
      %v4094 = vunpack.c.l.b16 %v3913
      %v4095 = vunpack.c.h.b16 %v3913
      %v4096 = vunpack.c.l.b16 %v3914
      %v4097 = vunpack.c.h.b16 %v3914
      %v4098 = vunpack.c.l.b16 %v3915
      %v4099 = vunpack.c.h.b16 %v3915
      %v4100 = vunpack.c.l.b16 %v3916
      %v4101 = vunpack.c.h.b16 %v3916
      %v4102 = vunpack.c.l.b16 %v3917
      %v4103 = vunpack.c.h.b16 %v3917
      %v4104 = vunpack.c.l.b16 %v3918
      %v4105 = vunpack.c.h.b16 %v3918
      %v4106 = vunpack.c.l.b16 %v3919
      %v4107 = vunpack.c.h.b16 %v3919
      %v4108 = vunpack.c.l.b16 %v3920
      %v4109 = vunpack.c.h.b16 %v3920
      %v4110 = vunpack.c.l.b16 %v3921
      %v4111 = vunpack.c.h.b16 %v3921
      %v4112 = vunpack.c.l.b16 %v3922
      %v4113 = vunpack.c.h.b16 %v3922
      %v4114 = vunpack.c.l.b16 %v3923
      %v4115 = vunpack.c.h.b16 %v3923
      %v4116 = vunpack.c.l.b16 %v3924
      %v4117 = vunpack.c.h.b16 %v3924
      %v4118 = vunpack.c.l.b16 %v3925
      %v4119 = vunpack.c.h.b16 %v3925
      %v4120 = vunpack.c.l.b16 %v3926
      %v4121 = vunpack.c.h.b16 %v3926
      %v4122 = vunpack.c.l.b16 %v3927
      %v4123 = vunpack.c.h.b16 %v3927
      %v4124 = vunpack.c.l.b16 %v3928
      %v4125 = vunpack.c.h.b16 %v3928
      %v4126 = vunpack.c.l.b16 %v3929
      %v4127 = vunpack.c.h.b16 %v3929
      %v4128 = vunpack.c.l.b16 %v3930
      %v4129 = vunpack.c.h.b16 %v3930
      %v4130 = vunpack.c.l.b16 %v3931
      %v4131 = vunpack.c.h.b16 %v3931
      %v4132 = vunpack.c.l.b16 %v3932
      %v4133 = vunpack.c.h.b16 %v3932
      %v4134 = vunpack.c.l.b16 %v3933
      %v4135 = vunpack.c.h.b16 %v3933
      %v4136 = vunpack.c.l.b16 %v3934
      %v4137 = vunpack.c.h.b16 %v3934
      %v4138 = vunpack.c.l.b16 %v3935
      %v4139 = vunpack.c.h.b16 %v3935
      %v4140 = vunpack.c.l.b16 %v3936
      %v4141 = vunpack.c.h.b16 %v3936
      %v4142 = vunpack.c.l.b16 %v3937
      %v4143 = vunpack.c.h.b16 %v3937
      %v4144 = vunpack.c.l.b16 %v3938
      %v4145 = vunpack.c.h.b16 %v3938
      %v4146 = vunpack.c.l.b16 %v3939
      %v4147 = vunpack.c.h.b16 %v3939
      %v4148 = vunpack.c.l.b16 %v3940
      %v4149 = vunpack.c.h.b16 %v3940
      %v4150 = vunpack.c.l.b16 %v3941
      %v4151 = vunpack.c.h.b16 %v3941
      %v4152 = vunpack.c.l.b16 %v3942
      %v4153 = vunpack.c.h.b16 %v3942
      %v4154 = vunpack.c.l.b16 %v3943
      %v4155 = vunpack.c.h.b16 %v3943
      %v4156 = vunpack.c.l.b16 %v3944
      %v4157 = vunpack.c.h.b16 %v3944
      %v4158 = vunpack.c.l.b16 %v3945
      %v4159 = vunpack.c.h.b16 %v3945
      %v4160 = vpack.c.b16 %v4036, %v4032
      %v4161 = vpack.c.b16 %v4037, %v4033
      %v4162 = vpack.c.b16 %v4038, %v4034
      %v4163 = vpack.c.b16 %v4039, %v4035
      %v4164 = vpack.c.b16 %v4044, %v4040
      %v4165 = vpack.c.b16 %v4045, %v4041
      %v4166 = vpack.c.b16 %v4046, %v4042
      %v4167 = vpack.c.b16 %v4047, %v4043
      %v4168 = vpack.c.b16 %v4052, %v4048
      %v4169 = vpack.c.b16 %v4053, %v4049
      %v4170 = vpack.c.b16 %v4054, %v4050
      %v4171 = vpack.c.b16 %v4055, %v4051
      %v4172 = vpack.c.b16 %v4060, %v4056
      %v4173 = vpack.c.b16 %v4061, %v4057
      %v4174 = vpack.c.b16 %v4062, %v4058
      %v4175 = vpack.c.b16 %v4063, %v4059
      %v4176 = vpack.c.b16 %v4068, %v4064
      %v4177 = vpack.c.b16 %v4069, %v4065
      %v4178 = vpack.c.b16 %v4070, %v4066
      %v4179 = vpack.c.b16 %v4071, %v4067
      %v4180 = vpack.c.b16 %v4076, %v4072
      %v4181 = vpack.c.b16 %v4077, %v4073
      %v4182 = vpack.c.b16 %v4078, %v4074
      %v4183 = vpack.c.b16 %v4079, %v4075
      %v4184 = vpack.c.b16 %v4084, %v4080
      %v4185 = vpack.c.b16 %v4085, %v4081
      %v4186 = vpack.c.b16 %v4086, %v4082
      %v4187 = vpack.c.b16 %v4087, %v4083
      %v4188 = vpack.c.b16 %v4092, %v4088
      %v4189 = vpack.c.b16 %v4093, %v4089
      %v4190 = vpack.c.b16 %v4094, %v4090
      %v4191 = vpack.c.b16 %v4095, %v4091
      %v4192 = vpack.c.b16 %v4100, %v4096
      %v4193 = vpack.c.b16 %v4101, %v4097
      %v4194 = vpack.c.b16 %v4102, %v4098
      %v4195 = vpack.c.b16 %v4103, %v4099
      %v4196 = vpack.c.b16 %v4108, %v4104
      %v4197 = vpack.c.b16 %v4109, %v4105
      %v4198 = vpack.c.b16 %v4110, %v4106
      %v4199 = vpack.c.b16 %v4111, %v4107
      %v4200 = vpack.c.b16 %v4116, %v4112
      %v4201 = vpack.c.b16 %v4117, %v4113
      %v4202 = vpack.c.b16 %v4118, %v4114
      %v4203 = vpack.c.b16 %v4119, %v4115
      %v4204 = vpack.c.b16 %v4124, %v4120
      %v4205 = vpack.c.b16 %v4125, %v4121
      %v4206 = vpack.c.b16 %v4126, %v4122
      %v4207 = vpack.c.b16 %v4127, %v4123
      %v4208 = vpack.c.b16 %v4132, %v4128
      %v4209 = vpack.c.b16 %v4133, %v4129
      %v4210 = vpack.c.b16 %v4134, %v4130
      %v4211 = vpack.c.b16 %v4135, %v4131
      %v4212 = vpack.c.b16 %v4140, %v4136
      %v4213 = vpack.c.b16 %v4141, %v4137
      %v4214 = vpack.c.b16 %v4142, %v4138
      %v4215 = vpack.c.b16 %v4143, %v4139
      %v4216 = vpack.c.b16 %v4148, %v4144
      %v4217 = vpack.c.b16 %v4149, %v4145
      %v4218 = vpack.c.b16 %v4150, %v4146
      %v4219 = vpack.c.b16 %v4151, %v4147
      %v4220 = vpack.c.b16 %v4156, %v4152
      %v4221 = vpack.c.b16 %v4157, %v4153
      %v4222 = vpack.c.b16 %v4158, %v4154
      %v4223 = vpack.c.b16 %v4159, %v4155
      %4288 = vmatprep.subr.bf16.mxu0 %v4161
      %4289 = vmatpush1.bf16.msra.mxu0 %v4160
      %4290 = vmatprep.subr.bf16.mxu0 %v4165
      %4291 = vmatpush1.bf16.msra.mxu0 %v4164
      %4292 = vmatprep.subr.bf16.mxu0 %v4169
      %4293 = vmatpush1.bf16.msra.mxu0 %v4168
      %4294 = vmatprep.subr.bf16.mxu0 %v4173
      %4295 = vmatpush1.bf16.msra.mxu0 %v4172
      %4296 = vmatprep.subr.bf16.mxu0 %v4177
      %4297 = vmatpush1.bf16.msra.mxu0 %v4176
      %4298 = vmatprep.subr.bf16.mxu0 %v4181
      %4299 = vmatpush1.bf16.msra.mxu0 %v4180
      %4300 = vmatprep.subr.bf16.mxu0 %v4185
      %4301 = vmatpush1.bf16.msra.mxu0 %v4184
      %4302 = vmatprep.subr.bf16.mxu0 %v4189
      %4303 = vmatpush1.bf16.msra.mxu0 %v4188
      %4304 = vmatprep.subr.bf16.mxu0 %v4193
      %4305 = vmatpush1.bf16.msra.mxu0 %v4192
      %4306 = vmatprep.subr.bf16.mxu0 %v4197
      %4307 = vmatpush1.bf16.msra.mxu0 %v4196
      %4308 = vmatprep.subr.bf16.mxu0 %v4201
      %4309 = vmatpush1.bf16.msra.mxu0 %v4200
      %4310 = vmatprep.subr.bf16.mxu0 %v4205
      %4311 = vmatpush1.bf16.msra.mxu0 %v4204
      %4312 = vmatprep.subr.bf16.mxu0 %v4209
      %4313 = vmatpush1.bf16.msra.mxu0 %v4208
      %4314 = vmatprep.subr.bf16.mxu0 %v4213
      %4315 = vmatpush1.bf16.msra.mxu0 %v4212
      %4316 = vmatprep.subr.bf16.mxu0 %v4217
      %4317 = vmatpush1.bf16.msra.mxu0 %v4216
      %4318 = vmatprep.subr.bf16.mxu0 %v4221
      %4319 = vmatpush1.bf16.msra.mxu0 %v4220
      %4320 = vmatprep.mubr.bf16.mxu0 %v3881
      %4321 = vmatmul.mubr.bf16.gmra.mrb[0].mxu0 %v3880
      %v4322 = vpop.f32.mrb[0].mxu0
      %v4323 = vadd.f32 %v3951, %v4322
      %v4324 = vpop.f32.mrb[0].mxu0
      %v4325 = vadd.f32 %v3955, %v4324
      %v4326 = vpop.f32.mrb[0].mxu0
      %v4327 = vpop.f32.mrb[0].mxu0
      %4328 = vdwg.mxu0
      %4329 = vmatprep.subr.bf16.mxu0 %v4163
      %4330 = vmatpush1.bf16.msra.mxu0 %v4162
      %4331 = vmatprep.subr.bf16.mxu0 %v4167
      %4332 = vmatpush1.bf16.msra.mxu0 %v4166
      %4333 = vmatprep.subr.bf16.mxu0 %v4171
      %4334 = vmatpush1.bf16.msra.mxu0 %v4170
      %4335 = vmatprep.subr.bf16.mxu0 %v4175
      %4336 = vmatpush1.bf16.msra.mxu0 %v4174
      %4337 = vmatprep.subr.bf16.mxu0 %v4179
      %4338 = vmatpush1.bf16.msra.mxu0 %v4178
      %4339 = vmatprep.subr.bf16.mxu0 %v4183
      %4340 = vmatpush1.bf16.msra.mxu0 %v4182
      %4341 = vmatprep.subr.bf16.mxu0 %v4187
      %4342 = vmatpush1.bf16.msra.mxu0 %v4186
      %4343 = vmatprep.subr.bf16.mxu0 %v4191
      %4344 = vmatpush1.bf16.msra.mxu0 %v4190
      %4345 = vmatprep.subr.bf16.mxu0 %v4195
      %4346 = vmatpush1.bf16.msra.mxu0 %v4194
      %4347 = vmatprep.subr.bf16.mxu0 %v4199
      %4348 = vmatpush1.bf16.msra.mxu0 %v4198
      %4349 = vmatprep.subr.bf16.mxu0 %v4203
      %4350 = vmatpush1.bf16.msra.mxu0 %v4202
      %4351 = vmatprep.subr.bf16.mxu0 %v4207
      %4352 = vmatpush1.bf16.msra.mxu0 %v4206
      %4353 = vmatprep.subr.bf16.mxu0 %v4211
      %4354 = vmatpush1.bf16.msra.mxu0 %v4210
      %4355 = vmatprep.subr.bf16.mxu0 %v4215
      %4356 = vmatpush1.bf16.msra.mxu0 %v4214
      %4357 = vmatprep.subr.bf16.mxu0 %v4219
      %4358 = vmatpush1.bf16.msra.mxu0 %v4218
      %4359 = vmatprep.subr.bf16.mxu0 %v4223
      %4360 = vmatpush1.bf16.msra.mxu0 %v4222
      %4361 = vmatprep.mubr.bf16.mxu0 %v3881
      %4362 = vmatmul.mubr.bf16.gmra.mrb[0].mxu0 %v3880
      %v4363 = vpop.f32.mrb[0].mxu0
      %v4364 = vadd.f32 %v3959, %v4363
      %v4365 = vpop.f32.mrb[0].mxu0
      %v4366 = vadd.f32 %v3963, %v4365
      %v4367 = vpop.f32.mrb[0].mxu0
      %v4368 = vpop.f32.mrb[0].mxu0
      %4369 = vdwg.mxu0
      %v4370 = vxor.u32 %v4323, 2147483648
      %v4371 = vmul.f32 %v4370, 1.442695
      %v4372 = vpow.pop %v4371
      %v4373 = vadd.f32 %v4372, 1.0
      %v4374 = vrcp.pop %v4373
      %v4375 = vmul.f32 1.0, %v4374
      %v4376 = vxor.u32 %v4325, 2147483648
      %v4377 = vmul.f32 %v4376, 1.442695
      %v4378 = vpow.pop %v4377
      %v4379 = vadd.f32 %v4378, 1.0
      %v4380 = vrcp.pop %v4379
      %v4381 = vmul.f32 1.0, %v4380
      %v4382 = vtanh.pop %v4364
      %v4383 = vxor.u32 %v4366, 2147483648
      %v4384 = vmul.f32 %v4383, 1.442695
      %v4385 = vpow.pop %v4384
      %v4386 = vadd.f32 %v4385, 1.0
      %v4387 = vrcp.pop %v4386
      %v4388 = vmul.f32 1.0, %v4387
      %v4389 = vmul.f32 %v4381, %v3879
      %v4390 = vmul.f32 %v4375, %v4382
      %v4391 = vadd.f32 %v4389, %v4390
      %v4392 = vtanh.pop %v4391
      %v4393 = vmul.f32 %v4388, %v4392
      %4394 = vst [vmem:[#allocation2] sm:$0xff] %v4393
      %4395 = vst [vmem:[#allocation3] sm:$0xff] %v4391
      %v4396 = vld [vmem:[%s1923] sm:$0xff]
      %v4397 = vld [vmem:[%s1925] sm:$0xff]
      %v4398 = vpack.c.bf16 %v4393, %v4393
      %v4399 = vpack.c.bf16 %v4396, %v4396
      %v4400 = vld [vmem:[%s5] sm:$0xff]
      %v4401 = vld [vmem:[%s5 + $0x8] sm:$0xff]
      %v4402 = vld [vmem:[%s5 + $0x10] sm:$0xff]
      %v4403 = vld [vmem:[%s5 + $0x18] sm:$0xff]
      %v4404 = vld [vmem:[%s5 + $0x20] sm:$0xff]
      %v4405 = vld [vmem:[%s5 + $0x28] sm:$0xff]
      %v4406 = vld [vmem:[%s5 + $0x30] sm:$0xff]
      %v4407 = vld [vmem:[%s5 + $0x38] sm:$0xff]
      %v4408 = vld [vmem:[%s5 + $0x40] sm:$0xff]
      %v4409 = vld [vmem:[%s5 + $0x48] sm:$0xff]
      %v4410 = vld [vmem:[%s5 + $0x50] sm:$0xff]
      %v4411 = vld [vmem:[%s5 + $0x58] sm:$0xff]
      %v4412 = vld [vmem:[%s5 + $0x60] sm:$0xff]
      %v4413 = vld [vmem:[%s5 + $0x68] sm:$0xff]
      %v4414 = vld [vmem:[%s5 + $0x70] sm:$0xff]
      %v4415 = vld [vmem:[%s5 + $0x78] sm:$0xff]
      %v4416 = vld [vmem:[%s5 + $0x80] sm:$0xff]
      %v4417 = vld [vmem:[%s5 + $0x88] sm:$0xff]
      %v4418 = vld [vmem:[%s5 + $0x90] sm:$0xff]
      %v4419 = vld [vmem:[%s5 + $0x98] sm:$0xff]
      %v4420 = vld [vmem:[%s5 + $0xa0] sm:$0xff]
      %v4421 = vld [vmem:[%s5 + $0xa8] sm:$0xff]
      %v4422 = vld [vmem:[%s5 + $0xb0] sm:$0xff]
      %v4423 = vld [vmem:[%s5 + $0xb8] sm:$0xff]
      %v4424 = vld [vmem:[%s5 + $0xc0] sm:$0xff]
      %v4425 = vld [vmem:[%s5 + $0xc8] sm:$0xff]
      %v4426 = vld [vmem:[%s5 + $0xd0] sm:$0xff]
      %v4427 = vld [vmem:[%s5 + $0xd8] sm:$0xff]
      %v4428 = vld [vmem:[%s5 + $0xe0] sm:$0xff]
      %v4429 = vld [vmem:[%s5 + $0xe8] sm:$0xff]
      %v4430 = vld [vmem:[%s5 + $0xf0] sm:$0xff]
      %v4431 = vld [vmem:[%s5 + $0xf8] sm:$0xff]
      %v4432 = vld [vmem:[%s5 + $0x100] sm:$0xff]
      %v4433 = vld [vmem:[%s5 + $0x108] sm:$0xff]
      %v4434 = vld [vmem:[%s5 + $0x110] sm:$0xff]
      %v4435 = vld [vmem:[%s5 + $0x118] sm:$0xff]
      %v4436 = vld [vmem:[%s5 + $0x120] sm:$0xff]
      %v4437 = vld [vmem:[%s5 + $0x128] sm:$0xff]
      %v4438 = vld [vmem:[%s5 + $0x130] sm:$0xff]
      %v4439 = vld [vmem:[%s5 + $0x138] sm:$0xff]
      %v4440 = vld [vmem:[%s5 + $0x140] sm:$0xff]
      %v4441 = vld [vmem:[%s5 + $0x148] sm:$0xff]
      %v4442 = vld [vmem:[%s5 + $0x150] sm:$0xff]
      %v4443 = vld [vmem:[%s5 + $0x158] sm:$0xff]
      %v4444 = vld [vmem:[%s5 + $0x160] sm:$0xff]
      %v4445 = vld [vmem:[%s5 + $0x168] sm:$0xff]
      %v4446 = vld [vmem:[%s5 + $0x170] sm:$0xff]
      %v4447 = vld [vmem:[%s5 + $0x178] sm:$0xff]
      %v4448 = vld [vmem:[%s5 + $0x180] sm:$0xff]
      %v4449 = vld [vmem:[%s5 + $0x188] sm:$0xff]
      %v4450 = vld [vmem:[%s5 + $0x190] sm:$0xff]
      %v4451 = vld [vmem:[%s5 + $0x198] sm:$0xff]
      %v4452 = vld [vmem:[%s5 + $0x1a0] sm:$0xff]
      %v4453 = vld [vmem:[%s5 + $0x1a8] sm:$0xff]
      %v4454 = vld [vmem:[%s5 + $0x1b0] sm:$0xff]
      %v4455 = vld [vmem:[%s5 + $0x1b8] sm:$0xff]
      %v4456 = vld [vmem:[%s5 + $0x1c0] sm:$0xff]
      %v4457 = vld [vmem:[%s5 + $0x1c8] sm:$0xff]
      %v4458 = vld [vmem:[%s5 + $0x1d0] sm:$0xff]
      %v4459 = vld [vmem:[%s5 + $0x1d8] sm:$0xff]
      %v4460 = vld [vmem:[%s5 + $0x1e0] sm:$0xff]
      %v4461 = vld [vmem:[%s5 + $0x1e8] sm:$0xff]
      %v4462 = vld [vmem:[%s5 + $0x1f0] sm:$0xff]
      %v4463 = vld [vmem:[%s5 + $0x1f8] sm:$0xff]
      %v4464 = vld [vmem:[%s6] sm:$0xf]
      %v4466 = vlaneseq
      %v4467 = vshrl.u32 %v4466, 7
      %v4468 = vsub.s32 0, %v4467
      %v4469 = vrot.slane %v4464, %v4468
      %v4470 = vlaneseq
      %v4471 = vshrl.u32 %v4470, 7
      %v4472 = vsub.s32 1, %v4471
      %v4473 = vrot.slane %v4464, %v4472
      %v4474 = vlaneseq
      %v4475 = vshrl.u32 %v4474, 7
      %v4476 = vsub.s32 2, %v4475
      %v4477 = vrot.slane %v4464, %v4476
      %v4478 = vlaneseq
      %v4479 = vshrl.u32 %v4478, 7
      %v4480 = vsub.s32 3, %v4479
      %v4481 = vrot.slane %v4464, %v4480
      %v4550 = vunpack.c.l.b16 %v4400
      %v4551 = vunpack.c.h.b16 %v4400
      %v4552 = vunpack.c.l.b16 %v4401
      %v4553 = vunpack.c.h.b16 %v4401
      %v4554 = vunpack.c.l.b16 %v4402
      %v4555 = vunpack.c.h.b16 %v4402
      %v4556 = vunpack.c.l.b16 %v4403
      %v4557 = vunpack.c.h.b16 %v4403
      %v4558 = vunpack.c.l.b16 %v4404
      %v4559 = vunpack.c.h.b16 %v4404
      %v4560 = vunpack.c.l.b16 %v4405
      %v4561 = vunpack.c.h.b16 %v4405
      %v4562 = vunpack.c.l.b16 %v4406
      %v4563 = vunpack.c.h.b16 %v4406
      %v4564 = vunpack.c.l.b16 %v4407
      %v4565 = vunpack.c.h.b16 %v4407
      %v4566 = vunpack.c.l.b16 %v4408
      %v4567 = vunpack.c.h.b16 %v4408
      %v4568 = vunpack.c.l.b16 %v4409
      %v4569 = vunpack.c.h.b16 %v4409
      %v4570 = vunpack.c.l.b16 %v4410
      %v4571 = vunpack.c.h.b16 %v4410
      %v4572 = vunpack.c.l.b16 %v4411
      %v4573 = vunpack.c.h.b16 %v4411
      %v4574 = vunpack.c.l.b16 %v4412
      %v4575 = vunpack.c.h.b16 %v4412
      %v4576 = vunpack.c.l.b16 %v4413
      %v4577 = vunpack.c.h.b16 %v4413
      %v4578 = vunpack.c.l.b16 %v4414
      %v4579 = vunpack.c.h.b16 %v4414
      %v4580 = vunpack.c.l.b16 %v4415
      %v4581 = vunpack.c.h.b16 %v4415
      %v4582 = vunpack.c.l.b16 %v4416
      %v4583 = vunpack.c.h.b16 %v4416
      %v4584 = vunpack.c.l.b16 %v4417
      %v4585 = vunpack.c.h.b16 %v4417
      %v4586 = vunpack.c.l.b16 %v4418
      %v4587 = vunpack.c.h.b16 %v4418
      %v4588 = vunpack.c.l.b16 %v4419
      %v4589 = vunpack.c.h.b16 %v4419
      %v4590 = vunpack.c.l.b16 %v4420
      %v4591 = vunpack.c.h.b16 %v4420
      %v4592 = vunpack.c.l.b16 %v4421
      %v4593 = vunpack.c.h.b16 %v4421
      %v4594 = vunpack.c.l.b16 %v4422
      %v4595 = vunpack.c.h.b16 %v4422
      %v4596 = vunpack.c.l.b16 %v4423
      %v4597 = vunpack.c.h.b16 %v4423
      %v4598 = vunpack.c.l.b16 %v4424
      %v4599 = vunpack.c.h.b16 %v4424
      %v4600 = vunpack.c.l.b16 %v4425
      %v4601 = vunpack.c.h.b16 %v4425
      %v4602 = vunpack.c.l.b16 %v4426
      %v4603 = vunpack.c.h.b16 %v4426
      %v4604 = vunpack.c.l.b16 %v4427
      %v4605 = vunpack.c.h.b16 %v4427
      %v4606 = vunpack.c.l.b16 %v4428
      %v4607 = vunpack.c.h.b16 %v4428
      %v4608 = vunpack.c.l.b16 %v4429
      %v4609 = vunpack.c.h.b16 %v4429
      %v4610 = vunpack.c.l.b16 %v4430
      %v4611 = vunpack.c.h.b16 %v4430
      %v4612 = vunpack.c.l.b16 %v4431
      %v4613 = vunpack.c.h.b16 %v4431
      %v4614 = vunpack.c.l.b16 %v4432
      %v4615 = vunpack.c.h.b16 %v4432
      %v4616 = vunpack.c.l.b16 %v4433
      %v4617 = vunpack.c.h.b16 %v4433
      %v4618 = vunpack.c.l.b16 %v4434
      %v4619 = vunpack.c.h.b16 %v4434
      %v4620 = vunpack.c.l.b16 %v4435
      %v4621 = vunpack.c.h.b16 %v4435
      %v4622 = vunpack.c.l.b16 %v4436
      %v4623 = vunpack.c.h.b16 %v4436
      %v4624 = vunpack.c.l.b16 %v4437
      %v4625 = vunpack.c.h.b16 %v4437
      %v4626 = vunpack.c.l.b16 %v4438
      %v4627 = vunpack.c.h.b16 %v4438
      %v4628 = vunpack.c.l.b16 %v4439
      %v4629 = vunpack.c.h.b16 %v4439
      %v4630 = vunpack.c.l.b16 %v4440
      %v4631 = vunpack.c.h.b16 %v4440
      %v4632 = vunpack.c.l.b16 %v4441
      %v4633 = vunpack.c.h.b16 %v4441
      %v4634 = vunpack.c.l.b16 %v4442
      %v4635 = vunpack.c.h.b16 %v4442
      %v4636 = vunpack.c.l.b16 %v4443
      %v4637 = vunpack.c.h.b16 %v4443
      %v4638 = vunpack.c.l.b16 %v4444
      %v4639 = vunpack.c.h.b16 %v4444
      %v4640 = vunpack.c.l.b16 %v4445
      %v4641 = vunpack.c.h.b16 %v4445
      %v4642 = vunpack.c.l.b16 %v4446
      %v4643 = vunpack.c.h.b16 %v4446
      %v4644 = vunpack.c.l.b16 %v4447
      %v4645 = vunpack.c.h.b16 %v4447
      %v4646 = vunpack.c.l.b16 %v4448
      %v4647 = vunpack.c.h.b16 %v4448
      %v4648 = vunpack.c.l.b16 %v4449
      %v4649 = vunpack.c.h.b16 %v4449
      %v4650 = vunpack.c.l.b16 %v4450
      %v4651 = vunpack.c.h.b16 %v4450
      %v4652 = vunpack.c.l.b16 %v4451
      %v4653 = vunpack.c.h.b16 %v4451
      %v4654 = vunpack.c.l.b16 %v4452
      %v4655 = vunpack.c.h.b16 %v4452
      %v4656 = vunpack.c.l.b16 %v4453
      %v4657 = vunpack.c.h.b16 %v4453
      %v4658 = vunpack.c.l.b16 %v4454
      %v4659 = vunpack.c.h.b16 %v4454
      %v4660 = vunpack.c.l.b16 %v4455
      %v4661 = vunpack.c.h.b16 %v4455
      %v4662 = vunpack.c.l.b16 %v4456
      %v4663 = vunpack.c.h.b16 %v4456
      %v4664 = vunpack.c.l.b16 %v4457
      %v4665 = vunpack.c.h.b16 %v4457
      %v4666 = vunpack.c.l.b16 %v4458
      %v4667 = vunpack.c.h.b16 %v4458
      %v4668 = vunpack.c.l.b16 %v4459
      %v4669 = vunpack.c.h.b16 %v4459
      %v4670 = vunpack.c.l.b16 %v4460
      %v4671 = vunpack.c.h.b16 %v4460
      %v4672 = vunpack.c.l.b16 %v4461
      %v4673 = vunpack.c.h.b16 %v4461
      %v4674 = vunpack.c.l.b16 %v4462
      %v4675 = vunpack.c.h.b16 %v4462
      %v4676 = vunpack.c.l.b16 %v4463
      %v4677 = vunpack.c.h.b16 %v4463
      %v4678 = vpack.c.b16 %v4554, %v4550
      %v4679 = vpack.c.b16 %v4555, %v4551
      %v4680 = vpack.c.b16 %v4556, %v4552
      %v4681 = vpack.c.b16 %v4557, %v4553
      %v4682 = vpack.c.b16 %v4562, %v4558
      %v4683 = vpack.c.b16 %v4563, %v4559
      %v4684 = vpack.c.b16 %v4564, %v4560
      %v4685 = vpack.c.b16 %v4565, %v4561
      %v4686 = vpack.c.b16 %v4570, %v4566
      %v4687 = vpack.c.b16 %v4571, %v4567
      %v4688 = vpack.c.b16 %v4572, %v4568
      %v4689 = vpack.c.b16 %v4573, %v4569
      %v4690 = vpack.c.b16 %v4578, %v4574
      %v4691 = vpack.c.b16 %v4579, %v4575
      %v4692 = vpack.c.b16 %v4580, %v4576
      %v4693 = vpack.c.b16 %v4581, %v4577
      %v4694 = vpack.c.b16 %v4586, %v4582
      %v4695 = vpack.c.b16 %v4587, %v4583
      %v4696 = vpack.c.b16 %v4588, %v4584
      %v4697 = vpack.c.b16 %v4589, %v4585
      %v4698 = vpack.c.b16 %v4594, %v4590
      %v4699 = vpack.c.b16 %v4595, %v4591
      %v4700 = vpack.c.b16 %v4596, %v4592
      %v4701 = vpack.c.b16 %v4597, %v4593
      %v4702 = vpack.c.b16 %v4602, %v4598
      %v4703 = vpack.c.b16 %v4603, %v4599
      %v4704 = vpack.c.b16 %v4604, %v4600
      %v4705 = vpack.c.b16 %v4605, %v4601
      %v4706 = vpack.c.b16 %v4610, %v4606
      %v4707 = vpack.c.b16 %v4611, %v4607
      %v4708 = vpack.c.b16 %v4612, %v4608
      %v4709 = vpack.c.b16 %v4613, %v4609
      %v4710 = vpack.c.b16 %v4618, %v4614
      %v4711 = vpack.c.b16 %v4619, %v4615
      %v4712 = vpack.c.b16 %v4620, %v4616
      %v4713 = vpack.c.b16 %v4621, %v4617
      %v4714 = vpack.c.b16 %v4626, %v4622
      %v4715 = vpack.c.b16 %v4627, %v4623
      %v4716 = vpack.c.b16 %v4628, %v4624
      %v4717 = vpack.c.b16 %v4629, %v4625
      %v4718 = vpack.c.b16 %v4634, %v4630
      %v4719 = vpack.c.b16 %v4635, %v4631
      %v4720 = vpack.c.b16 %v4636, %v4632
      %v4721 = vpack.c.b16 %v4637, %v4633
      %v4722 = vpack.c.b16 %v4642, %v4638
      %v4723 = vpack.c.b16 %v4643, %v4639
      %v4724 = vpack.c.b16 %v4644, %v4640
      %v4725 = vpack.c.b16 %v4645, %v4641
      %v4726 = vpack.c.b16 %v4650, %v4646
      %v4727 = vpack.c.b16 %v4651, %v4647
      %v4728 = vpack.c.b16 %v4652, %v4648
      %v4729 = vpack.c.b16 %v4653, %v4649
      %v4730 = vpack.c.b16 %v4658, %v4654
      %v4731 = vpack.c.b16 %v4659, %v4655
      %v4732 = vpack.c.b16 %v4660, %v4656
      %v4733 = vpack.c.b16 %v4661, %v4657
      %v4734 = vpack.c.b16 %v4666, %v4662
      %v4735 = vpack.c.b16 %v4667, %v4663
      %v4736 = vpack.c.b16 %v4668, %v4664
      %v4737 = vpack.c.b16 %v4669, %v4665
      %v4738 = vpack.c.b16 %v4674, %v4670
      %v4739 = vpack.c.b16 %v4675, %v4671
      %v4740 = vpack.c.b16 %v4676, %v4672
      %v4741 = vpack.c.b16 %v4677, %v4673
      %4806 = vmatprep.subr.bf16.mxu0 %v4679
      %4807 = vmatpush1.bf16.msra.mxu0 %v4678
      %4808 = vmatprep.subr.bf16.mxu0 %v4683
      %4809 = vmatpush1.bf16.msra.mxu0 %v4682
      %4810 = vmatprep.subr.bf16.mxu0 %v4687
      %4811 = vmatpush1.bf16.msra.mxu0 %v4686
      %4812 = vmatprep.subr.bf16.mxu0 %v4691
      %4813 = vmatpush1.bf16.msra.mxu0 %v4690
      %4814 = vmatprep.subr.bf16.mxu0 %v4695
      %4815 = vmatpush1.bf16.msra.mxu0 %v4694
      %4816 = vmatprep.subr.bf16.mxu0 %v4699
      %4817 = vmatpush1.bf16.msra.mxu0 %v4698
      %4818 = vmatprep.subr.bf16.mxu0 %v4703
      %4819 = vmatpush1.bf16.msra.mxu0 %v4702
      %4820 = vmatprep.subr.bf16.mxu0 %v4707
      %4821 = vmatpush1.bf16.msra.mxu0 %v4706
      %4822 = vmatprep.subr.bf16.mxu0 %v4711
      %4823 = vmatpush1.bf16.msra.mxu0 %v4710
      %4824 = vmatprep.subr.bf16.mxu0 %v4715
      %4825 = vmatpush1.bf16.msra.mxu0 %v4714
      %4826 = vmatprep.subr.bf16.mxu0 %v4719
      %4827 = vmatpush1.bf16.msra.mxu0 %v4718
      %4828 = vmatprep.subr.bf16.mxu0 %v4723
      %4829 = vmatpush1.bf16.msra.mxu0 %v4722
      %4830 = vmatprep.subr.bf16.mxu0 %v4727
      %4831 = vmatpush1.bf16.msra.mxu0 %v4726
      %4832 = vmatprep.subr.bf16.mxu0 %v4731
      %4833 = vmatpush1.bf16.msra.mxu0 %v4730
      %4834 = vmatprep.subr.bf16.mxu0 %v4735
      %4835 = vmatpush1.bf16.msra.mxu0 %v4734
      %4836 = vmatprep.subr.bf16.mxu0 %v4739
      %4837 = vmatpush1.bf16.msra.mxu0 %v4738
      %4838 = vmatprep.mubr.bf16.mxu0 %v4399
      %4839 = vmatmul.mubr.bf16.gmra.mrb[0].mxu0 %v4398
      %v4840 = vpop.f32.mrb[0].mxu0
      %v4841 = vadd.f32 %v4469, %v4840
      %v4842 = vpop.f32.mrb[0].mxu0
      %v4843 = vadd.f32 %v4473, %v4842
      %v4844 = vpop.f32.mrb[0].mxu0
      %v4845 = vpop.f32.mrb[0].mxu0
      %4846 = vdwg.mxu0
      %4847 = vmatprep.subr.bf16.mxu0 %v4681
      %4848 = vmatpush1.bf16.msra.mxu0 %v4680
      %4849 = vmatprep.subr.bf16.mxu0 %v4685
      %4850 = vmatpush1.bf16.msra.mxu0 %v4684
      %4851 = vmatprep.subr.bf16.mxu0 %v4689
      %4852 = vmatpush1.bf16.msra.mxu0 %v4688
      %4853 = vmatprep.subr.bf16.mxu0 %v4693
      %4854 = vmatpush1.bf16.msra.mxu0 %v4692
      %4855 = vmatprep.subr.bf16.mxu0 %v4697
      %4856 = vmatpush1.bf16.msra.mxu0 %v4696
      %4857 = vmatprep.subr.bf16.mxu0 %v4701
      %4858 = vmatpush1.bf16.msra.mxu0 %v4700
      %4859 = vmatprep.subr.bf16.mxu0 %v4705
      %4860 = vmatpush1.bf16.msra.mxu0 %v4704
      %4861 = vmatprep.subr.bf16.mxu0 %v4709
      %4862 = vmatpush1.bf16.msra.mxu0 %v4708
      %4863 = vmatprep.subr.bf16.mxu0 %v4713
      %4864 = vmatpush1.bf16.msra.mxu0 %v4712
      %4865 = vmatprep.subr.bf16.mxu0 %v4717
      %4866 = vmatpush1.bf16.msra.mxu0 %v4716
      %4867 = vmatprep.subr.bf16.mxu0 %v4721
      %4868 = vmatpush1.bf16.msra.mxu0 %v4720
      %4869 = vmatprep.subr.bf16.mxu0 %v4725
      %4870 = vmatpush1.bf16.msra.mxu0 %v4724
      %4871 = vmatprep.subr.bf16.mxu0 %v4729
      %4872 = vmatpush1.bf16.msra.mxu0 %v4728
      %4873 = vmatprep.subr.bf16.mxu0 %v4733
      %4874 = vmatpush1.bf16.msra.mxu0 %v4732
      %4875 = vmatprep.subr.bf16.mxu0 %v4737
      %4876 = vmatpush1.bf16.msra.mxu0 %v4736
      %4877 = vmatprep.subr.bf16.mxu0 %v4741
      %4878 = vmatpush1.bf16.msra.mxu0 %v4740
      %4879 = vmatprep.mubr.bf16.mxu0 %v4399
      %4880 = vmatmul.mubr.bf16.gmra.mrb[0].mxu0 %v4398
      %v4881 = vpop.f32.mrb[0].mxu0
      %v4882 = vadd.f32 %v4477, %v4881
      %v4883 = vpop.f32.mrb[0].mxu0
      %v4884 = vadd.f32 %v4481, %v4883
      %v4885 = vpop.f32.mrb[0].mxu0
      %v4886 = vpop.f32.mrb[0].mxu0
      %4887 = vdwg.mxu0
      %v4888 = vxor.u32 %v4841, 2147483648
      %v4889 = vmul.f32 %v4888, 1.442695
      %v4890 = vpow.pop %v4889
      %v4891 = vadd.f32 %v4890, 1.0
      %v4892 = vrcp.pop %v4891
      %v4893 = vmul.f32 1.0, %v4892
      %v4894 = vxor.u32 %v4843, 2147483648
      %v4895 = vmul.f32 %v4894, 1.442695
      %v4896 = vpow.pop %v4895
      %v4897 = vadd.f32 %v4896, 1.0
      %v4898 = vrcp.pop %v4897
      %v4899 = vmul.f32 1.0, %v4898
      %v4900 = vtanh.pop %v4882
      %v4901 = vxor.u32 %v4884, 2147483648
      %v4902 = vmul.f32 %v4901, 1.442695
      %v4903 = vpow.pop %v4902
      %v4904 = vadd.f32 %v4903, 1.0
      %v4905 = vrcp.pop %v4904
      %v4906 = vmul.f32 1.0, %v4905
      %v4907 = vmul.f32 %v4899, %v4397
      %v4908 = vmul.f32 %v4893, %v4900
      %v4909 = vadd.f32 %v4907, %v4908
      %v4910 = vtanh.pop %v4909
      %v4911 = vmul.f32 %v4906, %v4910
      %4912 = vst [vmem:[%s1923] sm:$0xff] %v4911
      %4913 = vst [vmem:[%s1925] sm:$0xff] %v4909
      %v4914 = vpack.c.bf16 %v4911, %v4911
      %v4915 = vld [vmem:[%s7] sm:$0xf]
      %v4916 = vld [vmem:[%s7 + $0x4] sm:$0xf]
      %v4917 = vld [vmem:[%s7 + $0x8] sm:$0xf]
      %v4918 = vld [vmem:[%s7 + $0xc] sm:$0xf]
      %v4919 = vld [vmem:[%s7 + $0x10] sm:$0xf]
      %v4920 = vld [vmem:[%s7 + $0x14] sm:$0xf]
      %v4921 = vld [vmem:[%s7 + $0x18] sm:$0xf]
      %v4922 = vld [vmem:[%s7 + $0x1c] sm:$0xf]
      %v4923 = vld [vmem:[%s7 + $0x20] sm:$0xf]
      %v4924 = vld [vmem:[%s7 + $0x24] sm:$0xf]
      %v4925 = vld [vmem:[%s7 + $0x28] sm:$0xf]
      %v4926 = vld [vmem:[%s7 + $0x2c] sm:$0xf]
      %v4927 = vld [vmem:[%s7 + $0x30] sm:$0xf]
      %v4928 = vld [vmem:[%s7 + $0x34] sm:$0xf]
      %v4929 = vld [vmem:[%s7 + $0x38] sm:$0xf]
      %v4930 = vld [vmem:[%s7 + $0x3c] sm:$0xf]
      %v4931 = vld [vmem:[%s8] sm:$0x1]
      %v4933 = vlaneseq
      %v4934 = vshrl.u32 %v4933, 7
      %v4935 = vsub.s32 0, %v4934
      %v4936 = vrot.slane %v4931, %v4935
      %v4954 = vunpack.c.l.b16 %v4915
      %v4955 = vunpack.c.l.b16 %v4916
      %v4956 = vunpack.c.l.b16 %v4917
      %v4957 = vunpack.c.l.b16 %v4918
      %v4958 = vunpack.c.l.b16 %v4919
      %v4959 = vunpack.c.l.b16 %v4920
      %v4960 = vunpack.c.l.b16 %v4921
      %v4961 = vunpack.c.l.b16 %v4922
      %v4962 = vunpack.c.l.b16 %v4923
      %v4963 = vunpack.c.l.b16 %v4924
      %v4964 = vunpack.c.l.b16 %v4925
      %v4965 = vunpack.c.l.b16 %v4926
      %v4966 = vunpack.c.l.b16 %v4927
      %v4967 = vunpack.c.l.b16 %v4928
      %v4968 = vunpack.c.l.b16 %v4929
      %v4969 = vunpack.c.l.b16 %v4930
      %v4970 = vpack.c.b16 %v4955, %v4954
      %v4971 = vpack.c.b16 %v4957, %v4956
      %v4972 = vpack.c.b16 %v4959, %v4958
      %v4973 = vpack.c.b16 %v4961, %v4960
      %v4974 = vpack.c.b16 %v4963, %v4962
      %v4975 = vpack.c.b16 %v4965, %v4964
      %v4976 = vpack.c.b16 %v4967, %v4966
      %v4977 = vpack.c.b16 %v4969, %v4968
      %4986 = vmatprep.subr.bf16.mxu0 0
      %4987 = vmatpush1.bf16.msra.mxu0 %v4970
      %4988 = vmatprep.subr.bf16.mxu0 0
      %4989 = vmatpush1.bf16.msra.mxu0 %v4971
      %4990 = vmatprep.subr.bf16.mxu0 0
      %4991 = vmatpush1.bf16.msra.mxu0 %v4972
      %4992 = vmatprep.subr.bf16.mxu0 0
      %4993 = vmatpush1.bf16.msra.mxu0 %v4973
      %4994 = vmatprep.subr.bf16.mxu0 0
      %4995 = vmatpush1.bf16.msra.mxu0 %v4974
      %4996 = vmatprep.subr.bf16.mxu0 0
      %4997 = vmatpush1.bf16.msra.mxu0 %v4975
      %4998 = vmatprep.subr.bf16.mxu0 0
      %4999 = vmatpush1.bf16.msra.mxu0 %v4976
      %5000 = vmatprep.subr.bf16.mxu0 0
      %5001 = vmatpush1.bf16.msra.mxu0 %v4977
      %5002 = vmatprep.subr.bf16.mxu0 0
      %5003 = vmatpush1.bf16.msra.mxu0 0
      %5004 = vmatprep.subr.bf16.mxu0 0
      %5005 = vmatpush1.bf16.msra.mxu0 0
      %5006 = vmatprep.subr.bf16.mxu0 0
      %5007 = vmatpush1.bf16.msra.mxu0 0
      %5008 = vmatprep.subr.bf16.mxu0 0
      %5009 = vmatpush1.bf16.msra.mxu0 0
      %5010 = vmatprep.subr.bf16.mxu0 0
      %5011 = vmatpush1.bf16.msra.mxu0 0
      %5012 = vmatprep.subr.bf16.mxu0 0
      %5013 = vmatpush1.bf16.msra.mxu0 0
      %5014 = vmatprep.subr.bf16.mxu0 0
      %5015 = vmatpush1.bf16.msra.mxu0 0
      %5016 = vmatprep.subr.bf16.mxu0 0
      %5017 = vmatpush1.bf16.msra.mxu0 0
      %5018 = vmatprep.mubr.bf16.mxu0 0
      %5019 = vmatmul.mubr.bf16.gmra.mrb[0].mxu0 %v4914
      %v5020 = vpop.f32.mrb[0].mxu0
      %v5021 = vadd.f32 %v4936, %v5020
      %v5022 = vpop.f32.mrb[0].mxu0
      %v5023 = vpop.f32.mrb[0].mxu0
      %v5024 = vpop.f32.mrb[0].mxu0
      %5025 = vdwg.mxu0
      %s5026 = scalar_lea.vmem %s341, 16
      %5027 = vst [vmem:[%s5026] sm:$0xff] %v5021
      %v5028 = vsel %vm2558, %v5021, -inf
      %5029 = vmax.xlane.f32.xlu0 %v5028
      %v5030 = vpop.xlane.xlu0 %5029
      %vm5031 = vcmp.ge.f32.partialorder %v5021, %v5030
      %v5032 = vsel %vm5031, %v2557, 128
      %v5033 = vsel %vm2558, %v5032, 2147483647
      %v5034 = vand.u32 %v5033, 65535
      %v5035 = vshra.s32 %v5033, 16
      %v5036 = vcvt.s32.f32 %v5034
      %v5037 = vcvt.s32.f32 %v5035
      %5038 = vmin.xlane.f32.xlu0 %v5037
      %v5039 = vpop.xlane.xlu0 %5038
      %vm5040 = vcmp.eq.f32.partialorder %v5037, %v5039
      %v5041 = vsel %vm5040, %v5036, inf
      %5042 = vmin.xlane.f32.xlu0 %v5041
      %v5043 = vpop.xlane.xlu0 %5042
      %v5044 = vcvt.f32.s32 %v5043
      %v5045 = vcvt.f32.s32 %v5039
      %v5046 = vshll.u32 %v5045, 16
      %v5047 = vadd.s32 %v5046, %v5044
      %v5048 = vrot.slane %v5047, 4
      %vm5049 = vcmp.lt.s32.totalorder %v5047, %v5048
      %v5050 = vsel %vm5049, %v5047, %v5048
      %v5051 = vrot.slane %v5050, 2
      %vm5052 = vcmp.lt.s32.totalorder %v5050, %v5051
      %v5053 = vsel %vm5052, %v5050, %v5051
      %v5054 = vrot.slane %v5053, 1
      %vm5055 = vcmp.lt.s32.totalorder %v5053, %v5054
      %v5056 = vsel %vm5055, %v5053, %v5054
      %s5057 = vtos %v5056
      %p5058 = scmp.lt.s32.totalorder %s5057, 127
      %s5059 = scalar_select %p5058, %s5057, 127
      %s5060 = scalar_lea.vmem %s9, %s5059
      %v5061 = vld [vmem:[%s5060] sm:$0x1]
      %5062 = vst [vmem:[#allocation4] sm:$0x1] %v5061
      %v5063 = vsel %vm2594, %v5021, -inf
      %5064 = vmax.xlane.f32.xlu0 %v5063
      %v5065 = vpop.xlane.xlu0 %5064
      %vm5066 = vcmp.ge.f32.partialorder %v5021, %v5065
      %v5067 = vsel %vm5066, %v2557, 128
      %v5068 = vsel %vm2594, %v5067, 2147483647
      %v5069 = vand.u32 %v5068, 65535
      %v5070 = vshra.s32 %v5068, 16
      %v5071 = vcvt.s32.f32 %v5069
      %v5072 = vcvt.s32.f32 %v5070
      %5073 = vmin.xlane.f32.xlu0 %v5072
      %v5074 = vpop.xlane.xlu0 %5073
      %vm5075 = vcmp.eq.f32.partialorder %v5072, %v5074
      %v5076 = vsel %vm5075, %v5071, inf
      %5077 = vmin.xlane.f32.xlu0 %v5076
      %v5078 = vpop.xlane.xlu0 %5077
      %v5079 = vcvt.f32.s32 %v5078
      %v5080 = vcvt.f32.s32 %v5074
      %v5081 = vshll.u32 %v5080, 16
      %v5082 = vadd.s32 %v5081, %v5079
      %v5083 = vrot.slane %v5082, 4
      %vm5084 = vcmp.lt.s32.totalorder %v5082, %v5083
      %v5085 = vsel %vm5084, %v5082, %v5083
      %v5086 = vrot.slane %v5085, 2
      %vm5087 = vcmp.lt.s32.totalorder %v5085, %v5086
      %v5088 = vsel %vm5087, %v5085, %v5086
      %v5089 = vrot.slane %v5088, 1
      %vm5090 = vcmp.lt.s32.totalorder %v5088, %v5089
      %v5091 = vsel %vm5090, %v5088, %v5089
      %s5092 = vtos %v5091
      %p5093 = scmp.lt.s32.totalorder %s5092, 127
      %s5094 = scalar_select %p5093, %s5092, 127
      %s5095 = scalar_lea.vmem %s9, %s5094
      %v5096 = vld [vmem:[%s5095] sm:$0x1]
      %5097 = vst [vmem:[#allocation4 + $0x1] sm:$0x1] %v5096
      %s5098 = sadd.s32 %s1391, 3
      %p5099 = scmp.gt.s32.totalorder %s3864, 0
      %s5100 = scalar_select %p5099, %s3864, 0
      %s5101 = sld [smem:[#allocation6 + %s5100]]
      %p5102 = scmp.gt.s32.totalorder %s5101, 0
      %p5103 = scmp.eq.s32.totalorder %s5098, 0
      %p5104 = por %p5103, %p5102
      // Predicated region
      $region73: #{_lambda_.3} parent=55 // pred_check
        %p5105 = pneg %p5104
      $region74: #{_lambda_.3} parent=55 // pred_check_branch
        %5107 = sbr.rel (%p5105) target = $region76
      $region75: #{_lambda_.3} parent=55 // pred_region
        %s5108 = scalar_lea.vmem %s335, 24
        %v5109 = vld [vmem:[%s5108] sm:$0xff]
        %5110 = vst [vmem:[#allocation4] sm:$0xff] %v5109
      $region76: #{_lambda_.3} parent=55 // pred_fallthru
        _
      %v5111 = vld [vmem:[#allocation4] sm:$0xff]
      %v5112 = vld [vmem:[#allocation2] sm:$0xff]
      %v5113 = vld [vmem:[#allocation3] sm:$0xff]
      %v5114 = vpack.c.bf16 %v5111, %v5111
      %v5115 = vpack.c.bf16 %v5112, %v5112
      %v5116 = vld [vmem:[%s3] sm:$0xff]
      %v5117 = vld [vmem:[%s3 + $0x8] sm:$0xff]
      %v5118 = vld [vmem:[%s3 + $0x10] sm:$0xff]
      %v5119 = vld [vmem:[%s3 + $0x18] sm:$0xff]
      %v5120 = vld [vmem:[%s3 + $0x20] sm:$0xff]
      %v5121 = vld [vmem:[%s3 + $0x28] sm:$0xff]
      %v5122 = vld [vmem:[%s3 + $0x30] sm:$0xff]
      %v5123 = vld [vmem:[%s3 + $0x38] sm:$0xff]
      %v5124 = vld [vmem:[%s3 + $0x40] sm:$0xff]
      %v5125 = vld [vmem:[%s3 + $0x48] sm:$0xff]
      %v5126 = vld [vmem:[%s3 + $0x50] sm:$0xff]
      %v5127 = vld [vmem:[%s3 + $0x58] sm:$0xff]
      %v5128 = vld [vmem:[%s3 + $0x60] sm:$0xff]
      %v5129 = vld [vmem:[%s3 + $0x68] sm:$0xff]
      %v5130 = vld [vmem:[%s3 + $0x70] sm:$0xff]
      %v5131 = vld [vmem:[%s3 + $0x78] sm:$0xff]
      %v5132 = vld [vmem:[%s3 + $0x80] sm:$0xff]
      %v5133 = vld [vmem:[%s3 + $0x88] sm:$0xff]
      %v5134 = vld [vmem:[%s3 + $0x90] sm:$0xff]
      %v5135 = vld [vmem:[%s3 + $0x98] sm:$0xff]
      %v5136 = vld [vmem:[%s3 + $0xa0] sm:$0xff]
      %v5137 = vld [vmem:[%s3 + $0xa8] sm:$0xff]
      %v5138 = vld [vmem:[%s3 + $0xb0] sm:$0xff]
      %v5139 = vld [vmem:[%s3 + $0xb8] sm:$0xff]
      %v5140 = vld [vmem:[%s3 + $0xc0] sm:$0xff]
      %v5141 = vld [vmem:[%s3 + $0xc8] sm:$0xff]
      %v5142 = vld [vmem:[%s3 + $0xd0] sm:$0xff]
      %v5143 = vld [vmem:[%s3 + $0xd8] sm:$0xff]
      %v5144 = vld [vmem:[%s3 + $0xe0] sm:$0xff]
      %v5145 = vld [vmem:[%s3 + $0xe8] sm:$0xff]
      %v5146 = vld [vmem:[%s3 + $0xf0] sm:$0xff]
      %v5147 = vld [vmem:[%s3 + $0xf8] sm:$0xff]
      %v5148 = vld [vmem:[%s3 + $0x100] sm:$0xff]
      %v5149 = vld [vmem:[%s3 + $0x108] sm:$0xff]
      %v5150 = vld [vmem:[%s3 + $0x110] sm:$0xff]
      %v5151 = vld [vmem:[%s3 + $0x118] sm:$0xff]
      %v5152 = vld [vmem:[%s3 + $0x120] sm:$0xff]
      %v5153 = vld [vmem:[%s3 + $0x128] sm:$0xff]
      %v5154 = vld [vmem:[%s3 + $0x130] sm:$0xff]
      %v5155 = vld [vmem:[%s3 + $0x138] sm:$0xff]
      %v5156 = vld [vmem:[%s3 + $0x140] sm:$0xff]
      %v5157 = vld [vmem:[%s3 + $0x148] sm:$0xff]
      %v5158 = vld [vmem:[%s3 + $0x150] sm:$0xff]
      %v5159 = vld [vmem:[%s3 + $0x158] sm:$0xff]
      %v5160 = vld [vmem:[%s3 + $0x160] sm:$0xff]
      %v5161 = vld [vmem:[%s3 + $0x168] sm:$0xff]
      %v5162 = vld [vmem:[%s3 + $0x170] sm:$0xff]
      %v5163 = vld [vmem:[%s3 + $0x178] sm:$0xff]
      %v5164 = vld [vmem:[%s3 + $0x180] sm:$0xff]
      %v5165 = vld [vmem:[%s3 + $0x188] sm:$0xff]
      %v5166 = vld [vmem:[%s3 + $0x190] sm:$0xff]
      %v5167 = vld [vmem:[%s3 + $0x198] sm:$0xff]
      %v5168 = vld [vmem:[%s3 + $0x1a0] sm:$0xff]
      %v5169 = vld [vmem:[%s3 + $0x1a8] sm:$0xff]
      %v5170 = vld [vmem:[%s3 + $0x1b0] sm:$0xff]
      %v5171 = vld [vmem:[%s3 + $0x1b8] sm:$0xff]
      %v5172 = vld [vmem:[%s3 + $0x1c0] sm:$0xff]
      %v5173 = vld [vmem:[%s3 + $0x1c8] sm:$0xff]
      %v5174 = vld [vmem:[%s3 + $0x1d0] sm:$0xff]
      %v5175 = vld [vmem:[%s3 + $0x1d8] sm:$0xff]
      %v5176 = vld [vmem:[%s3 + $0x1e0] sm:$0xff]
      %v5177 = vld [vmem:[%s3 + $0x1e8] sm:$0xff]
      %v5178 = vld [vmem:[%s3 + $0x1f0] sm:$0xff]
      %v5179 = vld [vmem:[%s3 + $0x1f8] sm:$0xff]
      %v5180 = vld [vmem:[%s4] sm:$0xf]
      %v5182 = vlaneseq
      %v5183 = vshrl.u32 %v5182, 7
      %v5184 = vsub.s32 0, %v5183
      %v5185 = vrot.slane %v5180, %v5184
      %v5186 = vlaneseq
      %v5187 = vshrl.u32 %v5186, 7
      %v5188 = vsub.s32 1, %v5187
      %v5189 = vrot.slane %v5180, %v5188
      %v5190 = vlaneseq
      %v5191 = vshrl.u32 %v5190, 7
      %v5192 = vsub.s32 2, %v5191
      %v5193 = vrot.slane %v5180, %v5192
      %v5194 = vlaneseq
      %v5195 = vshrl.u32 %v5194, 7
      %v5196 = vsub.s32 3, %v5195
      %v5197 = vrot.slane %v5180, %v5196
      %v5266 = vunpack.c.l.b16 %v5116
      %v5267 = vunpack.c.h.b16 %v5116
      %v5268 = vunpack.c.l.b16 %v5117
      %v5269 = vunpack.c.h.b16 %v5117
      %v5270 = vunpack.c.l.b16 %v5118
      %v5271 = vunpack.c.h.b16 %v5118
      %v5272 = vunpack.c.l.b16 %v5119
      %v5273 = vunpack.c.h.b16 %v5119
      %v5274 = vunpack.c.l.b16 %v5120
      %v5275 = vunpack.c.h.b16 %v5120
      %v5276 = vunpack.c.l.b16 %v5121
      %v5277 = vunpack.c.h.b16 %v5121
      %v5278 = vunpack.c.l.b16 %v5122
      %v5279 = vunpack.c.h.b16 %v5122
      %v5280 = vunpack.c.l.b16 %v5123
      %v5281 = vunpack.c.h.b16 %v5123
      %v5282 = vunpack.c.l.b16 %v5124
      %v5283 = vunpack.c.h.b16 %v5124
      %v5284 = vunpack.c.l.b16 %v5125
      %v5285 = vunpack.c.h.b16 %v5125
      %v5286 = vunpack.c.l.b16 %v5126
      %v5287 = vunpack.c.h.b16 %v5126
      %v5288 = vunpack.c.l.b16 %v5127
      %v5289 = vunpack.c.h.b16 %v5127
      %v5290 = vunpack.c.l.b16 %v5128
      %v5291 = vunpack.c.h.b16 %v5128
      %v5292 = vunpack.c.l.b16 %v5129
      %v5293 = vunpack.c.h.b16 %v5129
      %v5294 = vunpack.c.l.b16 %v5130
      %v5295 = vunpack.c.h.b16 %v5130
      %v5296 = vunpack.c.l.b16 %v5131
      %v5297 = vunpack.c.h.b16 %v5131
      %v5298 = vunpack.c.l.b16 %v5132
      %v5299 = vunpack.c.h.b16 %v5132
      %v5300 = vunpack.c.l.b16 %v5133
      %v5301 = vunpack.c.h.b16 %v5133
      %v5302 = vunpack.c.l.b16 %v5134
      %v5303 = vunpack.c.h.b16 %v5134
      %v5304 = vunpack.c.l.b16 %v5135
      %v5305 = vunpack.c.h.b16 %v5135
      %v5306 = vunpack.c.l.b16 %v5136
      %v5307 = vunpack.c.h.b16 %v5136
      %v5308 = vunpack.c.l.b16 %v5137
      %v5309 = vunpack.c.h.b16 %v5137
      %v5310 = vunpack.c.l.b16 %v5138
      %v5311 = vunpack.c.h.b16 %v5138
      %v5312 = vunpack.c.l.b16 %v5139
      %v5313 = vunpack.c.h.b16 %v5139
      %v5314 = vunpack.c.l.b16 %v5140
      %v5315 = vunpack.c.h.b16 %v5140
      %v5316 = vunpack.c.l.b16 %v5141
      %v5317 = vunpack.c.h.b16 %v5141
      %v5318 = vunpack.c.l.b16 %v5142
      %v5319 = vunpack.c.h.b16 %v5142
      %v5320 = vunpack.c.l.b16 %v5143
      %v5321 = vunpack.c.h.b16 %v5143
      %v5322 = vunpack.c.l.b16 %v5144
      %v5323 = vunpack.c.h.b16 %v5144
      %v5324 = vunpack.c.l.b16 %v5145
      %v5325 = vunpack.c.h.b16 %v5145
      %v5326 = vunpack.c.l.b16 %v5146
      %v5327 = vunpack.c.h.b16 %v5146
      %v5328 = vunpack.c.l.b16 %v5147
      %v5329 = vunpack.c.h.b16 %v5147
      %v5330 = vunpack.c.l.b16 %v5148
      %v5331 = vunpack.c.h.b16 %v5148
      %v5332 = vunpack.c.l.b16 %v5149
      %v5333 = vunpack.c.h.b16 %v5149
      %v5334 = vunpack.c.l.b16 %v5150
      %v5335 = vunpack.c.h.b16 %v5150
      %v5336 = vunpack.c.l.b16 %v5151
      %v5337 = vunpack.c.h.b16 %v5151
      %v5338 = vunpack.c.l.b16 %v5152
      %v5339 = vunpack.c.h.b16 %v5152
      %v5340 = vunpack.c.l.b16 %v5153
      %v5341 = vunpack.c.h.b16 %v5153
      %v5342 = vunpack.c.l.b16 %v5154
      %v5343 = vunpack.c.h.b16 %v5154
      %v5344 = vunpack.c.l.b16 %v5155
      %v5345 = vunpack.c.h.b16 %v5155
      %v5346 = vunpack.c.l.b16 %v5156
      %v5347 = vunpack.c.h.b16 %v5156
      %v5348 = vunpack.c.l.b16 %v5157
      %v5349 = vunpack.c.h.b16 %v5157
      %v5350 = vunpack.c.l.b16 %v5158
      %v5351 = vunpack.c.h.b16 %v5158
      %v5352 = vunpack.c.l.b16 %v5159
      %v5353 = vunpack.c.h.b16 %v5159
      %v5354 = vunpack.c.l.b16 %v5160
      %v5355 = vunpack.c.h.b16 %v5160
      %v5356 = vunpack.c.l.b16 %v5161
      %v5357 = vunpack.c.h.b16 %v5161
      %v5358 = vunpack.c.l.b16 %v5162
      %v5359 = vunpack.c.h.b16 %v5162
      %v5360 = vunpack.c.l.b16 %v5163
      %v5361 = vunpack.c.h.b16 %v5163
      %v5362 = vunpack.c.l.b16 %v5164
      %v5363 = vunpack.c.h.b16 %v5164
      %v5364 = vunpack.c.l.b16 %v5165
      %v5365 = vunpack.c.h.b16 %v5165
      %v5366 = vunpack.c.l.b16 %v5166
      %v5367 = vunpack.c.h.b16 %v5166
      %v5368 = vunpack.c.l.b16 %v5167
      %v5369 = vunpack.c.h.b16 %v5167
      %v5370 = vunpack.c.l.b16 %v5168
      %v5371 = vunpack.c.h.b16 %v5168
      %v5372 = vunpack.c.l.b16 %v5169
      %v5373 = vunpack.c.h.b16 %v5169
      %v5374 = vunpack.c.l.b16 %v5170
      %v5375 = vunpack.c.h.b16 %v5170
      %v5376 = vunpack.c.l.b16 %v5171
      %v5377 = vunpack.c.h.b16 %v5171
      %v5378 = vunpack.c.l.b16 %v5172
      %v5379 = vunpack.c.h.b16 %v5172
      %v5380 = vunpack.c.l.b16 %v5173
      %v5381 = vunpack.c.h.b16 %v5173
      %v5382 = vunpack.c.l.b16 %v5174
      %v5383 = vunpack.c.h.b16 %v5174
      %v5384 = vunpack.c.l.b16 %v5175
      %v5385 = vunpack.c.h.b16 %v5175
      %v5386 = vunpack.c.l.b16 %v5176
      %v5387 = vunpack.c.h.b16 %v5176
      %v5388 = vunpack.c.l.b16 %v5177
      %v5389 = vunpack.c.h.b16 %v5177
      %v5390 = vunpack.c.l.b16 %v5178
      %v5391 = vunpack.c.h.b16 %v5178
      %v5392 = vunpack.c.l.b16 %v5179
      %v5393 = vunpack.c.h.b16 %v5179
      %v5394 = vpack.c.b16 %v5270, %v5266
      %v5395 = vpack.c.b16 %v5271, %v5267
      %v5396 = vpack.c.b16 %v5272, %v5268
      %v5397 = vpack.c.b16 %v5273, %v5269
      %v5398 = vpack.c.b16 %v5278, %v5274
      %v5399 = vpack.c.b16 %v5279, %v5275
      %v5400 = vpack.c.b16 %v5280, %v5276
      %v5401 = vpack.c.b16 %v5281, %v5277
      %v5402 = vpack.c.b16 %v5286, %v5282
      %v5403 = vpack.c.b16 %v5287, %v5283
      %v5404 = vpack.c.b16 %v5288, %v5284
      %v5405 = vpack.c.b16 %v5289, %v5285
      %v5406 = vpack.c.b16 %v5294, %v5290
      %v5407 = vpack.c.b16 %v5295, %v5291
      %v5408 = vpack.c.b16 %v5296, %v5292
      %v5409 = vpack.c.b16 %v5297, %v5293
      %v5410 = vpack.c.b16 %v5302, %v5298
      %v5411 = vpack.c.b16 %v5303, %v5299
      %v5412 = vpack.c.b16 %v5304, %v5300
      %v5413 = vpack.c.b16 %v5305, %v5301
      %v5414 = vpack.c.b16 %v5310, %v5306
      %v5415 = vpack.c.b16 %v5311, %v5307
      %v5416 = vpack.c.b16 %v5312, %v5308
      %v5417 = vpack.c.b16 %v5313, %v5309
      %v5418 = vpack.c.b16 %v5318, %v5314
      %v5419 = vpack.c.b16 %v5319, %v5315
      %v5420 = vpack.c.b16 %v5320, %v5316
      %v5421 = vpack.c.b16 %v5321, %v5317
      %v5422 = vpack.c.b16 %v5326, %v5322
      %v5423 = vpack.c.b16 %v5327, %v5323
      %v5424 = vpack.c.b16 %v5328, %v5324
      %v5425 = vpack.c.b16 %v5329, %v5325
      %v5426 = vpack.c.b16 %v5334, %v5330
      %v5427 = vpack.c.b16 %v5335, %v5331
      %v5428 = vpack.c.b16 %v5336, %v5332
      %v5429 = vpack.c.b16 %v5337, %v5333
      %v5430 = vpack.c.b16 %v5342, %v5338
      %v5431 = vpack.c.b16 %v5343, %v5339
      %v5432 = vpack.c.b16 %v5344, %v5340
      %v5433 = vpack.c.b16 %v5345, %v5341
      %v5434 = vpack.c.b16 %v5350, %v5346
      %v5435 = vpack.c.b16 %v5351, %v5347
      %v5436 = vpack.c.b16 %v5352, %v5348
      %v5437 = vpack.c.b16 %v5353, %v5349
      %v5438 = vpack.c.b16 %v5358, %v5354
      %v5439 = vpack.c.b16 %v5359, %v5355
      %v5440 = vpack.c.b16 %v5360, %v5356
      %v5441 = vpack.c.b16 %v5361, %v5357
      %v5442 = vpack.c.b16 %v5366, %v5362
      %v5443 = vpack.c.b16 %v5367, %v5363
      %v5444 = vpack.c.b16 %v5368, %v5364
      %v5445 = vpack.c.b16 %v5369, %v5365
      %v5446 = vpack.c.b16 %v5374, %v5370
      %v5447 = vpack.c.b16 %v5375, %v5371
      %v5448 = vpack.c.b16 %v5376, %v5372
      %v5449 = vpack.c.b16 %v5377, %v5373
      %v5450 = vpack.c.b16 %v5382, %v5378
      %v5451 = vpack.c.b16 %v5383, %v5379
      %v5452 = vpack.c.b16 %v5384, %v5380
      %v5453 = vpack.c.b16 %v5385, %v5381
      %v5454 = vpack.c.b16 %v5390, %v5386
      %v5455 = vpack.c.b16 %v5391, %v5387
      %v5456 = vpack.c.b16 %v5392, %v5388
      %v5457 = vpack.c.b16 %v5393, %v5389
      %5522 = vmatprep.subr.bf16.mxu0 %v5395
      %5523 = vmatpush1.bf16.msra.mxu0 %v5394
      %5524 = vmatprep.subr.bf16.mxu0 %v5399
      %5525 = vmatpush1.bf16.msra.mxu0 %v5398
      %5526 = vmatprep.subr.bf16.mxu0 %v5403
      %5527 = vmatpush1.bf16.msra.mxu0 %v5402
      %5528 = vmatprep.subr.bf16.mxu0 %v5407
      %5529 = vmatpush1.bf16.msra.mxu0 %v5406
      %5530 = vmatprep.subr.bf16.mxu0 %v5411
      %5531 = vmatpush1.bf16.msra.mxu0 %v5410
      %5532 = vmatprep.subr.bf16.mxu0 %v5415
      %5533 = vmatpush1.bf16.msra.mxu0 %v5414
      %5534 = vmatprep.subr.bf16.mxu0 %v5419
      %5535 = vmatpush1.bf16.msra.mxu0 %v5418
      %5536 = vmatprep.subr.bf16.mxu0 %v5423
      %5537 = vmatpush1.bf16.msra.mxu0 %v5422
      %5538 = vmatprep.subr.bf16.mxu0 %v5427
      %5539 = vmatpush1.bf16.msra.mxu0 %v5426
      %5540 = vmatprep.subr.bf16.mxu0 %v5431
      %5541 = vmatpush1.bf16.msra.mxu0 %v5430
      %5542 = vmatprep.subr.bf16.mxu0 %v5435
      %5543 = vmatpush1.bf16.msra.mxu0 %v5434
      %5544 = vmatprep.subr.bf16.mxu0 %v5439
      %5545 = vmatpush1.bf16.msra.mxu0 %v5438
      %5546 = vmatprep.subr.bf16.mxu0 %v5443
      %5547 = vmatpush1.bf16.msra.mxu0 %v5442
      %5548 = vmatprep.subr.bf16.mxu0 %v5447
      %5549 = vmatpush1.bf16.msra.mxu0 %v5446
      %5550 = vmatprep.subr.bf16.mxu0 %v5451
      %5551 = vmatpush1.bf16.msra.mxu0 %v5450
      %5552 = vmatprep.subr.bf16.mxu0 %v5455
      %5553 = vmatpush1.bf16.msra.mxu0 %v5454
      %5554 = vmatprep.mubr.bf16.mxu0 %v5115
      %5555 = vmatmul.mubr.bf16.gmra.mrb[0].mxu0 %v5114
      %v5556 = vpop.f32.mrb[0].mxu0
      %v5557 = vadd.f32 %v5185, %v5556
      %v5558 = vpop.f32.mrb[0].mxu0
      %v5559 = vadd.f32 %v5189, %v5558
      %v5560 = vpop.f32.mrb[0].mxu0
      %v5561 = vpop.f32.mrb[0].mxu0
      %5562 = vdwg.mxu0
      %5563 = vmatprep.subr.bf16.mxu0 %v5397
      %5564 = vmatpush1.bf16.msra.mxu0 %v5396
      %5565 = vmatprep.subr.bf16.mxu0 %v5401
      %5566 = vmatpush1.bf16.msra.mxu0 %v5400
      %5567 = vmatprep.subr.bf16.mxu0 %v5405
      %5568 = vmatpush1.bf16.msra.mxu0 %v5404
      %5569 = vmatprep.subr.bf16.mxu0 %v5409
      %5570 = vmatpush1.bf16.msra.mxu0 %v5408
      %5571 = vmatprep.subr.bf16.mxu0 %v5413
      %5572 = vmatpush1.bf16.msra.mxu0 %v5412
      %5573 = vmatprep.subr.bf16.mxu0 %v5417
      %5574 = vmatpush1.bf16.msra.mxu0 %v5416
      %5575 = vmatprep.subr.bf16.mxu0 %v5421
      %5576 = vmatpush1.bf16.msra.mxu0 %v5420
      %5577 = vmatprep.subr.bf16.mxu0 %v5425
      %5578 = vmatpush1.bf16.msra.mxu0 %v5424
      %5579 = vmatprep.subr.bf16.mxu0 %v5429
      %5580 = vmatpush1.bf16.msra.mxu0 %v5428
      %5581 = vmatprep.subr.bf16.mxu0 %v5433
      %5582 = vmatpush1.bf16.msra.mxu0 %v5432
      %5583 = vmatprep.subr.bf16.mxu0 %v5437
      %5584 = vmatpush1.bf16.msra.mxu0 %v5436
      %5585 = vmatprep.subr.bf16.mxu0 %v5441
      %5586 = vmatpush1.bf16.msra.mxu0 %v5440
      %5587 = vmatprep.subr.bf16.mxu0 %v5445
      %5588 = vmatpush1.bf16.msra.mxu0 %v5444
      %5589 = vmatprep.subr.bf16.mxu0 %v5449
      %5590 = vmatpush1.bf16.msra.mxu0 %v5448
      %5591 = vmatprep.subr.bf16.mxu0 %v5453
      %5592 = vmatpush1.bf16.msra.mxu0 %v5452
      %5593 = vmatprep.subr.bf16.mxu0 %v5457
      %5594 = vmatpush1.bf16.msra.mxu0 %v5456
      %5595 = vmatprep.mubr.bf16.mxu0 %v5115
      %5596 = vmatmul.mubr.bf16.gmra.mrb[0].mxu0 %v5114
      %v5597 = vpop.f32.mrb[0].mxu0
      %v5598 = vadd.f32 %v5193, %v5597
      %v5599 = vpop.f32.mrb[0].mxu0
      %v5600 = vadd.f32 %v5197, %v5599
      %v5601 = vpop.f32.mrb[0].mxu0
      %v5602 = vpop.f32.mrb[0].mxu0
      %5603 = vdwg.mxu0
      %v5604 = vxor.u32 %v5557, 2147483648
      %v5605 = vmul.f32 %v5604, 1.442695
      %v5606 = vpow.pop %v5605
      %v5607 = vadd.f32 %v5606, 1.0
      %v5608 = vrcp.pop %v5607
      %v5609 = vmul.f32 1.0, %v5608
      %v5610 = vxor.u32 %v5559, 2147483648
      %v5611 = vmul.f32 %v5610, 1.442695
      %v5612 = vpow.pop %v5611
      %v5613 = vadd.f32 %v5612, 1.0
      %v5614 = vrcp.pop %v5613
      %v5615 = vmul.f32 1.0, %v5614
      %v5616 = vtanh.pop %v5598
      %v5617 = vxor.u32 %v5600, 2147483648
      %v5618 = vmul.f32 %v5617, 1.442695
      %v5619 = vpow.pop %v5618
      %v5620 = vadd.f32 %v5619, 1.0
      %v5621 = vrcp.pop %v5620
      %v5622 = vmul.f32 1.0, %v5621
      %v5623 = vmul.f32 %v5615, %v5113
      %v5624 = vmul.f32 %v5609, %v5616
      %v5625 = vadd.f32 %v5623, %v5624
      %v5626 = vtanh.pop %v5625
      %v5627 = vmul.f32 %v5622, %v5626
      %5628 = vst [vmem:[#allocation2] sm:$0xff] %v5627
      %5629 = vst [vmem:[#allocation3] sm:$0xff] %v5625
      %v5630 = vld [vmem:[%s1923] sm:$0xff]
      %v5631 = vld [vmem:[%s1925] sm:$0xff]
      %v5632 = vpack.c.bf16 %v5627, %v5627
      %v5633 = vpack.c.bf16 %v5630, %v5630
      %v5634 = vld [vmem:[%s5] sm:$0xff]
      %v5635 = vld [vmem:[%s5 + $0x8] sm:$0xff]
      %v5636 = vld [vmem:[%s5 + $0x10] sm:$0xff]
      %v5637 = vld [vmem:[%s5 + $0x18] sm:$0xff]
      %v5638 = vld [vmem:[%s5 + $0x20] sm:$0xff]
      %v5639 = vld [vmem:[%s5 + $0x28] sm:$0xff]
      %v5640 = vld [vmem:[%s5 + $0x30] sm:$0xff]
      %v5641 = vld [vmem:[%s5 + $0x38] sm:$0xff]
      %v5642 = vld [vmem:[%s5 + $0x40] sm:$0xff]
      %v5643 = vld [vmem:[%s5 + $0x48] sm:$0xff]
      %v5644 = vld [vmem:[%s5 + $0x50] sm:$0xff]
      %v5645 = vld [vmem:[%s5 + $0x58] sm:$0xff]
      %v5646 = vld [vmem:[%s5 + $0x60] sm:$0xff]
      %v5647 = vld [vmem:[%s5 + $0x68] sm:$0xff]
      %v5648 = vld [vmem:[%s5 + $0x70] sm:$0xff]
      %v5649 = vld [vmem:[%s5 + $0x78] sm:$0xff]
      %v5650 = vld [vmem:[%s5 + $0x80] sm:$0xff]
      %v5651 = vld [vmem:[%s5 + $0x88] sm:$0xff]
      %v5652 = vld [vmem:[%s5 + $0x90] sm:$0xff]
      %v5653 = vld [vmem:[%s5 + $0x98] sm:$0xff]
      %v5654 = vld [vmem:[%s5 + $0xa0] sm:$0xff]
      %v5655 = vld [vmem:[%s5 + $0xa8] sm:$0xff]
      %v5656 = vld [vmem:[%s5 + $0xb0] sm:$0xff]
      %v5657 = vld [vmem:[%s5 + $0xb8] sm:$0xff]
      %v5658 = vld [vmem:[%s5 + $0xc0] sm:$0xff]
      %v5659 = vld [vmem:[%s5 + $0xc8] sm:$0xff]
      %v5660 = vld [vmem:[%s5 + $0xd0] sm:$0xff]
      %v5661 = vld [vmem:[%s5 + $0xd8] sm:$0xff]
      %v5662 = vld [vmem:[%s5 + $0xe0] sm:$0xff]
      %v5663 = vld [vmem:[%s5 + $0xe8] sm:$0xff]
      %v5664 = vld [vmem:[%s5 + $0xf0] sm:$0xff]
      %v5665 = vld [vmem:[%s5 + $0xf8] sm:$0xff]
      %v5666 = vld [vmem:[%s5 + $0x100] sm:$0xff]
      %v5667 = vld [vmem:[%s5 + $0x108] sm:$0xff]
      %v5668 = vld [vmem:[%s5 + $0x110] sm:$0xff]
      %v5669 = vld [vmem:[%s5 + $0x118] sm:$0xff]
      %v5670 = vld [vmem:[%s5 + $0x120] sm:$0xff]
      %v5671 = vld [vmem:[%s5 + $0x128] sm:$0xff]
      %v5672 = vld [vmem:[%s5 + $0x130] sm:$0xff]
      %v5673 = vld [vmem:[%s5 + $0x138] sm:$0xff]
      %v5674 = vld [vmem:[%s5 + $0x140] sm:$0xff]
      %v5675 = vld [vmem:[%s5 + $0x148] sm:$0xff]
      %v5676 = vld [vmem:[%s5 + $0x150] sm:$0xff]
      %v5677 = vld [vmem:[%s5 + $0x158] sm:$0xff]
      %v5678 = vld [vmem:[%s5 + $0x160] sm:$0xff]
      %v5679 = vld [vmem:[%s5 + $0x168] sm:$0xff]
      %v5680 = vld [vmem:[%s5 + $0x170] sm:$0xff]
      %v5681 = vld [vmem:[%s5 + $0x178] sm:$0xff]
      %v5682 = vld [vmem:[%s5 + $0x180] sm:$0xff]
      %v5683 = vld [vmem:[%s5 + $0x188] sm:$0xff]
      %v5684 = vld [vmem:[%s5 + $0x190] sm:$0xff]
      %v5685 = vld [vmem:[%s5 + $0x198] sm:$0xff]
      %v5686 = vld [vmem:[%s5 + $0x1a0] sm:$0xff]
      %v5687 = vld [vmem:[%s5 + $0x1a8] sm:$0xff]
      %v5688 = vld [vmem:[%s5 + $0x1b0] sm:$0xff]
      %v5689 = vld [vmem:[%s5 + $0x1b8] sm:$0xff]
      %v5690 = vld [vmem:[%s5 + $0x1c0] sm:$0xff]
      %v5691 = vld [vmem:[%s5 + $0x1c8] sm:$0xff]
      %v5692 = vld [vmem:[%s5 + $0x1d0] sm:$0xff]
      %v5693 = vld [vmem:[%s5 + $0x1d8] sm:$0xff]
      %v5694 = vld [vmem:[%s5 + $0x1e0] sm:$0xff]
      %v5695 = vld [vmem:[%s5 + $0x1e8] sm:$0xff]
      %v5696 = vld [vmem:[%s5 + $0x1f0] sm:$0xff]
      %v5697 = vld [vmem:[%s5 + $0x1f8] sm:$0xff]
      %v5698 = vld [vmem:[%s6] sm:$0xf]
      %v5700 = vlaneseq
      %v5701 = vshrl.u32 %v5700, 7
      %v5702 = vsub.s32 0, %v5701
      %v5703 = vrot.slane %v5698, %v5702
      %v5704 = vlaneseq
      %v5705 = vshrl.u32 %v5704, 7
      %v5706 = vsub.s32 1, %v5705
      %v5707 = vrot.slane %v5698, %v5706
      %v5708 = vlaneseq
      %v5709 = vshrl.u32 %v5708, 7
      %v5710 = vsub.s32 2, %v5709
      %v5711 = vrot.slane %v5698, %v5710
      %v5712 = vlaneseq
      %v5713 = vshrl.u32 %v5712, 7
      %v5714 = vsub.s32 3, %v5713
      %v5715 = vrot.slane %v5698, %v5714
      %v5784 = vunpack.c.l.b16 %v5634
      %v5785 = vunpack.c.h.b16 %v5634
      %v5786 = vunpack.c.l.b16 %v5635
      %v5787 = vunpack.c.h.b16 %v5635
      %v5788 = vunpack.c.l.b16 %v5636
      %v5789 = vunpack.c.h.b16 %v5636
      %v5790 = vunpack.c.l.b16 %v5637
      %v5791 = vunpack.c.h.b16 %v5637
      %v5792 = vunpack.c.l.b16 %v5638
      %v5793 = vunpack.c.h.b16 %v5638
      %v5794 = vunpack.c.l.b16 %v5639
      %v5795 = vunpack.c.h.b16 %v5639
      %v5796 = vunpack.c.l.b16 %v5640
      %v5797 = vunpack.c.h.b16 %v5640
      %v5798 = vunpack.c.l.b16 %v5641
      %v5799 = vunpack.c.h.b16 %v5641
      %v5800 = vunpack.c.l.b16 %v5642
      %v5801 = vunpack.c.h.b16 %v5642
      %v5802 = vunpack.c.l.b16 %v5643
      %v5803 = vunpack.c.h.b16 %v5643
      %v5804 = vunpack.c.l.b16 %v5644
      %v5805 = vunpack.c.h.b16 %v5644
      %v5806 = vunpack.c.l.b16 %v5645
      %v5807 = vunpack.c.h.b16 %v5645
      %v5808 = vunpack.c.l.b16 %v5646
      %v5809 = vunpack.c.h.b16 %v5646
      %v5810 = vunpack.c.l.b16 %v5647
      %v5811 = vunpack.c.h.b16 %v5647
      %v5812 = vunpack.c.l.b16 %v5648
      %v5813 = vunpack.c.h.b16 %v5648
      %v5814 = vunpack.c.l.b16 %v5649
      %v5815 = vunpack.c.h.b16 %v5649
      %v5816 = vunpack.c.l.b16 %v5650
      %v5817 = vunpack.c.h.b16 %v5650
      %v5818 = vunpack.c.l.b16 %v5651
      %v5819 = vunpack.c.h.b16 %v5651
      %v5820 = vunpack.c.l.b16 %v5652
      %v5821 = vunpack.c.h.b16 %v5652
      %v5822 = vunpack.c.l.b16 %v5653
      %v5823 = vunpack.c.h.b16 %v5653
      %v5824 = vunpack.c.l.b16 %v5654
      %v5825 = vunpack.c.h.b16 %v5654
      %v5826 = vunpack.c.l.b16 %v5655
      %v5827 = vunpack.c.h.b16 %v5655
      %v5828 = vunpack.c.l.b16 %v5656
      %v5829 = vunpack.c.h.b16 %v5656
      %v5830 = vunpack.c.l.b16 %v5657
      %v5831 = vunpack.c.h.b16 %v5657
      %v5832 = vunpack.c.l.b16 %v5658
      %v5833 = vunpack.c.h.b16 %v5658
      %v5834 = vunpack.c.l.b16 %v5659
      %v5835 = vunpack.c.h.b16 %v5659
      %v5836 = vunpack.c.l.b16 %v5660
      %v5837 = vunpack.c.h.b16 %v5660
      %v5838 = vunpack.c.l.b16 %v5661
      %v5839 = vunpack.c.h.b16 %v5661
      %v5840 = vunpack.c.l.b16 %v5662
      %v5841 = vunpack.c.h.b16 %v5662
      %v5842 = vunpack.c.l.b16 %v5663
      %v5843 = vunpack.c.h.b16 %v5663
      %v5844 = vunpack.c.l.b16 %v5664
      %v5845 = vunpack.c.h.b16 %v5664
      %v5846 = vunpack.c.l.b16 %v5665
      %v5847 = vunpack.c.h.b16 %v5665
      %v5848 = vunpack.c.l.b16 %v5666
      %v5849 = vunpack.c.h.b16 %v5666
      %v5850 = vunpack.c.l.b16 %v5667
      %v5851 = vunpack.c.h.b16 %v5667
      %v5852 = vunpack.c.l.b16 %v5668
      %v5853 = vunpack.c.h.b16 %v5668
      %v5854 = vunpack.c.l.b16 %v5669
      %v5855 = vunpack.c.h.b16 %v5669
      %v5856 = vunpack.c.l.b16 %v5670
      %v5857 = vunpack.c.h.b16 %v5670
      %v5858 = vunpack.c.l.b16 %v5671
      %v5859 = vunpack.c.h.b16 %v5671
      %v5860 = vunpack.c.l.b16 %v5672
      %v5861 = vunpack.c.h.b16 %v5672
      %v5862 = vunpack.c.l.b16 %v5673
      %v5863 = vunpack.c.h.b16 %v5673
      %v5864 = vunpack.c.l.b16 %v5674
      %v5865 = vunpack.c.h.b16 %v5674
      %v5866 = vunpack.c.l.b16 %v5675
      %v5867 = vunpack.c.h.b16 %v5675
      %v5868 = vunpack.c.l.b16 %v5676
      %v5869 = vunpack.c.h.b16 %v5676
      %v5870 = vunpack.c.l.b16 %v5677
      %v5871 = vunpack.c.h.b16 %v5677
      %v5872 = vunpack.c.l.b16 %v5678
      %v5873 = vunpack.c.h.b16 %v5678
      %v5874 = vunpack.c.l.b16 %v5679
      %v5875 = vunpack.c.h.b16 %v5679
      %v5876 = vunpack.c.l.b16 %v5680
      %v5877 = vunpack.c.h.b16 %v5680
      %v5878 = vunpack.c.l.b16 %v5681
      %v5879 = vunpack.c.h.b16 %v5681
      %v5880 = vunpack.c.l.b16 %v5682
      %v5881 = vunpack.c.h.b16 %v5682
      %v5882 = vunpack.c.l.b16 %v5683
      %v5883 = vunpack.c.h.b16 %v5683
      %v5884 = vunpack.c.l.b16 %v5684
      %v5885 = vunpack.c.h.b16 %v5684
      %v5886 = vunpack.c.l.b16 %v5685
      %v5887 = vunpack.c.h.b16 %v5685
      %v5888 = vunpack.c.l.b16 %v5686
      %v5889 = vunpack.c.h.b16 %v5686
      %v5890 = vunpack.c.l.b16 %v5687
      %v5891 = vunpack.c.h.b16 %v5687
      %v5892 = vunpack.c.l.b16 %v5688
      %v5893 = vunpack.c.h.b16 %v5688
      %v5894 = vunpack.c.l.b16 %v5689
      %v5895 = vunpack.c.h.b16 %v5689
      %v5896 = vunpack.c.l.b16 %v5690
      %v5897 = vunpack.c.h.b16 %v5690
      %v5898 = vunpack.c.l.b16 %v5691
      %v5899 = vunpack.c.h.b16 %v5691
      %v5900 = vunpack.c.l.b16 %v5692
      %v5901 = vunpack.c.h.b16 %v5692
      %v5902 = vunpack.c.l.b16 %v5693
      %v5903 = vunpack.c.h.b16 %v5693
      %v5904 = vunpack.c.l.b16 %v5694
      %v5905 = vunpack.c.h.b16 %v5694
      %v5906 = vunpack.c.l.b16 %v5695
      %v5907 = vunpack.c.h.b16 %v5695
      %v5908 = vunpack.c.l.b16 %v5696
      %v5909 = vunpack.c.h.b16 %v5696
      %v5910 = vunpack.c.l.b16 %v5697
      %v5911 = vunpack.c.h.b16 %v5697
      %v5912 = vpack.c.b16 %v5788, %v5784
      %v5913 = vpack.c.b16 %v5789, %v5785
      %v5914 = vpack.c.b16 %v5790, %v5786
      %v5915 = vpack.c.b16 %v5791, %v5787
      %v5916 = vpack.c.b16 %v5796, %v5792
      %v5917 = vpack.c.b16 %v5797, %v5793
      %v5918 = vpack.c.b16 %v5798, %v5794
      %v5919 = vpack.c.b16 %v5799, %v5795
      %v5920 = vpack.c.b16 %v5804, %v5800
      %v5921 = vpack.c.b16 %v5805, %v5801
      %v5922 = vpack.c.b16 %v5806, %v5802
      %v5923 = vpack.c.b16 %v5807, %v5803
      %v5924 = vpack.c.b16 %v5812, %v5808
      %v5925 = vpack.c.b16 %v5813, %v5809
      %v5926 = vpack.c.b16 %v5814, %v5810
      %v5927 = vpack.c.b16 %v5815, %v5811
      %v5928 = vpack.c.b16 %v5820, %v5816
      %v5929 = vpack.c.b16 %v5821, %v5817
      %v5930 = vpack.c.b16 %v5822, %v5818
      %v5931 = vpack.c.b16 %v5823, %v5819
      %v5932 = vpack.c.b16 %v5828, %v5824
      %v5933 = vpack.c.b16 %v5829, %v5825
      %v5934 = vpack.c.b16 %v5830, %v5826
      %v5935 = vpack.c.b16 %v5831, %v5827
      %v5936 = vpack.c.b16 %v5836, %v5832
      %v5937 = vpack.c.b16 %v5837, %v5833
      %v5938 = vpack.c.b16 %v5838, %v5834
      %v5939 = vpack.c.b16 %v5839, %v5835
      %v5940 = vpack.c.b16 %v5844, %v5840
      %v5941 = vpack.c.b16 %v5845, %v5841
      %v5942 = vpack.c.b16 %v5846, %v5842
      %v5943 = vpack.c.b16 %v5847, %v5843
      %v5944 = vpack.c.b16 %v5852, %v5848
      %v5945 = vpack.c.b16 %v5853, %v5849
      %v5946 = vpack.c.b16 %v5854, %v5850
      %v5947 = vpack.c.b16 %v5855, %v5851
      %v5948 = vpack.c.b16 %v5860, %v5856
      %v5949 = vpack.c.b16 %v5861, %v5857
      %v5950 = vpack.c.b16 %v5862, %v5858
      %v5951 = vpack.c.b16 %v5863, %v5859
      %v5952 = vpack.c.b16 %v5868, %v5864
      %v5953 = vpack.c.b16 %v5869, %v5865
      %v5954 = vpack.c.b16 %v5870, %v5866
      %v5955 = vpack.c.b16 %v5871, %v5867
      %v5956 = vpack.c.b16 %v5876, %v5872
      %v5957 = vpack.c.b16 %v5877, %v5873
      %v5958 = vpack.c.b16 %v5878, %v5874
      %v5959 = vpack.c.b16 %v5879, %v5875
      %v5960 = vpack.c.b16 %v5884, %v5880
      %v5961 = vpack.c.b16 %v5885, %v5881
      %v5962 = vpack.c.b16 %v5886, %v5882
      %v5963 = vpack.c.b16 %v5887, %v5883
      %v5964 = vpack.c.b16 %v5892, %v5888
      %v5965 = vpack.c.b16 %v5893, %v5889
      %v5966 = vpack.c.b16 %v5894, %v5890
      %v5967 = vpack.c.b16 %v5895, %v5891
      %v5968 = vpack.c.b16 %v5900, %v5896
      %v5969 = vpack.c.b16 %v5901, %v5897
      %v5970 = vpack.c.b16 %v5902, %v5898
      %v5971 = vpack.c.b16 %v5903, %v5899
      %v5972 = vpack.c.b16 %v5908, %v5904
      %v5973 = vpack.c.b16 %v5909, %v5905
      %v5974 = vpack.c.b16 %v5910, %v5906
      %v5975 = vpack.c.b16 %v5911, %v5907
      %6040 = vmatprep.subr.bf16.mxu0 %v5913
      %6041 = vmatpush1.bf16.msra.mxu0 %v5912
      %6042 = vmatprep.subr.bf16.mxu0 %v5917
      %6043 = vmatpush1.bf16.msra.mxu0 %v5916
      %6044 = vmatprep.subr.bf16.mxu0 %v5921
      %6045 = vmatpush1.bf16.msra.mxu0 %v5920
      %6046 = vmatprep.subr.bf16.mxu0 %v5925
      %6047 = vmatpush1.bf16.msra.mxu0 %v5924
      %6048 = vmatprep.subr.bf16.mxu0 %v5929
      %6049 = vmatpush1.bf16.msra.mxu0 %v5928
      %6050 = vmatprep.subr.bf16.mxu0 %v5933
      %6051 = vmatpush1.bf16.msra.mxu0 %v5932
      %6052 = vmatprep.subr.bf16.mxu0 %v5937
      %6053 = vmatpush1.bf16.msra.mxu0 %v5936
      %6054 = vmatprep.subr.bf16.mxu0 %v5941
      %6055 = vmatpush1.bf16.msra.mxu0 %v5940
      %6056 = vmatprep.subr.bf16.mxu0 %v5945
      %6057 = vmatpush1.bf16.msra.mxu0 %v5944
      %6058 = vmatprep.subr.bf16.mxu0 %v5949
      %6059 = vmatpush1.bf16.msra.mxu0 %v5948
      %6060 = vmatprep.subr.bf16.mxu0 %v5953
      %6061 = vmatpush1.bf16.msra.mxu0 %v5952
      %6062 = vmatprep.subr.bf16.mxu0 %v5957
      %6063 = vmatpush1.bf16.msra.mxu0 %v5956
      %6064 = vmatprep.subr.bf16.mxu0 %v5961
      %6065 = vmatpush1.bf16.msra.mxu0 %v5960
      %6066 = vmatprep.subr.bf16.mxu0 %v5965
      %6067 = vmatpush1.bf16.msra.mxu0 %v5964
      %6068 = vmatprep.subr.bf16.mxu0 %v5969
      %6069 = vmatpush1.bf16.msra.mxu0 %v5968
      %6070 = vmatprep.subr.bf16.mxu0 %v5973
      %6071 = vmatpush1.bf16.msra.mxu0 %v5972
      %6072 = vmatprep.mubr.bf16.mxu0 %v5633
      %6073 = vmatmul.mubr.bf16.gmra.mrb[0].mxu0 %v5632
      %v6074 = vpop.f32.mrb[0].mxu0
      %v6075 = vadd.f32 %v5703, %v6074
      %v6076 = vpop.f32.mrb[0].mxu0
      %v6077 = vadd.f32 %v5707, %v6076
      %v6078 = vpop.f32.mrb[0].mxu0
      %v6079 = vpop.f32.mrb[0].mxu0
      %6080 = vdwg.mxu0
      %6081 = vmatprep.subr.bf16.mxu0 %v5915
      %6082 = vmatpush1.bf16.msra.mxu0 %v5914
      %6083 = vmatprep.subr.bf16.mxu0 %v5919
      %6084 = vmatpush1.bf16.msra.mxu0 %v5918
      %6085 = vmatprep.subr.bf16.mxu0 %v5923
      %6086 = vmatpush1.bf16.msra.mxu0 %v5922
      %6087 = vmatprep.subr.bf16.mxu0 %v5927
      %6088 = vmatpush1.bf16.msra.mxu0 %v5926
      %6089 = vmatprep.subr.bf16.mxu0 %v5931
      %6090 = vmatpush1.bf16.msra.mxu0 %v5930
      %6091 = vmatprep.subr.bf16.mxu0 %v5935
      %6092 = vmatpush1.bf16.msra.mxu0 %v5934
      %6093 = vmatprep.subr.bf16.mxu0 %v5939
      %6094 = vmatpush1.bf16.msra.mxu0 %v5938
      %6095 = vmatprep.subr.bf16.mxu0 %v5943
      %6096 = vmatpush1.bf16.msra.mxu0 %v5942
      %6097 = vmatprep.subr.bf16.mxu0 %v5947
      %6098 = vmatpush1.bf16.msra.mxu0 %v5946
      %6099 = vmatprep.subr.bf16.mxu0 %v5951
      %6100 = vmatpush1.bf16.msra.mxu0 %v5950
      %6101 = vmatprep.subr.bf16.mxu0 %v5955
      %6102 = vmatpush1.bf16.msra.mxu0 %v5954
      %6103 = vmatprep.subr.bf16.mxu0 %v5959
      %6104 = vmatpush1.bf16.msra.mxu0 %v5958
      %6105 = vmatprep.subr.bf16.mxu0 %v5963
      %6106 = vmatpush1.bf16.msra.mxu0 %v5962
      %6107 = vmatprep.subr.bf16.mxu0 %v5967
      %6108 = vmatpush1.bf16.msra.mxu0 %v5966
      %6109 = vmatprep.subr.bf16.mxu0 %v5971
      %6110 = vmatpush1.bf16.msra.mxu0 %v5970
      %6111 = vmatprep.subr.bf16.mxu0 %v5975
      %6112 = vmatpush1.bf16.msra.mxu0 %v5974
      %6113 = vmatprep.mubr.bf16.mxu0 %v5633
      %6114 = vmatmul.mubr.bf16.gmra.mrb[0].mxu0 %v5632
      %v6115 = vpop.f32.mrb[0].mxu0
      %v6116 = vadd.f32 %v5711, %v6115
      %v6117 = vpop.f32.mrb[0].mxu0
      %v6118 = vadd.f32 %v5715, %v6117
      %v6119 = vpop.f32.mrb[0].mxu0
      %v6120 = vpop.f32.mrb[0].mxu0
      %6121 = vdwg.mxu0
      %v6122 = vxor.u32 %v6075, 2147483648
      %v6123 = vmul.f32 %v6122, 1.442695
      %v6124 = vpow.pop %v6123
      %v6125 = vadd.f32 %v6124, 1.0
      %v6126 = vrcp.pop %v6125
      %v6127 = vmul.f32 1.0, %v6126
      %v6128 = vxor.u32 %v6077, 2147483648
      %v6129 = vmul.f32 %v6128, 1.442695
      %v6130 = vpow.pop %v6129
      %v6131 = vadd.f32 %v6130, 1.0
      %v6132 = vrcp.pop %v6131
      %v6133 = vmul.f32 1.0, %v6132
      %v6134 = vtanh.pop %v6116
      %v6135 = vxor.u32 %v6118, 2147483648
      %v6136 = vmul.f32 %v6135, 1.442695
      %v6137 = vpow.pop %v6136
      %v6138 = vadd.f32 %v6137, 1.0
      %v6139 = vrcp.pop %v6138
      %v6140 = vmul.f32 1.0, %v6139
      %v6141 = vmul.f32 %v6133, %v5631
      %v6142 = vmul.f32 %v6127, %v6134
      %v6143 = vadd.f32 %v6141, %v6142
      %v6144 = vtanh.pop %v6143
      %v6145 = vmul.f32 %v6140, %v6144
      %6146 = vst [vmem:[%s1923] sm:$0xff] %v6145
      %6147 = vst [vmem:[%s1925] sm:$0xff] %v6143
      %v6148 = vpack.c.bf16 %v6145, %v6145
      %v6149 = vld [vmem:[%s7] sm:$0xf]
      %v6150 = vld [vmem:[%s7 + $0x4] sm:$0xf]
      %v6151 = vld [vmem:[%s7 + $0x8] sm:$0xf]
      %v6152 = vld [vmem:[%s7 + $0xc] sm:$0xf]
      %v6153 = vld [vmem:[%s7 + $0x10] sm:$0xf]
      %v6154 = vld [vmem:[%s7 + $0x14] sm:$0xf]
      %v6155 = vld [vmem:[%s7 + $0x18] sm:$0xf]
      %v6156 = vld [vmem:[%s7 + $0x1c] sm:$0xf]
      %v6157 = vld [vmem:[%s7 + $0x20] sm:$0xf]
      %v6158 = vld [vmem:[%s7 + $0x24] sm:$0xf]
      %v6159 = vld [vmem:[%s7 + $0x28] sm:$0xf]
      %v6160 = vld [vmem:[%s7 + $0x2c] sm:$0xf]
      %v6161 = vld [vmem:[%s7 + $0x30] sm:$0xf]
      %v6162 = vld [vmem:[%s7 + $0x34] sm:$0xf]
      %v6163 = vld [vmem:[%s7 + $0x38] sm:$0xf]
      %v6164 = vld [vmem:[%s7 + $0x3c] sm:$0xf]
      %v6165 = vld [vmem:[%s8] sm:$0x1]
      %v6167 = vlaneseq
      %v6168 = vshrl.u32 %v6167, 7
      %v6169 = vsub.s32 0, %v6168
      %v6170 = vrot.slane %v6165, %v6169
      %v6188 = vunpack.c.l.b16 %v6149
      %v6189 = vunpack.c.l.b16 %v6150
      %v6190 = vunpack.c.l.b16 %v6151
      %v6191 = vunpack.c.l.b16 %v6152
      %v6192 = vunpack.c.l.b16 %v6153
      %v6193 = vunpack.c.l.b16 %v6154
      %v6194 = vunpack.c.l.b16 %v6155
      %v6195 = vunpack.c.l.b16 %v6156
      %v6196 = vunpack.c.l.b16 %v6157
      %v6197 = vunpack.c.l.b16 %v6158
      %v6198 = vunpack.c.l.b16 %v6159
      %v6199 = vunpack.c.l.b16 %v6160
      %v6200 = vunpack.c.l.b16 %v6161
      %v6201 = vunpack.c.l.b16 %v6162
      %v6202 = vunpack.c.l.b16 %v6163
      %v6203 = vunpack.c.l.b16 %v6164
      %v6204 = vpack.c.b16 %v6189, %v6188
      %v6205 = vpack.c.b16 %v6191, %v6190
      %v6206 = vpack.c.b16 %v6193, %v6192
      %v6207 = vpack.c.b16 %v6195, %v6194
      %v6208 = vpack.c.b16 %v6197, %v6196
      %v6209 = vpack.c.b16 %v6199, %v6198
      %v6210 = vpack.c.b16 %v6201, %v6200
      %v6211 = vpack.c.b16 %v6203, %v6202
      %6220 = vmatprep.subr.bf16.mxu0 0
      %6221 = vmatpush1.bf16.msra.mxu0 %v6204
      %6222 = vmatprep.subr.bf16.mxu0 0
      %6223 = vmatpush1.bf16.msra.mxu0 %v6205
      %6224 = vmatprep.subr.bf16.mxu0 0
      %6225 = vmatpush1.bf16.msra.mxu0 %v6206
      %6226 = vmatprep.subr.bf16.mxu0 0
      %6227 = vmatpush1.bf16.msra.mxu0 %v6207
      %6228 = vmatprep.subr.bf16.mxu0 0
      %6229 = vmatpush1.bf16.msra.mxu0 %v6208
      %6230 = vmatprep.subr.bf16.mxu0 0
      %6231 = vmatpush1.bf16.msra.mxu0 %v6209
      %6232 = vmatprep.subr.bf16.mxu0 0
      %6233 = vmatpush1.bf16.msra.mxu0 %v6210
      %6234 = vmatprep.subr.bf16.mxu0 0
      %6235 = vmatpush1.bf16.msra.mxu0 %v6211
      %6236 = vmatprep.subr.bf16.mxu0 0
      %6237 = vmatpush1.bf16.msra.mxu0 0
      %6238 = vmatprep.subr.bf16.mxu0 0
      %6239 = vmatpush1.bf16.msra.mxu0 0
      %6240 = vmatprep.subr.bf16.mxu0 0
      %6241 = vmatpush1.bf16.msra.mxu0 0
      %6242 = vmatprep.subr.bf16.mxu0 0
      %6243 = vmatpush1.bf16.msra.mxu0 0
      %6244 = vmatprep.subr.bf16.mxu0 0
      %6245 = vmatpush1.bf16.msra.mxu0 0
      %6246 = vmatprep.subr.bf16.mxu0 0
      %6247 = vmatpush1.bf16.msra.mxu0 0
      %6248 = vmatprep.subr.bf16.mxu0 0
      %6249 = vmatpush1.bf16.msra.mxu0 0
      %6250 = vmatprep.subr.bf16.mxu0 0
      %6251 = vmatpush1.bf16.msra.mxu0 0
      %6252 = vmatprep.mubr.bf16.mxu0 0
      %6253 = vmatmul.mubr.bf16.gmra.mrb[0].mxu0 %v6148
      %v6254 = vpop.f32.mrb[0].mxu0
      %v6255 = vadd.f32 %v6170, %v6254
      %v6256 = vpop.f32.mrb[0].mxu0
      %v6257 = vpop.f32.mrb[0].mxu0
      %v6258 = vpop.f32.mrb[0].mxu0
      %6259 = vdwg.mxu0
      %s6260 = scalar_lea.vmem %s341, 24
      %6261 = vst [vmem:[%s6260] sm:$0xff] %v6255
      %v6262 = vsel %vm2558, %v6255, -inf
      %6263 = vmax.xlane.f32.xlu0 %v6262
      %v6264 = vpop.xlane.xlu0 %6263
      %vm6265 = vcmp.ge.f32.partialorder %v6255, %v6264
      %v6266 = vsel %vm6265, %v2557, 128
      %v6267 = vsel %vm2558, %v6266, 2147483647
      %v6268 = vand.u32 %v6267, 65535
      %v6269 = vshra.s32 %v6267, 16
      %v6270 = vcvt.s32.f32 %v6268
      %v6271 = vcvt.s32.f32 %v6269
      %6272 = vmin.xlane.f32.xlu0 %v6271
      %v6273 = vpop.xlane.xlu0 %6272
      %vm6274 = vcmp.eq.f32.partialorder %v6271, %v6273
      %v6275 = vsel %vm6274, %v6270, inf
      %6276 = vmin.xlane.f32.xlu0 %v6275
      %v6277 = vpop.xlane.xlu0 %6276
      %v6278 = vcvt.f32.s32 %v6277
      %v6279 = vcvt.f32.s32 %v6273
      %v6280 = vshll.u32 %v6279, 16
      %v6281 = vadd.s32 %v6280, %v6278
      %v6282 = vrot.slane %v6281, 4
      %vm6283 = vcmp.lt.s32.totalorder %v6281, %v6282
      %v6284 = vsel %vm6283, %v6281, %v6282
      %v6285 = vrot.slane %v6284, 2
      %vm6286 = vcmp.lt.s32.totalorder %v6284, %v6285
      %v6287 = vsel %vm6286, %v6284, %v6285
      %v6288 = vrot.slane %v6287, 1
      %vm6289 = vcmp.lt.s32.totalorder %v6287, %v6288
      %v6290 = vsel %vm6289, %v6287, %v6288
      %s6291 = vtos %v6290
      %p6292 = scmp.lt.s32.totalorder %s6291, 127
      %s6293 = scalar_select %p6292, %s6291, 127
      %s6294 = scalar_lea.vmem %s9, %s6293
      %v6295 = vld [vmem:[%s6294] sm:$0x1]
      %6296 = vst [vmem:[#allocation4] sm:$0x1] %v6295
      %v6297 = vsel %vm2594, %v6255, -inf
      %6298 = vmax.xlane.f32.xlu0 %v6297
      %v6299 = vpop.xlane.xlu0 %6298
      %vm6300 = vcmp.ge.f32.partialorder %v6255, %v6299
      %v6301 = vsel %vm6300, %v2557, 128
      %v6302 = vsel %vm2594, %v6301, 2147483647
      %v6303 = vand.u32 %v6302, 65535
      %v6304 = vshra.s32 %v6302, 16
      %v6305 = vcvt.s32.f32 %v6303
      %v6306 = vcvt.s32.f32 %v6304
      %6307 = vmin.xlane.f32.xlu0 %v6306
      %v6308 = vpop.xlane.xlu0 %6307
      %vm6309 = vcmp.eq.f32.partialorder %v6306, %v6308
      %v6310 = vsel %vm6309, %v6305, inf
      %6311 = vmin.xlane.f32.xlu0 %v6310
      %v6312 = vpop.xlane.xlu0 %6311
      %v6313 = vcvt.f32.s32 %v6312
      %v6314 = vcvt.f32.s32 %v6308
      %v6315 = vshll.u32 %v6314, 16
      %v6316 = vadd.s32 %v6315, %v6313
      %v6317 = vrot.slane %v6316, 4
      %vm6318 = vcmp.lt.s32.totalorder %v6316, %v6317
      %v6319 = vsel %vm6318, %v6316, %v6317
      %v6320 = vrot.slane %v6319, 2
      %vm6321 = vcmp.lt.s32.totalorder %v6319, %v6320
      %v6322 = vsel %vm6321, %v6319, %v6320
      %v6323 = vrot.slane %v6322, 1
      %vm6324 = vcmp.lt.s32.totalorder %v6322, %v6323
      %v6325 = vsel %vm6324, %v6322, %v6323
      %s6326 = vtos %v6325
      %p6327 = scmp.lt.s32.totalorder %s6326, 127
      %s6328 = scalar_select %p6327, %s6326, 127
      %s6329 = scalar_lea.vmem %s9, %s6328
      %v6330 = vld [vmem:[%s6329] sm:$0x1]
      %6331 = vst [vmem:[#allocation4 + $0x1] sm:$0x1] %v6330
      %s6332 = smul.u32 4, %s27
      %p6333 = scmp.lt.s32.totalorder %s6332, 7
      %s6334 = scalar_select %p6333, %s6332, 7
      %s6335 = smul.addr %s6334, 8
      %s6336 = scalar_lea.vmem %s10, %s6335
      // Predicated region
      $region77: #{_lambda_.3} parent=55 // pred_check
        %p6337 = pneg %p239
      $region78: #{_lambda_.3} parent=55 // pred_check_branch
        %6339 = sbr.rel (%p6337) target = $region80
      $region79: #{_lambda_.3} parent=55 // pred_region
        %s6340 = smul.u32 4, %s27
      $region80: #{_lambda_.3} parent=55 // pred_fallthru
        _
    $region56: #{_lambda_.3} parent=5 // pred_fallthru
      _
    %p6341 = scmp.le.s32.totalorder 2, %s22
    // Predicated region
    $region81: #{_lambda_.3} parent=5 // pred_check
      %p6342 = pneg %p6341
    $region82: #{_lambda_.3} parent=5 // pred_check_branch
      %6344 = sbr.rel (%p6342) target = $region84
    $region83: #{_lambda_.3} parent=5 // pred_region
      %s6345 = ssub.s32 %s22, 2
      // Predicated region
      $region85: #{_lambda_.3} parent=83 // pred_check
        %p6346 = pneg %p245
      $region86: #{_lambda_.3} parent=83 // pred_check_branch
        %6348 = sbr.rel (%p6346) target = $region88
      $region87: #{_lambda_.3} parent=83 // pred_region
        %s6349 = smul.u32 4, %s28
        %p6350 = scmp.lt.s32.totalorder %s6349, 7
        %s6351 = scalar_select %p6350, %s6349, 7
        %s6352 = smul.addr %s6351, 8
        %s6353 = scalar_lea.vmem %s10, %s6352
      $region88: #{_lambda_.3} parent=83 // pred_fallthru
        _
    $region84: #{_lambda_.3} parent=5 // pred_fallthru
      _
  $region6: #{_lambda_.3} parent=0 // loop_footer
    %s26 = sadd.s32 1, %s22
  $region7: #{_lambda_.3} parent=0 // loop_footer_branch
    %21 = sbr.rel target = $region3
  $region8: #{_lambda_.3} parent=0 // loop_exit
    _

</llo_original>
